<compile_context>
chip_gen: v7x
topology: tpu7x:2x2x1
jax: 0.10.0
libtpu: 0.0.40
codegen_flags: <defaults>
</compile_context>

<pallas_src>
import functools

import jax
import jax.numpy as jnp
from jax.experimental import pallas as pl
from jax.experimental.pallas import tpu as pltpu

FILTER = 200  # hidden width from the PyTorch module


# ----------------------------------------------------------------------------
# Kernel
# ----------------------------------------------------------------------------
def nerf_kernel(
    x_ref, d_ref,
    # bf16 weights, stored as (in, out); w10ad = [w10a | wd] of shape (200, 201)
    w1, w2, w3, w4, w5, w6a, w6b, w7, w8, w9, w10ad, w10b, w11, wr,
    # f32 biases, stored as (1, out)
    b1, b2, b3, b4, b5, b6, b7, b8, b9, b10, b11, br, bd,
    # output: (TM, 4) = [rgb(3) | density(1)]
    out_ref,
):
    f = FILTER

    def mm(a_bf16, w_ref):
        # bf16 x bf16 MXU matmul with f32 accumulation.
        return jnp.dot(a_bf16, w_ref[...], preferred_element_type=jnp.float32)

    def act(v_f32):
        # f32 ReLU, then cast to bf16 for the next MXU pass.
        return jnp.maximum(v_f32, 0.0).astype(jnp.bfloat16)

    xb = x_ref[...].astype(jnp.bfloat16)
    db = d_ref[...].astype(jnp.bfloat16)

    y = act(mm(xb, w1) + b1[...])
    y = act(mm(y, w2) + b2[...])
    y = act(mm(y, w3) + b3[...])
    y = act(mm(y, w4) + b4[...])
    y = act(mm(y, w5) + b5[...])
    # layer6 on concat([y, x]) == y @ w6a + x @ w6b
    y = act(mm(y, w6a) + mm(xb, w6b) + b6[...])
    y = act(mm(y, w7) + b7[...])
    y = act(mm(y, w8) + b8[...])
    y9 = act(mm(y, w9) + b9[...])

    # One MXU pass computes both the layer-10 partial and the density head:
    #   h[:, :f] = y9 @ w10a       h[:, f:f+1] = y9 @ wd
    h = mm(y9, w10ad)
    density = jnp.maximum(h[:, f:f + 1] + bd[...], 0.0)          # f32 (TM, 1)

    # layer10 on concat([y9, d]) == y9 @ w10a + d @ w10b
    y = act(h[:, :f] + mm(db, w10b) + b10[...])
    y = act(mm(y, w11) + b11[...])

    z = mm(y, wr) + br[...]
    rgb = pl.reciprocal(1.0 + jnp.exp(-z), approx=True)          # sigmoid (EUP)

    out_ref[:, 0:3] = rgb
    out_ref[:, 3:4] = density


# ----------------------------------------------------------------------------
# Parameter construction (deterministic, in-script)
# ----------------------------------------------------------------------------
def init_params(key, num_pos_enc, num_dir_enc):
    dx = 3 + 3 * 2 * num_pos_enc
    dd = 3 + 3 * 2 * num_dir_enc
    f = FILTER

    # (name, in_dim, out_dim)
    weight_dims = [
        ("w1", dx, f), ("w2", f, f), ("w3", f, f), ("w4", f, f), ("w5", f, f),
        ("w6a", f, f), ("w6b", dx, f),            # split of layer6 (f + dx -> f)
        ("w7", f, f), ("w8", f, f), ("w9", f, f),
        ("w10a", f, f), ("w10b", dd, f),          # split of layer10 (f + dd -> f)
        ("w11", f, f), ("wr", f, 3), ("wd", f, 1),
    ]
    bias_dims = [
        ("b1", f), ("b2", f), ("b3", f), ("b4", f), ("b5", f), ("b6", f),
        ("b7", f), ("b8", f), ("b9", f), ("b10", f), ("b11", f),
        ("br", 3), ("bd", 1),
    ]

    keys = jax.random.split(key, len(weight_dims) + len(bias_dims))
    weights, biases = [], []
    for k, (_, din, dout) in zip(keys[:len(weight_dims)], weight_dims):
        # He-style scaling keeps activations O(1) through the deep ReLU chain.
        weights.append(jax.random.normal(k, (din, dout), jnp.float32)
                       * (2.0 / din) ** 0.5)
    for k, (_, dout) in zip(keys[len(weight_dims):], bias_dims):
        biases.append(jax.random.normal(k, (1, dout), jnp.float32) * 0.01)
    return weights, biases


# ----------------------------------------------------------------------------
# Wrapper
# ----------------------------------------------------------------------------
@functools.partial(jax.jit, static_argnames=("tm",))
def nerf_forward(x, d, weights, biases, *, tm=512):
    n, dx = x.shape
    _, dd = d.shape

    # Fuse the density head into the layer-10 weight, cast matmul weights to
    # bf16 for the MXU (accumulation stays f32 inside the kernel).
    (w1, w2, w3, w4, w5, w6a, w6b, w7, w8, w9,
     w10a, w10b, w11, wr, wd) = weights
    w10ad = jnp.concatenate([w10a, wd], axis=1)                  # (200, 201)
    wlist = [w.astype(jnp.bfloat16) for w in
             (w1, w2, w3, w4, w5, w6a, w6b, w7, w8, w9,
              w10ad, w10b, w11, wr)]

    # Pad the batch to a multiple of the tile so any sample count works.
    n_pad = pl.cdiv(n, tm) * tm
    if n_pad != n:
        x = jnp.pad(x, ((0, n_pad - n), (0, 0)))
        d = jnp.pad(d, ((0, n_pad - n), (0, 0)))

    # Full-array (un-tiled) specs for parameters; constant block index means
    # they are DMA'd into VMEM only once for the whole grid.
    param_spec = lambda arr: pl.BlockSpec(arr.shape, lambda i: (0, 0))
    in_specs = (
        [pl.BlockSpec((tm, dx), lambda i: (i, 0)),
         pl.BlockSpec((tm, dd), lambda i: (i, 0))]
        + [param_spec(w) for w in wlist]
        + [param_spec(b) for b in biases]
    )

    # Advisory cost estimate so XLA schedules surrounding ops sensibly.
    flops = 2 * n_pad * sum(int(w.shape[0]) * int(w.shape[1]) for w in wlist)
    bytes_accessed = int(
        sum(int(w.size) * 2 for w in wlist)
        + sum(int(b.size) * 4 for b in biases)
        + n_pad * (dx + dd + 4) * 4)
    cost = pl.CostEstimate(flops=int(flops), transcendentals=3 * int(n_pad),
                           bytes_accessed=bytes_accessed)

    out = pl.pallas_call(
        nerf_kernel,
        grid=(n_pad // tm,),
        in_specs=in_specs,
        out_specs=pl.BlockSpec((tm, 4), lambda i: (i, 0)),
        out_shape=jax.ShapeDtypeStruct((n_pad, 4), jnp.float32),
        compiler_params=pltpu.CompilerParams(
            dimension_semantics=("parallel",),
            vmem_limit_bytes=48 * 1024 * 1024,
        ),
        cost_estimate=cost,
    )(x, d, *wlist, *biases)

    rgb = out[:n, 0:3]
    density = out[:n, 3]   # matches torch.squeeze for N > 1 (N==1 would also drop batch dim in torch)
    return rgb, density


# ----------------------------------------------------------------------------
# Pure-JAX references (for correctness checks)
# ----------------------------------------------------------------------------
def nerf_reference_f32(x, d, weights, biases):
    (w1, w2, w3, w4, w5, w6a, w6b, w7, w8, w9, w10a, w10b, w11, wr, wd) = weights
    (b1, b2, b3, b4, b5, b6, b7, b8, b9, b10, b11, br, bd) = biases
    relu = lambda v: jnp.maximum(v, 0.0)
    y = relu(x @ w1 + b1)
    y = relu(y @ w2 + b2)
    y = relu(y @ w3 + b3)
    y = relu(y @ w4 + b4)
    y = relu(y @ w5 + b5)
    y = relu(jnp.concatenate([y, x], -1) @ jnp.concatenate([w6a, w6b], 0) + b6)
    y = relu(y @ w7 + b7)
    y = relu(y @ w8 + b8)
    y9 = relu(y @ w9 + b9)
    den = jnp.squeeze(relu(y9 @ wd + bd), -1)
    y = relu(jnp.concatenate([y9, d], -1) @ jnp.concatenate([w10a, w10b], 0) + b10)
    y = relu(y @ w11 + b11)
    rgb = jax.nn.sigmoid(y @ wr + br)
    return rgb, den


def nerf_reference_bf16(x, d, weights, biases):
    # Same bf16-input / f32-accumulation semantics as the kernel.
    (w1, w2, w3, w4, w5, w6a, w6b, w7, w8, w9, w10a, w10b, w11, wr, wd) = weights
    (b1, b2, b3, b4, b5, b6, b7, b8, b9, b10, b11, br, bd) = biases
    bf = jnp.bfloat16
    mm = lambda a, w: jnp.dot(a.astype(bf), w.astype(bf),
                              preferred_element_type=jnp.float32)
    relu = lambda v: jnp.maximum(v, 0.0)
    y = relu(mm(x, w1) + b1)
    y = relu(mm(y, w2) + b2)
    y = relu(mm(y, w3) + b3)
    y = relu(mm(y, w4) + b4)
    y = relu(mm(y, w5) + b5)
    y = relu(mm(y, w6a) + mm(x, w6b) + b6)
    y = relu(mm(y, w7) + b7)
    y = relu(mm(y, w8) + b8)
    y9 = relu(mm(y, w9) + b9)
    den = jnp.squeeze(relu(mm(y9, wd) + bd), -1)
    y = relu(mm(y9, w10a) + mm(d, w10b) + b10)
    y = relu(mm(y, w11) + b11)
    rgb = 1.0 / (1.0 + jnp.exp(-(mm(y, wr) + br)))
    return rgb, den


# ----------------------------------------------------------------------------
if __name__ == "__main__":
    num_pos_encoding_functions = 4   # x feature dim: 3 + 3*2*4 = 27
    num_dir_encoding_functions = 2   # d feature dim: 3 + 3*2*2 = 15
    n_samples = 1000                 # deliberately NOT a multiple of the tile
    tm = 512                         # -> padded to 1024, 2 "parallel" grid steps

    key = jax.random.PRNGKey(0)
    kx, kd, kp = jax.random.split(key, 3)

    dx = 3 + 3 * 2 * num_pos_encoding_functions
    dd = 3 + 3 * 2 * num_dir_encoding_functions
    x = jax.random.normal(kx, (n_samples, dx), jnp.float32)
    d = jax.random.normal(kd, (n_samples, dd), jnp.float32)

    weights, biases = init_params(kp, num_pos_encoding_functions,
                                  num_dir_encoding_functions)

    rgb, density = nerf_forward(x, d, weights, biases, tm=tm)
    jax.block_until_ready((rgb, density))

    assert rgb.shape == (n_samples, 3) and density.shape == (n_samples,)

    # Tight check against a reference with identical bf16/f32 semantics.
    rgb_bf, den_bf = nerf_reference_bf16(x, d, weights, biases)
    assert jnp.allclose(rgb, rgb_bf, atol=5e-3, rtol=5e-3)
    assert jnp.allclose(density, den_bf, atol=5e-3, rtol=5e-3)

    # Coarse sanity check against the full-f32 reference (tolerance accounts
    # for the bf16 matmul chain inside the kernel).
    with jax.default_matmul_precision("highest"):
        rgb_f32, den_f32 = nerf_reference_f32(x, d, weights, biases)
    assert jnp.allclose(rgb, rgb_f32, atol=1e-1, rtol=1e-1)
    assert jnp.allclose(density, den_f32, atol=1e-1, rtol=1e-1)

    print("KERNEL_OK")
</pallas_src>

<mosaic_0001>
module attributes {stable_mosaic.version = 11 : i64} {
  func.func @nerf_kernel(%arg0: i32, %arg1: memref<512x27xf32, #tpu.memory_space<vmem>>, %arg2: memref<512x15xf32, #tpu.memory_space<vmem>>, %arg3: memref<27x200xbf16, #tpu.memory_space<vmem>>, %arg4: memref<200x200xbf16, #tpu.memory_space<vmem>>, %arg5: memref<200x200xbf16, #tpu.memory_space<vmem>>, %arg6: memref<200x200xbf16, #tpu.memory_space<vmem>>, %arg7: memref<200x200xbf16, #tpu.memory_space<vmem>>, %arg8: memref<200x200xbf16, #tpu.memory_space<vmem>>, %arg9: memref<27x200xbf16, #tpu.memory_space<vmem>>, %arg10: memref<200x200xbf16, #tpu.memory_space<vmem>>, %arg11: memref<200x200xbf16, #tpu.memory_space<vmem>>, %arg12: memref<200x200xbf16, #tpu.memory_space<vmem>>, %arg13: memref<200x201xbf16, #tpu.memory_space<vmem>>, %arg14: memref<15x200xbf16, #tpu.memory_space<vmem>>, %arg15: memref<200x200xbf16, #tpu.memory_space<vmem>>, %arg16: memref<200x3xbf16, #tpu.memory_space<vmem>>, %arg17: memref<1x200xf32, #tpu.memory_space<vmem>>, %arg18: memref<1x200xf32, #tpu.memory_space<vmem>>, %arg19: memref<1x200xf32, #tpu.memory_space<vmem>>, %arg20: memref<1x200xf32, #tpu.memory_space<vmem>>, %arg21: memref<1x200xf32, #tpu.memory_space<vmem>>, %arg22: memref<1x200xf32, #tpu.memory_space<vmem>>, %arg23: memref<1x200xf32, #tpu.memory_space<vmem>>, %arg24: memref<1x200xf32, #tpu.memory_space<vmem>>, %arg25: memref<1x200xf32, #tpu.memory_space<vmem>>, %arg26: memref<1x200xf32, #tpu.memory_space<vmem>>, %arg27: memref<1x200xf32, #tpu.memory_space<vmem>>, %arg28: memref<1x3xf32, #tpu.memory_space<vmem>>, %arg29: memref<1x1xf32, #tpu.memory_space<vmem>>, %arg30: memref<512x4xf32, #tpu.memory_space<vmem>>) attributes {dimension_semantics = [#tpu.dimension_semantics<parallel>], iteration_bounds = array<i64: 2>, scalar_prefetch = 0 : i64, scratch_operands = 0 : i64, tpu.core_type = #tpu.core_type<tc>, window_params = [{transform_indices = @transform_0, window_bounds = array<i64: 512, 27>}, {transform_indices = @transform_1, window_bounds = array<i64: 512, 15>}, {pipeline_mode = #tpu.pipeline_mode<synchronous>, transform_indices = @transform_2, window_bounds = array<i64: 27, 200>}, {pipeline_mode = #tpu.pipeline_mode<synchronous>, transform_indices = @transform_3, window_bounds = array<i64: 200, 200>}, {pipeline_mode = #tpu.pipeline_mode<synchronous>, transform_indices = @transform_4, window_bounds = array<i64: 200, 200>}, {pipeline_mode = #tpu.pipeline_mode<synchronous>, transform_indices = @transform_5, window_bounds = array<i64: 200, 200>}, {pipeline_mode = #tpu.pipeline_mode<synchronous>, transform_indices = @transform_6, window_bounds = array<i64: 200, 200>}, {pipeline_mode = #tpu.pipeline_mode<synchronous>, transform_indices = @transform_7, window_bounds = array<i64: 200, 200>}, {pipeline_mode = #tpu.pipeline_mode<synchronous>, transform_indices = @transform_8, window_bounds = array<i64: 27, 200>}, {pipeline_mode = #tpu.pipeline_mode<synchronous>, transform_indices = @transform_9, window_bounds = array<i64: 200, 200>}, {pipeline_mode = #tpu.pipeline_mode<synchronous>, transform_indices = @transform_10, window_bounds = array<i64: 200, 200>}, {pipeline_mode = #tpu.pipeline_mode<synchronous>, transform_indices = @transform_11, window_bounds = array<i64: 200, 200>}, {pipeline_mode = #tpu.pipeline_mode<synchronous>, transform_indices = @transform_12, window_bounds = array<i64: 200, 201>}, {pipeline_mode = #tpu.pipeline_mode<synchronous>, transform_indices = @transform_13, window_bounds = array<i64: 15, 200>}, {pipeline_mode = #tpu.pipeline_mode<synchronous>, transform_indices = @transform_14, window_bounds = array<i64: 200, 200>}, {pipeline_mode = #tpu.pipeline_mode<synchronous>, transform_indices = @transform_15, window_bounds = array<i64: 200, 3>}, {pipeline_mode = #tpu.pipeline_mode<synchronous>, transform_indices = @transform_16, window_bounds = array<i64: 1, 200>}, {pipeline_mode = #tpu.pipeline_mode<synchronous>, transform_indices = @transform_17, window_bounds = array<i64: 1, 200>}, {pipeline_mode = #tpu.pipeline_mode<synchronous>, transform_indices = @transform_18, window_bounds = array<i64: 1, 200>}, {pipeline_mode = #tpu.pipeline_mode<synchronous>, transform_indices = @transform_19, window_bounds = array<i64: 1, 200>}, {pipeline_mode = #tpu.pipeline_mode<synchronous>, transform_indices = @transform_20, window_bounds = array<i64: 1, 200>}, {pipeline_mode = #tpu.pipeline_mode<synchronous>, transform_indices = @transform_21, window_bounds = array<i64: 1, 200>}, {pipeline_mode = #tpu.pipeline_mode<synchronous>, transform_indices = @transform_22, window_bounds = array<i64: 1, 200>}, {pipeline_mode = #tpu.pipeline_mode<synchronous>, transform_indices = @transform_23, window_bounds = array<i64: 1, 200>}, {pipeline_mode = #tpu.pipeline_mode<synchronous>, transform_indices = @transform_24, window_bounds = array<i64: 1, 200>}, {pipeline_mode = #tpu.pipeline_mode<synchronous>, transform_indices = @transform_25, window_bounds = array<i64: 1, 200>}, {pipeline_mode = #tpu.pipeline_mode<synchronous>, transform_indices = @transform_26, window_bounds = array<i64: 1, 200>}, {pipeline_mode = #tpu.pipeline_mode<synchronous>, transform_indices = @transform_27, window_bounds = array<i64: 1, 3>}, {pipeline_mode = #tpu.pipeline_mode<synchronous>, transform_indices = @transform_28, window_bounds = array<i64: 1, 1>}, {transform_indices = @transform_29, window_bounds = array<i64: 512, 4>}]} {
    %c0 = arith.constant 0 : index
    %c0_0 = arith.constant 0 : index
    %0 = vector.load %arg1[%c0, %c0_0] : memref<512x27xf32, #tpu.memory_space<vmem>>, vector<512x27xf32>
    %1 = arith.truncf %0 : vector<512x27xf32> to vector<512x27xbf16>
    %c0_1 = arith.constant 0 : index
    %c0_2 = arith.constant 0 : index
    %2 = vector.load %arg2[%c0_1, %c0_2] : memref<512x15xf32, #tpu.memory_space<vmem>>, vector<512x15xf32>
    %3 = arith.truncf %2 : vector<512x15xf32> to vector<512x15xbf16>
    %c0_3 = arith.constant 0 : index
    %c0_4 = arith.constant 0 : index
    %4 = vector.load %arg3[%c0_3, %c0_4] : memref<27x200xbf16, #tpu.memory_space<vmem>>, vector<27x200xbf16>
    %cst = arith.constant dense<0.000000e+00> : vector<512x200xf32>
    %5 = tpu.matmul %1, %4, %cst {dimension_numbers = #tpu.dot_dimension_numbers<[1], [0], [0], [1], [0, 0, 1, 1], [], []>} : vector<512x27xbf16>, vector<27x200xbf16>, vector<512x200xf32> -> vector<512x200xf32>
    %c0_5 = arith.constant 0 : index
    %c0_6 = arith.constant 0 : index
    %6 = vector.load %arg17[%c0_5, %c0_6] : memref<1x200xf32, #tpu.memory_space<vmem>>, vector<1x200xf32>
    %7 = vector.broadcast %6 : vector<1x200xf32> to vector<512x200xf32>
    %8 = arith.addf %5, %7 : vector<512x200xf32>
    %cst_7 = arith.constant 0.000000e+00 : f32
    %9 = vector.broadcast %cst_7 : f32 to vector<512x200xf32>
    %10 = arith.maximumf %8, %9 : vector<512x200xf32>
    %11 = arith.truncf %10 : vector<512x200xf32> to vector<512x200xbf16>
    %c0_8 = arith.constant 0 : index
    %c0_9 = arith.constant 0 : index
    %12 = vector.load %arg4[%c0_8, %c0_9] : memref<200x200xbf16, #tpu.memory_space<vmem>>, vector<200x200xbf16>
    %cst_10 = arith.constant dense<0.000000e+00> : vector<512x200xf32>
    %13 = tpu.matmul %11, %12, %cst_10 {dimension_numbers = #tpu.dot_dimension_numbers<[1], [0], [0], [1], [0, 0, 1, 1], [], []>} : vector<512x200xbf16>, vector<200x200xbf16>, vector<512x200xf32> -> vector<512x200xf32>
    %c0_11 = arith.constant 0 : index
    %c0_12 = arith.constant 0 : index
    %14 = vector.load %arg18[%c0_11, %c0_12] : memref<1x200xf32, #tpu.memory_space<vmem>>, vector<1x200xf32>
    %15 = vector.broadcast %14 : vector<1x200xf32> to vector<512x200xf32>
    %16 = arith.addf %13, %15 : vector<512x200xf32>
    %cst_13 = arith.constant 0.000000e+00 : f32
    %17 = vector.broadcast %cst_13 : f32 to vector<512x200xf32>
    %18 = arith.maximumf %16, %17 : vector<512x200xf32>
    %19 = arith.truncf %18 : vector<512x200xf32> to vector<512x200xbf16>
    %c0_14 = arith.constant 0 : index
    %c0_15 = arith.constant 0 : index
    %20 = vector.load %arg5[%c0_14, %c0_15] : memref<200x200xbf16, #tpu.memory_space<vmem>>, vector<200x200xbf16>
    %cst_16 = arith.constant dense<0.000000e+00> : vector<512x200xf32>
    %21 = tpu.matmul %19, %20, %cst_16 {dimension_numbers = #tpu.dot_dimension_numbers<[1], [0], [0], [1], [0, 0, 1, 1], [], []>} : vector<512x200xbf16>, vector<200x200xbf16>, vector<512x200xf32> -> vector<512x200xf32>
    %c0_17 = arith.constant 0 : index
    %c0_18 = arith.constant 0 : index
    %22 = vector.load %arg19[%c0_17, %c0_18] : memref<1x200xf32, #tpu.memory_space<vmem>>, vector<1x200xf32>
    %23 = vector.broadcast %22 : vector<1x200xf32> to vector<512x200xf32>
    %24 = arith.addf %21, %23 : vector<512x200xf32>
    %cst_19 = arith.constant 0.000000e+00 : f32
    %25 = vector.broadcast %cst_19 : f32 to vector<512x200xf32>
    %26 = arith.maximumf %24, %25 : vector<512x200xf32>
    %27 = arith.truncf %26 : vector<512x200xf32> to vector<512x200xbf16>
    %c0_20 = arith.constant 0 : index
    %c0_21 = arith.constant 0 : index
    %28 = vector.load %arg6[%c0_20, %c0_21] : memref<200x200xbf16, #tpu.memory_space<vmem>>, vector<200x200xbf16>
    %cst_22 = arith.constant dense<0.000000e+00> : vector<512x200xf32>
    %29 = tpu.matmul %27, %28, %cst_22 {dimension_numbers = #tpu.dot_dimension_numbers<[1], [0], [0], [1], [0, 0, 1, 1], [], []>} : vector<512x200xbf16>, vector<200x200xbf16>, vector<512x200xf32> -> vector<512x200xf32>
    %c0_23 = arith.constant 0 : index
    %c0_24 = arith.constant 0 : index
    %30 = vector.load %arg20[%c0_23, %c0_24] : memref<1x200xf32, #tpu.memory_space<vmem>>, vector<1x200xf32>
    %31 = vector.broadcast %30 : vector<1x200xf32> to vector<512x200xf32>
    %32 = arith.addf %29, %31 : vector<512x200xf32>
    %cst_25 = arith.constant 0.000000e+00 : f32
    %33 = vector.broadcast %cst_25 : f32 to vector<512x200xf32>
    %34 = arith.maximumf %32, %33 : vector<512x200xf32>
    %35 = arith.truncf %34 : vector<512x200xf32> to vector<512x200xbf16>
    %c0_26 = arith.constant 0 : index
    %c0_27 = arith.constant 0 : index
    %36 = vector.load %arg7[%c0_26, %c0_27] : memref<200x200xbf16, #tpu.memory_space<vmem>>, vector<200x200xbf16>
    %cst_28 = arith.constant dense<0.000000e+00> : vector<512x200xf32>
    %37 = tpu.matmul %35, %36, %cst_28 {dimension_numbers = #tpu.dot_dimension_numbers<[1], [0], [0], [1], [0, 0, 1, 1], [], []>} : vector<512x200xbf16>, vector<200x200xbf16>, vector<512x200xf32> -> vector<512x200xf32>
    %c0_29 = arith.constant 0 : index
    %c0_30 = arith.constant 0 : index
    %38 = vector.load %arg21[%c0_29, %c0_30] : memref<1x200xf32, #tpu.memory_space<vmem>>, vector<1x200xf32>
    %39 = vector.broadcast %38 : vector<1x200xf32> to vector<512x200xf32>
    %40 = arith.addf %37, %39 : vector<512x200xf32>
    %cst_31 = arith.constant 0.000000e+00 : f32
    %41 = vector.broadcast %cst_31 : f32 to vector<512x200xf32>
    %42 = arith.maximumf %40, %41 : vector<512x200xf32>
    %43 = arith.truncf %42 : vector<512x200xf32> to vector<512x200xbf16>
    %c0_32 = arith.constant 0 : index
    %c0_33 = arith.constant 0 : index
    %44 = vector.load %arg8[%c0_32, %c0_33] : memref<200x200xbf16, #tpu.memory_space<vmem>>, vector<200x200xbf16>
    %cst_34 = arith.constant dense<0.000000e+00> : vector<512x200xf32>
    %45 = tpu.matmul %43, %44, %cst_34 {dimension_numbers = #tpu.dot_dimension_numbers<[1], [0], [0], [1], [0, 0, 1, 1], [], []>} : vector<512x200xbf16>, vector<200x200xbf16>, vector<512x200xf32> -> vector<512x200xf32>
    %c0_35 = arith.constant 0 : index
    %c0_36 = arith.constant 0 : index
    %46 = vector.load %arg9[%c0_35, %c0_36] : memref<27x200xbf16, #tpu.memory_space<vmem>>, vector<27x200xbf16>
    %cst_37 = arith.constant dense<0.000000e+00> : vector<512x200xf32>
    %47 = tpu.matmul %1, %46, %cst_37 {dimension_numbers = #tpu.dot_dimension_numbers<[1], [0], [0], [1], [0, 0, 1, 1], [], []>} : vector<512x27xbf16>, vector<27x200xbf16>, vector<512x200xf32> -> vector<512x200xf32>
    %48 = arith.addf %45, %47 : vector<512x200xf32>
    %c0_38 = arith.constant 0 : index
    %c0_39 = arith.constant 0 : index
    %49 = vector.load %arg22[%c0_38, %c0_39] : memref<1x200xf32, #tpu.memory_space<vmem>>, vector<1x200xf32>
    %50 = vector.broadcast %49 : vector<1x200xf32> to vector<512x200xf32>
    %51 = arith.addf %48, %50 : vector<512x200xf32>
    %cst_40 = arith.constant 0.000000e+00 : f32
    %52 = vector.broadcast %cst_40 : f32 to vector<512x200xf32>
    %53 = arith.maximumf %51, %52 : vector<512x200xf32>
    %54 = arith.truncf %53 : vector<512x200xf32> to vector<512x200xbf16>
    %c0_41 = arith.constant 0 : index
    %c0_42 = arith.constant 0 : index
    %55 = vector.load %arg10[%c0_41, %c0_42] : memref<200x200xbf16, #tpu.memory_space<vmem>>, vector<200x200xbf16>
    %cst_43 = arith.constant dense<0.000000e+00> : vector<512x200xf32>
    %56 = tpu.matmul %54, %55, %cst_43 {dimension_numbers = #tpu.dot_dimension_numbers<[1], [0], [0], [1], [0, 0, 1, 1], [], []>} : vector<512x200xbf16>, vector<200x200xbf16>, vector<512x200xf32> -> vector<512x200xf32>
    %c0_44 = arith.constant 0 : index
    %c0_45 = arith.constant 0 : index
    %57 = vector.load %arg23[%c0_44, %c0_45] : memref<1x200xf32, #tpu.memory_space<vmem>>, vector<1x200xf32>
    %58 = vector.broadcast %57 : vector<1x200xf32> to vector<512x200xf32>
    %59 = arith.addf %56, %58 : vector<512x200xf32>
    %cst_46 = arith.constant 0.000000e+00 : f32
    %60 = vector.broadcast %cst_46 : f32 to vector<512x200xf32>
    %61 = arith.maximumf %59, %60 : vector<512x200xf32>
    %62 = arith.truncf %61 : vector<512x200xf32> to vector<512x200xbf16>
    %c0_47 = arith.constant 0 : index
    %c0_48 = arith.constant 0 : index
    %63 = vector.load %arg11[%c0_47, %c0_48] : memref<200x200xbf16, #tpu.memory_space<vmem>>, vector<200x200xbf16>
    %cst_49 = arith.constant dense<0.000000e+00> : vector<512x200xf32>
    %64 = tpu.matmul %62, %63, %cst_49 {dimension_numbers = #tpu.dot_dimension_numbers<[1], [0], [0], [1], [0, 0, 1, 1], [], []>} : vector<512x200xbf16>, vector<200x200xbf16>, vector<512x200xf32> -> vector<512x200xf32>
    %c0_50 = arith.constant 0 : index
    %c0_51 = arith.constant 0 : index
    %65 = vector.load %arg24[%c0_50, %c0_51] : memref<1x200xf32, #tpu.memory_space<vmem>>, vector<1x200xf32>
    %66 = vector.broadcast %65 : vector<1x200xf32> to vector<512x200xf32>
    %67 = arith.addf %64, %66 : vector<512x200xf32>
    %cst_52 = arith.constant 0.000000e+00 : f32
    %68 = vector.broadcast %cst_52 : f32 to vector<512x200xf32>
    %69 = arith.maximumf %67, %68 : vector<512x200xf32>
    %70 = arith.truncf %69 : vector<512x200xf32> to vector<512x200xbf16>
    %c0_53 = arith.constant 0 : index
    %c0_54 = arith.constant 0 : index
    %71 = vector.load %arg12[%c0_53, %c0_54] : memref<200x200xbf16, #tpu.memory_space<vmem>>, vector<200x200xbf16>
    %cst_55 = arith.constant dense<0.000000e+00> : vector<512x200xf32>
    %72 = tpu.matmul %70, %71, %cst_55 {dimension_numbers = #tpu.dot_dimension_numbers<[1], [0], [0], [1], [0, 0, 1, 1], [], []>} : vector<512x200xbf16>, vector<200x200xbf16>, vector<512x200xf32> -> vector<512x200xf32>
    %c0_56 = arith.constant 0 : index
    %c0_57 = arith.constant 0 : index
    %73 = vector.load %arg25[%c0_56, %c0_57] : memref<1x200xf32, #tpu.memory_space<vmem>>, vector<1x200xf32>
    %74 = vector.broadcast %73 : vector<1x200xf32> to vector<512x200xf32>
    %75 = arith.addf %72, %74 : vector<512x200xf32>
    %cst_58 = arith.constant 0.000000e+00 : f32
    %76 = vector.broadcast %cst_58 : f32 to vector<512x200xf32>
    %77 = arith.maximumf %75, %76 : vector<512x200xf32>
    %78 = arith.truncf %77 : vector<512x200xf32> to vector<512x200xbf16>
    %c0_59 = arith.constant 0 : index
    %c0_60 = arith.constant 0 : index
    %79 = vector.load %arg13[%c0_59, %c0_60] : memref<200x201xbf16, #tpu.memory_space<vmem>>, vector<200x201xbf16>
    %cst_61 = arith.constant dense<0.000000e+00> : vector<512x201xf32>
    %80 = tpu.matmul %78, %79, %cst_61 {dimension_numbers = #tpu.dot_dimension_numbers<[1], [0], [0], [1], [0, 0, 1, 1], [], []>} : vector<512x200xbf16>, vector<200x201xbf16>, vector<512x201xf32> -> vector<512x201xf32>
    %81 = vector.extract_strided_slice %80 {offsets = [0, 200], sizes = [512, 1], strides = [1, 1]} : vector<512x201xf32> to vector<512x1xf32>
    %c0_62 = arith.constant 0 : index
    %c0_63 = arith.constant 0 : index
    %82 = vector.load %arg29[%c0_62, %c0_63] : memref<1x1xf32, #tpu.memory_space<vmem>>, vector<1x1xf32>
    %83 = vector.broadcast %82 : vector<1x1xf32> to vector<512x1xf32>
    %84 = arith.addf %81, %83 : vector<512x1xf32>
    %cst_64 = arith.constant 0.000000e+00 : f32
    %85 = vector.broadcast %cst_64 : f32 to vector<512x1xf32>
    %86 = arith.maximumf %84, %85 : vector<512x1xf32>
    %87 = vector.extract_strided_slice %80 {offsets = [0, 0], sizes = [512, 200], strides = [1, 1]} : vector<512x201xf32> to vector<512x200xf32>
    %c0_65 = arith.constant 0 : index
    %c0_66 = arith.constant 0 : index
    %88 = vector.load %arg14[%c0_65, %c0_66] : memref<15x200xbf16, #tpu.memory_space<vmem>>, vector<15x200xbf16>
    %cst_67 = arith.constant dense<0.000000e+00> : vector<512x200xf32>
    %89 = tpu.matmul %3, %88, %cst_67 {dimension_numbers = #tpu.dot_dimension_numbers<[1], [0], [0], [1], [0, 0, 1, 1], [], []>} : vector<512x15xbf16>, vector<15x200xbf16>, vector<512x200xf32> -> vector<512x200xf32>
    %90 = arith.addf %87, %89 : vector<512x200xf32>
    %c0_68 = arith.constant 0 : index
    %c0_69 = arith.constant 0 : index
    %91 = vector.load %arg26[%c0_68, %c0_69] : memref<1x200xf32, #tpu.memory_space<vmem>>, vector<1x200xf32>
    %92 = vector.broadcast %91 : vector<1x200xf32> to vector<512x200xf32>
    %93 = arith.addf %90, %92 : vector<512x200xf32>
    %cst_70 = arith.constant 0.000000e+00 : f32
    %94 = vector.broadcast %cst_70 : f32 to vector<512x200xf32>
    %95 = arith.maximumf %93, %94 : vector<512x200xf32>
    %96 = arith.truncf %95 : vector<512x200xf32> to vector<512x200xbf16>
    %c0_71 = arith.constant 0 : index
    %c0_72 = arith.constant 0 : index
    %97 = vector.load %arg15[%c0_71, %c0_72] : memref<200x200xbf16, #tpu.memory_space<vmem>>, vector<200x200xbf16>
    %cst_73 = arith.constant dense<0.000000e+00> : vector<512x200xf32>
    %98 = tpu.matmul %96, %97, %cst_73 {dimension_numbers = #tpu.dot_dimension_numbers<[1], [0], [0], [1], [0, 0, 1, 1], [], []>} : vector<512x200xbf16>, vector<200x200xbf16>, vector<512x200xf32> -> vector<512x200xf32>
    %c0_74 = arith.constant 0 : index
    %c0_75 = arith.constant 0 : index
    %99 = vector.load %arg27[%c0_74, %c0_75] : memref<1x200xf32, #tpu.memory_space<vmem>>, vector<1x200xf32>
    %100 = vector.broadcast %99 : vector<1x200xf32> to vector<512x200xf32>
    %101 = arith.addf %98, %100 : vector<512x200xf32>
    %cst_76 = arith.constant 0.000000e+00 : f32
    %102 = vector.broadcast %cst_76 : f32 to vector<512x200xf32>
    %103 = arith.maximumf %101, %102 : vector<512x200xf32>
    %104 = arith.truncf %103 : vector<512x200xf32> to vector<512x200xbf16>
    %c0_77 = arith.constant 0 : index
    %c0_78 = arith.constant 0 : index
    %105 = vector.load %arg16[%c0_77, %c0_78] : memref<200x3xbf16, #tpu.memory_space<vmem>>, vector<200x3xbf16>
    %cst_79 = arith.constant dense<0.000000e+00> : vector<512x3xf32>
    %106 = tpu.matmul %104, %105, %cst_79 {dimension_numbers = #tpu.dot_dimension_numbers<[1], [0], [0], [1], [0, 0, 1, 1], [], []>} : vector<512x200xbf16>, vector<200x3xbf16>, vector<512x3xf32> -> vector<512x3xf32>
    %c0_80 = arith.constant 0 : index
    %c0_81 = arith.constant 0 : index
    %107 = vector.load %arg28[%c0_80, %c0_81] : memref<1x3xf32, #tpu.memory_space<vmem>>, vector<1x3xf32>
    %108 = vector.broadcast %107 : vector<1x3xf32> to vector<512x3xf32>
    %109 = arith.addf %106, %108 : vector<512x3xf32>
    %cst_82 = arith.constant 0.000000e+00 : f32
    %110 = vector.broadcast %cst_82 : f32 to vector<512x3xf32>
    %111 = arith.subf %110, %109 : vector<512x3xf32>
    %112 = math.exp %111 : vector<512x3xf32>
    %cst_83 = arith.constant 1.000000e+00 : f32
    %113 = vector.broadcast %cst_83 : f32 to vector<512x3xf32>
    %114 = arith.addf %113, %112 : vector<512x3xf32>
    %115 = tpu.reciprocal %114 {approx = true} : vector<512x3xf32> -> vector<512x3xf32>
    %c0_84 = arith.constant 0 : index
    %c0_85 = arith.constant 0 : index
    %116 = vector.load %arg30[%c0_84, %c0_85] : memref<512x4xf32, #tpu.memory_space<vmem>>, vector<512x3xf32>
    tpu.vector_store %arg30[%c0_84, %c0_85], %115 {strides = array<i32>} : memref<512x4xf32, #tpu.memory_space<vmem>>, vector<512x3xf32>,
    %c0_86 = arith.constant 0 : index
    %c3 = arith.constant 3 : index
    %117 = vector.load %arg30[%c0_86, %c3] : memref<512x4xf32, #tpu.memory_space<vmem>>, vector<512x1xf32>
    tpu.vector_store %arg30[%c0_86, %c3], %86 {strides = array<i32>} : memref<512x4xf32, #tpu.memory_space<vmem>>, vector<512x1xf32>,
    return
  }
  func.func @transform_0(%arg0: i32) -> (i32, i32) {
    %c0_i32 = arith.constant 0 : i32
    %c0_i32_0 = arith.constant 0 : i32
    return %arg0, %c0_i32 : i32, i32
  }
  func.func @transform_1(%arg0: i32) -> (i32, i32) {
    %c0_i32 = arith.constant 0 : i32
    %c0_i32_0 = arith.constant 0 : i32
    return %arg0, %c0_i32 : i32, i32
  }
  func.func @transform_2(%arg0: i32) -> (i32, i32) {
    %c0_i32 = arith.constant 0 : i32
    %c0_i32_0 = arith.constant 0 : i32
    %c0_i32_1 = arith.constant 0 : i32
    return %c0_i32, %c0_i32_0 : i32, i32
  }
  func.func @transform_3(%arg0: i32) -> (i32, i32) {
    %c0_i32 = arith.constant 0 : i32
    %c0_i32_0 = arith.constant 0 : i32
    %c0_i32_1 = arith.constant 0 : i32
    return %c0_i32, %c0_i32_0 : i32, i32
  }
  func.func @transform_4(%arg0: i32) -> (i32, i32) {
    %c0_i32 = arith.constant 0 : i32
    %c0_i32_0 = arith.constant 0 : i32
    %c0_i32_1 = arith.constant 0 : i32
    return %c0_i32, %c0_i32_0 : i32, i32
  }
  func.func @transform_5(%arg0: i32) -> (i32, i32) {
    %c0_i32 = arith.constant 0 : i32
    %c0_i32_0 = arith.constant 0 : i32
    %c0_i32_1 = arith.constant 0 : i32
    return %c0_i32, %c0_i32_0 : i32, i32
  }
  func.func @transform_6(%arg0: i32) -> (i32, i32) {
    %c0_i32 = arith.constant 0 : i32
    %c0_i32_0 = arith.constant 0 : i32
    %c0_i32_1 = arith.constant 0 : i32
    return %c0_i32, %c0_i32_0 : i32, i32
  }
  func.func @transform_7(%arg0: i32) -> (i32, i32) {
    %c0_i32 = arith.constant 0 : i32
    %c0_i32_0 = arith.constant 0 : i32
    %c0_i32_1 = arith.constant 0 : i32
    return %c0_i32, %c0_i32_0 : i32, i32
  }
  func.func @transform_8(%arg0: i32) -> (i32, i32) {
    %c0_i32 = arith.constant 0 : i32
    %c0_i32_0 = arith.constant 0 : i32
    %c0_i32_1 = arith.constant 0 : i32
    return %c0_i32, %c0_i32_0 : i32, i32
  }
  func.func @transform_9(%arg0: i32) -> (i32, i32) {
    %c0_i32 = arith.constant 0 : i32
    %c0_i32_0 = arith.constant 0 : i32
    %c0_i32_1 = arith.constant 0 : i32
    return %c0_i32, %c0_i32_0 : i32, i32
  }
  func.func @transform_10(%arg0: i32) -> (i32, i32) {
    %c0_i32 = arith.constant 0 : i32
    %c0_i32_0 = arith.constant 0 : i32
    %c0_i32_1 = arith.constant 0 : i32
    return %c0_i32, %c0_i32_0 : i32, i32
  }
  func.func @transform_11(%arg0: i32) -> (i32, i32) {
    %c0_i32 = arith.constant 0 : i32
    %c0_i32_0 = arith.constant 0 : i32
    %c0_i32_1 = arith.constant 0 : i32
    return %c0_i32, %c0_i32_0 : i32, i32
  }
  func.func @transform_12(%arg0: i32) -> (i32, i32) {
    %c0_i32 = arith.constant 0 : i32
    %c0_i32_0 = arith.constant 0 : i32
    %c0_i32_1 = arith.constant 0 : i32
    return %c0_i32, %c0_i32_0 : i32, i32
  }
  func.func @transform_13(%arg0: i32) -> (i32, i32) {
    %c0_i32 = arith.constant 0 : i32
    %c0_i32_0 = arith.constant 0 : i32
    %c0_i32_1 = arith.constant 0 : i32
    return %c0_i32, %c0_i32_0 : i32, i32
  }
  func.func @transform_14(%arg0: i32) -> (i32, i32) {
    %c0_i32 = arith.constant 0 : i32
    %c0_i32_0 = arith.constant 0 : i32
    %c0_i32_1 = arith.constant 0 : i32
    return %c0_i32, %c0_i32_0 : i32, i32
  }
  func.func @transform_15(%arg0: i32) -> (i32, i32) {
    %c0_i32 = arith.constant 0 : i32
    %c0_i32_0 = arith.constant 0 : i32
    %c0_i32_1 = arith.constant 0 : i32
    return %c0_i32, %c0_i32_0 : i32, i32
  }
  func.func @transform_16(%arg0: i32) -> (i32, i32) {
    %c0_i32 = arith.constant 0 : i32
    %c0_i32_0 = arith.constant 0 : i32
    %c0_i32_1 = arith.constant 0 : i32
    return %c0_i32, %c0_i32_0 : i32, i32
  }
  func.func @transform_17(%arg0: i32) -> (i32, i32) {
    %c0_i32 = arith.constant 0 : i32
    %c0_i32_0 = arith.constant 0 : i32
    %c0_i32_1 = arith.constant 0 : i32
    return %c0_i32, %c0_i32_0 : i32, i32
  }
  func.func @transform_18(%arg0: i32) -> (i32, i32) {
    %c0_i32 = arith.constant 0 : i32
    %c0_i32_0 = arith.constant 0 : i32
    %c0_i32_1 = arith.constant 0 : i32
    return %c0_i32, %c0_i32_0 : i32, i32
  }
  func.func @transform_19(%arg0: i32) -> (i32, i32) {
    %c0_i32 = arith.constant 0 : i32
    %c0_i32_0 = arith.constant 0 : i32
    %c0_i32_1 = arith.constant 0 : i32
    return %c0_i32, %c0_i32_0 : i32, i32
  }
  func.func @transform_20(%arg0: i32) -> (i32, i32) {
    %c0_i32 = arith.constant 0 : i32
    %c0_i32_0 = arith.constant 0 : i32
    %c0_i32_1 = arith.constant 0 : i32
    return %c0_i32, %c0_i32_0 : i32, i32
  }
  func.func @transform_21(%arg0: i32) -> (i32, i32) {
    %c0_i32 = arith.constant 0 : i32
    %c0_i32_0 = arith.constant 0 : i32
    %c0_i32_1 = arith.constant 0 : i32
    return %c0_i32, %c0_i32_0 : i32, i32
  }
  func.func @transform_22(%arg0: i32) -> (i32, i32) {
    %c0_i32 = arith.constant 0 : i32
    %c0_i32_0 = arith.constant 0 : i32
    %c0_i32_1 = arith.constant 0 : i32
    return %c0_i32, %c0_i32_0 : i32, i32
  }
  func.func @transform_23(%arg0: i32) -> (i32, i32) {
    %c0_i32 = arith.constant 0 : i32
    %c0_i32_0 = arith.constant 0 : i32
    %c0_i32_1 = arith.constant 0 : i32
    return %c0_i32, %c0_i32_0 : i32, i32
  }
  func.func @transform_24(%arg0: i32) -> (i32, i32) {
    %c0_i32 = arith.constant 0 : i32
    %c0_i32_0 = arith.constant 0 : i32
    %c0_i32_1 = arith.constant 0 : i32
    return %c0_i32, %c0_i32_0 : i32, i32
  }
  func.func @transform_25(%arg0: i32) -> (i32, i32) {
    %c0_i32 = arith.constant 0 : i32
    %c0_i32_0 = arith.constant 0 : i32
    %c0_i32_1 = arith.constant 0 : i32
    return %c0_i32, %c0_i32_0 : i32, i32
  }
  func.func @transform_26(%arg0: i32) -> (i32, i32) {
    %c0_i32 = arith.constant 0 : i32
    %c0_i32_0 = arith.constant 0 : i32
    %c0_i32_1 = arith.constant 0 : i32
    return %c0_i32, %c0_i32_0 : i32, i32
  }
  func.func @transform_27(%arg0: i32) -> (i32, i32) {
    %c0_i32 = arith.constant 0 : i32
    %c0_i32_0 = arith.constant 0 : i32
    %c0_i32_1 = arith.constant 0 : i32
    return %c0_i32, %c0_i32_0 : i32, i32
  }
  func.func @transform_28(%arg0: i32) -> (i32, i32) {
    %c0_i32 = arith.constant 0 : i32
    %c0_i32_0 = arith.constant 0 : i32
    %c0_i32_1 = arith.constant 0 : i32
    return %c0_i32, %c0_i32_0 : i32, i32
  }
  func.func @transform_29(%arg0: i32) -> (i32, i32) {
    %c0_i32 = arith.constant 0 : i32
    %c0_i32_0 = arith.constant 0 : i32
    return %arg0, %c0_i32 : i32, i32
  }
}

</mosaic_0001>

<llo_original>
// kernel: nerf_forward.1
$region0: #{nerf_forward.1}
  #allocation0 [shape = 'u32[]', space=smem, size = 0x4, offset = 0x4, fixed_abs, tag = 'smem constant byte address 0x4 - core index']
  #allocation1 [shape = 'u32[144,128]{1,0:T(1,128)}', space=vmem, size = 0x12000, scoped, tag = 'internal scratch']
  #allocation2 [shape = 'f32[1,1]{1,0:T(1,128)S(1)}', space=vmem, size = 0x200, scoped, tag = 'scoped memory for nerf_forward.1']
  %s0 = inlined_call_operand.smem [shape: u32[30], index: -1, kind: input, shape index: {}]
  %s1 = sld [smem:[%s0]]
  %s2 = scalar_lea.smem %s0, 1
  %s3 = sld [smem:[%s2]]
  %s4 = scalar_lea.smem %s0, 2
  %s5 = sld [smem:[%s4]]
  %s6 = scalar_lea.smem %s0, 3
  %s7 = sld [smem:[%s6]]
  %s8 = scalar_lea.smem %s0, 4
  %s9 = sld [smem:[%s8]]
  %s10 = scalar_lea.smem %s0, 5
  %s11 = sld [smem:[%s10]]
  %s12 = scalar_lea.smem %s0, 6
  %s13 = sld [smem:[%s12]]
  %s14 = scalar_lea.smem %s0, 7
  %s15 = sld [smem:[%s14]]
  %s16 = scalar_lea.smem %s0, 8
  %s17 = sld [smem:[%s16]]
  %s18 = scalar_lea.smem %s0, 9
  %s19 = sld [smem:[%s18]]
  %s20 = scalar_lea.smem %s0, 10
  %s21 = sld [smem:[%s20]]
  %s22 = scalar_lea.smem %s0, 11
  %s23 = sld [smem:[%s22]]
  %s24 = scalar_lea.smem %s0, 12
  %s25 = sld [smem:[%s24]]
  %s26 = scalar_lea.smem %s0, 13
  %s27 = sld [smem:[%s26]]
  %s28 = scalar_lea.smem %s0, 14
  %s29 = sld [smem:[%s28]]
  %s30 = scalar_lea.smem %s0, 15
  %s31 = sld [smem:[%s30]]
  %s32 = scalar_lea.smem %s0, 16
  %s33 = sld [smem:[%s32]]
  %s34 = scalar_lea.smem %s0, 17
  %s35 = sld [smem:[%s34]]
  %s36 = scalar_lea.smem %s0, 18
  %s37 = sld [smem:[%s36]]
  %s38 = scalar_lea.smem %s0, 19
  %s39 = sld [smem:[%s38]]
  %s40 = scalar_lea.smem %s0, 20
  %s41 = sld [smem:[%s40]]
  %s42 = scalar_lea.smem %s0, 21
  %s43 = sld [smem:[%s42]]
  %s44 = scalar_lea.smem %s0, 22
  %s45 = sld [smem:[%s44]]
  %s46 = scalar_lea.smem %s0, 23
  %s47 = sld [smem:[%s46]]
  %s48 = scalar_lea.smem %s0, 24
  %s49 = sld [smem:[%s48]]
  %s50 = scalar_lea.smem %s0, 25
  %s51 = sld [smem:[%s50]]
  %s52 = scalar_lea.smem %s0, 26
  %s53 = sld [smem:[%s52]]
  %s54 = scalar_lea.smem %s0, 27
  %s55 = sld [smem:[%s54]]
  %s56 = scalar_lea.smem %s0, 28
  %s57 = sld [smem:[%s56]]
  %s58 = scalar_lea.smem %s0, 29
  %s59 = sld [smem:[%s58]]
  %s60 = sld [smem:[#allocation0]]
  $region149: #{nerf_forward.1} parent=0
    _
  %s62 = ssub.s32 1, %s60
  %s63 = scalar_select 0, %s62, %s60
  %v64 = vstv %s57
  %65 = vst [vmem:[#allocation2] sm:$0x1] %v64
  loop: start=0, step=1, limit=4
  $region2: #{nerf_forward.1} parent=0 // loop_pre_header
    _
  $region3: #{nerf_forward.1} parent=0 // loop_header
    %s67 = sphi 0, %s71
    %p68 = scmp.ge.s32.totalorder %s67, 4
    %s77 = sphi 0, %s79
    %s80 = sphi 0, %s77
    %s81 = sphi 0, %s80
    %s97 = sphi 0, %s81
    %s103 = sphi 0, %s105
    %s106 = sphi 0, %s103
    %s107 = sphi 0, %s106
    %s123 = sphi 0, %s107
    %s127 = sphi 0, %s127
    %s129 = sphi 0, %s127
    %s130 = sphi 0, %s129
    %s144 = sphi 0, %s130
    %s148 = sphi 0, %s148
    %s150 = sphi 0, %s148
    %s151 = sphi 0, %s150
    %s165 = sphi 0, %s151
    %s169 = sphi 0, %s169
    %s171 = sphi 0, %s169
    %s172 = sphi 0, %s171
    %s186 = sphi 0, %s172
    %s190 = sphi 0, %s190
    %s192 = sphi 0, %s190
    %s193 = sphi 0, %s192
    %s207 = sphi 0, %s193
    %s211 = sphi 0, %s211
    %s213 = sphi 0, %s211
    %s214 = sphi 0, %s213
    %s228 = sphi 0, %s214
    %s232 = sphi 0, %s232
    %s234 = sphi 0, %s232
    %s235 = sphi 0, %s234
    %s249 = sphi 0, %s235
    %s253 = sphi 0, %s253
    %s255 = sphi 0, %s253
    %s256 = sphi 0, %s255
    %s270 = sphi 0, %s256
    %s274 = sphi 0, %s274
    %s276 = sphi 0, %s274
    %s277 = sphi 0, %s276
    %s291 = sphi 0, %s277
    %s295 = sphi 0, %s295
    %s297 = sphi 0, %s295
    %s298 = sphi 0, %s297
    %s312 = sphi 0, %s298
    %s316 = sphi 0, %s316
    %s318 = sphi 0, %s316
    %s319 = sphi 0, %s318
    %s333 = sphi 0, %s319
    %s337 = sphi 0, %s337
    %s339 = sphi 0, %s337
    %s340 = sphi 0, %s339
    %s354 = sphi 0, %s340
    %s358 = sphi 0, %s358
    %s360 = sphi 0, %s358
    %s361 = sphi 0, %s360
    %s375 = sphi 0, %s361
    %s379 = sphi 0, %s379
    %s381 = sphi 0, %s379
    %s382 = sphi 0, %s381
    %s396 = sphi 0, %s382
    %s400 = sphi 0, %s400
    %s402 = sphi 0, %s400
    %s403 = sphi 0, %s402
    %s417 = sphi 0, %s403
    %s421 = sphi 0, %s421
    %s423 = sphi 0, %s421
    %s424 = sphi 0, %s423
    %s438 = sphi 0, %s424
    %s442 = sphi 0, %s442
    %s444 = sphi 0, %s442
    %s445 = sphi 0, %s444
    %s459 = sphi 0, %s445
    %s463 = sphi 0, %s463
    %s465 = sphi 0, %s463
    %s466 = sphi 0, %s465
    %s480 = sphi 0, %s466
    %s484 = sphi 0, %s484
    %s486 = sphi 0, %s484
    %s487 = sphi 0, %s486
    %s501 = sphi 0, %s487
    %s505 = sphi 0, %s505
    %s507 = sphi 0, %s505
    %s508 = sphi 0, %s507
    %s522 = sphi 0, %s508
    %s526 = sphi 0, %s526
    %s528 = sphi 0, %s526
    %s529 = sphi 0, %s528
    %s543 = sphi 0, %s529
    %s547 = sphi 0, %s547
    %s549 = sphi 0, %s547
    %s550 = sphi 0, %s549
    %s564 = sphi 0, %s550
    %s568 = sphi 0, %s568
    %s570 = sphi 0, %s568
    %s571 = sphi 0, %s570
    %s585 = sphi 0, %s571
    %s589 = sphi 0, %s589
    %s591 = sphi 0, %s589
    %s592 = sphi 0, %s591
    %s606 = sphi 0, %s592
    %s610 = sphi 0, %s610
    %s612 = sphi 0, %s610
    %s613 = sphi 0, %s612
    %s627 = sphi 0, %s613
    %s631 = sphi 0, %s631
    %s633 = sphi 0, %s631
    %s634 = sphi 0, %s633
    %s648 = sphi 0, %s634
    %s652 = sphi 0, %s652
    %s654 = sphi 0, %s652
    %s655 = sphi 0, %s654
    %s669 = sphi 0, %s655
    %s673 = sphi 0, %s673
    %s675 = sphi 0, %s673
    %s676 = sphi 0, %s675
    %s690 = sphi 0, %s676
    %s696 = sphi 0, %s698
    %s699 = sphi 0, %s696
    %s700 = sphi 0, %s699
    %s716 = sphi 0, %s700
  $region4: #{nerf_forward.1} parent=0 // loop_header_branch
    %70 = sbr.rel (%p68) target = $region8
  $region5: #{nerf_forward.1} parent=0 // loop_body
    %s72 = ssub.s32 %s67, 1
    %s73 = ssub.s32 %s67, 2
    %s74 = sadd.s32 %s67, 1
    %s75 = ssub.s32 %s67, %s74
    %p76 = scmp.eq.s32.totalorder %s75, 0
    %s78 = sadd.s32 %s77, 1
    %s79 = scalar_select %p76, %s77, %s78
    %p82 = pneg %p76
    %p83 = scmp.eq.s32.totalorder %s67, 1
    %p84 = por %p82, %p83
    %p85 = scmp.ne.s32.totalorder %s77, %s80
    %p86 = scmp.eq.s32.totalorder %s67, 0
    %p87 = por %p85, %p86
    %p88 = scmp.ne.s32.totalorder %s77, %s80
    %p89 = scmp.eq.s32.totalorder %s72, 1
    %p90 = por %p88, %p89
    %p91 = scmp.ne.s32.totalorder %s80, %s81
    %p92 = scmp.eq.s32.totalorder %s72, 0
    %p93 = por %p91, %p92
    %p94 = scmp.ne.s32.totalorder %s80, %s81
    %p95 = scmp.eq.s32.totalorder %s73, 1
    %p96 = por %p94, %p95
    %p98 = scmp.ne.s32.totalorder %s81, %s97
    %p99 = scmp.eq.s32.totalorder %s73, 0
    %p100 = por %p98, %p99
    %s101 = ssub.s32 %s67, %s74
    %p102 = scmp.eq.s32.totalorder %s101, 0
    %s104 = sadd.s32 %s103, 1
    %s105 = scalar_select %p102, %s103, %s104
    %p108 = pneg %p102
    %p109 = scmp.eq.s32.totalorder %s67, 1
    %p110 = por %p108, %p109
    %p111 = scmp.ne.s32.totalorder %s103, %s106
    %p112 = scmp.eq.s32.totalorder %s67, 0
    %p113 = por %p111, %p112
    %p114 = scmp.ne.s32.totalorder %s103, %s106
    %p115 = scmp.eq.s32.totalorder %s72, 1
    %p116 = por %p114, %p115
    %p117 = scmp.ne.s32.totalorder %s106, %s107
    %p118 = scmp.eq.s32.totalorder %s72, 0
    %p119 = por %p117, %p118
    %p120 = scmp.ne.s32.totalorder %s106, %s107
    %p121 = scmp.eq.s32.totalorder %s73, 1
    %p122 = por %p120, %p121
    %p124 = scmp.ne.s32.totalorder %s107, %s123
    %p125 = scmp.eq.s32.totalorder %s73, 0
    %p126 = por %p124, %p125
    %s128 = sadd.s32 %s127, 1
    %p131 = scmp.eq.s32.totalorder %s67, 1
    %p132 = scmp.ne.s32.totalorder %s127, %s129
    %p133 = scmp.eq.s32.totalorder %s67, 0
    %p134 = por %p132, %p133
    %p135 = scmp.ne.s32.totalorder %s127, %s129
    %p136 = scmp.eq.s32.totalorder %s72, 1
    %p137 = por %p135, %p136
    %p138 = scmp.ne.s32.totalorder %s129, %s130
    %p139 = scmp.eq.s32.totalorder %s72, 0
    %p140 = por %p138, %p139
    %p141 = scmp.ne.s32.totalorder %s129, %s130
    %p142 = scmp.eq.s32.totalorder %s73, 1
    %p143 = por %p141, %p142
    %p145 = scmp.ne.s32.totalorder %s130, %s144
    %p146 = scmp.eq.s32.totalorder %s73, 0
    %p147 = por %p145, %p146
    %s149 = sadd.s32 %s148, 1
    %p152 = scmp.eq.s32.totalorder %s67, 1
    %p153 = scmp.ne.s32.totalorder %s148, %s150
    %p154 = scmp.eq.s32.totalorder %s67, 0
    %p155 = por %p153, %p154
    %p156 = scmp.ne.s32.totalorder %s148, %s150
    %p157 = scmp.eq.s32.totalorder %s72, 1
    %p158 = por %p156, %p157
    %p159 = scmp.ne.s32.totalorder %s150, %s151
    %p160 = scmp.eq.s32.totalorder %s72, 0
    %p161 = por %p159, %p160
    %p162 = scmp.ne.s32.totalorder %s150, %s151
    %p163 = scmp.eq.s32.totalorder %s73, 1
    %p164 = por %p162, %p163
    %p166 = scmp.ne.s32.totalorder %s151, %s165
    %p167 = scmp.eq.s32.totalorder %s73, 0
    %p168 = por %p166, %p167
    %s170 = sadd.s32 %s169, 1
    %p173 = scmp.eq.s32.totalorder %s67, 1
    %p174 = scmp.ne.s32.totalorder %s169, %s171
    %p175 = scmp.eq.s32.totalorder %s67, 0
    %p176 = por %p174, %p175
    %p177 = scmp.ne.s32.totalorder %s169, %s171
    %p178 = scmp.eq.s32.totalorder %s72, 1
    %p179 = por %p177, %p178
    %p180 = scmp.ne.s32.totalorder %s171, %s172
    %p181 = scmp.eq.s32.totalorder %s72, 0
    %p182 = por %p180, %p181
    %p183 = scmp.ne.s32.totalorder %s171, %s172
    %p184 = scmp.eq.s32.totalorder %s73, 1
    %p185 = por %p183, %p184
    %p187 = scmp.ne.s32.totalorder %s172, %s186
    %p188 = scmp.eq.s32.totalorder %s73, 0
    %p189 = por %p187, %p188
    %s191 = sadd.s32 %s190, 1
    %p194 = scmp.eq.s32.totalorder %s67, 1
    %p195 = scmp.ne.s32.totalorder %s190, %s192
    %p196 = scmp.eq.s32.totalorder %s67, 0
    %p197 = por %p195, %p196
    %p198 = scmp.ne.s32.totalorder %s190, %s192
    %p199 = scmp.eq.s32.totalorder %s72, 1
    %p200 = por %p198, %p199
    %p201 = scmp.ne.s32.totalorder %s192, %s193
    %p202 = scmp.eq.s32.totalorder %s72, 0
    %p203 = por %p201, %p202
    %p204 = scmp.ne.s32.totalorder %s192, %s193
    %p205 = scmp.eq.s32.totalorder %s73, 1
    %p206 = por %p204, %p205
    %p208 = scmp.ne.s32.totalorder %s193, %s207
    %p209 = scmp.eq.s32.totalorder %s73, 0
    %p210 = por %p208, %p209
    %s212 = sadd.s32 %s211, 1
    %p215 = scmp.eq.s32.totalorder %s67, 1
    %p216 = scmp.ne.s32.totalorder %s211, %s213
    %p217 = scmp.eq.s32.totalorder %s67, 0
    %p218 = por %p216, %p217
    %p219 = scmp.ne.s32.totalorder %s211, %s213
    %p220 = scmp.eq.s32.totalorder %s72, 1
    %p221 = por %p219, %p220
    %p222 = scmp.ne.s32.totalorder %s213, %s214
    %p223 = scmp.eq.s32.totalorder %s72, 0
    %p224 = por %p222, %p223
    %p225 = scmp.ne.s32.totalorder %s213, %s214
    %p226 = scmp.eq.s32.totalorder %s73, 1
    %p227 = por %p225, %p226
    %p229 = scmp.ne.s32.totalorder %s214, %s228
    %p230 = scmp.eq.s32.totalorder %s73, 0
    %p231 = por %p229, %p230
    %s233 = sadd.s32 %s232, 1
    %p236 = scmp.eq.s32.totalorder %s67, 1
    %p237 = scmp.ne.s32.totalorder %s232, %s234
    %p238 = scmp.eq.s32.totalorder %s67, 0
    %p239 = por %p237, %p238
    %p240 = scmp.ne.s32.totalorder %s232, %s234
    %p241 = scmp.eq.s32.totalorder %s72, 1
    %p242 = por %p240, %p241
    %p243 = scmp.ne.s32.totalorder %s234, %s235
    %p244 = scmp.eq.s32.totalorder %s72, 0
    %p245 = por %p243, %p244
    %p246 = scmp.ne.s32.totalorder %s234, %s235
    %p247 = scmp.eq.s32.totalorder %s73, 1
    %p248 = por %p246, %p247
    %p250 = scmp.ne.s32.totalorder %s235, %s249
    %p251 = scmp.eq.s32.totalorder %s73, 0
    %p252 = por %p250, %p251
    %s254 = sadd.s32 %s253, 1
    %p257 = scmp.eq.s32.totalorder %s67, 1
    %p258 = scmp.ne.s32.totalorder %s253, %s255
    %p259 = scmp.eq.s32.totalorder %s67, 0
    %p260 = por %p258, %p259
    %p261 = scmp.ne.s32.totalorder %s253, %s255
    %p262 = scmp.eq.s32.totalorder %s72, 1
    %p263 = por %p261, %p262
    %p264 = scmp.ne.s32.totalorder %s255, %s256
    %p265 = scmp.eq.s32.totalorder %s72, 0
    %p266 = por %p264, %p265
    %p267 = scmp.ne.s32.totalorder %s255, %s256
    %p268 = scmp.eq.s32.totalorder %s73, 1
    %p269 = por %p267, %p268
    %p271 = scmp.ne.s32.totalorder %s256, %s270
    %p272 = scmp.eq.s32.totalorder %s73, 0
    %p273 = por %p271, %p272
    %s275 = sadd.s32 %s274, 1
    %p278 = scmp.eq.s32.totalorder %s67, 1
    %p279 = scmp.ne.s32.totalorder %s274, %s276
    %p280 = scmp.eq.s32.totalorder %s67, 0
    %p281 = por %p279, %p280
    %p282 = scmp.ne.s32.totalorder %s274, %s276
    %p283 = scmp.eq.s32.totalorder %s72, 1
    %p284 = por %p282, %p283
    %p285 = scmp.ne.s32.totalorder %s276, %s277
    %p286 = scmp.eq.s32.totalorder %s72, 0
    %p287 = por %p285, %p286
    %p288 = scmp.ne.s32.totalorder %s276, %s277
    %p289 = scmp.eq.s32.totalorder %s73, 1
    %p290 = por %p288, %p289
    %p292 = scmp.ne.s32.totalorder %s277, %s291
    %p293 = scmp.eq.s32.totalorder %s73, 0
    %p294 = por %p292, %p293
    %s296 = sadd.s32 %s295, 1
    %p299 = scmp.eq.s32.totalorder %s67, 1
    %p300 = scmp.ne.s32.totalorder %s295, %s297
    %p301 = scmp.eq.s32.totalorder %s67, 0
    %p302 = por %p300, %p301
    %p303 = scmp.ne.s32.totalorder %s295, %s297
    %p304 = scmp.eq.s32.totalorder %s72, 1
    %p305 = por %p303, %p304
    %p306 = scmp.ne.s32.totalorder %s297, %s298
    %p307 = scmp.eq.s32.totalorder %s72, 0
    %p308 = por %p306, %p307
    %p309 = scmp.ne.s32.totalorder %s297, %s298
    %p310 = scmp.eq.s32.totalorder %s73, 1
    %p311 = por %p309, %p310
    %p313 = scmp.ne.s32.totalorder %s298, %s312
    %p314 = scmp.eq.s32.totalorder %s73, 0
    %p315 = por %p313, %p314
    %s317 = sadd.s32 %s316, 1
    %p320 = scmp.eq.s32.totalorder %s67, 1
    %p321 = scmp.ne.s32.totalorder %s316, %s318
    %p322 = scmp.eq.s32.totalorder %s67, 0
    %p323 = por %p321, %p322
    %p324 = scmp.ne.s32.totalorder %s316, %s318
    %p325 = scmp.eq.s32.totalorder %s72, 1
    %p326 = por %p324, %p325
    %p327 = scmp.ne.s32.totalorder %s318, %s319
    %p328 = scmp.eq.s32.totalorder %s72, 0
    %p329 = por %p327, %p328
    %p330 = scmp.ne.s32.totalorder %s318, %s319
    %p331 = scmp.eq.s32.totalorder %s73, 1
    %p332 = por %p330, %p331
    %p334 = scmp.ne.s32.totalorder %s319, %s333
    %p335 = scmp.eq.s32.totalorder %s73, 0
    %p336 = por %p334, %p335
    %s338 = sadd.s32 %s337, 1
    %p341 = scmp.eq.s32.totalorder %s67, 1
    %p342 = scmp.ne.s32.totalorder %s337, %s339
    %p343 = scmp.eq.s32.totalorder %s67, 0
    %p344 = por %p342, %p343
    %p345 = scmp.ne.s32.totalorder %s337, %s339
    %p346 = scmp.eq.s32.totalorder %s72, 1
    %p347 = por %p345, %p346
    %p348 = scmp.ne.s32.totalorder %s339, %s340
    %p349 = scmp.eq.s32.totalorder %s72, 0
    %p350 = por %p348, %p349
    %p351 = scmp.ne.s32.totalorder %s339, %s340
    %p352 = scmp.eq.s32.totalorder %s73, 1
    %p353 = por %p351, %p352
    %p355 = scmp.ne.s32.totalorder %s340, %s354
    %p356 = scmp.eq.s32.totalorder %s73, 0
    %p357 = por %p355, %p356
    %s359 = sadd.s32 %s358, 1
    %p362 = scmp.eq.s32.totalorder %s67, 1
    %p363 = scmp.ne.s32.totalorder %s358, %s360
    %p364 = scmp.eq.s32.totalorder %s67, 0
    %p365 = por %p363, %p364
    %p366 = scmp.ne.s32.totalorder %s358, %s360
    %p367 = scmp.eq.s32.totalorder %s72, 1
    %p368 = por %p366, %p367
    %p369 = scmp.ne.s32.totalorder %s360, %s361
    %p370 = scmp.eq.s32.totalorder %s72, 0
    %p371 = por %p369, %p370
    %p372 = scmp.ne.s32.totalorder %s360, %s361
    %p373 = scmp.eq.s32.totalorder %s73, 1
    %p374 = por %p372, %p373
    %p376 = scmp.ne.s32.totalorder %s361, %s375
    %p377 = scmp.eq.s32.totalorder %s73, 0
    %p378 = por %p376, %p377
    %s380 = sadd.s32 %s379, 1
    %p383 = scmp.eq.s32.totalorder %s67, 1
    %p384 = scmp.ne.s32.totalorder %s379, %s381
    %p385 = scmp.eq.s32.totalorder %s67, 0
    %p386 = por %p384, %p385
    %p387 = scmp.ne.s32.totalorder %s379, %s381
    %p388 = scmp.eq.s32.totalorder %s72, 1
    %p389 = por %p387, %p388
    %p390 = scmp.ne.s32.totalorder %s381, %s382
    %p391 = scmp.eq.s32.totalorder %s72, 0
    %p392 = por %p390, %p391
    %p393 = scmp.ne.s32.totalorder %s381, %s382
    %p394 = scmp.eq.s32.totalorder %s73, 1
    %p395 = por %p393, %p394
    %p397 = scmp.ne.s32.totalorder %s382, %s396
    %p398 = scmp.eq.s32.totalorder %s73, 0
    %p399 = por %p397, %p398
    %s401 = sadd.s32 %s400, 1
    %p404 = scmp.eq.s32.totalorder %s67, 1
    %p405 = scmp.ne.s32.totalorder %s400, %s402
    %p406 = scmp.eq.s32.totalorder %s67, 0
    %p407 = por %p405, %p406
    %p408 = scmp.ne.s32.totalorder %s400, %s402
    %p409 = scmp.eq.s32.totalorder %s72, 1
    %p410 = por %p408, %p409
    %p411 = scmp.ne.s32.totalorder %s402, %s403
    %p412 = scmp.eq.s32.totalorder %s72, 0
    %p413 = por %p411, %p412
    %p414 = scmp.ne.s32.totalorder %s402, %s403
    %p415 = scmp.eq.s32.totalorder %s73, 1
    %p416 = por %p414, %p415
    %p418 = scmp.ne.s32.totalorder %s403, %s417
    %p419 = scmp.eq.s32.totalorder %s73, 0
    %p420 = por %p418, %p419
    %s422 = sadd.s32 %s421, 1
    %p425 = scmp.eq.s32.totalorder %s67, 1
    %p426 = scmp.ne.s32.totalorder %s421, %s423
    %p427 = scmp.eq.s32.totalorder %s67, 0
    %p428 = por %p426, %p427
    %p429 = scmp.ne.s32.totalorder %s421, %s423
    %p430 = scmp.eq.s32.totalorder %s72, 1
    %p431 = por %p429, %p430
    %p432 = scmp.ne.s32.totalorder %s423, %s424
    %p433 = scmp.eq.s32.totalorder %s72, 0
    %p434 = por %p432, %p433
    %p435 = scmp.ne.s32.totalorder %s423, %s424
    %p436 = scmp.eq.s32.totalorder %s73, 1
    %p437 = por %p435, %p436
    %p439 = scmp.ne.s32.totalorder %s424, %s438
    %p440 = scmp.eq.s32.totalorder %s73, 0
    %p441 = por %p439, %p440
    %s443 = sadd.s32 %s442, 1
    %p446 = scmp.eq.s32.totalorder %s67, 1
    %p447 = scmp.ne.s32.totalorder %s442, %s444
    %p448 = scmp.eq.s32.totalorder %s67, 0
    %p449 = por %p447, %p448
    %p450 = scmp.ne.s32.totalorder %s442, %s444
    %p451 = scmp.eq.s32.totalorder %s72, 1
    %p452 = por %p450, %p451
    %p453 = scmp.ne.s32.totalorder %s444, %s445
    %p454 = scmp.eq.s32.totalorder %s72, 0
    %p455 = por %p453, %p454
    %p456 = scmp.ne.s32.totalorder %s444, %s445
    %p457 = scmp.eq.s32.totalorder %s73, 1
    %p458 = por %p456, %p457
    %p460 = scmp.ne.s32.totalorder %s445, %s459
    %p461 = scmp.eq.s32.totalorder %s73, 0
    %p462 = por %p460, %p461
    %s464 = sadd.s32 %s463, 1
    %p467 = scmp.eq.s32.totalorder %s67, 1
    %p468 = scmp.ne.s32.totalorder %s463, %s465
    %p469 = scmp.eq.s32.totalorder %s67, 0
    %p470 = por %p468, %p469
    %p471 = scmp.ne.s32.totalorder %s463, %s465
    %p472 = scmp.eq.s32.totalorder %s72, 1
    %p473 = por %p471, %p472
    %p474 = scmp.ne.s32.totalorder %s465, %s466
    %p475 = scmp.eq.s32.totalorder %s72, 0
    %p476 = por %p474, %p475
    %p477 = scmp.ne.s32.totalorder %s465, %s466
    %p478 = scmp.eq.s32.totalorder %s73, 1
    %p479 = por %p477, %p478
    %p481 = scmp.ne.s32.totalorder %s466, %s480
    %p482 = scmp.eq.s32.totalorder %s73, 0
    %p483 = por %p481, %p482
    %s485 = sadd.s32 %s484, 1
    %p488 = scmp.eq.s32.totalorder %s67, 1
    %p489 = scmp.ne.s32.totalorder %s484, %s486
    %p490 = scmp.eq.s32.totalorder %s67, 0
    %p491 = por %p489, %p490
    %p492 = scmp.ne.s32.totalorder %s484, %s486
    %p493 = scmp.eq.s32.totalorder %s72, 1
    %p494 = por %p492, %p493
    %p495 = scmp.ne.s32.totalorder %s486, %s487
    %p496 = scmp.eq.s32.totalorder %s72, 0
    %p497 = por %p495, %p496
    %p498 = scmp.ne.s32.totalorder %s486, %s487
    %p499 = scmp.eq.s32.totalorder %s73, 1
    %p500 = por %p498, %p499
    %p502 = scmp.ne.s32.totalorder %s487, %s501
    %p503 = scmp.eq.s32.totalorder %s73, 0
    %p504 = por %p502, %p503
    %s506 = sadd.s32 %s505, 1
    %p509 = scmp.eq.s32.totalorder %s67, 1
    %p510 = scmp.ne.s32.totalorder %s505, %s507
    %p511 = scmp.eq.s32.totalorder %s67, 0
    %p512 = por %p510, %p511
    %p513 = scmp.ne.s32.totalorder %s505, %s507
    %p514 = scmp.eq.s32.totalorder %s72, 1
    %p515 = por %p513, %p514
    %p516 = scmp.ne.s32.totalorder %s507, %s508
    %p517 = scmp.eq.s32.totalorder %s72, 0
    %p518 = por %p516, %p517
    %p519 = scmp.ne.s32.totalorder %s507, %s508
    %p520 = scmp.eq.s32.totalorder %s73, 1
    %p521 = por %p519, %p520
    %p523 = scmp.ne.s32.totalorder %s508, %s522
    %p524 = scmp.eq.s32.totalorder %s73, 0
    %p525 = por %p523, %p524
    %s527 = sadd.s32 %s526, 1
    %p530 = scmp.eq.s32.totalorder %s67, 1
    %p531 = scmp.ne.s32.totalorder %s526, %s528
    %p532 = scmp.eq.s32.totalorder %s67, 0
    %p533 = por %p531, %p532
    %p534 = scmp.ne.s32.totalorder %s526, %s528
    %p535 = scmp.eq.s32.totalorder %s72, 1
    %p536 = por %p534, %p535
    %p537 = scmp.ne.s32.totalorder %s528, %s529
    %p538 = scmp.eq.s32.totalorder %s72, 0
    %p539 = por %p537, %p538
    %p540 = scmp.ne.s32.totalorder %s528, %s529
    %p541 = scmp.eq.s32.totalorder %s73, 1
    %p542 = por %p540, %p541
    %p544 = scmp.ne.s32.totalorder %s529, %s543
    %p545 = scmp.eq.s32.totalorder %s73, 0
    %p546 = por %p544, %p545
    %s548 = sadd.s32 %s547, 1
    %p551 = scmp.eq.s32.totalorder %s67, 1
    %p552 = scmp.ne.s32.totalorder %s547, %s549
    %p553 = scmp.eq.s32.totalorder %s67, 0
    %p554 = por %p552, %p553
    %p555 = scmp.ne.s32.totalorder %s547, %s549
    %p556 = scmp.eq.s32.totalorder %s72, 1
    %p557 = por %p555, %p556
    %p558 = scmp.ne.s32.totalorder %s549, %s550
    %p559 = scmp.eq.s32.totalorder %s72, 0
    %p560 = por %p558, %p559
    %p561 = scmp.ne.s32.totalorder %s549, %s550
    %p562 = scmp.eq.s32.totalorder %s73, 1
    %p563 = por %p561, %p562
    %p565 = scmp.ne.s32.totalorder %s550, %s564
    %p566 = scmp.eq.s32.totalorder %s73, 0
    %p567 = por %p565, %p566
    %s569 = sadd.s32 %s568, 1
    %p572 = scmp.eq.s32.totalorder %s67, 1
    %p573 = scmp.ne.s32.totalorder %s568, %s570
    %p574 = scmp.eq.s32.totalorder %s67, 0
    %p575 = por %p573, %p574
    %p576 = scmp.ne.s32.totalorder %s568, %s570
    %p577 = scmp.eq.s32.totalorder %s72, 1
    %p578 = por %p576, %p577
    %p579 = scmp.ne.s32.totalorder %s570, %s571
    %p580 = scmp.eq.s32.totalorder %s72, 0
    %p581 = por %p579, %p580
    %p582 = scmp.ne.s32.totalorder %s570, %s571
    %p583 = scmp.eq.s32.totalorder %s73, 1
    %p584 = por %p582, %p583
    %p586 = scmp.ne.s32.totalorder %s571, %s585
    %p587 = scmp.eq.s32.totalorder %s73, 0
    %p588 = por %p586, %p587
    %s590 = sadd.s32 %s589, 1
    %p593 = scmp.eq.s32.totalorder %s67, 1
    %p594 = scmp.ne.s32.totalorder %s589, %s591
    %p595 = scmp.eq.s32.totalorder %s67, 0
    %p596 = por %p594, %p595
    %p597 = scmp.ne.s32.totalorder %s589, %s591
    %p598 = scmp.eq.s32.totalorder %s72, 1
    %p599 = por %p597, %p598
    %p600 = scmp.ne.s32.totalorder %s591, %s592
    %p601 = scmp.eq.s32.totalorder %s72, 0
    %p602 = por %p600, %p601
    %p603 = scmp.ne.s32.totalorder %s591, %s592
    %p604 = scmp.eq.s32.totalorder %s73, 1
    %p605 = por %p603, %p604
    %p607 = scmp.ne.s32.totalorder %s592, %s606
    %p608 = scmp.eq.s32.totalorder %s73, 0
    %p609 = por %p607, %p608
    %s611 = sadd.s32 %s610, 1
    %p614 = scmp.eq.s32.totalorder %s67, 1
    %p615 = scmp.ne.s32.totalorder %s610, %s612
    %p616 = scmp.eq.s32.totalorder %s67, 0
    %p617 = por %p615, %p616
    %p618 = scmp.ne.s32.totalorder %s610, %s612
    %p619 = scmp.eq.s32.totalorder %s72, 1
    %p620 = por %p618, %p619
    %p621 = scmp.ne.s32.totalorder %s612, %s613
    %p622 = scmp.eq.s32.totalorder %s72, 0
    %p623 = por %p621, %p622
    %p624 = scmp.ne.s32.totalorder %s612, %s613
    %p625 = scmp.eq.s32.totalorder %s73, 1
    %p626 = por %p624, %p625
    %p628 = scmp.ne.s32.totalorder %s613, %s627
    %p629 = scmp.eq.s32.totalorder %s73, 0
    %p630 = por %p628, %p629
    %s632 = sadd.s32 %s631, 1
    %p635 = scmp.eq.s32.totalorder %s67, 1
    %p636 = scmp.ne.s32.totalorder %s631, %s633
    %p637 = scmp.eq.s32.totalorder %s67, 0
    %p638 = por %p636, %p637
    %p639 = scmp.ne.s32.totalorder %s631, %s633
    %p640 = scmp.eq.s32.totalorder %s72, 1
    %p641 = por %p639, %p640
    %p642 = scmp.ne.s32.totalorder %s633, %s634
    %p643 = scmp.eq.s32.totalorder %s72, 0
    %p644 = por %p642, %p643
    %p645 = scmp.ne.s32.totalorder %s633, %s634
    %p646 = scmp.eq.s32.totalorder %s73, 1
    %p647 = por %p645, %p646
    %p649 = scmp.ne.s32.totalorder %s634, %s648
    %p650 = scmp.eq.s32.totalorder %s73, 0
    %p651 = por %p649, %p650
    %s653 = sadd.s32 %s652, 1
    %p656 = scmp.eq.s32.totalorder %s67, 1
    %p657 = scmp.ne.s32.totalorder %s652, %s654
    %p658 = scmp.eq.s32.totalorder %s67, 0
    %p659 = por %p657, %p658
    %p660 = scmp.ne.s32.totalorder %s652, %s654
    %p661 = scmp.eq.s32.totalorder %s72, 1
    %p662 = por %p660, %p661
    %p663 = scmp.ne.s32.totalorder %s654, %s655
    %p664 = scmp.eq.s32.totalorder %s72, 0
    %p665 = por %p663, %p664
    %p666 = scmp.ne.s32.totalorder %s654, %s655
    %p667 = scmp.eq.s32.totalorder %s73, 1
    %p668 = por %p666, %p667
    %p670 = scmp.ne.s32.totalorder %s655, %s669
    %p671 = scmp.eq.s32.totalorder %s73, 0
    %p672 = por %p670, %p671
    %s674 = sadd.s32 %s673, 1
    %p677 = scmp.eq.s32.totalorder %s67, 1
    %p678 = scmp.ne.s32.totalorder %s673, %s675
    %p679 = scmp.eq.s32.totalorder %s67, 0
    %p680 = por %p678, %p679
    %p681 = scmp.ne.s32.totalorder %s673, %s675
    %p682 = scmp.eq.s32.totalorder %s72, 1
    %p683 = por %p681, %p682
    %p684 = scmp.ne.s32.totalorder %s675, %s676
    %p685 = scmp.eq.s32.totalorder %s72, 0
    %p686 = por %p684, %p685
    %p687 = scmp.ne.s32.totalorder %s675, %s676
    %p688 = scmp.eq.s32.totalorder %s73, 1
    %p689 = por %p687, %p688
    %p691 = scmp.ne.s32.totalorder %s676, %s690
    %p692 = scmp.eq.s32.totalorder %s73, 0
    %p693 = por %p691, %p692
    %s694 = ssub.s32 %s67, %s74
    %p695 = scmp.eq.s32.totalorder %s694, 0
    %s697 = sadd.s32 %s696, 1
    %s698 = scalar_select %p695, %s696, %s697
    %p701 = pneg %p695
    %p702 = scmp.eq.s32.totalorder %s67, 1
    %p703 = por %p701, %p702
    %p704 = scmp.ne.s32.totalorder %s696, %s699
    %p705 = scmp.eq.s32.totalorder %s67, 0
    %p706 = por %p704, %p705
    %p707 = scmp.ne.s32.totalorder %s696, %s699
    %p708 = scmp.eq.s32.totalorder %s72, 1
    %p709 = por %p707, %p708
    %p710 = scmp.ne.s32.totalorder %s699, %s700
    %p711 = scmp.eq.s32.totalorder %s72, 0
    %p712 = por %p710, %p711
    %p713 = scmp.ne.s32.totalorder %s699, %s700
    %p714 = scmp.eq.s32.totalorder %s73, 1
    %p715 = por %p713, %p714
    %p717 = scmp.ne.s32.totalorder %s700, %s716
    %p718 = scmp.eq.s32.totalorder %s73, 0
    %p719 = por %p717, %p718
    %p720 = scmp.le.s32.totalorder 1, %s67
    %p721 = scmp.lt.s32.totalorder %s67, 3
    %p722 = pnand %p720, %p721
    %p723 = pneg %p722
    // Predicated region
    $region9: #{nerf_forward.1} parent=5 // pred_check
      _
    $region10: #{nerf_forward.1} parent=5 // pred_check_branch
      %725 = sbr.rel (%p722) target = $region12
    $region11: #{nerf_forward.1} parent=5 // pred_region
      %s726 = ssub.s32 %s67, 1
      // Predicated region
      $region13: #{nerf_forward.1} parent=11 // pred_check
        %p727 = pneg %p140
      $region14: #{nerf_forward.1} parent=11 // pred_check_branch
        %729 = sbr.rel (%p727) target = $region16
      $region15: #{nerf_forward.1} parent=11 // pred_region
        _
      $region16: #{nerf_forward.1} parent=11 // pred_fallthru
        _
      // Predicated region
      $region17: #{nerf_forward.1} parent=11 // pred_check
        %p730 = pneg %p161
      $region18: #{nerf_forward.1} parent=11 // pred_check_branch
        %732 = sbr.rel (%p730) target = $region20
      $region19: #{nerf_forward.1} parent=11 // pred_region
        _
      $region20: #{nerf_forward.1} parent=11 // pred_fallthru
        _
      // Predicated region
      $region21: #{nerf_forward.1} parent=11 // pred_check
        %p733 = pneg %p182
      $region22: #{nerf_forward.1} parent=11 // pred_check_branch
        %735 = sbr.rel (%p733) target = $region24
      $region23: #{nerf_forward.1} parent=11 // pred_region
        _
      $region24: #{nerf_forward.1} parent=11 // pred_fallthru
        _
      // Predicated region
      $region25: #{nerf_forward.1} parent=11 // pred_check
        %p736 = pneg %p203
      $region26: #{nerf_forward.1} parent=11 // pred_check_branch
        %738 = sbr.rel (%p736) target = $region28
      $region27: #{nerf_forward.1} parent=11 // pred_region
        _
      $region28: #{nerf_forward.1} parent=11 // pred_fallthru
        _
      // Predicated region
      $region29: #{nerf_forward.1} parent=11 // pred_check
        %p739 = pneg %p224
      $region30: #{nerf_forward.1} parent=11 // pred_check_branch
        %741 = sbr.rel (%p739) target = $region32
      $region31: #{nerf_forward.1} parent=11 // pred_region
        _
      $region32: #{nerf_forward.1} parent=11 // pred_fallthru
        _
      // Predicated region
      $region33: #{nerf_forward.1} parent=11 // pred_check
        %p742 = pneg %p245
      $region34: #{nerf_forward.1} parent=11 // pred_check_branch
        %744 = sbr.rel (%p742) target = $region36
      $region35: #{nerf_forward.1} parent=11 // pred_region
        _
      $region36: #{nerf_forward.1} parent=11 // pred_fallthru
        _
      // Predicated region
      $region37: #{nerf_forward.1} parent=11 // pred_check
        %p745 = pneg %p266
      $region38: #{nerf_forward.1} parent=11 // pred_check_branch
        %747 = sbr.rel (%p745) target = $region40
      $region39: #{nerf_forward.1} parent=11 // pred_region
        _
      $region40: #{nerf_forward.1} parent=11 // pred_fallthru
        _
      // Predicated region
      $region41: #{nerf_forward.1} parent=11 // pred_check
        %p748 = pneg %p287
      $region42: #{nerf_forward.1} parent=11 // pred_check_branch
        %750 = sbr.rel (%p748) target = $region44
      $region43: #{nerf_forward.1} parent=11 // pred_region
        _
      $region44: #{nerf_forward.1} parent=11 // pred_fallthru
        _
      // Predicated region
      $region45: #{nerf_forward.1} parent=11 // pred_check
        %p751 = pneg %p308
      $region46: #{nerf_forward.1} parent=11 // pred_check_branch
        %753 = sbr.rel (%p751) target = $region48
      $region47: #{nerf_forward.1} parent=11 // pred_region
        _
      $region48: #{nerf_forward.1} parent=11 // pred_fallthru
        _
      // Predicated region
      $region49: #{nerf_forward.1} parent=11 // pred_check
        %p754 = pneg %p329
      $region50: #{nerf_forward.1} parent=11 // pred_check_branch
        %756 = sbr.rel (%p754) target = $region52
      $region51: #{nerf_forward.1} parent=11 // pred_region
        _
      $region52: #{nerf_forward.1} parent=11 // pred_fallthru
        _
      // Predicated region
      $region53: #{nerf_forward.1} parent=11 // pred_check
        %p757 = pneg %p350
      $region54: #{nerf_forward.1} parent=11 // pred_check_branch
        %759 = sbr.rel (%p757) target = $region56
      $region55: #{nerf_forward.1} parent=11 // pred_region
        _
      $region56: #{nerf_forward.1} parent=11 // pred_fallthru
        _
      // Predicated region
      $region57: #{nerf_forward.1} parent=11 // pred_check
        %p760 = pneg %p371
      $region58: #{nerf_forward.1} parent=11 // pred_check_branch
        %762 = sbr.rel (%p760) target = $region60
      $region59: #{nerf_forward.1} parent=11 // pred_region
        _
      $region60: #{nerf_forward.1} parent=11 // pred_fallthru
        _
      // Predicated region
      $region61: #{nerf_forward.1} parent=11 // pred_check
        %p763 = pneg %p392
      $region62: #{nerf_forward.1} parent=11 // pred_check_branch
        %765 = sbr.rel (%p763) target = $region64
      $region63: #{nerf_forward.1} parent=11 // pred_region
        _
      $region64: #{nerf_forward.1} parent=11 // pred_fallthru
        _
      // Predicated region
      $region65: #{nerf_forward.1} parent=11 // pred_check
        %p766 = pneg %p413
      $region66: #{nerf_forward.1} parent=11 // pred_check_branch
        %768 = sbr.rel (%p766) target = $region68
      $region67: #{nerf_forward.1} parent=11 // pred_region
        _
      $region68: #{nerf_forward.1} parent=11 // pred_fallthru
        _
      // Predicated region
      $region69: #{nerf_forward.1} parent=11 // pred_check
        %p769 = pneg %p434
      $region70: #{nerf_forward.1} parent=11 // pred_check_branch
        %771 = sbr.rel (%p769) target = $region72
      $region71: #{nerf_forward.1} parent=11 // pred_region
        _
      $region72: #{nerf_forward.1} parent=11 // pred_fallthru
        _
      // Predicated region
      $region73: #{nerf_forward.1} parent=11 // pred_check
        %p772 = pneg %p455
      $region74: #{nerf_forward.1} parent=11 // pred_check_branch
        %774 = sbr.rel (%p772) target = $region76
      $region75: #{nerf_forward.1} parent=11 // pred_region
        _
      $region76: #{nerf_forward.1} parent=11 // pred_fallthru
        _
      // Predicated region
      $region77: #{nerf_forward.1} parent=11 // pred_check
        %p775 = pneg %p476
      $region78: #{nerf_forward.1} parent=11 // pred_check_branch
        %777 = sbr.rel (%p775) target = $region80
      $region79: #{nerf_forward.1} parent=11 // pred_region
        _
      $region80: #{nerf_forward.1} parent=11 // pred_fallthru
        _
      // Predicated region
      $region81: #{nerf_forward.1} parent=11 // pred_check
        %p778 = pneg %p497
      $region82: #{nerf_forward.1} parent=11 // pred_check_branch
        %780 = sbr.rel (%p778) target = $region84
      $region83: #{nerf_forward.1} parent=11 // pred_region
        _
      $region84: #{nerf_forward.1} parent=11 // pred_fallthru
        _
      // Predicated region
      $region85: #{nerf_forward.1} parent=11 // pred_check
        %p781 = pneg %p518
      $region86: #{nerf_forward.1} parent=11 // pred_check_branch
        %783 = sbr.rel (%p781) target = $region88
      $region87: #{nerf_forward.1} parent=11 // pred_region
        _
      $region88: #{nerf_forward.1} parent=11 // pred_fallthru
        _
      // Predicated region
      $region89: #{nerf_forward.1} parent=11 // pred_check
        %p784 = pneg %p539
      $region90: #{nerf_forward.1} parent=11 // pred_check_branch
        %786 = sbr.rel (%p784) target = $region92
      $region91: #{nerf_forward.1} parent=11 // pred_region
        _
      $region92: #{nerf_forward.1} parent=11 // pred_fallthru
        _
      // Predicated region
      $region93: #{nerf_forward.1} parent=11 // pred_check
        %p787 = pneg %p560
      $region94: #{nerf_forward.1} parent=11 // pred_check_branch
        %789 = sbr.rel (%p787) target = $region96
      $region95: #{nerf_forward.1} parent=11 // pred_region
        _
      $region96: #{nerf_forward.1} parent=11 // pred_fallthru
        _
      // Predicated region
      $region97: #{nerf_forward.1} parent=11 // pred_check
        %p790 = pneg %p581
      $region98: #{nerf_forward.1} parent=11 // pred_check_branch
        %792 = sbr.rel (%p790) target = $region100
      $region99: #{nerf_forward.1} parent=11 // pred_region
        _
      $region100: #{nerf_forward.1} parent=11 // pred_fallthru
        _
      // Predicated region
      $region101: #{nerf_forward.1} parent=11 // pred_check
        %p793 = pneg %p602
      $region102: #{nerf_forward.1} parent=11 // pred_check_branch
        %795 = sbr.rel (%p793) target = $region104
      $region103: #{nerf_forward.1} parent=11 // pred_region
        _
      $region104: #{nerf_forward.1} parent=11 // pred_fallthru
        _
      // Predicated region
      $region105: #{nerf_forward.1} parent=11 // pred_check
        %p796 = pneg %p623
      $region106: #{nerf_forward.1} parent=11 // pred_check_branch
        %798 = sbr.rel (%p796) target = $region108
      $region107: #{nerf_forward.1} parent=11 // pred_region
        _
      $region108: #{nerf_forward.1} parent=11 // pred_fallthru
        _
      // Predicated region
      $region109: #{nerf_forward.1} parent=11 // pred_check
        %p799 = pneg %p644
      $region110: #{nerf_forward.1} parent=11 // pred_check_branch
        %801 = sbr.rel (%p799) target = $region112
      $region111: #{nerf_forward.1} parent=11 // pred_region
        _
      $region112: #{nerf_forward.1} parent=11 // pred_fallthru
        _
      // Predicated region
      $region113: #{nerf_forward.1} parent=11 // pred_check
        %p802 = pneg %p665
      $region114: #{nerf_forward.1} parent=11 // pred_check_branch
        %804 = sbr.rel (%p802) target = $region116
      $region115: #{nerf_forward.1} parent=11 // pred_region
        _
      $region116: #{nerf_forward.1} parent=11 // pred_fallthru
        _
      // Predicated region
      $region117: #{nerf_forward.1} parent=11 // pred_check
        %p805 = pneg %p686
      $region118: #{nerf_forward.1} parent=11 // pred_check_branch
        %807 = sbr.rel (%p805) target = $region120
      $region119: #{nerf_forward.1} parent=11 // pred_region
        _
      $region120: #{nerf_forward.1} parent=11 // pred_fallthru
        _
    $region12: #{nerf_forward.1} parent=5 // pred_fallthru
      _
    %p808 = scmp.lt.s32.totalorder %s67, 2
    // Predicated region
    $region121: #{nerf_forward.1} parent=5 // pred_check
      %p809 = pneg %p808
    $region122: #{nerf_forward.1} parent=5 // pred_check_branch
      %811 = sbr.rel (%p809) target = $region124
    $region123: #{nerf_forward.1} parent=5 // pred_region
      // Predicated region
      $region125: #{nerf_forward.1} parent=123 // pred_check
        %p812 = pneg %p87
      $region126: #{nerf_forward.1} parent=123 // pred_check_branch
        %814 = sbr.rel (%p812) target = $region128
      $region127: #{nerf_forward.1} parent=123 // pred_region
        %s815 = smul.u32 64, %s67
        %p816 = scmp.lt.s32.totalorder %s815, 127
        %s817 = scalar_select %p816, %s815, 127
        %s818 = smul.addr %s817, 8
        %s819 = scalar_lea.vmem %s1, %s818
        %s820 = smul.u32 64, %s67
      $region128: #{nerf_forward.1} parent=123 // pred_fallthru
        _
      // Predicated region
      $region129: #{nerf_forward.1} parent=123 // pred_check
        %p821 = pneg %p113
      $region130: #{nerf_forward.1} parent=123 // pred_check_branch
        %823 = sbr.rel (%p821) target = $region132
      $region131: #{nerf_forward.1} parent=123 // pred_region
        %s824 = smul.u32 64, %s67
        %p825 = scmp.lt.s32.totalorder %s824, 127
        %s826 = scalar_select %p825, %s824, 127
        %s827 = smul.addr %s826, 8
        %s828 = scalar_lea.vmem %s3, %s827
        %s829 = smul.u32 64, %s67
      $region132: #{nerf_forward.1} parent=123 // pred_fallthru
        _
    $region124: #{nerf_forward.1} parent=5 // pred_fallthru
      _
    %p830 = scmp.le.s32.totalorder 1, %s67
    %p831 = scmp.lt.s32.totalorder %s67, 3
    %p832 = pnand %p830, %p831
    %p833 = pneg %p832
    // Predicated region
    $region133: #{nerf_forward.1} parent=5 // pred_check
      _
    $region134: #{nerf_forward.1} parent=5 // pred_check_branch
      %835 = sbr.rel (%p832) target = $region136
    $region135: #{nerf_forward.1} parent=5 // pred_region
      %s836 = ssub.s32 %s67, 1
      %s837 = smul.u32 64, %s72
      %p838 = scmp.lt.s32.totalorder %s837, 127
      %s839 = scalar_select %p838, %s837, 127
      %s840 = smul.addr %s839, 8
      %s841 = scalar_lea.vmem %s1, %s840
      %p842 = pneg %p93
      %p843 = pneg %p90
      %s844 = smul.u32 64, %s72
      %p845 = scmp.lt.s32.totalorder %s844, 127
      %s846 = scalar_select %p845, %s844, 127
      %s847 = smul.addr %s846, 8
      %s848 = scalar_lea.vmem %s3, %s847
      %p849 = pneg %p119
      %p850 = pneg %p116
      %p851 = pneg %p140
      %p852 = pneg %p137
      %p853 = pneg %p161
      %p854 = pneg %p158
      %p855 = pneg %p182
      %p856 = pneg %p179
      %p857 = pneg %p203
      %p858 = pneg %p200
      %p859 = pneg %p224
      %p860 = pneg %p221
      %p861 = pneg %p245
      %p862 = pneg %p242
      %p863 = pneg %p266
      %p864 = pneg %p263
      %p865 = pneg %p287
      %p866 = pneg %p284
      %p867 = pneg %p308
      %p868 = pneg %p305
      %p869 = pneg %p329
      %p870 = pneg %p326
      %p871 = pneg %p350
      %p872 = pneg %p347
      %p873 = pneg %p371
      %p874 = pneg %p368
      %p875 = pneg %p392
      %p876 = pneg %p389
      %p877 = pneg %p413
      %p878 = pneg %p410
      %p879 = pneg %p434
      %p880 = pneg %p431
      %p881 = pneg %p455
      %p882 = pneg %p452
      %p883 = pneg %p476
      %p884 = pneg %p473
      %p885 = pneg %p497
      %p886 = pneg %p494
      %p887 = pneg %p518
      %p888 = pneg %p515
      %p889 = pneg %p539
      %p890 = pneg %p536
      %p891 = pneg %p560
      %p892 = pneg %p557
      %p893 = pneg %p581
      %p894 = pneg %p578
      %p895 = pneg %p602
      %p896 = pneg %p599
      %p897 = pneg %p623
      %p898 = pneg %p620
      %p899 = pneg %p644
      %p900 = pneg %p641
      %p901 = pneg %p665
      %p902 = pneg %p662
      %p903 = pneg %p686
      %p904 = pneg %p683
      %p905 = pneg %p712
      %p906 = pneg %p709
      %s907 = smul.u32 64, %s72
      %p908 = scmp.lt.s32.totalorder %s907, 127
      %s909 = scalar_select %p908, %s907, 127
      %s910 = smul.addr %s909, 8
      %s911 = scalar_lea.vmem %s59, %s910
      %s912 = smul.u32 64, %s72
      %p913 = scmp.lt.s32.totalorder %s912, 127
      %s914 = scalar_select %p913, %s912, 127
      %s915 = smul.addr %s914, 8
      %s916 = scalar_lea.vmem %s1, %s915
      %s917 = smul.u32 64, %s72
      %s918 = smul.u32 64, %s72
      %p919 = scmp.lt.s32.totalorder %s918, 127
      %s920 = scalar_select %p919, %s918, 127
      %s921 = smul.addr %s920, 8
      %s922 = scalar_lea.vmem %s3, %s921
      %s923 = smul.u32 64, %s72
      %s924 = smul.u32 64, %s72
      %p925 = scmp.lt.s32.totalorder %s924, 127
      %s926 = scalar_select %p925, %s924, 127
      %s927 = smul.addr %s926, 8
      %s928 = scalar_lea.vmem %s59, %s927
      %s929 = smul.u32 64, %s72
      %v931 = vld [vmem:[%s916] sm:$0xff]
      %v932 = vld [vmem:[%s916 + $0x8] sm:$0xff]
      %v933 = vld [vmem:[%s916 + $0x10] sm:$0xff]
      %v934 = vld [vmem:[%s916 + $0x18] sm:$0xff]
      %v935 = vld [vmem:[%s916 + $0x20] sm:$0xff]
      %v936 = vld [vmem:[%s916 + $0x28] sm:$0xff]
      %v937 = vld [vmem:[%s916 + $0x30] sm:$0xff]
      %v938 = vld [vmem:[%s916 + $0x38] sm:$0xff]
      %v939 = vld [vmem:[%s916 + $0x40] sm:$0xff]
      %v940 = vld [vmem:[%s916 + $0x48] sm:$0xff]
      %v941 = vld [vmem:[%s916 + $0x50] sm:$0xff]
      %v942 = vld [vmem:[%s916 + $0x58] sm:$0xff]
      %v943 = vld [vmem:[%s916 + $0x60] sm:$0xff]
      %v944 = vld [vmem:[%s916 + $0x68] sm:$0xff]
      %v945 = vld [vmem:[%s916 + $0x70] sm:$0xff]
      %v946 = vld [vmem:[%s916 + $0x78] sm:$0xff]
      %v947 = vld [vmem:[%s916 + $0x80] sm:$0xff]
      %v948 = vld [vmem:[%s916 + $0x88] sm:$0xff]
      %v949 = vld [vmem:[%s916 + $0x90] sm:$0xff]
      %v950 = vld [vmem:[%s916 + $0x98] sm:$0xff]
      %v951 = vld [vmem:[%s916 + $0xa0] sm:$0xff]
      %v952 = vld [vmem:[%s916 + $0xa8] sm:$0xff]
      %v953 = vld [vmem:[%s916 + $0xb0] sm:$0xff]
      %v954 = vld [vmem:[%s916 + $0xb8] sm:$0xff]
      %v955 = vld [vmem:[%s916 + $0xc0] sm:$0xff]
      %v956 = vld [vmem:[%s916 + $0xc8] sm:$0xff]
      %v957 = vld [vmem:[%s916 + $0xd0] sm:$0xff]
      %v958 = vld [vmem:[%s916 + $0xd8] sm:$0xff]
      %v959 = vld [vmem:[%s916 + $0xe0] sm:$0xff]
      %v960 = vld [vmem:[%s916 + $0xe8] sm:$0xff]
      %v961 = vld [vmem:[%s916 + $0xf0] sm:$0xff]
      %v962 = vld [vmem:[%s916 + $0xf8] sm:$0xff]
      %v963 = vld [vmem:[%s916 + $0x100] sm:$0xff]
      %v964 = vld [vmem:[%s916 + $0x108] sm:$0xff]
      %v965 = vld [vmem:[%s916 + $0x110] sm:$0xff]
      %v966 = vld [vmem:[%s916 + $0x118] sm:$0xff]
      %v967 = vld [vmem:[%s916 + $0x120] sm:$0xff]
      %v968 = vld [vmem:[%s916 + $0x128] sm:$0xff]
      %v969 = vld [vmem:[%s916 + $0x130] sm:$0xff]
      %v970 = vld [vmem:[%s916 + $0x138] sm:$0xff]
      %v971 = vld [vmem:[%s916 + $0x140] sm:$0xff]
      %v972 = vld [vmem:[%s916 + $0x148] sm:$0xff]
      %v973 = vld [vmem:[%s916 + $0x150] sm:$0xff]
      %v974 = vld [vmem:[%s916 + $0x158] sm:$0xff]
      %v975 = vld [vmem:[%s916 + $0x160] sm:$0xff]
      %v976 = vld [vmem:[%s916 + $0x168] sm:$0xff]
      %v977 = vld [vmem:[%s916 + $0x170] sm:$0xff]
      %v978 = vld [vmem:[%s916 + $0x178] sm:$0xff]
      %v979 = vld [vmem:[%s916 + $0x180] sm:$0xff]
      %v980 = vld [vmem:[%s916 + $0x188] sm:$0xff]
      %v981 = vld [vmem:[%s916 + $0x190] sm:$0xff]
      %v982 = vld [vmem:[%s916 + $0x198] sm:$0xff]
      %v983 = vld [vmem:[%s916 + $0x1a0] sm:$0xff]
      %v984 = vld [vmem:[%s916 + $0x1a8] sm:$0xff]
      %v985 = vld [vmem:[%s916 + $0x1b0] sm:$0xff]
      %v986 = vld [vmem:[%s916 + $0x1b8] sm:$0xff]
      %v987 = vld [vmem:[%s916 + $0x1c0] sm:$0xff]
      %v988 = vld [vmem:[%s916 + $0x1c8] sm:$0xff]
      %v989 = vld [vmem:[%s916 + $0x1d0] sm:$0xff]
      %v990 = vld [vmem:[%s916 + $0x1d8] sm:$0xff]
      %v991 = vld [vmem:[%s916 + $0x1e0] sm:$0xff]
      %v992 = vld [vmem:[%s916 + $0x1e8] sm:$0xff]
      %v993 = vld [vmem:[%s916 + $0x1f0] sm:$0xff]
      %v994 = vld [vmem:[%s916 + $0x1f8] sm:$0xff]
      %v995 = vpack.c.bf16 %v932, %v931
      %v996 = vpack.c.bf16 %v934, %v933
      %v997 = vpack.c.bf16 %v936, %v935
      %v998 = vpack.c.bf16 %v938, %v937
      %v999 = vpack.c.bf16 %v940, %v939
      %v1000 = vpack.c.bf16 %v942, %v941
      %v1001 = vpack.c.bf16 %v944, %v943
      %v1002 = vpack.c.bf16 %v946, %v945
      %v1003 = vpack.c.bf16 %v948, %v947
      %v1004 = vpack.c.bf16 %v950, %v949
      %v1005 = vpack.c.bf16 %v952, %v951
      %v1006 = vpack.c.bf16 %v954, %v953
      %v1007 = vpack.c.bf16 %v956, %v955
      %v1008 = vpack.c.bf16 %v958, %v957
      %v1009 = vpack.c.bf16 %v960, %v959
      %v1010 = vpack.c.bf16 %v962, %v961
      %v1011 = vpack.c.bf16 %v964, %v963
      %v1012 = vpack.c.bf16 %v966, %v965
      %v1013 = vpack.c.bf16 %v968, %v967
      %v1014 = vpack.c.bf16 %v970, %v969
      %v1015 = vpack.c.bf16 %v972, %v971
      %v1016 = vpack.c.bf16 %v974, %v973
      %v1017 = vpack.c.bf16 %v976, %v975
      %v1018 = vpack.c.bf16 %v978, %v977
      %v1019 = vpack.c.bf16 %v980, %v979
      %v1020 = vpack.c.bf16 %v982, %v981
      %v1021 = vpack.c.bf16 %v984, %v983
      %v1022 = vpack.c.bf16 %v986, %v985
      %v1023 = vpack.c.bf16 %v988, %v987
      %v1024 = vpack.c.bf16 %v990, %v989
      %v1025 = vpack.c.bf16 %v992, %v991
      %v1026 = vpack.c.bf16 %v994, %v993
      %v1027 = vld [vmem:[%s922] sm:$0xff]
      %v1028 = vld [vmem:[%s922 + $0x8] sm:$0xff]
      %v1029 = vld [vmem:[%s922 + $0x10] sm:$0xff]
      %v1030 = vld [vmem:[%s922 + $0x18] sm:$0xff]
      %v1031 = vld [vmem:[%s922 + $0x20] sm:$0xff]
      %v1032 = vld [vmem:[%s922 + $0x28] sm:$0xff]
      %v1033 = vld [vmem:[%s922 + $0x30] sm:$0xff]
      %v1034 = vld [vmem:[%s922 + $0x38] sm:$0xff]
      %v1035 = vld [vmem:[%s922 + $0x40] sm:$0xff]
      %v1036 = vld [vmem:[%s922 + $0x48] sm:$0xff]
      %v1037 = vld [vmem:[%s922 + $0x50] sm:$0xff]
      %v1038 = vld [vmem:[%s922 + $0x58] sm:$0xff]
      %v1039 = vld [vmem:[%s922 + $0x60] sm:$0xff]
      %v1040 = vld [vmem:[%s922 + $0x68] sm:$0xff]
      %v1041 = vld [vmem:[%s922 + $0x70] sm:$0xff]
      %v1042 = vld [vmem:[%s922 + $0x78] sm:$0xff]
      %v1043 = vld [vmem:[%s922 + $0x80] sm:$0xff]
      %v1044 = vld [vmem:[%s922 + $0x88] sm:$0xff]
      %v1045 = vld [vmem:[%s922 + $0x90] sm:$0xff]
      %v1046 = vld [vmem:[%s922 + $0x98] sm:$0xff]
      %v1047 = vld [vmem:[%s922 + $0xa0] sm:$0xff]
      %v1048 = vld [vmem:[%s922 + $0xa8] sm:$0xff]
      %v1049 = vld [vmem:[%s922 + $0xb0] sm:$0xff]
      %v1050 = vld [vmem:[%s922 + $0xb8] sm:$0xff]
      %v1051 = vld [vmem:[%s922 + $0xc0] sm:$0xff]
      %v1052 = vld [vmem:[%s922 + $0xc8] sm:$0xff]
      %v1053 = vld [vmem:[%s922 + $0xd0] sm:$0xff]
      %v1054 = vld [vmem:[%s922 + $0xd8] sm:$0xff]
      %v1055 = vld [vmem:[%s922 + $0xe0] sm:$0xff]
      %v1056 = vld [vmem:[%s922 + $0xe8] sm:$0xff]
      %v1057 = vld [vmem:[%s922 + $0xf0] sm:$0xff]
      %v1058 = vld [vmem:[%s922 + $0xf8] sm:$0xff]
      %v1059 = vld [vmem:[%s922 + $0x100] sm:$0xff]
      %v1060 = vld [vmem:[%s922 + $0x108] sm:$0xff]
      %v1061 = vld [vmem:[%s922 + $0x110] sm:$0xff]
      %v1062 = vld [vmem:[%s922 + $0x118] sm:$0xff]
      %v1063 = vld [vmem:[%s922 + $0x120] sm:$0xff]
      %v1064 = vld [vmem:[%s922 + $0x128] sm:$0xff]
      %v1065 = vld [vmem:[%s922 + $0x130] sm:$0xff]
      %v1066 = vld [vmem:[%s922 + $0x138] sm:$0xff]
      %v1067 = vld [vmem:[%s922 + $0x140] sm:$0xff]
      %v1068 = vld [vmem:[%s922 + $0x148] sm:$0xff]
      %v1069 = vld [vmem:[%s922 + $0x150] sm:$0xff]
      %v1070 = vld [vmem:[%s922 + $0x158] sm:$0xff]
      %v1071 = vld [vmem:[%s922 + $0x160] sm:$0xff]
      %v1072 = vld [vmem:[%s922 + $0x168] sm:$0xff]
      %v1073 = vld [vmem:[%s922 + $0x170] sm:$0xff]
      %v1074 = vld [vmem:[%s922 + $0x178] sm:$0xff]
      %v1075 = vld [vmem:[%s922 + $0x180] sm:$0xff]
      %v1076 = vld [vmem:[%s922 + $0x188] sm:$0xff]
      %v1077 = vld [vmem:[%s922 + $0x190] sm:$0xff]
      %v1078 = vld [vmem:[%s922 + $0x198] sm:$0xff]
      %v1079 = vld [vmem:[%s922 + $0x1a0] sm:$0xff]
      %v1080 = vld [vmem:[%s922 + $0x1a8] sm:$0xff]
      %v1081 = vld [vmem:[%s922 + $0x1b0] sm:$0xff]
      %v1082 = vld [vmem:[%s922 + $0x1b8] sm:$0xff]
      %v1083 = vld [vmem:[%s922 + $0x1c0] sm:$0xff]
      %v1084 = vld [vmem:[%s922 + $0x1c8] sm:$0xff]
      %v1085 = vld [vmem:[%s922 + $0x1d0] sm:$0xff]
      %v1086 = vld [vmem:[%s922 + $0x1d8] sm:$0xff]
      %v1087 = vld [vmem:[%s922 + $0x1e0] sm:$0xff]
      %v1088 = vld [vmem:[%s922 + $0x1e8] sm:$0xff]
      %v1089 = vld [vmem:[%s922 + $0x1f0] sm:$0xff]
      %v1090 = vld [vmem:[%s922 + $0x1f8] sm:$0xff]
      %v1091 = vpack.c.bf16 %v1028, %v1027
      %v1092 = vpack.c.bf16 %v1030, %v1029
      %v1093 = vpack.c.bf16 %v1032, %v1031
      %v1094 = vpack.c.bf16 %v1034, %v1033
      %v1095 = vpack.c.bf16 %v1036, %v1035
      %v1096 = vpack.c.bf16 %v1038, %v1037
      %v1097 = vpack.c.bf16 %v1040, %v1039
      %v1098 = vpack.c.bf16 %v1042, %v1041
      %v1099 = vpack.c.bf16 %v1044, %v1043
      %v1100 = vpack.c.bf16 %v1046, %v1045
      %v1101 = vpack.c.bf16 %v1048, %v1047
      %v1102 = vpack.c.bf16 %v1050, %v1049
      %v1103 = vpack.c.bf16 %v1052, %v1051
      %v1104 = vpack.c.bf16 %v1054, %v1053
      %v1105 = vpack.c.bf16 %v1056, %v1055
      %v1106 = vpack.c.bf16 %v1058, %v1057
      %v1107 = vpack.c.bf16 %v1060, %v1059
      %v1108 = vpack.c.bf16 %v1062, %v1061
      %v1109 = vpack.c.bf16 %v1064, %v1063
      %v1110 = vpack.c.bf16 %v1066, %v1065
      %v1111 = vpack.c.bf16 %v1068, %v1067
      %v1112 = vpack.c.bf16 %v1070, %v1069
      %v1113 = vpack.c.bf16 %v1072, %v1071
      %v1114 = vpack.c.bf16 %v1074, %v1073
      %v1115 = vpack.c.bf16 %v1076, %v1075
      %v1116 = vpack.c.bf16 %v1078, %v1077
      %v1117 = vpack.c.bf16 %v1080, %v1079
      %v1118 = vpack.c.bf16 %v1082, %v1081
      %v1119 = vpack.c.bf16 %v1084, %v1083
      %v1120 = vpack.c.bf16 %v1086, %v1085
      %v1121 = vpack.c.bf16 %v1088, %v1087
      %v1122 = vpack.c.bf16 %v1090, %v1089
      %v1123 = vld [vmem:[%s5] sm:$0xff]
      %v1124 = vld [vmem:[%s5 + $0x8] sm:$0xff]
      %v1125 = vld [vmem:[%s5 + $0x10] sm:$0xff]
      %v1126 = vld [vmem:[%s5 + $0x18] sm:$0x33]
      %v1127 = vld [vmem:[%s33] sm:$0x3]
      %v1129 = vlaneseq
      %v1130 = vshrl.u32 %v1129, 7
      %v1131 = vsub.s32 0, %v1130
      %v1132 = vrot.slane %v1127, %v1131
      %v1133 = vlaneseq
      %v1134 = vshrl.u32 %v1133, 7
      %v1135 = vsub.s32 1, %v1134
      %v1136 = vrot.slane %v1127, %v1135
      %v1143 = vunpack.c.l.b16 %v1123
      %v1144 = vunpack.c.h.b16 %v1123
      %v1145 = vunpack.c.l.b16 %v1124
      %v1146 = vunpack.c.h.b16 %v1124
      %v1147 = vunpack.c.l.b16 %v1125
      %v1148 = vunpack.c.h.b16 %v1125
      %v1149 = vunpack.c.l.b16 %v1126
      %v1150 = vunpack.c.h.b16 %v1126
      %v1151 = vpack.c.b16 %v1145, %v1143
      %v1152 = vpack.c.b16 %v1146, %v1144
      %v1153 = vpack.c.b16 %v1149, %v1147
      %v1154 = vpack.c.b16 %v1150, %v1148
      %vm1157 = vcmask 220160
      %v1159 = vsel %vm1157, %v995, 0
      %v1162 = vsel %vm1157, %v996, 0
      %v1165 = vsel %vm1157, %v997, 0
      %v1168 = vsel %vm1157, %v998, 0
      %v1171 = vsel %vm1157, %v999, 0
      %v1174 = vsel %vm1157, %v1000, 0
      %v1177 = vsel %vm1157, %v1001, 0
      %v1180 = vsel %vm1157, %v1002, 0
      %v1183 = vsel %vm1157, %v1003, 0
      %v1186 = vsel %vm1157, %v1004, 0
      %v1189 = vsel %vm1157, %v1005, 0
      %v1192 = vsel %vm1157, %v1006, 0
      %v1195 = vsel %vm1157, %v1007, 0
      %v1198 = vsel %vm1157, %v1008, 0
      %v1201 = vsel %vm1157, %v1009, 0
      %v1204 = vsel %vm1157, %v1010, 0
      %v1207 = vsel %vm1157, %v1011, 0
      %v1210 = vsel %vm1157, %v1012, 0
      %v1213 = vsel %vm1157, %v1013, 0
      %v1216 = vsel %vm1157, %v1014, 0
      %v1219 = vsel %vm1157, %v1015, 0
      %v1222 = vsel %vm1157, %v1016, 0
      %v1225 = vsel %vm1157, %v1017, 0
      %v1228 = vsel %vm1157, %v1018, 0
      %v1231 = vsel %vm1157, %v1019, 0
      %v1234 = vsel %vm1157, %v1020, 0
      %v1237 = vsel %vm1157, %v1021, 0
      %v1240 = vsel %vm1157, %v1022, 0
      %v1243 = vsel %vm1157, %v1023, 0
      %v1246 = vsel %vm1157, %v1024, 0
      %v1249 = vsel %vm1157, %v1025, 0
      %v1252 = vsel %vm1157, %v1026, 0
      %vm1254 = vcmask 1044480
      %vm1255 = vcmask 1045504
      %v1256 = vsel %vm1254, 4294967295, 65535
      %v1257 = vsel %vm1255, %v1256, 0
      %v1259 = vand.u32 %v1153, %v1257
      %v1262 = vand.u32 %v1154, %v1257
      %1264 = vmatprep.subr.bf16.mxu0 %v1152
      %1265 = vmatpush1.bf16.msra.mxu0 %v1151
      %1266 = vmatprep.subr.bf16.mxu0 %v1262
      %1267 = vmatpush1.bf16.msra.mxu0 %v1259
      %1268 = vmatprep.subr.bf16.mxu0 0
      %1269 = vmatpush1.bf16.msra.mxu0 0
      %1270 = vmatprep.subr.bf16.mxu0 0
      %1271 = vmatpush1.bf16.msra.mxu0 0
      %1272 = vmatprep.subr.bf16.mxu0 0
      %1273 = vmatpush1.bf16.msra.mxu0 0
      %1274 = vmatprep.subr.bf16.mxu0 0
      %1275 = vmatpush1.bf16.msra.mxu0 0
      %1276 = vmatprep.subr.bf16.mxu0 0
      %1277 = vmatpush1.bf16.msra.mxu0 0
      %1278 = vmatprep.subr.bf16.mxu0 0
      %1279 = vmatpush1.bf16.msra.mxu0 0
      %1280 = vmatprep.subr.bf16.mxu0 0
      %1281 = vmatpush1.bf16.msra.mxu0 0
      %1282 = vmatprep.subr.bf16.mxu0 0
      %1283 = vmatpush1.bf16.msra.mxu0 0
      %1284 = vmatprep.subr.bf16.mxu0 0
      %1285 = vmatpush1.bf16.msra.mxu0 0
      %1286 = vmatprep.subr.bf16.mxu0 0
      %1287 = vmatpush1.bf16.msra.mxu0 0
      %1288 = vmatprep.subr.bf16.mxu0 0
      %1289 = vmatpush1.bf16.msra.mxu0 0
      %1290 = vmatprep.subr.bf16.mxu0 0
      %1291 = vmatpush1.bf16.msra.mxu0 0
      %1292 = vmatprep.subr.bf16.mxu0 0
      %1293 = vmatpush1.bf16.msra.mxu0 0
      %1294 = vmatprep.subr.bf16.mxu0 0
      %1295 = vmatpush1.bf16.msra.mxu0 0
      %1296 = vmatprep.mubr.bf16.mxu0 0
      %1297 = vmatmul.mubr.bf16.gmra.mrb[0].mxu0 %v1159
      %v1298 = vpop.f32.mrb[0].mxu0
      %v1299 = vadd.f32 %v1132, %v1298
      %v1300 = vpop.f32.mrb[0].mxu0
      %v1301 = vadd.f32 %v1136, %v1300
      %v1302 = vpop.f32.mrb[0].mxu0
      %v1303 = vadd.f32 %v1132, %v1302
      %v1304 = vpop.f32.mrb[0].mxu0
      %v1305 = vadd.f32 %v1136, %v1304
      %1306 = vmatprep.mubr.bf16.mxu0 0
      %1307 = vmatmul.mubr.bf16.gmra.mrb[0].mxu0 %v1162
      %v1308 = vpop.f32.mrb[0].mxu0
      %v1309 = vadd.f32 %v1132, %v1308
      %v1310 = vpop.f32.mrb[0].mxu0
      %v1311 = vadd.f32 %v1136, %v1310
      %v1312 = vpop.f32.mrb[0].mxu0
      %v1313 = vadd.f32 %v1132, %v1312
      %v1314 = vpop.f32.mrb[0].mxu0
      %v1315 = vadd.f32 %v1136, %v1314
      %1316 = vmatprep.mubr.bf16.mxu0 0
      %1317 = vmatmul.mubr.bf16.gmra.mrb[0].mxu0 %v1165
      %v1318 = vpop.f32.mrb[0].mxu0
      %v1319 = vadd.f32 %v1132, %v1318
      %v1320 = vpop.f32.mrb[0].mxu0
      %v1321 = vadd.f32 %v1136, %v1320
      %v1322 = vpop.f32.mrb[0].mxu0
      %v1323 = vadd.f32 %v1132, %v1322
      %v1324 = vpop.f32.mrb[0].mxu0
      %v1325 = vadd.f32 %v1136, %v1324
      %1326 = vmatprep.mubr.bf16.mxu0 0
      %1327 = vmatmul.mubr.bf16.gmra.mrb[0].mxu0 %v1168
      %v1328 = vpop.f32.mrb[0].mxu0
      %v1329 = vadd.f32 %v1132, %v1328
      %v1330 = vpop.f32.mrb[0].mxu0
      %v1331 = vadd.f32 %v1136, %v1330
      %v1332 = vpop.f32.mrb[0].mxu0
      %v1333 = vadd.f32 %v1132, %v1332
      %v1334 = vpop.f32.mrb[0].mxu0
      %v1335 = vadd.f32 %v1136, %v1334
      %1336 = vmatprep.mubr.bf16.mxu0 0
      %1337 = vmatmul.mubr.bf16.gmra.mrb[0].mxu0 %v1171
      %v1338 = vpop.f32.mrb[0].mxu0
      %v1339 = vadd.f32 %v1132, %v1338
      %v1340 = vpop.f32.mrb[0].mxu0
      %v1341 = vadd.f32 %v1136, %v1340
      %v1342 = vpop.f32.mrb[0].mxu0
      %v1343 = vadd.f32 %v1132, %v1342
      %v1344 = vpop.f32.mrb[0].mxu0
      %v1345 = vadd.f32 %v1136, %v1344
      %1346 = vmatprep.mubr.bf16.mxu0 0
      %1347 = vmatmul.mubr.bf16.gmra.mrb[0].mxu0 %v1174
      %v1348 = vpop.f32.mrb[0].mxu0
      %v1349 = vadd.f32 %v1132, %v1348
      %v1350 = vpop.f32.mrb[0].mxu0
      %v1351 = vadd.f32 %v1136, %v1350
      %v1352 = vpop.f32.mrb[0].mxu0
      %v1353 = vadd.f32 %v1132, %v1352
      %v1354 = vpop.f32.mrb[0].mxu0
      %v1355 = vadd.f32 %v1136, %v1354
      %1356 = vmatprep.mubr.bf16.mxu0 0
      %1357 = vmatmul.mubr.bf16.gmra.mrb[0].mxu0 %v1177
      %v1358 = vpop.f32.mrb[0].mxu0
      %v1359 = vadd.f32 %v1132, %v1358
      %v1360 = vpop.f32.mrb[0].mxu0
      %v1361 = vadd.f32 %v1136, %v1360
      %v1362 = vpop.f32.mrb[0].mxu0
      %v1363 = vadd.f32 %v1132, %v1362
      %v1364 = vpop.f32.mrb[0].mxu0
      %v1365 = vadd.f32 %v1136, %v1364
      %1366 = vmatprep.mubr.bf16.mxu0 0
      %1367 = vmatmul.mubr.bf16.gmra.mrb[0].mxu0 %v1180
      %v1368 = vpop.f32.mrb[0].mxu0
      %v1369 = vadd.f32 %v1132, %v1368
      %v1370 = vpop.f32.mrb[0].mxu0
      %v1371 = vadd.f32 %v1136, %v1370
      %v1372 = vpop.f32.mrb[0].mxu0
      %v1373 = vadd.f32 %v1132, %v1372
      %v1374 = vpop.f32.mrb[0].mxu0
      %v1375 = vadd.f32 %v1136, %v1374
      %1376 = vmatprep.mubr.bf16.mxu0 0
      %1377 = vmatmul.mubr.bf16.gmra.mrb[0].mxu0 %v1183
      %v1378 = vpop.f32.mrb[0].mxu0
      %v1379 = vadd.f32 %v1132, %v1378
      %v1380 = vpop.f32.mrb[0].mxu0
      %v1381 = vadd.f32 %v1136, %v1380
      %v1382 = vpop.f32.mrb[0].mxu0
      %v1383 = vadd.f32 %v1132, %v1382
      %v1384 = vpop.f32.mrb[0].mxu0
      %v1385 = vadd.f32 %v1136, %v1384
      %1386 = vmatprep.mubr.bf16.mxu0 0
      %1387 = vmatmul.mubr.bf16.gmra.mrb[0].mxu0 %v1186
      %v1388 = vpop.f32.mrb[0].mxu0
      %v1389 = vadd.f32 %v1132, %v1388
      %v1390 = vpop.f32.mrb[0].mxu0
      %v1391 = vadd.f32 %v1136, %v1390
      %v1392 = vpop.f32.mrb[0].mxu0
      %v1393 = vadd.f32 %v1132, %v1392
      %v1394 = vpop.f32.mrb[0].mxu0
      %v1395 = vadd.f32 %v1136, %v1394
      %1396 = vmatprep.mubr.bf16.mxu0 0
      %1397 = vmatmul.mubr.bf16.gmra.mrb[0].mxu0 %v1189
      %v1398 = vpop.f32.mrb[0].mxu0
      %v1399 = vadd.f32 %v1132, %v1398
      %v1400 = vpop.f32.mrb[0].mxu0
      %v1401 = vadd.f32 %v1136, %v1400
      %v1402 = vpop.f32.mrb[0].mxu0
      %v1403 = vadd.f32 %v1132, %v1402
      %v1404 = vpop.f32.mrb[0].mxu0
      %v1405 = vadd.f32 %v1136, %v1404
      %1406 = vmatprep.mubr.bf16.mxu0 0
      %1407 = vmatmul.mubr.bf16.gmra.mrb[0].mxu0 %v1192
      %v1408 = vpop.f32.mrb[0].mxu0
      %v1409 = vadd.f32 %v1132, %v1408
      %v1410 = vpop.f32.mrb[0].mxu0
      %v1411 = vadd.f32 %v1136, %v1410
      %v1412 = vpop.f32.mrb[0].mxu0
      %v1413 = vadd.f32 %v1132, %v1412
      %v1414 = vpop.f32.mrb[0].mxu0
      %v1415 = vadd.f32 %v1136, %v1414
      %1416 = vmatprep.mubr.bf16.mxu0 0
      %1417 = vmatmul.mubr.bf16.gmra.mrb[0].mxu0 %v1195
      %v1418 = vpop.f32.mrb[0].mxu0
      %v1419 = vadd.f32 %v1132, %v1418
      %v1420 = vpop.f32.mrb[0].mxu0
      %v1421 = vadd.f32 %v1136, %v1420
      %v1422 = vpop.f32.mrb[0].mxu0
      %v1423 = vadd.f32 %v1132, %v1422
      %v1424 = vpop.f32.mrb[0].mxu0
      %v1425 = vadd.f32 %v1136, %v1424
      %1426 = vmatprep.mubr.bf16.mxu0 0
      %1427 = vmatmul.mubr.bf16.gmra.mrb[0].mxu0 %v1198
      %v1428 = vpop.f32.mrb[0].mxu0
      %v1429 = vadd.f32 %v1132, %v1428
      %v1430 = vpop.f32.mrb[0].mxu0
      %v1431 = vadd.f32 %v1136, %v1430
      %v1432 = vpop.f32.mrb[0].mxu0
      %v1433 = vadd.f32 %v1132, %v1432
      %v1434 = vpop.f32.mrb[0].mxu0
      %v1435 = vadd.f32 %v1136, %v1434
      %1436 = vmatprep.mubr.bf16.mxu0 0
      %1437 = vmatmul.mubr.bf16.gmra.mrb[0].mxu0 %v1201
      %v1438 = vpop.f32.mrb[0].mxu0
      %v1439 = vadd.f32 %v1132, %v1438
      %v1440 = vpop.f32.mrb[0].mxu0
      %v1441 = vadd.f32 %v1136, %v1440
      %v1442 = vpop.f32.mrb[0].mxu0
      %v1443 = vadd.f32 %v1132, %v1442
      %v1444 = vpop.f32.mrb[0].mxu0
      %v1445 = vadd.f32 %v1136, %v1444
      %1446 = vmatprep.mubr.bf16.mxu0 0
      %1447 = vmatmul.mubr.bf16.gmra.mrb[0].mxu0 %v1204
      %v1448 = vpop.f32.mrb[0].mxu0
      %v1449 = vadd.f32 %v1132, %v1448
      %v1450 = vpop.f32.mrb[0].mxu0
      %v1451 = vadd.f32 %v1136, %v1450
      %v1452 = vpop.f32.mrb[0].mxu0
      %v1453 = vadd.f32 %v1132, %v1452
      %v1454 = vpop.f32.mrb[0].mxu0
      %v1455 = vadd.f32 %v1136, %v1454
      %1456 = vmatprep.mubr.bf16.mxu0 0
      %1457 = vmatmul.mubr.bf16.gmra.mrb[0].mxu0 %v1207
      %v1458 = vpop.f32.mrb[0].mxu0
      %v1459 = vadd.f32 %v1132, %v1458
      %v1460 = vpop.f32.mrb[0].mxu0
      %v1461 = vadd.f32 %v1136, %v1460
      %v1462 = vpop.f32.mrb[0].mxu0
      %v1463 = vadd.f32 %v1132, %v1462
      %v1464 = vpop.f32.mrb[0].mxu0
      %v1465 = vadd.f32 %v1136, %v1464
      %1466 = vmatprep.mubr.bf16.mxu0 0
      %1467 = vmatmul.mubr.bf16.gmra.mrb[0].mxu0 %v1210
      %v1468 = vpop.f32.mrb[0].mxu0
      %v1469 = vadd.f32 %v1132, %v1468
      %v1470 = vpop.f32.mrb[0].mxu0
      %v1471 = vadd.f32 %v1136, %v1470
      %v1472 = vpop.f32.mrb[0].mxu0
      %v1473 = vadd.f32 %v1132, %v1472
      %v1474 = vpop.f32.mrb[0].mxu0
      %v1475 = vadd.f32 %v1136, %v1474
      %1476 = vmatprep.mubr.bf16.mxu0 0
      %1477 = vmatmul.mubr.bf16.gmra.mrb[0].mxu0 %v1213
      %v1478 = vpop.f32.mrb[0].mxu0
      %v1479 = vadd.f32 %v1132, %v1478
      %v1480 = vpop.f32.mrb[0].mxu0
      %v1481 = vadd.f32 %v1136, %v1480
      %v1482 = vpop.f32.mrb[0].mxu0
      %v1483 = vadd.f32 %v1132, %v1482
      %v1484 = vpop.f32.mrb[0].mxu0
      %v1485 = vadd.f32 %v1136, %v1484
      %1486 = vmatprep.mubr.bf16.mxu0 0
      %1487 = vmatmul.mubr.bf16.gmra.mrb[0].mxu0 %v1216
      %v1488 = vpop.f32.mrb[0].mxu0
      %v1489 = vadd.f32 %v1132, %v1488
      %v1490 = vpop.f32.mrb[0].mxu0
      %v1491 = vadd.f32 %v1136, %v1490
      %v1492 = vpop.f32.mrb[0].mxu0
      %v1493 = vadd.f32 %v1132, %v1492
      %v1494 = vpop.f32.mrb[0].mxu0
      %v1495 = vadd.f32 %v1136, %v1494
      %1496 = vmatprep.mubr.bf16.mxu0 0
      %1497 = vmatmul.mubr.bf16.gmra.mrb[0].mxu0 %v1219
      %v1498 = vpop.f32.mrb[0].mxu0
      %v1499 = vadd.f32 %v1132, %v1498
      %v1500 = vpop.f32.mrb[0].mxu0
      %v1501 = vadd.f32 %v1136, %v1500
      %v1502 = vpop.f32.mrb[0].mxu0
      %v1503 = vadd.f32 %v1132, %v1502
      %v1504 = vpop.f32.mrb[0].mxu0
      %v1505 = vadd.f32 %v1136, %v1504
      %1506 = vmatprep.mubr.bf16.mxu0 0
      %1507 = vmatmul.mubr.bf16.gmra.mrb[0].mxu0 %v1222
      %v1508 = vpop.f32.mrb[0].mxu0
      %v1509 = vadd.f32 %v1132, %v1508
      %v1510 = vpop.f32.mrb[0].mxu0
      %v1511 = vadd.f32 %v1136, %v1510
      %v1512 = vpop.f32.mrb[0].mxu0
      %v1513 = vadd.f32 %v1132, %v1512
      %v1514 = vpop.f32.mrb[0].mxu0
      %v1515 = vadd.f32 %v1136, %v1514
      %1516 = vmatprep.mubr.bf16.mxu0 0
      %1517 = vmatmul.mubr.bf16.gmra.mrb[0].mxu0 %v1225
      %v1518 = vpop.f32.mrb[0].mxu0
      %v1519 = vadd.f32 %v1132, %v1518
      %v1520 = vpop.f32.mrb[0].mxu0
      %v1521 = vadd.f32 %v1136, %v1520
      %v1522 = vpop.f32.mrb[0].mxu0
      %v1523 = vadd.f32 %v1132, %v1522
      %v1524 = vpop.f32.mrb[0].mxu0
      %v1525 = vadd.f32 %v1136, %v1524
      %1526 = vmatprep.mubr.bf16.mxu0 0
      %1527 = vmatmul.mubr.bf16.gmra.mrb[0].mxu0 %v1228
      %v1528 = vpop.f32.mrb[0].mxu0
      %v1529 = vadd.f32 %v1132, %v1528
      %v1530 = vpop.f32.mrb[0].mxu0
      %v1531 = vadd.f32 %v1136, %v1530
      %v1532 = vpop.f32.mrb[0].mxu0
      %v1533 = vadd.f32 %v1132, %v1532
      %v1534 = vpop.f32.mrb[0].mxu0
      %v1535 = vadd.f32 %v1136, %v1534
      %1536 = vmatprep.mubr.bf16.mxu0 0
      %1537 = vmatmul.mubr.bf16.gmra.mrb[0].mxu0 %v1231
      %v1538 = vpop.f32.mrb[0].mxu0
      %v1539 = vadd.f32 %v1132, %v1538
      %v1540 = vpop.f32.mrb[0].mxu0
      %v1541 = vadd.f32 %v1136, %v1540
      %v1542 = vpop.f32.mrb[0].mxu0
      %v1543 = vadd.f32 %v1132, %v1542
      %v1544 = vpop.f32.mrb[0].mxu0
      %v1545 = vadd.f32 %v1136, %v1544
      %1546 = vmatprep.mubr.bf16.mxu0 0
      %1547 = vmatmul.mubr.bf16.gmra.mrb[0].mxu0 %v1234
      %v1548 = vpop.f32.mrb[0].mxu0
      %v1549 = vadd.f32 %v1132, %v1548
      %v1550 = vpop.f32.mrb[0].mxu0
      %v1551 = vadd.f32 %v1136, %v1550
      %v1552 = vpop.f32.mrb[0].mxu0
      %v1553 = vadd.f32 %v1132, %v1552
      %v1554 = vpop.f32.mrb[0].mxu0
      %v1555 = vadd.f32 %v1136, %v1554
      %1556 = vmatprep.mubr.bf16.mxu0 0
      %1557 = vmatmul.mubr.bf16.gmra.mrb[0].mxu0 %v1237
      %v1558 = vpop.f32.mrb[0].mxu0
      %v1559 = vadd.f32 %v1132, %v1558
      %v1560 = vpop.f32.mrb[0].mxu0
      %v1561 = vadd.f32 %v1136, %v1560
      %v1562 = vpop.f32.mrb[0].mxu0
      %v1563 = vadd.f32 %v1132, %v1562
      %v1564 = vpop.f32.mrb[0].mxu0
      %v1565 = vadd.f32 %v1136, %v1564
      %1566 = vmatprep.mubr.bf16.mxu0 0
      %1567 = vmatmul.mubr.bf16.gmra.mrb[0].mxu0 %v1240
      %v1568 = vpop.f32.mrb[0].mxu0
      %v1569 = vadd.f32 %v1132, %v1568
      %v1570 = vpop.f32.mrb[0].mxu0
      %v1571 = vadd.f32 %v1136, %v1570
      %v1572 = vpop.f32.mrb[0].mxu0
      %v1573 = vadd.f32 %v1132, %v1572
      %v1574 = vpop.f32.mrb[0].mxu0
      %v1575 = vadd.f32 %v1136, %v1574
      %1576 = vmatprep.mubr.bf16.mxu0 0
      %1577 = vmatmul.mubr.bf16.gmra.mrb[0].mxu0 %v1243
      %v1578 = vpop.f32.mrb[0].mxu0
      %v1579 = vadd.f32 %v1132, %v1578
      %v1580 = vpop.f32.mrb[0].mxu0
      %v1581 = vadd.f32 %v1136, %v1580
      %v1582 = vpop.f32.mrb[0].mxu0
      %v1583 = vadd.f32 %v1132, %v1582
      %v1584 = vpop.f32.mrb[0].mxu0
      %v1585 = vadd.f32 %v1136, %v1584
      %1586 = vmatprep.mubr.bf16.mxu0 0
      %1587 = vmatmul.mubr.bf16.gmra.mrb[0].mxu0 %v1246
      %v1588 = vpop.f32.mrb[0].mxu0
      %v1589 = vadd.f32 %v1132, %v1588
      %v1590 = vpop.f32.mrb[0].mxu0
      %v1591 = vadd.f32 %v1136, %v1590
      %v1592 = vpop.f32.mrb[0].mxu0
      %v1593 = vadd.f32 %v1132, %v1592
      %v1594 = vpop.f32.mrb[0].mxu0
      %v1595 = vadd.f32 %v1136, %v1594
      %1596 = vmatprep.mubr.bf16.mxu0 0
      %1597 = vmatmul.mubr.bf16.gmra.mrb[0].mxu0 %v1249
      %v1598 = vpop.f32.mrb[0].mxu0
      %v1599 = vadd.f32 %v1132, %v1598
      %v1600 = vpop.f32.mrb[0].mxu0
      %v1601 = vadd.f32 %v1136, %v1600
      %v1602 = vpop.f32.mrb[0].mxu0
      %v1603 = vadd.f32 %v1132, %v1602
      %v1604 = vpop.f32.mrb[0].mxu0
      %v1605 = vadd.f32 %v1136, %v1604
      %1606 = vmatprep.mubr.bf16.mxu0 0
      %1607 = vmatmul.mubr.bf16.gmra.mrb[0].mxu0 %v1252
      %v1608 = vpop.f32.mrb[0].mxu0
      %v1609 = vadd.f32 %v1132, %v1608
      %v1610 = vpop.f32.mrb[0].mxu0
      %v1611 = vadd.f32 %v1136, %v1610
      %v1612 = vpop.f32.mrb[0].mxu0
      %v1613 = vadd.f32 %v1132, %v1612
      %v1614 = vpop.f32.mrb[0].mxu0
      %v1615 = vadd.f32 %v1136, %v1614
      %1616 = vdwg.mxu0
      %v1617 = vmax.f32 %v1299, 0.0
      %v1618 = vmax.f32 %v1301, 0.0
      %v1619 = vmax.f32 %v1303, 0.0
      %v1620 = vmax.f32 %v1305, 0.0
      %v1621 = vmax.f32 %v1309, 0.0
      %v1622 = vmax.f32 %v1311, 0.0
      %v1623 = vmax.f32 %v1313, 0.0
      %v1624 = vmax.f32 %v1315, 0.0
      %v1625 = vmax.f32 %v1319, 0.0
      %v1626 = vmax.f32 %v1321, 0.0
      %v1627 = vmax.f32 %v1323, 0.0
      %v1628 = vmax.f32 %v1325, 0.0
      %v1629 = vmax.f32 %v1329, 0.0
      %v1630 = vmax.f32 %v1331, 0.0
      %v1631 = vmax.f32 %v1333, 0.0
      %v1632 = vmax.f32 %v1335, 0.0
      %v1633 = vmax.f32 %v1339, 0.0
      %v1634 = vmax.f32 %v1341, 0.0
      %v1635 = vmax.f32 %v1343, 0.0
      %v1636 = vmax.f32 %v1345, 0.0
      %v1637 = vmax.f32 %v1349, 0.0
      %v1638 = vmax.f32 %v1351, 0.0
      %v1639 = vmax.f32 %v1353, 0.0
      %v1640 = vmax.f32 %v1355, 0.0
      %v1641 = vmax.f32 %v1359, 0.0
      %v1642 = vmax.f32 %v1361, 0.0
      %v1643 = vmax.f32 %v1363, 0.0
      %v1644 = vmax.f32 %v1365, 0.0
      %v1645 = vmax.f32 %v1369, 0.0
      %v1646 = vmax.f32 %v1371, 0.0
      %v1647 = vmax.f32 %v1373, 0.0
      %v1648 = vmax.f32 %v1375, 0.0
      %v1649 = vmax.f32 %v1379, 0.0
      %v1650 = vmax.f32 %v1381, 0.0
      %v1651 = vmax.f32 %v1383, 0.0
      %v1652 = vmax.f32 %v1385, 0.0
      %v1653 = vmax.f32 %v1389, 0.0
      %v1654 = vmax.f32 %v1391, 0.0
      %v1655 = vmax.f32 %v1393, 0.0
      %v1656 = vmax.f32 %v1395, 0.0
      %v1657 = vmax.f32 %v1399, 0.0
      %v1658 = vmax.f32 %v1401, 0.0
      %v1659 = vmax.f32 %v1403, 0.0
      %v1660 = vmax.f32 %v1405, 0.0
      %v1661 = vmax.f32 %v1409, 0.0
      %v1662 = vmax.f32 %v1411, 0.0
      %v1663 = vmax.f32 %v1413, 0.0
      %v1664 = vmax.f32 %v1415, 0.0
      %v1665 = vmax.f32 %v1419, 0.0
      %v1666 = vmax.f32 %v1421, 0.0
      %v1667 = vmax.f32 %v1423, 0.0
      %v1668 = vmax.f32 %v1425, 0.0
      %v1669 = vmax.f32 %v1429, 0.0
      %v1670 = vmax.f32 %v1431, 0.0
      %v1671 = vmax.f32 %v1433, 0.0
      %v1672 = vmax.f32 %v1435, 0.0
      %v1673 = vmax.f32 %v1439, 0.0
      %v1674 = vmax.f32 %v1441, 0.0
      %v1675 = vmax.f32 %v1443, 0.0
      %v1676 = vmax.f32 %v1445, 0.0
      %v1677 = vmax.f32 %v1449, 0.0
      %v1678 = vmax.f32 %v1451, 0.0
      %v1679 = vmax.f32 %v1453, 0.0
      %v1680 = vmax.f32 %v1455, 0.0
      %v1681 = vmax.f32 %v1459, 0.0
      %v1682 = vmax.f32 %v1461, 0.0
      %v1683 = vmax.f32 %v1463, 0.0
      %v1684 = vmax.f32 %v1465, 0.0
      %v1685 = vmax.f32 %v1469, 0.0
      %v1686 = vmax.f32 %v1471, 0.0
      %v1687 = vmax.f32 %v1473, 0.0
      %v1688 = vmax.f32 %v1475, 0.0
      %v1689 = vmax.f32 %v1479, 0.0
      %v1690 = vmax.f32 %v1481, 0.0
      %v1691 = vmax.f32 %v1483, 0.0
      %v1692 = vmax.f32 %v1485, 0.0
      %v1693 = vmax.f32 %v1489, 0.0
      %v1694 = vmax.f32 %v1491, 0.0
      %v1695 = vmax.f32 %v1493, 0.0
      %v1696 = vmax.f32 %v1495, 0.0
      %v1697 = vmax.f32 %v1499, 0.0
      %v1698 = vmax.f32 %v1501, 0.0
      %v1699 = vmax.f32 %v1503, 0.0
      %v1700 = vmax.f32 %v1505, 0.0
      %v1701 = vmax.f32 %v1509, 0.0
      %v1702 = vmax.f32 %v1511, 0.0
      %v1703 = vmax.f32 %v1513, 0.0
      %v1704 = vmax.f32 %v1515, 0.0
      %v1705 = vmax.f32 %v1519, 0.0
      %v1706 = vmax.f32 %v1521, 0.0
      %v1707 = vmax.f32 %v1523, 0.0
      %v1708 = vmax.f32 %v1525, 0.0
      %v1709 = vmax.f32 %v1529, 0.0
      %v1710 = vmax.f32 %v1531, 0.0
      %v1711 = vmax.f32 %v1533, 0.0
      %v1712 = vmax.f32 %v1535, 0.0
      %v1713 = vmax.f32 %v1539, 0.0
      %v1714 = vmax.f32 %v1541, 0.0
      %v1715 = vmax.f32 %v1543, 0.0
      %v1716 = vmax.f32 %v1545, 0.0
      %v1717 = vmax.f32 %v1549, 0.0
      %v1718 = vmax.f32 %v1551, 0.0
      %v1719 = vmax.f32 %v1553, 0.0
      %v1720 = vmax.f32 %v1555, 0.0
      %v1721 = vmax.f32 %v1559, 0.0
      %v1722 = vmax.f32 %v1561, 0.0
      %v1723 = vmax.f32 %v1563, 0.0
      %v1724 = vmax.f32 %v1565, 0.0
      %v1725 = vmax.f32 %v1569, 0.0
      %v1726 = vmax.f32 %v1571, 0.0
      %v1727 = vmax.f32 %v1573, 0.0
      %v1728 = vmax.f32 %v1575, 0.0
      %v1729 = vmax.f32 %v1579, 0.0
      %v1730 = vmax.f32 %v1581, 0.0
      %v1731 = vmax.f32 %v1583, 0.0
      %v1732 = vmax.f32 %v1585, 0.0
      %v1733 = vmax.f32 %v1589, 0.0
      %v1734 = vmax.f32 %v1591, 0.0
      %v1735 = vmax.f32 %v1593, 0.0
      %v1736 = vmax.f32 %v1595, 0.0
      %v1737 = vmax.f32 %v1599, 0.0
      %v1738 = vmax.f32 %v1601, 0.0
      %v1739 = vmax.f32 %v1603, 0.0
      %v1740 = vmax.f32 %v1605, 0.0
      %v1741 = vmax.f32 %v1609, 0.0
      %v1742 = vmax.f32 %v1611, 0.0
      %v1743 = vmax.f32 %v1613, 0.0
      %v1744 = vmax.f32 %v1615, 0.0
      %v1745 = vpack.c.bf16 %v1619, %v1617
      %v1746 = vpack.c.bf16 %v1620, %v1618
      %v1747 = vpack.c.bf16 %v1623, %v1621
      %v1748 = vpack.c.bf16 %v1624, %v1622
      %v1749 = vpack.c.bf16 %v1627, %v1625
      %v1750 = vpack.c.bf16 %v1628, %v1626
      %v1751 = vpack.c.bf16 %v1631, %v1629
      %v1752 = vpack.c.bf16 %v1632, %v1630
      %v1753 = vpack.c.bf16 %v1635, %v1633
      %v1754 = vpack.c.bf16 %v1636, %v1634
      %v1755 = vpack.c.bf16 %v1639, %v1637
      %v1756 = vpack.c.bf16 %v1640, %v1638
      %v1757 = vpack.c.bf16 %v1643, %v1641
      %v1758 = vpack.c.bf16 %v1644, %v1642
      %v1759 = vpack.c.bf16 %v1647, %v1645
      %v1760 = vpack.c.bf16 %v1648, %v1646
      %v1761 = vpack.c.bf16 %v1651, %v1649
      %v1762 = vpack.c.bf16 %v1652, %v1650
      %v1763 = vpack.c.bf16 %v1655, %v1653
      %v1764 = vpack.c.bf16 %v1656, %v1654
      %v1765 = vpack.c.bf16 %v1659, %v1657
      %v1766 = vpack.c.bf16 %v1660, %v1658
      %v1767 = vpack.c.bf16 %v1663, %v1661
      %v1768 = vpack.c.bf16 %v1664, %v1662
      %v1769 = vpack.c.bf16 %v1667, %v1665
      %v1770 = vpack.c.bf16 %v1668, %v1666
      %v1771 = vpack.c.bf16 %v1671, %v1669
      %v1772 = vpack.c.bf16 %v1672, %v1670
      %v1773 = vpack.c.bf16 %v1675, %v1673
      %v1774 = vpack.c.bf16 %v1676, %v1674
      %v1775 = vpack.c.bf16 %v1679, %v1677
      %v1776 = vpack.c.bf16 %v1680, %v1678
      %v1777 = vpack.c.bf16 %v1683, %v1681
      %v1778 = vpack.c.bf16 %v1684, %v1682
      %v1779 = vpack.c.bf16 %v1687, %v1685
      %v1780 = vpack.c.bf16 %v1688, %v1686
      %v1781 = vpack.c.bf16 %v1691, %v1689
      %v1782 = vpack.c.bf16 %v1692, %v1690
      %v1783 = vpack.c.bf16 %v1695, %v1693
      %v1784 = vpack.c.bf16 %v1696, %v1694
      %v1785 = vpack.c.bf16 %v1699, %v1697
      %v1786 = vpack.c.bf16 %v1700, %v1698
      %v1787 = vpack.c.bf16 %v1703, %v1701
      %v1788 = vpack.c.bf16 %v1704, %v1702
      %v1789 = vpack.c.bf16 %v1707, %v1705
      %v1790 = vpack.c.bf16 %v1708, %v1706
      %v1791 = vpack.c.bf16 %v1711, %v1709
      %v1792 = vpack.c.bf16 %v1712, %v1710
      %v1793 = vpack.c.bf16 %v1715, %v1713
      %v1794 = vpack.c.bf16 %v1716, %v1714
      %v1795 = vpack.c.bf16 %v1719, %v1717
      %v1796 = vpack.c.bf16 %v1720, %v1718
      %v1797 = vpack.c.bf16 %v1723, %v1721
      %v1798 = vpack.c.bf16 %v1724, %v1722
      %v1799 = vpack.c.bf16 %v1727, %v1725
      %v1800 = vpack.c.bf16 %v1728, %v1726
      %v1801 = vpack.c.bf16 %v1731, %v1729
      %v1802 = vpack.c.bf16 %v1732, %v1730
      %v1803 = vpack.c.bf16 %v1735, %v1733
      %v1804 = vpack.c.bf16 %v1736, %v1734
      %v1805 = vpack.c.bf16 %v1739, %v1737
      %v1806 = vpack.c.bf16 %v1740, %v1738
      %v1807 = vpack.c.bf16 %v1743, %v1741
      %v1808 = vpack.c.bf16 %v1744, %v1742
      %v1809 = vld [vmem:[%s7] sm:$0xff]
      %v1810 = vld [vmem:[%s7 + $0x8] sm:$0xff]
      %v1811 = vld [vmem:[%s7 + $0x10] sm:$0xff]
      %v1812 = vld [vmem:[%s7 + $0x18] sm:$0xff]
      %v1813 = vld [vmem:[%s7 + $0x20] sm:$0xff]
      %v1814 = vld [vmem:[%s7 + $0x28] sm:$0xff]
      %v1815 = vld [vmem:[%s7 + $0x30] sm:$0xff]
      %v1816 = vld [vmem:[%s7 + $0x38] sm:$0xff]
      %v1817 = vld [vmem:[%s7 + $0x40] sm:$0xff]
      %v1818 = vld [vmem:[%s7 + $0x48] sm:$0xff]
      %v1819 = vld [vmem:[%s7 + $0x50] sm:$0xff]
      %v1820 = vld [vmem:[%s7 + $0x58] sm:$0xff]
      %v1821 = vld [vmem:[%s7 + $0x60] sm:$0xff]
      %v1822 = vld [vmem:[%s7 + $0x68] sm:$0xff]
      %v1823 = vld [vmem:[%s7 + $0x70] sm:$0xff]
      %v1824 = vld [vmem:[%s7 + $0x78] sm:$0xff]
      %v1825 = vld [vmem:[%s7 + $0x80] sm:$0xff]
      %v1826 = vld [vmem:[%s7 + $0x88] sm:$0xff]
      %v1827 = vld [vmem:[%s7 + $0x90] sm:$0xff]
      %v1828 = vld [vmem:[%s7 + $0x98] sm:$0xff]
      %v1829 = vld [vmem:[%s7 + $0xa0] sm:$0xff]
      %v1830 = vld [vmem:[%s7 + $0xa8] sm:$0xff]
      %v1831 = vld [vmem:[%s7 + $0xb0] sm:$0xff]
      %v1832 = vld [vmem:[%s7 + $0xb8] sm:$0xff]
      %v1833 = vld [vmem:[%s7 + $0xc0] sm:$0xff]
      %v1834 = vld [vmem:[%s35] sm:$0x3]
      %v1836 = vlaneseq
      %v1837 = vshrl.u32 %v1836, 7
      %v1838 = vsub.s32 0, %v1837
      %v1839 = vrot.slane %v1834, %v1838
      %v1840 = vlaneseq
      %v1841 = vshrl.u32 %v1840, 7
      %v1842 = vsub.s32 1, %v1841
      %v1843 = vrot.slane %v1834, %v1842
      %v1871 = vunpack.c.l.b16 %v1809
      %v1872 = vunpack.c.h.b16 %v1809
      %v1873 = vunpack.c.l.b16 %v1810
      %v1874 = vunpack.c.h.b16 %v1810
      %v1875 = vunpack.c.l.b16 %v1811
      %v1876 = vunpack.c.h.b16 %v1811
      %v1877 = vunpack.c.l.b16 %v1812
      %v1878 = vunpack.c.h.b16 %v1812
      %v1879 = vunpack.c.l.b16 %v1813
      %v1880 = vunpack.c.h.b16 %v1813
      %v1881 = vunpack.c.l.b16 %v1814
      %v1882 = vunpack.c.h.b16 %v1814
      %v1883 = vunpack.c.l.b16 %v1815
      %v1884 = vunpack.c.h.b16 %v1815
      %v1885 = vunpack.c.l.b16 %v1816
      %v1886 = vunpack.c.h.b16 %v1816
      %v1887 = vunpack.c.l.b16 %v1817
      %v1888 = vunpack.c.h.b16 %v1817
      %v1889 = vunpack.c.l.b16 %v1818
      %v1890 = vunpack.c.h.b16 %v1818
      %v1891 = vunpack.c.l.b16 %v1819
      %v1892 = vunpack.c.h.b16 %v1819
      %v1893 = vunpack.c.l.b16 %v1820
      %v1894 = vunpack.c.h.b16 %v1820
      %v1895 = vunpack.c.l.b16 %v1821
      %v1896 = vunpack.c.h.b16 %v1821
      %v1897 = vunpack.c.l.b16 %v1822
      %v1898 = vunpack.c.h.b16 %v1822
      %v1899 = vunpack.c.l.b16 %v1823
      %v1900 = vunpack.c.h.b16 %v1823
      %v1901 = vunpack.c.l.b16 %v1824
      %v1902 = vunpack.c.h.b16 %v1824
      %v1903 = vunpack.c.l.b16 %v1825
      %v1904 = vunpack.c.h.b16 %v1825
      %v1905 = vunpack.c.l.b16 %v1826
      %v1906 = vunpack.c.h.b16 %v1826
      %v1907 = vunpack.c.l.b16 %v1827
      %v1908 = vunpack.c.h.b16 %v1827
      %v1909 = vunpack.c.l.b16 %v1828
      %v1910 = vunpack.c.h.b16 %v1828
      %v1911 = vunpack.c.l.b16 %v1829
      %v1912 = vunpack.c.h.b16 %v1829
      %v1913 = vunpack.c.l.b16 %v1830
      %v1914 = vunpack.c.h.b16 %v1830
      %v1915 = vunpack.c.l.b16 %v1831
      %v1916 = vunpack.c.h.b16 %v1831
      %v1917 = vunpack.c.l.b16 %v1832
      %v1918 = vunpack.c.h.b16 %v1832
      %v1919 = vunpack.c.l.b16 %v1833
      %v1920 = vunpack.c.h.b16 %v1833
      %v1921 = vpack.c.b16 %v1873, %v1871
      %v1922 = vpack.c.b16 %v1874, %v1872
      %v1923 = vpack.c.b16 %v1877, %v1875
      %v1924 = vpack.c.b16 %v1878, %v1876
      %v1925 = vpack.c.b16 %v1881, %v1879
      %v1926 = vpack.c.b16 %v1882, %v1880
      %v1927 = vpack.c.b16 %v1885, %v1883
      %v1928 = vpack.c.b16 %v1886, %v1884
      %v1929 = vpack.c.b16 %v1889, %v1887
      %v1930 = vpack.c.b16 %v1890, %v1888
      %v1931 = vpack.c.b16 %v1893, %v1891
      %v1932 = vpack.c.b16 %v1894, %v1892
      %v1933 = vpack.c.b16 %v1897, %v1895
      %v1934 = vpack.c.b16 %v1898, %v1896
      %v1935 = vpack.c.b16 %v1901, %v1899
      %v1936 = vpack.c.b16 %v1902, %v1900
      %v1937 = vpack.c.b16 %v1905, %v1903
      %v1938 = vpack.c.b16 %v1906, %v1904
      %v1939 = vpack.c.b16 %v1909, %v1907
      %v1940 = vpack.c.b16 %v1910, %v1908
      %v1941 = vpack.c.b16 %v1913, %v1911
      %v1942 = vpack.c.b16 %v1914, %v1912
      %v1943 = vpack.c.b16 %v1917, %v1915
      %v1944 = vpack.c.b16 %v1918, %v1916
      %v1945 = vpack.c.b16 %v1919, %v1919
      %v1946 = vpack.c.b16 %v1920, %v1920
      %vm1971 = vcmask 588800
      %v1973 = vsel %vm1971, %v1746, 0
      %v1976 = vsel %vm1971, %v1748, 0
      %v1979 = vsel %vm1971, %v1750, 0
      %v1982 = vsel %vm1971, %v1752, 0
      %v1985 = vsel %vm1971, %v1754, 0
      %v1988 = vsel %vm1971, %v1756, 0
      %v1991 = vsel %vm1971, %v1758, 0
      %v1994 = vsel %vm1971, %v1760, 0
      %v1997 = vsel %vm1971, %v1762, 0
      %v2000 = vsel %vm1971, %v1764, 0
      %v2003 = vsel %vm1971, %v1766, 0
      %v2006 = vsel %vm1971, %v1768, 0
      %v2009 = vsel %vm1971, %v1770, 0
      %v2012 = vsel %vm1971, %v1772, 0
      %v2015 = vsel %vm1971, %v1774, 0
      %v2018 = vsel %vm1971, %v1776, 0
      %v2021 = vsel %vm1971, %v1778, 0
      %v2024 = vsel %vm1971, %v1780, 0
      %v2027 = vsel %vm1971, %v1782, 0
      %v2030 = vsel %vm1971, %v1784, 0
      %v2033 = vsel %vm1971, %v1786, 0
      %v2036 = vsel %vm1971, %v1788, 0
      %v2039 = vsel %vm1971, %v1790, 0
      %v2042 = vsel %vm1971, %v1792, 0
      %v2045 = vsel %vm1971, %v1794, 0
      %v2048 = vsel %vm1971, %v1796, 0
      %v2051 = vsel %vm1971, %v1798, 0
      %v2054 = vsel %vm1971, %v1800, 0
      %v2057 = vsel %vm1971, %v1802, 0
      %v2060 = vsel %vm1971, %v1804, 0
      %v2063 = vsel %vm1971, %v1806, 0
      %v2066 = vsel %vm1971, %v1808, 0
      %vm2068 = vcmask 1043456
      %v2070 = vsel %vm2068, %v1945, 0
      %v2073 = vsel %vm2068, %v1946, 0
      %2075 = vmatprep.subr.bf16.mxu0 %v1922
      %2076 = vmatpush1.bf16.msra.mxu0 %v1921
      %2077 = vmatprep.subr.bf16.mxu0 %v1924
      %2078 = vmatpush1.bf16.msra.mxu0 %v1923
      %2079 = vmatprep.subr.bf16.mxu0 %v1926
      %2080 = vmatpush1.bf16.msra.mxu0 %v1925
      %2081 = vmatprep.subr.bf16.mxu0 %v1928
      %2082 = vmatpush1.bf16.msra.mxu0 %v1927
      %2083 = vmatprep.subr.bf16.mxu0 %v1930
      %2084 = vmatpush1.bf16.msra.mxu0 %v1929
      %2085 = vmatprep.subr.bf16.mxu0 %v1932
      %2086 = vmatpush1.bf16.msra.mxu0 %v1931
      %2087 = vmatprep.subr.bf16.mxu0 %v1934
      %2088 = vmatpush1.bf16.msra.mxu0 %v1933
      %2089 = vmatprep.subr.bf16.mxu0 %v1936
      %2090 = vmatpush1.bf16.msra.mxu0 %v1935
      %2091 = vmatprep.subr.bf16.mxu0 %v1938
      %2092 = vmatpush1.bf16.msra.mxu0 %v1937
      %2093 = vmatprep.subr.bf16.mxu0 %v1940
      %2094 = vmatpush1.bf16.msra.mxu0 %v1939
      %2095 = vmatprep.subr.bf16.mxu0 %v1942
      %2096 = vmatpush1.bf16.msra.mxu0 %v1941
      %2097 = vmatprep.subr.bf16.mxu0 %v1944
      %2098 = vmatpush1.bf16.msra.mxu0 %v1943
      %2099 = vmatprep.subr.bf16.mxu0 %v2073
      %2100 = vmatpush1.bf16.msra.mxu0 %v2070
      %2101 = vmatprep.subr.bf16.mxu0 0
      %2102 = vmatpush1.bf16.msra.mxu0 0
      %2103 = vmatprep.subr.bf16.mxu0 0
      %2104 = vmatpush1.bf16.msra.mxu0 0
      %2105 = vmatprep.subr.bf16.mxu0 0
      %2106 = vmatpush1.bf16.msra.mxu0 0
      %2107 = vmatprep.mubr.bf16.mxu0 %v1973
      %2108 = vmatmul.mubr.bf16.gmra.mrb[0].mxu0 %v1745
      %v2109 = vpop.f32.mrb[0].mxu0
      %v2110 = vadd.f32 %v1839, %v2109
      %v2111 = vpop.f32.mrb[0].mxu0
      %v2112 = vadd.f32 %v1843, %v2111
      %v2113 = vpop.f32.mrb[0].mxu0
      %v2114 = vadd.f32 %v1839, %v2113
      %v2115 = vpop.f32.mrb[0].mxu0
      %v2116 = vadd.f32 %v1843, %v2115
      %2117 = vmatprep.mubr.bf16.mxu0 %v1976
      %2118 = vmatmul.mubr.bf16.gmra.mrb[0].mxu0 %v1747
      %v2119 = vpop.f32.mrb[0].mxu0
      %v2120 = vadd.f32 %v1839, %v2119
      %v2121 = vpop.f32.mrb[0].mxu0
      %v2122 = vadd.f32 %v1843, %v2121
      %v2123 = vpop.f32.mrb[0].mxu0
      %v2124 = vadd.f32 %v1839, %v2123
      %v2125 = vpop.f32.mrb[0].mxu0
      %v2126 = vadd.f32 %v1843, %v2125
      %2127 = vmatprep.mubr.bf16.mxu0 %v1979
      %2128 = vmatmul.mubr.bf16.gmra.mrb[0].mxu0 %v1749
      %v2129 = vpop.f32.mrb[0].mxu0
      %v2130 = vadd.f32 %v1839, %v2129
      %v2131 = vpop.f32.mrb[0].mxu0
      %v2132 = vadd.f32 %v1843, %v2131
      %v2133 = vpop.f32.mrb[0].mxu0
      %v2134 = vadd.f32 %v1839, %v2133
      %v2135 = vpop.f32.mrb[0].mxu0
      %v2136 = vadd.f32 %v1843, %v2135
      %2137 = vmatprep.mubr.bf16.mxu0 %v1982
      %2138 = vmatmul.mubr.bf16.gmra.mrb[0].mxu0 %v1751
      %v2139 = vpop.f32.mrb[0].mxu0
      %v2140 = vadd.f32 %v1839, %v2139
      %v2141 = vpop.f32.mrb[0].mxu0
      %v2142 = vadd.f32 %v1843, %v2141
      %v2143 = vpop.f32.mrb[0].mxu0
      %v2144 = vadd.f32 %v1839, %v2143
      %v2145 = vpop.f32.mrb[0].mxu0
      %v2146 = vadd.f32 %v1843, %v2145
      %2147 = vmatprep.mubr.bf16.mxu0 %v1985
      %2148 = vmatmul.mubr.bf16.gmra.mrb[0].mxu0 %v1753
      %v2149 = vpop.f32.mrb[0].mxu0
      %v2150 = vadd.f32 %v1839, %v2149
      %v2151 = vpop.f32.mrb[0].mxu0
      %v2152 = vadd.f32 %v1843, %v2151
      %v2153 = vpop.f32.mrb[0].mxu0
      %v2154 = vadd.f32 %v1839, %v2153
      %v2155 = vpop.f32.mrb[0].mxu0
      %v2156 = vadd.f32 %v1843, %v2155
      %2157 = vmatprep.mubr.bf16.mxu0 %v1988
      %2158 = vmatmul.mubr.bf16.gmra.mrb[0].mxu0 %v1755
      %v2159 = vpop.f32.mrb[0].mxu0
      %v2160 = vadd.f32 %v1839, %v2159
      %v2161 = vpop.f32.mrb[0].mxu0
      %v2162 = vadd.f32 %v1843, %v2161
      %v2163 = vpop.f32.mrb[0].mxu0
      %v2164 = vadd.f32 %v1839, %v2163
      %v2165 = vpop.f32.mrb[0].mxu0
      %v2166 = vadd.f32 %v1843, %v2165
      %2167 = vmatprep.mubr.bf16.mxu0 %v1991
      %2168 = vmatmul.mubr.bf16.gmra.mrb[0].mxu0 %v1757
      %v2169 = vpop.f32.mrb[0].mxu0
      %v2170 = vadd.f32 %v1839, %v2169
      %v2171 = vpop.f32.mrb[0].mxu0
      %v2172 = vadd.f32 %v1843, %v2171
      %v2173 = vpop.f32.mrb[0].mxu0
      %v2174 = vadd.f32 %v1839, %v2173
      %v2175 = vpop.f32.mrb[0].mxu0
      %v2176 = vadd.f32 %v1843, %v2175
      %2177 = vmatprep.mubr.bf16.mxu0 %v1994
      %2178 = vmatmul.mubr.bf16.gmra.mrb[0].mxu0 %v1759
      %v2179 = vpop.f32.mrb[0].mxu0
      %v2180 = vadd.f32 %v1839, %v2179
      %v2181 = vpop.f32.mrb[0].mxu0
      %v2182 = vadd.f32 %v1843, %v2181
      %v2183 = vpop.f32.mrb[0].mxu0
      %v2184 = vadd.f32 %v1839, %v2183
      %v2185 = vpop.f32.mrb[0].mxu0
      %v2186 = vadd.f32 %v1843, %v2185
      %2187 = vmatprep.mubr.bf16.mxu0 %v1997
      %2188 = vmatmul.mubr.bf16.gmra.mrb[0].mxu0 %v1761
      %v2189 = vpop.f32.mrb[0].mxu0
      %v2190 = vadd.f32 %v1839, %v2189
      %v2191 = vpop.f32.mrb[0].mxu0
      %v2192 = vadd.f32 %v1843, %v2191
      %v2193 = vpop.f32.mrb[0].mxu0
      %v2194 = vadd.f32 %v1839, %v2193
      %v2195 = vpop.f32.mrb[0].mxu0
      %v2196 = vadd.f32 %v1843, %v2195
      %2197 = vmatprep.mubr.bf16.mxu0 %v2000
      %2198 = vmatmul.mubr.bf16.gmra.mrb[0].mxu0 %v1763
      %v2199 = vpop.f32.mrb[0].mxu0
      %v2200 = vadd.f32 %v1839, %v2199
      %v2201 = vpop.f32.mrb[0].mxu0
      %v2202 = vadd.f32 %v1843, %v2201
      %v2203 = vpop.f32.mrb[0].mxu0
      %v2204 = vadd.f32 %v1839, %v2203
      %v2205 = vpop.f32.mrb[0].mxu0
      %v2206 = vadd.f32 %v1843, %v2205
      %2207 = vmatprep.mubr.bf16.mxu0 %v2003
      %2208 = vmatmul.mubr.bf16.gmra.mrb[0].mxu0 %v1765
      %v2209 = vpop.f32.mrb[0].mxu0
      %v2210 = vadd.f32 %v1839, %v2209
      %v2211 = vpop.f32.mrb[0].mxu0
      %v2212 = vadd.f32 %v1843, %v2211
      %v2213 = vpop.f32.mrb[0].mxu0
      %v2214 = vadd.f32 %v1839, %v2213
      %v2215 = vpop.f32.mrb[0].mxu0
      %v2216 = vadd.f32 %v1843, %v2215
      %2217 = vmatprep.mubr.bf16.mxu0 %v2006
      %2218 = vmatmul.mubr.bf16.gmra.mrb[0].mxu0 %v1767
      %v2219 = vpop.f32.mrb[0].mxu0
      %v2220 = vadd.f32 %v1839, %v2219
      %v2221 = vpop.f32.mrb[0].mxu0
      %v2222 = vadd.f32 %v1843, %v2221
      %v2223 = vpop.f32.mrb[0].mxu0
      %v2224 = vadd.f32 %v1839, %v2223
      %v2225 = vpop.f32.mrb[0].mxu0
      %v2226 = vadd.f32 %v1843, %v2225
      %2227 = vmatprep.mubr.bf16.mxu0 %v2009
      %2228 = vmatmul.mubr.bf16.gmra.mrb[0].mxu0 %v1769
      %v2229 = vpop.f32.mrb[0].mxu0
      %v2230 = vadd.f32 %v1839, %v2229
      %v2231 = vpop.f32.mrb[0].mxu0
      %v2232 = vadd.f32 %v1843, %v2231
      %v2233 = vpop.f32.mrb[0].mxu0
      %v2234 = vadd.f32 %v1839, %v2233
      %v2235 = vpop.f32.mrb[0].mxu0
      %v2236 = vadd.f32 %v1843, %v2235
      %2237 = vmatprep.mubr.bf16.mxu0 %v2012
      %2238 = vmatmul.mubr.bf16.gmra.mrb[0].mxu0 %v1771
      %v2239 = vpop.f32.mrb[0].mxu0
      %v2240 = vadd.f32 %v1839, %v2239
      %v2241 = vpop.f32.mrb[0].mxu0
      %v2242 = vadd.f32 %v1843, %v2241
      %v2243 = vpop.f32.mrb[0].mxu0
      %v2244 = vadd.f32 %v1839, %v2243
      %v2245 = vpop.f32.mrb[0].mxu0
      %v2246 = vadd.f32 %v1843, %v2245
      %2247 = vmatprep.mubr.bf16.mxu0 %v2015
      %2248 = vmatmul.mubr.bf16.gmra.mrb[0].mxu0 %v1773
      %v2249 = vpop.f32.mrb[0].mxu0
      %v2250 = vadd.f32 %v1839, %v2249
      %v2251 = vpop.f32.mrb[0].mxu0
      %v2252 = vadd.f32 %v1843, %v2251
      %v2253 = vpop.f32.mrb[0].mxu0
      %v2254 = vadd.f32 %v1839, %v2253
      %v2255 = vpop.f32.mrb[0].mxu0
      %v2256 = vadd.f32 %v1843, %v2255
      %2257 = vmatprep.mubr.bf16.mxu0 %v2018
      %2258 = vmatmul.mubr.bf16.gmra.mrb[0].mxu0 %v1775
      %v2259 = vpop.f32.mrb[0].mxu0
      %v2260 = vadd.f32 %v1839, %v2259
      %v2261 = vpop.f32.mrb[0].mxu0
      %v2262 = vadd.f32 %v1843, %v2261
      %v2263 = vpop.f32.mrb[0].mxu0
      %v2264 = vadd.f32 %v1839, %v2263
      %v2265 = vpop.f32.mrb[0].mxu0
      %v2266 = vadd.f32 %v1843, %v2265
      %2267 = vmatprep.mubr.bf16.mxu0 %v2021
      %2268 = vmatmul.mubr.bf16.gmra.mrb[0].mxu0 %v1777
      %v2269 = vpop.f32.mrb[0].mxu0
      %v2270 = vadd.f32 %v1839, %v2269
      %v2271 = vpop.f32.mrb[0].mxu0
      %v2272 = vadd.f32 %v1843, %v2271
      %v2273 = vpop.f32.mrb[0].mxu0
      %v2274 = vadd.f32 %v1839, %v2273
      %v2275 = vpop.f32.mrb[0].mxu0
      %v2276 = vadd.f32 %v1843, %v2275
      %2277 = vmatprep.mubr.bf16.mxu0 %v2024
      %2278 = vmatmul.mubr.bf16.gmra.mrb[0].mxu0 %v1779
      %v2279 = vpop.f32.mrb[0].mxu0
      %v2280 = vadd.f32 %v1839, %v2279
      %v2281 = vpop.f32.mrb[0].mxu0
      %v2282 = vadd.f32 %v1843, %v2281
      %v2283 = vpop.f32.mrb[0].mxu0
      %v2284 = vadd.f32 %v1839, %v2283
      %v2285 = vpop.f32.mrb[0].mxu0
      %v2286 = vadd.f32 %v1843, %v2285
      %2287 = vmatprep.mubr.bf16.mxu0 %v2027
      %2288 = vmatmul.mubr.bf16.gmra.mrb[0].mxu0 %v1781
      %v2289 = vpop.f32.mrb[0].mxu0
      %v2290 = vadd.f32 %v1839, %v2289
      %v2291 = vpop.f32.mrb[0].mxu0
      %v2292 = vadd.f32 %v1843, %v2291
      %v2293 = vpop.f32.mrb[0].mxu0
      %v2294 = vadd.f32 %v1839, %v2293
      %v2295 = vpop.f32.mrb[0].mxu0
      %v2296 = vadd.f32 %v1843, %v2295
      %2297 = vmatprep.mubr.bf16.mxu0 %v2030
      %2298 = vmatmul.mubr.bf16.gmra.mrb[0].mxu0 %v1783
      %v2299 = vpop.f32.mrb[0].mxu0
      %v2300 = vadd.f32 %v1839, %v2299
      %v2301 = vpop.f32.mrb[0].mxu0
      %v2302 = vadd.f32 %v1843, %v2301
      %v2303 = vpop.f32.mrb[0].mxu0
      %v2304 = vadd.f32 %v1839, %v2303
      %v2305 = vpop.f32.mrb[0].mxu0
      %v2306 = vadd.f32 %v1843, %v2305
      %2307 = vmatprep.mubr.bf16.mxu0 %v2033
      %2308 = vmatmul.mubr.bf16.gmra.mrb[0].mxu0 %v1785
      %v2309 = vpop.f32.mrb[0].mxu0
      %v2310 = vadd.f32 %v1839, %v2309
      %v2311 = vpop.f32.mrb[0].mxu0
      %v2312 = vadd.f32 %v1843, %v2311
      %v2313 = vpop.f32.mrb[0].mxu0
      %v2314 = vadd.f32 %v1839, %v2313
      %v2315 = vpop.f32.mrb[0].mxu0
      %v2316 = vadd.f32 %v1843, %v2315
      %2317 = vmatprep.mubr.bf16.mxu0 %v2036
      %2318 = vmatmul.mubr.bf16.gmra.mrb[0].mxu0 %v1787
      %v2319 = vpop.f32.mrb[0].mxu0
      %v2320 = vadd.f32 %v1839, %v2319
      %v2321 = vpop.f32.mrb[0].mxu0
      %v2322 = vadd.f32 %v1843, %v2321
      %v2323 = vpop.f32.mrb[0].mxu0
      %v2324 = vadd.f32 %v1839, %v2323
      %v2325 = vpop.f32.mrb[0].mxu0
      %v2326 = vadd.f32 %v1843, %v2325
      %2327 = vmatprep.mubr.bf16.mxu0 %v2039
      %2328 = vmatmul.mubr.bf16.gmra.mrb[0].mxu0 %v1789
      %v2329 = vpop.f32.mrb[0].mxu0
      %v2330 = vadd.f32 %v1839, %v2329
      %v2331 = vpop.f32.mrb[0].mxu0
      %v2332 = vadd.f32 %v1843, %v2331
      %v2333 = vpop.f32.mrb[0].mxu0
      %v2334 = vadd.f32 %v1839, %v2333
      %v2335 = vpop.f32.mrb[0].mxu0
      %v2336 = vadd.f32 %v1843, %v2335
      %2337 = vmatprep.mubr.bf16.mxu0 %v2042
      %2338 = vmatmul.mubr.bf16.gmra.mrb[0].mxu0 %v1791
      %v2339 = vpop.f32.mrb[0].mxu0
      %v2340 = vadd.f32 %v1839, %v2339
      %v2341 = vpop.f32.mrb[0].mxu0
      %v2342 = vadd.f32 %v1843, %v2341
      %v2343 = vpop.f32.mrb[0].mxu0
      %v2344 = vadd.f32 %v1839, %v2343
      %v2345 = vpop.f32.mrb[0].mxu0
      %v2346 = vadd.f32 %v1843, %v2345
      %2347 = vmatprep.mubr.bf16.mxu0 %v2045
      %2348 = vmatmul.mubr.bf16.gmra.mrb[0].mxu0 %v1793
      %v2349 = vpop.f32.mrb[0].mxu0
      %v2350 = vadd.f32 %v1839, %v2349
      %v2351 = vpop.f32.mrb[0].mxu0
      %v2352 = vadd.f32 %v1843, %v2351
      %v2353 = vpop.f32.mrb[0].mxu0
      %v2354 = vadd.f32 %v1839, %v2353
      %v2355 = vpop.f32.mrb[0].mxu0
      %v2356 = vadd.f32 %v1843, %v2355
      %2357 = vmatprep.mubr.bf16.mxu0 %v2048
      %2358 = vmatmul.mubr.bf16.gmra.mrb[0].mxu0 %v1795
      %v2359 = vpop.f32.mrb[0].mxu0
      %v2360 = vadd.f32 %v1839, %v2359
      %v2361 = vpop.f32.mrb[0].mxu0
      %v2362 = vadd.f32 %v1843, %v2361
      %v2363 = vpop.f32.mrb[0].mxu0
      %v2364 = vadd.f32 %v1839, %v2363
      %v2365 = vpop.f32.mrb[0].mxu0
      %v2366 = vadd.f32 %v1843, %v2365
      %2367 = vmatprep.mubr.bf16.mxu0 %v2051
      %2368 = vmatmul.mubr.bf16.gmra.mrb[0].mxu0 %v1797
      %v2369 = vpop.f32.mrb[0].mxu0
      %v2370 = vadd.f32 %v1839, %v2369
      %v2371 = vpop.f32.mrb[0].mxu0
      %v2372 = vadd.f32 %v1843, %v2371
      %v2373 = vpop.f32.mrb[0].mxu0
      %v2374 = vadd.f32 %v1839, %v2373
      %v2375 = vpop.f32.mrb[0].mxu0
      %v2376 = vadd.f32 %v1843, %v2375
      %2377 = vmatprep.mubr.bf16.mxu0 %v2054
      %2378 = vmatmul.mubr.bf16.gmra.mrb[0].mxu0 %v1799
      %v2379 = vpop.f32.mrb[0].mxu0
      %v2380 = vadd.f32 %v1839, %v2379
      %v2381 = vpop.f32.mrb[0].mxu0
      %v2382 = vadd.f32 %v1843, %v2381
      %v2383 = vpop.f32.mrb[0].mxu0
      %v2384 = vadd.f32 %v1839, %v2383
      %v2385 = vpop.f32.mrb[0].mxu0
      %v2386 = vadd.f32 %v1843, %v2385
      %2387 = vmatprep.mubr.bf16.mxu0 %v2057
      %2388 = vmatmul.mubr.bf16.gmra.mrb[0].mxu0 %v1801
      %v2389 = vpop.f32.mrb[0].mxu0
      %v2390 = vadd.f32 %v1839, %v2389
      %v2391 = vpop.f32.mrb[0].mxu0
      %v2392 = vadd.f32 %v1843, %v2391
      %v2393 = vpop.f32.mrb[0].mxu0
      %v2394 = vadd.f32 %v1839, %v2393
      %v2395 = vpop.f32.mrb[0].mxu0
      %v2396 = vadd.f32 %v1843, %v2395
      %2397 = vmatprep.mubr.bf16.mxu0 %v2060
      %2398 = vmatmul.mubr.bf16.gmra.mrb[0].mxu0 %v1803
      %v2399 = vpop.f32.mrb[0].mxu0
      %v2400 = vadd.f32 %v1839, %v2399
      %v2401 = vpop.f32.mrb[0].mxu0
      %v2402 = vadd.f32 %v1843, %v2401
      %v2403 = vpop.f32.mrb[0].mxu0
      %v2404 = vadd.f32 %v1839, %v2403
      %v2405 = vpop.f32.mrb[0].mxu0
      %v2406 = vadd.f32 %v1843, %v2405
      %2407 = vmatprep.mubr.bf16.mxu0 %v2063
      %2408 = vmatmul.mubr.bf16.gmra.mrb[0].mxu0 %v1805
      %v2409 = vpop.f32.mrb[0].mxu0
      %v2410 = vadd.f32 %v1839, %v2409
      %v2411 = vpop.f32.mrb[0].mxu0
      %v2412 = vadd.f32 %v1843, %v2411
      %v2413 = vpop.f32.mrb[0].mxu0
      %v2414 = vadd.f32 %v1839, %v2413
      %v2415 = vpop.f32.mrb[0].mxu0
      %v2416 = vadd.f32 %v1843, %v2415
      %2417 = vmatprep.mubr.bf16.mxu0 %v2066
      %2418 = vmatmul.mubr.bf16.gmra.mrb[0].mxu0 %v1807
      %v2419 = vpop.f32.mrb[0].mxu0
      %v2420 = vadd.f32 %v1839, %v2419
      %v2421 = vpop.f32.mrb[0].mxu0
      %v2422 = vadd.f32 %v1843, %v2421
      %v2423 = vpop.f32.mrb[0].mxu0
      %v2424 = vadd.f32 %v1839, %v2423
      %v2425 = vpop.f32.mrb[0].mxu0
      %v2426 = vadd.f32 %v1843, %v2425
      %2427 = vdwg.mxu0
      %v2428 = vmax.f32 %v2110, 0.0
      %v2429 = vmax.f32 %v2112, 0.0
      %v2430 = vmax.f32 %v2114, 0.0
      %v2431 = vmax.f32 %v2116, 0.0
      %v2432 = vmax.f32 %v2120, 0.0
      %v2433 = vmax.f32 %v2122, 0.0
      %v2434 = vmax.f32 %v2124, 0.0
      %v2435 = vmax.f32 %v2126, 0.0
      %v2436 = vmax.f32 %v2130, 0.0
      %v2437 = vmax.f32 %v2132, 0.0
      %v2438 = vmax.f32 %v2134, 0.0
      %v2439 = vmax.f32 %v2136, 0.0
      %v2440 = vmax.f32 %v2140, 0.0
      %v2441 = vmax.f32 %v2142, 0.0
      %v2442 = vmax.f32 %v2144, 0.0
      %v2443 = vmax.f32 %v2146, 0.0
      %v2444 = vmax.f32 %v2150, 0.0
      %v2445 = vmax.f32 %v2152, 0.0
      %v2446 = vmax.f32 %v2154, 0.0
      %v2447 = vmax.f32 %v2156, 0.0
      %v2448 = vmax.f32 %v2160, 0.0
      %v2449 = vmax.f32 %v2162, 0.0
      %v2450 = vmax.f32 %v2164, 0.0
      %v2451 = vmax.f32 %v2166, 0.0
      %v2452 = vmax.f32 %v2170, 0.0
      %v2453 = vmax.f32 %v2172, 0.0
      %v2454 = vmax.f32 %v2174, 0.0
      %v2455 = vmax.f32 %v2176, 0.0
      %v2456 = vmax.f32 %v2180, 0.0
      %v2457 = vmax.f32 %v2182, 0.0
      %v2458 = vmax.f32 %v2184, 0.0
      %v2459 = vmax.f32 %v2186, 0.0
      %v2460 = vmax.f32 %v2190, 0.0
      %v2461 = vmax.f32 %v2192, 0.0
      %v2462 = vmax.f32 %v2194, 0.0
      %v2463 = vmax.f32 %v2196, 0.0
      %v2464 = vmax.f32 %v2200, 0.0
      %v2465 = vmax.f32 %v2202, 0.0
      %v2466 = vmax.f32 %v2204, 0.0
      %v2467 = vmax.f32 %v2206, 0.0
      %v2468 = vmax.f32 %v2210, 0.0
      %v2469 = vmax.f32 %v2212, 0.0
      %v2470 = vmax.f32 %v2214, 0.0
      %v2471 = vmax.f32 %v2216, 0.0
      %v2472 = vmax.f32 %v2220, 0.0
      %v2473 = vmax.f32 %v2222, 0.0
      %v2474 = vmax.f32 %v2224, 0.0
      %v2475 = vmax.f32 %v2226, 0.0
      %v2476 = vmax.f32 %v2230, 0.0
      %v2477 = vmax.f32 %v2232, 0.0
      %v2478 = vmax.f32 %v2234, 0.0
      %v2479 = vmax.f32 %v2236, 0.0
      %v2480 = vmax.f32 %v2240, 0.0
      %v2481 = vmax.f32 %v2242, 0.0
      %v2482 = vmax.f32 %v2244, 0.0
      %v2483 = vmax.f32 %v2246, 0.0
      %v2484 = vmax.f32 %v2250, 0.0
      %v2485 = vmax.f32 %v2252, 0.0
      %v2486 = vmax.f32 %v2254, 0.0
      %v2487 = vmax.f32 %v2256, 0.0
      %v2488 = vmax.f32 %v2260, 0.0
      %v2489 = vmax.f32 %v2262, 0.0
      %v2490 = vmax.f32 %v2264, 0.0
      %v2491 = vmax.f32 %v2266, 0.0
      %v2492 = vmax.f32 %v2270, 0.0
      %v2493 = vmax.f32 %v2272, 0.0
      %v2494 = vmax.f32 %v2274, 0.0
      %v2495 = vmax.f32 %v2276, 0.0
      %v2496 = vmax.f32 %v2280, 0.0
      %v2497 = vmax.f32 %v2282, 0.0
      %v2498 = vmax.f32 %v2284, 0.0
      %v2499 = vmax.f32 %v2286, 0.0
      %v2500 = vmax.f32 %v2290, 0.0
      %v2501 = vmax.f32 %v2292, 0.0
      %v2502 = vmax.f32 %v2294, 0.0
      %v2503 = vmax.f32 %v2296, 0.0
      %v2504 = vmax.f32 %v2300, 0.0
      %v2505 = vmax.f32 %v2302, 0.0
      %v2506 = vmax.f32 %v2304, 0.0
      %v2507 = vmax.f32 %v2306, 0.0
      %v2508 = vmax.f32 %v2310, 0.0
      %v2509 = vmax.f32 %v2312, 0.0
      %v2510 = vmax.f32 %v2314, 0.0
      %v2511 = vmax.f32 %v2316, 0.0
      %v2512 = vmax.f32 %v2320, 0.0
      %v2513 = vmax.f32 %v2322, 0.0
      %v2514 = vmax.f32 %v2324, 0.0
      %v2515 = vmax.f32 %v2326, 0.0
      %v2516 = vmax.f32 %v2330, 0.0
      %v2517 = vmax.f32 %v2332, 0.0
      %v2518 = vmax.f32 %v2334, 0.0
      %v2519 = vmax.f32 %v2336, 0.0
      %v2520 = vmax.f32 %v2340, 0.0
      %v2521 = vmax.f32 %v2342, 0.0
      %v2522 = vmax.f32 %v2344, 0.0
      %v2523 = vmax.f32 %v2346, 0.0
      %v2524 = vmax.f32 %v2350, 0.0
      %v2525 = vmax.f32 %v2352, 0.0
      %v2526 = vmax.f32 %v2354, 0.0
      %v2527 = vmax.f32 %v2356, 0.0
      %v2528 = vmax.f32 %v2360, 0.0
      %v2529 = vmax.f32 %v2362, 0.0
      %v2530 = vmax.f32 %v2364, 0.0
      %v2531 = vmax.f32 %v2366, 0.0
      %v2532 = vmax.f32 %v2370, 0.0
      %v2533 = vmax.f32 %v2372, 0.0
      %v2534 = vmax.f32 %v2374, 0.0
      %v2535 = vmax.f32 %v2376, 0.0
      %v2536 = vmax.f32 %v2380, 0.0
      %v2537 = vmax.f32 %v2382, 0.0
      %v2538 = vmax.f32 %v2384, 0.0
      %v2539 = vmax.f32 %v2386, 0.0
      %v2540 = vmax.f32 %v2390, 0.0
      %v2541 = vmax.f32 %v2392, 0.0
      %v2542 = vmax.f32 %v2394, 0.0
      %v2543 = vmax.f32 %v2396, 0.0
      %v2544 = vmax.f32 %v2400, 0.0
      %v2545 = vmax.f32 %v2402, 0.0
      %v2546 = vmax.f32 %v2404, 0.0
      %v2547 = vmax.f32 %v2406, 0.0
      %v2548 = vmax.f32 %v2410, 0.0
      %v2549 = vmax.f32 %v2412, 0.0
      %v2550 = vmax.f32 %v2414, 0.0
      %v2551 = vmax.f32 %v2416, 0.0
      %v2552 = vmax.f32 %v2420, 0.0
      %v2553 = vmax.f32 %v2422, 0.0
      %v2554 = vmax.f32 %v2424, 0.0
      %v2555 = vmax.f32 %v2426, 0.0
      %v2556 = vpack.c.bf16 %v2430, %v2428
      %v2557 = vpack.c.bf16 %v2431, %v2429
      %v2558 = vpack.c.bf16 %v2434, %v2432
      %v2559 = vpack.c.bf16 %v2435, %v2433
      %v2560 = vpack.c.bf16 %v2438, %v2436
      %v2561 = vpack.c.bf16 %v2439, %v2437
      %v2562 = vpack.c.bf16 %v2442, %v2440
      %v2563 = vpack.c.bf16 %v2443, %v2441
      %v2564 = vpack.c.bf16 %v2446, %v2444
      %v2565 = vpack.c.bf16 %v2447, %v2445
      %v2566 = vpack.c.bf16 %v2450, %v2448
      %v2567 = vpack.c.bf16 %v2451, %v2449
      %v2568 = vpack.c.bf16 %v2454, %v2452
      %v2569 = vpack.c.bf16 %v2455, %v2453
      %v2570 = vpack.c.bf16 %v2458, %v2456
      %v2571 = vpack.c.bf16 %v2459, %v2457
      %v2572 = vpack.c.bf16 %v2462, %v2460
      %v2573 = vpack.c.bf16 %v2463, %v2461
      %v2574 = vpack.c.bf16 %v2466, %v2464
      %v2575 = vpack.c.bf16 %v2467, %v2465
      %v2576 = vpack.c.bf16 %v2470, %v2468
      %v2577 = vpack.c.bf16 %v2471, %v2469
      %v2578 = vpack.c.bf16 %v2474, %v2472
      %v2579 = vpack.c.bf16 %v2475, %v2473
      %v2580 = vpack.c.bf16 %v2478, %v2476
      %v2581 = vpack.c.bf16 %v2479, %v2477
      %v2582 = vpack.c.bf16 %v2482, %v2480
      %v2583 = vpack.c.bf16 %v2483, %v2481
      %v2584 = vpack.c.bf16 %v2486, %v2484
      %v2585 = vpack.c.bf16 %v2487, %v2485
      %v2586 = vpack.c.bf16 %v2490, %v2488
      %v2587 = vpack.c.bf16 %v2491, %v2489
      %v2588 = vpack.c.bf16 %v2494, %v2492
      %v2589 = vpack.c.bf16 %v2495, %v2493
      %v2590 = vpack.c.bf16 %v2498, %v2496
      %v2591 = vpack.c.bf16 %v2499, %v2497
      %v2592 = vpack.c.bf16 %v2502, %v2500
      %v2593 = vpack.c.bf16 %v2503, %v2501
      %v2594 = vpack.c.bf16 %v2506, %v2504
      %v2595 = vpack.c.bf16 %v2507, %v2505
      %v2596 = vpack.c.bf16 %v2510, %v2508
      %v2597 = vpack.c.bf16 %v2511, %v2509
      %v2598 = vpack.c.bf16 %v2514, %v2512
      %v2599 = vpack.c.bf16 %v2515, %v2513
      %v2600 = vpack.c.bf16 %v2518, %v2516
      %v2601 = vpack.c.bf16 %v2519, %v2517
      %v2602 = vpack.c.bf16 %v2522, %v2520
      %v2603 = vpack.c.bf16 %v2523, %v2521
      %v2604 = vpack.c.bf16 %v2526, %v2524
      %v2605 = vpack.c.bf16 %v2527, %v2525
      %v2606 = vpack.c.bf16 %v2530, %v2528
      %v2607 = vpack.c.bf16 %v2531, %v2529
      %v2608 = vpack.c.bf16 %v2534, %v2532
      %v2609 = vpack.c.bf16 %v2535, %v2533
      %v2610 = vpack.c.bf16 %v2538, %v2536
      %v2611 = vpack.c.bf16 %v2539, %v2537
      %v2612 = vpack.c.bf16 %v2542, %v2540
      %v2613 = vpack.c.bf16 %v2543, %v2541
      %v2614 = vpack.c.bf16 %v2546, %v2544
      %v2615 = vpack.c.bf16 %v2547, %v2545
      %v2616 = vpack.c.bf16 %v2550, %v2548
      %v2617 = vpack.c.bf16 %v2551, %v2549
      %v2618 = vpack.c.bf16 %v2554, %v2552
      %v2619 = vpack.c.bf16 %v2555, %v2553
      %v2620 = vld [vmem:[%s9] sm:$0xff]
      %v2621 = vld [vmem:[%s9 + $0x8] sm:$0xff]
      %v2622 = vld [vmem:[%s9 + $0x10] sm:$0xff]
      %v2623 = vld [vmem:[%s9 + $0x18] sm:$0xff]
      %v2624 = vld [vmem:[%s9 + $0x20] sm:$0xff]
      %v2625 = vld [vmem:[%s9 + $0x28] sm:$0xff]
      %v2626 = vld [vmem:[%s9 + $0x30] sm:$0xff]
      %v2627 = vld [vmem:[%s9 + $0x38] sm:$0xff]
      %v2628 = vld [vmem:[%s9 + $0x40] sm:$0xff]
      %v2629 = vld [vmem:[%s9 + $0x48] sm:$0xff]
      %v2630 = vld [vmem:[%s9 + $0x50] sm:$0xff]
      %v2631 = vld [vmem:[%s9 + $0x58] sm:$0xff]
      %v2632 = vld [vmem:[%s9 + $0x60] sm:$0xff]
      %v2633 = vld [vmem:[%s9 + $0x68] sm:$0xff]
      %v2634 = vld [vmem:[%s9 + $0x70] sm:$0xff]
      %v2635 = vld [vmem:[%s9 + $0x78] sm:$0xff]
      %v2636 = vld [vmem:[%s9 + $0x80] sm:$0xff]
      %v2637 = vld [vmem:[%s9 + $0x88] sm:$0xff]
      %v2638 = vld [vmem:[%s9 + $0x90] sm:$0xff]
      %v2639 = vld [vmem:[%s9 + $0x98] sm:$0xff]
      %v2640 = vld [vmem:[%s9 + $0xa0] sm:$0xff]
      %v2641 = vld [vmem:[%s9 + $0xa8] sm:$0xff]
      %v2642 = vld [vmem:[%s9 + $0xb0] sm:$0xff]
      %v2643 = vld [vmem:[%s9 + $0xb8] sm:$0xff]
      %v2644 = vld [vmem:[%s9 + $0xc0] sm:$0xff]
      %v2645 = vld [vmem:[%s37] sm:$0x3]
      %v2647 = vlaneseq
      %v2648 = vshrl.u32 %v2647, 7
      %v2649 = vsub.s32 0, %v2648
      %v2650 = vrot.slane %v2645, %v2649
      %v2651 = vlaneseq
      %v2652 = vshrl.u32 %v2651, 7
      %v2653 = vsub.s32 1, %v2652
      %v2654 = vrot.slane %v2645, %v2653
      %v2682 = vunpack.c.l.b16 %v2620
      %v2683 = vunpack.c.h.b16 %v2620
      %v2684 = vunpack.c.l.b16 %v2621
      %v2685 = vunpack.c.h.b16 %v2621
      %v2686 = vunpack.c.l.b16 %v2622
      %v2687 = vunpack.c.h.b16 %v2622
      %v2688 = vunpack.c.l.b16 %v2623
      %v2689 = vunpack.c.h.b16 %v2623
      %v2690 = vunpack.c.l.b16 %v2624
      %v2691 = vunpack.c.h.b16 %v2624
      %v2692 = vunpack.c.l.b16 %v2625
      %v2693 = vunpack.c.h.b16 %v2625
      %v2694 = vunpack.c.l.b16 %v2626
      %v2695 = vunpack.c.h.b16 %v2626
      %v2696 = vunpack.c.l.b16 %v2627
      %v2697 = vunpack.c.h.b16 %v2627
      %v2698 = vunpack.c.l.b16 %v2628
      %v2699 = vunpack.c.h.b16 %v2628
      %v2700 = vunpack.c.l.b16 %v2629
      %v2701 = vunpack.c.h.b16 %v2629
      %v2702 = vunpack.c.l.b16 %v2630
      %v2703 = vunpack.c.h.b16 %v2630
      %v2704 = vunpack.c.l.b16 %v2631
      %v2705 = vunpack.c.h.b16 %v2631
      %v2706 = vunpack.c.l.b16 %v2632
      %v2707 = vunpack.c.h.b16 %v2632
      %v2708 = vunpack.c.l.b16 %v2633
      %v2709 = vunpack.c.h.b16 %v2633
      %v2710 = vunpack.c.l.b16 %v2634
      %v2711 = vunpack.c.h.b16 %v2634
      %v2712 = vunpack.c.l.b16 %v2635
      %v2713 = vunpack.c.h.b16 %v2635
      %v2714 = vunpack.c.l.b16 %v2636
      %v2715 = vunpack.c.h.b16 %v2636
      %v2716 = vunpack.c.l.b16 %v2637
      %v2717 = vunpack.c.h.b16 %v2637
      %v2718 = vunpack.c.l.b16 %v2638
      %v2719 = vunpack.c.h.b16 %v2638
      %v2720 = vunpack.c.l.b16 %v2639
      %v2721 = vunpack.c.h.b16 %v2639
      %v2722 = vunpack.c.l.b16 %v2640
      %v2723 = vunpack.c.h.b16 %v2640
      %v2724 = vunpack.c.l.b16 %v2641
      %v2725 = vunpack.c.h.b16 %v2641
      %v2726 = vunpack.c.l.b16 %v2642
      %v2727 = vunpack.c.h.b16 %v2642
      %v2728 = vunpack.c.l.b16 %v2643
      %v2729 = vunpack.c.h.b16 %v2643
      %v2730 = vunpack.c.l.b16 %v2644
      %v2731 = vunpack.c.h.b16 %v2644
      %v2732 = vpack.c.b16 %v2684, %v2682
      %v2733 = vpack.c.b16 %v2685, %v2683
      %v2734 = vpack.c.b16 %v2688, %v2686
      %v2735 = vpack.c.b16 %v2689, %v2687
      %v2736 = vpack.c.b16 %v2692, %v2690
      %v2737 = vpack.c.b16 %v2693, %v2691
      %v2738 = vpack.c.b16 %v2696, %v2694
      %v2739 = vpack.c.b16 %v2697, %v2695
      %v2740 = vpack.c.b16 %v2700, %v2698
      %v2741 = vpack.c.b16 %v2701, %v2699
      %v2742 = vpack.c.b16 %v2704, %v2702
      %v2743 = vpack.c.b16 %v2705, %v2703
      %v2744 = vpack.c.b16 %v2708, %v2706
      %v2745 = vpack.c.b16 %v2709, %v2707
      %v2746 = vpack.c.b16 %v2712, %v2710
      %v2747 = vpack.c.b16 %v2713, %v2711
      %v2748 = vpack.c.b16 %v2716, %v2714
      %v2749 = vpack.c.b16 %v2717, %v2715
      %v2750 = vpack.c.b16 %v2720, %v2718
      %v2751 = vpack.c.b16 %v2721, %v2719
      %v2752 = vpack.c.b16 %v2724, %v2722
      %v2753 = vpack.c.b16 %v2725, %v2723
      %v2754 = vpack.c.b16 %v2728, %v2726
      %v2755 = vpack.c.b16 %v2729, %v2727
      %v2756 = vpack.c.b16 %v2730, %v2730
      %v2757 = vpack.c.b16 %v2731, %v2731
      %v2783 = vsel %vm1971, %v2557, 0
      %v2786 = vsel %vm1971, %v2559, 0
      %v2789 = vsel %vm1971, %v2561, 0
      %v2792 = vsel %vm1971, %v2563, 0
      %v2795 = vsel %vm1971, %v2565, 0
      %v2798 = vsel %vm1971, %v2567, 0
      %v2801 = vsel %vm1971, %v2569, 0
      %v2804 = vsel %vm1971, %v2571, 0
      %v2807 = vsel %vm1971, %v2573, 0
      %v2810 = vsel %vm1971, %v2575, 0
      %v2813 = vsel %vm1971, %v2577, 0
      %v2816 = vsel %vm1971, %v2579, 0
      %v2819 = vsel %vm1971, %v2581, 0
      %v2822 = vsel %vm1971, %v2583, 0
      %v2825 = vsel %vm1971, %v2585, 0
      %v2828 = vsel %vm1971, %v2587, 0
      %v2831 = vsel %vm1971, %v2589, 0
      %v2834 = vsel %vm1971, %v2591, 0
      %v2837 = vsel %vm1971, %v2593, 0
      %v2840 = vsel %vm1971, %v2595, 0
      %v2843 = vsel %vm1971, %v2597, 0
      %v2846 = vsel %vm1971, %v2599, 0
      %v2849 = vsel %vm1971, %v2601, 0
      %v2852 = vsel %vm1971, %v2603, 0
      %v2855 = vsel %vm1971, %v2605, 0
      %v2858 = vsel %vm1971, %v2607, 0
      %v2861 = vsel %vm1971, %v2609, 0
      %v2864 = vsel %vm1971, %v2611, 0
      %v2867 = vsel %vm1971, %v2613, 0
      %v2870 = vsel %vm1971, %v2615, 0
      %v2873 = vsel %vm1971, %v2617, 0
      %v2876 = vsel %vm1971, %v2619, 0
      %v2879 = vsel %vm2068, %v2756, 0
      %v2882 = vsel %vm2068, %v2757, 0
      %2884 = vmatprep.subr.bf16.mxu0 %v2733
      %2885 = vmatpush1.bf16.msra.mxu0 %v2732
      %2886 = vmatprep.subr.bf16.mxu0 %v2735
      %2887 = vmatpush1.bf16.msra.mxu0 %v2734
      %2888 = vmatprep.subr.bf16.mxu0 %v2737
      %2889 = vmatpush1.bf16.msra.mxu0 %v2736
      %2890 = vmatprep.subr.bf16.mxu0 %v2739
      %2891 = vmatpush1.bf16.msra.mxu0 %v2738
      %2892 = vmatprep.subr.bf16.mxu0 %v2741
      %2893 = vmatpush1.bf16.msra.mxu0 %v2740
      %2894 = vmatprep.subr.bf16.mxu0 %v2743
      %2895 = vmatpush1.bf16.msra.mxu0 %v2742
      %2896 = vmatprep.subr.bf16.mxu0 %v2745
      %2897 = vmatpush1.bf16.msra.mxu0 %v2744
      %2898 = vmatprep.subr.bf16.mxu0 %v2747
      %2899 = vmatpush1.bf16.msra.mxu0 %v2746
      %2900 = vmatprep.subr.bf16.mxu0 %v2749
      %2901 = vmatpush1.bf16.msra.mxu0 %v2748
      %2902 = vmatprep.subr.bf16.mxu0 %v2751
      %2903 = vmatpush1.bf16.msra.mxu0 %v2750
      %2904 = vmatprep.subr.bf16.mxu0 %v2753
      %2905 = vmatpush1.bf16.msra.mxu0 %v2752
      %2906 = vmatprep.subr.bf16.mxu0 %v2755
      %2907 = vmatpush1.bf16.msra.mxu0 %v2754
      %2908 = vmatprep.subr.bf16.mxu0 %v2882
      %2909 = vmatpush1.bf16.msra.mxu0 %v2879
      %2910 = vmatprep.subr.bf16.mxu0 0
      %2911 = vmatpush1.bf16.msra.mxu0 0
      %2912 = vmatprep.subr.bf16.mxu0 0
      %2913 = vmatpush1.bf16.msra.mxu0 0
      %2914 = vmatprep.subr.bf16.mxu0 0
      %2915 = vmatpush1.bf16.msra.mxu0 0
      %2916 = vmatprep.mubr.bf16.mxu0 %v2783
      %2917 = vmatmul.mubr.bf16.gmra.mrb[0].mxu0 %v2556
      %v2918 = vpop.f32.mrb[0].mxu0
      %v2919 = vadd.f32 %v2650, %v2918
      %v2920 = vpop.f32.mrb[0].mxu0
      %v2921 = vadd.f32 %v2654, %v2920
      %v2922 = vpop.f32.mrb[0].mxu0
      %v2923 = vadd.f32 %v2650, %v2922
      %v2924 = vpop.f32.mrb[0].mxu0
      %v2925 = vadd.f32 %v2654, %v2924
      %2926 = vmatprep.mubr.bf16.mxu0 %v2786
      %2927 = vmatmul.mubr.bf16.gmra.mrb[0].mxu0 %v2558
      %v2928 = vpop.f32.mrb[0].mxu0
      %v2929 = vadd.f32 %v2650, %v2928
      %v2930 = vpop.f32.mrb[0].mxu0
      %v2931 = vadd.f32 %v2654, %v2930
      %v2932 = vpop.f32.mrb[0].mxu0
      %v2933 = vadd.f32 %v2650, %v2932
      %v2934 = vpop.f32.mrb[0].mxu0
      %v2935 = vadd.f32 %v2654, %v2934
      %2936 = vmatprep.mubr.bf16.mxu0 %v2789
      %2937 = vmatmul.mubr.bf16.gmra.mrb[0].mxu0 %v2560
      %v2938 = vpop.f32.mrb[0].mxu0
      %v2939 = vadd.f32 %v2650, %v2938
      %v2940 = vpop.f32.mrb[0].mxu0
      %v2941 = vadd.f32 %v2654, %v2940
      %v2942 = vpop.f32.mrb[0].mxu0
      %v2943 = vadd.f32 %v2650, %v2942
      %v2944 = vpop.f32.mrb[0].mxu0
      %v2945 = vadd.f32 %v2654, %v2944
      %2946 = vmatprep.mubr.bf16.mxu0 %v2792
      %2947 = vmatmul.mubr.bf16.gmra.mrb[0].mxu0 %v2562
      %v2948 = vpop.f32.mrb[0].mxu0
      %v2949 = vadd.f32 %v2650, %v2948
      %v2950 = vpop.f32.mrb[0].mxu0
      %v2951 = vadd.f32 %v2654, %v2950
      %v2952 = vpop.f32.mrb[0].mxu0
      %v2953 = vadd.f32 %v2650, %v2952
      %v2954 = vpop.f32.mrb[0].mxu0
      %v2955 = vadd.f32 %v2654, %v2954
      %2956 = vmatprep.mubr.bf16.mxu0 %v2795
      %2957 = vmatmul.mubr.bf16.gmra.mrb[0].mxu0 %v2564
      %v2958 = vpop.f32.mrb[0].mxu0
      %v2959 = vadd.f32 %v2650, %v2958
      %v2960 = vpop.f32.mrb[0].mxu0
      %v2961 = vadd.f32 %v2654, %v2960
      %v2962 = vpop.f32.mrb[0].mxu0
      %v2963 = vadd.f32 %v2650, %v2962
      %v2964 = vpop.f32.mrb[0].mxu0
      %v2965 = vadd.f32 %v2654, %v2964
      %2966 = vmatprep.mubr.bf16.mxu0 %v2798
      %2967 = vmatmul.mubr.bf16.gmra.mrb[0].mxu0 %v2566
      %v2968 = vpop.f32.mrb[0].mxu0
      %v2969 = vadd.f32 %v2650, %v2968
      %v2970 = vpop.f32.mrb[0].mxu0
      %v2971 = vadd.f32 %v2654, %v2970
      %v2972 = vpop.f32.mrb[0].mxu0
      %v2973 = vadd.f32 %v2650, %v2972
      %v2974 = vpop.f32.mrb[0].mxu0
      %v2975 = vadd.f32 %v2654, %v2974
      %2976 = vmatprep.mubr.bf16.mxu0 %v2801
      %2977 = vmatmul.mubr.bf16.gmra.mrb[0].mxu0 %v2568
      %v2978 = vpop.f32.mrb[0].mxu0
      %v2979 = vadd.f32 %v2650, %v2978
      %v2980 = vpop.f32.mrb[0].mxu0
      %v2981 = vadd.f32 %v2654, %v2980
      %v2982 = vpop.f32.mrb[0].mxu0
      %v2983 = vadd.f32 %v2650, %v2982
      %v2984 = vpop.f32.mrb[0].mxu0
      %v2985 = vadd.f32 %v2654, %v2984
      %2986 = vmatprep.mubr.bf16.mxu0 %v2804
      %2987 = vmatmul.mubr.bf16.gmra.mrb[0].mxu0 %v2570
      %v2988 = vpop.f32.mrb[0].mxu0
      %v2989 = vadd.f32 %v2650, %v2988
      %v2990 = vpop.f32.mrb[0].mxu0
      %v2991 = vadd.f32 %v2654, %v2990
      %v2992 = vpop.f32.mrb[0].mxu0
      %v2993 = vadd.f32 %v2650, %v2992
      %v2994 = vpop.f32.mrb[0].mxu0
      %v2995 = vadd.f32 %v2654, %v2994
      %2996 = vmatprep.mubr.bf16.mxu0 %v2807
      %2997 = vmatmul.mubr.bf16.gmra.mrb[0].mxu0 %v2572
      %v2998 = vpop.f32.mrb[0].mxu0
      %v2999 = vadd.f32 %v2650, %v2998
      %v3000 = vpop.f32.mrb[0].mxu0
      %v3001 = vadd.f32 %v2654, %v3000
      %v3002 = vpop.f32.mrb[0].mxu0
      %v3003 = vadd.f32 %v2650, %v3002
      %v3004 = vpop.f32.mrb[0].mxu0
      %v3005 = vadd.f32 %v2654, %v3004
      %3006 = vmatprep.mubr.bf16.mxu0 %v2810
      %3007 = vmatmul.mubr.bf16.gmra.mrb[0].mxu0 %v2574
      %v3008 = vpop.f32.mrb[0].mxu0
      %v3009 = vadd.f32 %v2650, %v3008
      %v3010 = vpop.f32.mrb[0].mxu0
      %v3011 = vadd.f32 %v2654, %v3010
      %v3012 = vpop.f32.mrb[0].mxu0
      %v3013 = vadd.f32 %v2650, %v3012
      %v3014 = vpop.f32.mrb[0].mxu0
      %v3015 = vadd.f32 %v2654, %v3014
      %3016 = vmatprep.mubr.bf16.mxu0 %v2813
      %3017 = vmatmul.mubr.bf16.gmra.mrb[0].mxu0 %v2576
      %v3018 = vpop.f32.mrb[0].mxu0
      %v3019 = vadd.f32 %v2650, %v3018
      %v3020 = vpop.f32.mrb[0].mxu0
      %v3021 = vadd.f32 %v2654, %v3020
      %v3022 = vpop.f32.mrb[0].mxu0
      %v3023 = vadd.f32 %v2650, %v3022
      %v3024 = vpop.f32.mrb[0].mxu0
      %v3025 = vadd.f32 %v2654, %v3024
      %3026 = vmatprep.mubr.bf16.mxu0 %v2816
      %3027 = vmatmul.mubr.bf16.gmra.mrb[0].mxu0 %v2578
      %v3028 = vpop.f32.mrb[0].mxu0
      %v3029 = vadd.f32 %v2650, %v3028
      %v3030 = vpop.f32.mrb[0].mxu0
      %v3031 = vadd.f32 %v2654, %v3030
      %v3032 = vpop.f32.mrb[0].mxu0
      %v3033 = vadd.f32 %v2650, %v3032
      %v3034 = vpop.f32.mrb[0].mxu0
      %v3035 = vadd.f32 %v2654, %v3034
      %3036 = vmatprep.mubr.bf16.mxu0 %v2819
      %3037 = vmatmul.mubr.bf16.gmra.mrb[0].mxu0 %v2580
      %v3038 = vpop.f32.mrb[0].mxu0
      %v3039 = vadd.f32 %v2650, %v3038
      %v3040 = vpop.f32.mrb[0].mxu0
      %v3041 = vadd.f32 %v2654, %v3040
      %v3042 = vpop.f32.mrb[0].mxu0
      %v3043 = vadd.f32 %v2650, %v3042
      %v3044 = vpop.f32.mrb[0].mxu0
      %v3045 = vadd.f32 %v2654, %v3044
      %3046 = vmatprep.mubr.bf16.mxu0 %v2822
      %3047 = vmatmul.mubr.bf16.gmra.mrb[0].mxu0 %v2582
      %v3048 = vpop.f32.mrb[0].mxu0
      %v3049 = vadd.f32 %v2650, %v3048
      %v3050 = vpop.f32.mrb[0].mxu0
      %v3051 = vadd.f32 %v2654, %v3050
      %v3052 = vpop.f32.mrb[0].mxu0
      %v3053 = vadd.f32 %v2650, %v3052
      %v3054 = vpop.f32.mrb[0].mxu0
      %v3055 = vadd.f32 %v2654, %v3054
      %3056 = vmatprep.mubr.bf16.mxu0 %v2825
      %3057 = vmatmul.mubr.bf16.gmra.mrb[0].mxu0 %v2584
      %v3058 = vpop.f32.mrb[0].mxu0
      %v3059 = vadd.f32 %v2650, %v3058
      %v3060 = vpop.f32.mrb[0].mxu0
      %v3061 = vadd.f32 %v2654, %v3060
      %v3062 = vpop.f32.mrb[0].mxu0
      %v3063 = vadd.f32 %v2650, %v3062
      %v3064 = vpop.f32.mrb[0].mxu0
      %v3065 = vadd.f32 %v2654, %v3064
      %3066 = vmatprep.mubr.bf16.mxu0 %v2828
      %3067 = vmatmul.mubr.bf16.gmra.mrb[0].mxu0 %v2586
      %v3068 = vpop.f32.mrb[0].mxu0
      %v3069 = vadd.f32 %v2650, %v3068
      %v3070 = vpop.f32.mrb[0].mxu0
      %v3071 = vadd.f32 %v2654, %v3070
      %v3072 = vpop.f32.mrb[0].mxu0
      %v3073 = vadd.f32 %v2650, %v3072
      %v3074 = vpop.f32.mrb[0].mxu0
      %v3075 = vadd.f32 %v2654, %v3074
      %3076 = vmatprep.mubr.bf16.mxu0 %v2831
      %3077 = vmatmul.mubr.bf16.gmra.mrb[0].mxu0 %v2588
      %v3078 = vpop.f32.mrb[0].mxu0
      %v3079 = vadd.f32 %v2650, %v3078
      %v3080 = vpop.f32.mrb[0].mxu0
      %v3081 = vadd.f32 %v2654, %v3080
      %v3082 = vpop.f32.mrb[0].mxu0
      %v3083 = vadd.f32 %v2650, %v3082
      %v3084 = vpop.f32.mrb[0].mxu0
      %v3085 = vadd.f32 %v2654, %v3084
      %3086 = vmatprep.mubr.bf16.mxu0 %v2834
      %3087 = vmatmul.mubr.bf16.gmra.mrb[0].mxu0 %v2590
      %v3088 = vpop.f32.mrb[0].mxu0
      %v3089 = vadd.f32 %v2650, %v3088
      %v3090 = vpop.f32.mrb[0].mxu0
      %v3091 = vadd.f32 %v2654, %v3090
      %v3092 = vpop.f32.mrb[0].mxu0
      %v3093 = vadd.f32 %v2650, %v3092
      %v3094 = vpop.f32.mrb[0].mxu0
      %v3095 = vadd.f32 %v2654, %v3094
      %3096 = vmatprep.mubr.bf16.mxu0 %v2837
      %3097 = vmatmul.mubr.bf16.gmra.mrb[0].mxu0 %v2592
      %v3098 = vpop.f32.mrb[0].mxu0
      %v3099 = vadd.f32 %v2650, %v3098
      %v3100 = vpop.f32.mrb[0].mxu0
      %v3101 = vadd.f32 %v2654, %v3100
      %v3102 = vpop.f32.mrb[0].mxu0
      %v3103 = vadd.f32 %v2650, %v3102
      %v3104 = vpop.f32.mrb[0].mxu0
      %v3105 = vadd.f32 %v2654, %v3104
      %3106 = vmatprep.mubr.bf16.mxu0 %v2840
      %3107 = vmatmul.mubr.bf16.gmra.mrb[0].mxu0 %v2594
      %v3108 = vpop.f32.mrb[0].mxu0
      %v3109 = vadd.f32 %v2650, %v3108
      %v3110 = vpop.f32.mrb[0].mxu0
      %v3111 = vadd.f32 %v2654, %v3110
      %v3112 = vpop.f32.mrb[0].mxu0
      %v3113 = vadd.f32 %v2650, %v3112
      %v3114 = vpop.f32.mrb[0].mxu0
      %v3115 = vadd.f32 %v2654, %v3114
      %3116 = vmatprep.mubr.bf16.mxu0 %v2843
      %3117 = vmatmul.mubr.bf16.gmra.mrb[0].mxu0 %v2596
      %v3118 = vpop.f32.mrb[0].mxu0
      %v3119 = vadd.f32 %v2650, %v3118
      %v3120 = vpop.f32.mrb[0].mxu0
      %v3121 = vadd.f32 %v2654, %v3120
      %v3122 = vpop.f32.mrb[0].mxu0
      %v3123 = vadd.f32 %v2650, %v3122
      %v3124 = vpop.f32.mrb[0].mxu0
      %v3125 = vadd.f32 %v2654, %v3124
      %3126 = vmatprep.mubr.bf16.mxu0 %v2846
      %3127 = vmatmul.mubr.bf16.gmra.mrb[0].mxu0 %v2598
      %v3128 = vpop.f32.mrb[0].mxu0
      %v3129 = vadd.f32 %v2650, %v3128
      %v3130 = vpop.f32.mrb[0].mxu0
      %v3131 = vadd.f32 %v2654, %v3130
      %v3132 = vpop.f32.mrb[0].mxu0
      %v3133 = vadd.f32 %v2650, %v3132
      %v3134 = vpop.f32.mrb[0].mxu0
      %v3135 = vadd.f32 %v2654, %v3134
      %3136 = vmatprep.mubr.bf16.mxu0 %v2849
      %3137 = vmatmul.mubr.bf16.gmra.mrb[0].mxu0 %v2600
      %v3138 = vpop.f32.mrb[0].mxu0
      %v3139 = vadd.f32 %v2650, %v3138
      %v3140 = vpop.f32.mrb[0].mxu0
      %v3141 = vadd.f32 %v2654, %v3140
      %v3142 = vpop.f32.mrb[0].mxu0
      %v3143 = vadd.f32 %v2650, %v3142
      %v3144 = vpop.f32.mrb[0].mxu0
      %v3145 = vadd.f32 %v2654, %v3144
      %3146 = vmatprep.mubr.bf16.mxu0 %v2852
      %3147 = vmatmul.mubr.bf16.gmra.mrb[0].mxu0 %v2602
      %v3148 = vpop.f32.mrb[0].mxu0
      %v3149 = vadd.f32 %v2650, %v3148
      %v3150 = vpop.f32.mrb[0].mxu0
      %v3151 = vadd.f32 %v2654, %v3150
      %v3152 = vpop.f32.mrb[0].mxu0
      %v3153 = vadd.f32 %v2650, %v3152
      %v3154 = vpop.f32.mrb[0].mxu0
      %v3155 = vadd.f32 %v2654, %v3154
      %3156 = vmatprep.mubr.bf16.mxu0 %v2855
      %3157 = vmatmul.mubr.bf16.gmra.mrb[0].mxu0 %v2604
      %v3158 = vpop.f32.mrb[0].mxu0
      %v3159 = vadd.f32 %v2650, %v3158
      %v3160 = vpop.f32.mrb[0].mxu0
      %v3161 = vadd.f32 %v2654, %v3160
      %v3162 = vpop.f32.mrb[0].mxu0
      %v3163 = vadd.f32 %v2650, %v3162
      %v3164 = vpop.f32.mrb[0].mxu0
      %v3165 = vadd.f32 %v2654, %v3164
      %3166 = vmatprep.mubr.bf16.mxu0 %v2858
      %3167 = vmatmul.mubr.bf16.gmra.mrb[0].mxu0 %v2606
      %v3168 = vpop.f32.mrb[0].mxu0
      %v3169 = vadd.f32 %v2650, %v3168
      %v3170 = vpop.f32.mrb[0].mxu0
      %v3171 = vadd.f32 %v2654, %v3170
      %v3172 = vpop.f32.mrb[0].mxu0
      %v3173 = vadd.f32 %v2650, %v3172
      %v3174 = vpop.f32.mrb[0].mxu0
      %v3175 = vadd.f32 %v2654, %v3174
      %3176 = vmatprep.mubr.bf16.mxu0 %v2861
      %3177 = vmatmul.mubr.bf16.gmra.mrb[0].mxu0 %v2608
      %v3178 = vpop.f32.mrb[0].mxu0
      %v3179 = vadd.f32 %v2650, %v3178
      %v3180 = vpop.f32.mrb[0].mxu0
      %v3181 = vadd.f32 %v2654, %v3180
      %v3182 = vpop.f32.mrb[0].mxu0
      %v3183 = vadd.f32 %v2650, %v3182
      %v3184 = vpop.f32.mrb[0].mxu0
      %v3185 = vadd.f32 %v2654, %v3184
      %3186 = vmatprep.mubr.bf16.mxu0 %v2864
      %3187 = vmatmul.mubr.bf16.gmra.mrb[0].mxu0 %v2610
      %v3188 = vpop.f32.mrb[0].mxu0
      %v3189 = vadd.f32 %v2650, %v3188
      %v3190 = vpop.f32.mrb[0].mxu0
      %v3191 = vadd.f32 %v2654, %v3190
      %v3192 = vpop.f32.mrb[0].mxu0
      %v3193 = vadd.f32 %v2650, %v3192
      %v3194 = vpop.f32.mrb[0].mxu0
      %v3195 = vadd.f32 %v2654, %v3194
      %3196 = vmatprep.mubr.bf16.mxu0 %v2867
      %3197 = vmatmul.mubr.bf16.gmra.mrb[0].mxu0 %v2612
      %v3198 = vpop.f32.mrb[0].mxu0
      %v3199 = vadd.f32 %v2650, %v3198
      %v3200 = vpop.f32.mrb[0].mxu0
      %v3201 = vadd.f32 %v2654, %v3200
      %v3202 = vpop.f32.mrb[0].mxu0
      %v3203 = vadd.f32 %v2650, %v3202
      %v3204 = vpop.f32.mrb[0].mxu0
      %v3205 = vadd.f32 %v2654, %v3204
      %3206 = vmatprep.mubr.bf16.mxu0 %v2870
      %3207 = vmatmul.mubr.bf16.gmra.mrb[0].mxu0 %v2614
      %v3208 = vpop.f32.mrb[0].mxu0
      %v3209 = vadd.f32 %v2650, %v3208
      %v3210 = vpop.f32.mrb[0].mxu0
      %v3211 = vadd.f32 %v2654, %v3210
      %v3212 = vpop.f32.mrb[0].mxu0
      %v3213 = vadd.f32 %v2650, %v3212
      %v3214 = vpop.f32.mrb[0].mxu0
      %v3215 = vadd.f32 %v2654, %v3214
      %3216 = vmatprep.mubr.bf16.mxu0 %v2873
      %3217 = vmatmul.mubr.bf16.gmra.mrb[0].mxu0 %v2616
      %v3218 = vpop.f32.mrb[0].mxu0
      %v3219 = vadd.f32 %v2650, %v3218
      %v3220 = vpop.f32.mrb[0].mxu0
      %v3221 = vadd.f32 %v2654, %v3220
      %v3222 = vpop.f32.mrb[0].mxu0
      %v3223 = vadd.f32 %v2650, %v3222
      %v3224 = vpop.f32.mrb[0].mxu0
      %v3225 = vadd.f32 %v2654, %v3224
      %3226 = vmatprep.mubr.bf16.mxu0 %v2876
      %3227 = vmatmul.mubr.bf16.gmra.mrb[0].mxu0 %v2618
      %v3228 = vpop.f32.mrb[0].mxu0
      %v3229 = vadd.f32 %v2650, %v3228
      %v3230 = vpop.f32.mrb[0].mxu0
      %v3231 = vadd.f32 %v2654, %v3230
      %v3232 = vpop.f32.mrb[0].mxu0
      %v3233 = vadd.f32 %v2650, %v3232
      %v3234 = vpop.f32.mrb[0].mxu0
      %v3235 = vadd.f32 %v2654, %v3234
      %3236 = vdwg.mxu0
      %v3237 = vmax.f32 %v2919, 0.0
      %v3238 = vmax.f32 %v2921, 0.0
      %v3239 = vmax.f32 %v2923, 0.0
      %v3240 = vmax.f32 %v2925, 0.0
      %v3241 = vmax.f32 %v2929, 0.0
      %v3242 = vmax.f32 %v2931, 0.0
      %v3243 = vmax.f32 %v2933, 0.0
      %v3244 = vmax.f32 %v2935, 0.0
      %v3245 = vmax.f32 %v2939, 0.0
      %v3246 = vmax.f32 %v2941, 0.0
      %v3247 = vmax.f32 %v2943, 0.0
      %v3248 = vmax.f32 %v2945, 0.0
      %v3249 = vmax.f32 %v2949, 0.0
      %v3250 = vmax.f32 %v2951, 0.0
      %v3251 = vmax.f32 %v2953, 0.0
      %v3252 = vmax.f32 %v2955, 0.0
      %v3253 = vmax.f32 %v2959, 0.0
      %v3254 = vmax.f32 %v2961, 0.0
      %v3255 = vmax.f32 %v2963, 0.0
      %v3256 = vmax.f32 %v2965, 0.0
      %v3257 = vmax.f32 %v2969, 0.0
      %v3258 = vmax.f32 %v2971, 0.0
      %v3259 = vmax.f32 %v2973, 0.0
      %v3260 = vmax.f32 %v2975, 0.0
      %v3261 = vmax.f32 %v2979, 0.0
      %v3262 = vmax.f32 %v2981, 0.0
      %v3263 = vmax.f32 %v2983, 0.0
      %v3264 = vmax.f32 %v2985, 0.0
      %v3265 = vmax.f32 %v2989, 0.0
      %v3266 = vmax.f32 %v2991, 0.0
      %v3267 = vmax.f32 %v2993, 0.0
      %v3268 = vmax.f32 %v2995, 0.0
      %v3269 = vmax.f32 %v2999, 0.0
      %v3270 = vmax.f32 %v3001, 0.0
      %v3271 = vmax.f32 %v3003, 0.0
      %v3272 = vmax.f32 %v3005, 0.0
      %v3273 = vmax.f32 %v3009, 0.0
      %v3274 = vmax.f32 %v3011, 0.0
      %v3275 = vmax.f32 %v3013, 0.0
      %v3276 = vmax.f32 %v3015, 0.0
      %v3277 = vmax.f32 %v3019, 0.0
      %v3278 = vmax.f32 %v3021, 0.0
      %v3279 = vmax.f32 %v3023, 0.0
      %v3280 = vmax.f32 %v3025, 0.0
      %v3281 = vmax.f32 %v3029, 0.0
      %v3282 = vmax.f32 %v3031, 0.0
      %v3283 = vmax.f32 %v3033, 0.0
      %v3284 = vmax.f32 %v3035, 0.0
      %v3285 = vmax.f32 %v3039, 0.0
      %v3286 = vmax.f32 %v3041, 0.0
      %v3287 = vmax.f32 %v3043, 0.0
      %v3288 = vmax.f32 %v3045, 0.0
      %v3289 = vmax.f32 %v3049, 0.0
      %v3290 = vmax.f32 %v3051, 0.0
      %v3291 = vmax.f32 %v3053, 0.0
      %v3292 = vmax.f32 %v3055, 0.0
      %v3293 = vmax.f32 %v3059, 0.0
      %v3294 = vmax.f32 %v3061, 0.0
      %v3295 = vmax.f32 %v3063, 0.0
      %v3296 = vmax.f32 %v3065, 0.0
      %v3297 = vmax.f32 %v3069, 0.0
      %v3298 = vmax.f32 %v3071, 0.0
      %v3299 = vmax.f32 %v3073, 0.0
      %v3300 = vmax.f32 %v3075, 0.0
      %v3301 = vmax.f32 %v3079, 0.0
      %v3302 = vmax.f32 %v3081, 0.0
      %v3303 = vmax.f32 %v3083, 0.0
      %v3304 = vmax.f32 %v3085, 0.0
      %v3305 = vmax.f32 %v3089, 0.0
      %v3306 = vmax.f32 %v3091, 0.0
      %v3307 = vmax.f32 %v3093, 0.0
      %v3308 = vmax.f32 %v3095, 0.0
      %v3309 = vmax.f32 %v3099, 0.0
      %v3310 = vmax.f32 %v3101, 0.0
      %v3311 = vmax.f32 %v3103, 0.0
      %v3312 = vmax.f32 %v3105, 0.0
      %v3313 = vmax.f32 %v3109, 0.0
      %v3314 = vmax.f32 %v3111, 0.0
      %v3315 = vmax.f32 %v3113, 0.0
      %v3316 = vmax.f32 %v3115, 0.0
      %v3317 = vmax.f32 %v3119, 0.0
      %v3318 = vmax.f32 %v3121, 0.0
      %v3319 = vmax.f32 %v3123, 0.0
      %v3320 = vmax.f32 %v3125, 0.0
      %v3321 = vmax.f32 %v3129, 0.0
      %v3322 = vmax.f32 %v3131, 0.0
      %v3323 = vmax.f32 %v3133, 0.0
      %v3324 = vmax.f32 %v3135, 0.0
      %v3325 = vmax.f32 %v3139, 0.0
      %v3326 = vmax.f32 %v3141, 0.0
      %v3327 = vmax.f32 %v3143, 0.0
      %v3328 = vmax.f32 %v3145, 0.0
      %v3329 = vmax.f32 %v3149, 0.0
      %v3330 = vmax.f32 %v3151, 0.0
      %v3331 = vmax.f32 %v3153, 0.0
      %v3332 = vmax.f32 %v3155, 0.0
      %v3333 = vmax.f32 %v3159, 0.0
      %v3334 = vmax.f32 %v3161, 0.0
      %v3335 = vmax.f32 %v3163, 0.0
      %v3336 = vmax.f32 %v3165, 0.0
      %v3337 = vmax.f32 %v3169, 0.0
      %v3338 = vmax.f32 %v3171, 0.0
      %v3339 = vmax.f32 %v3173, 0.0
      %v3340 = vmax.f32 %v3175, 0.0
      %v3341 = vmax.f32 %v3179, 0.0
      %v3342 = vmax.f32 %v3181, 0.0
      %v3343 = vmax.f32 %v3183, 0.0
      %v3344 = vmax.f32 %v3185, 0.0
      %v3345 = vmax.f32 %v3189, 0.0
      %v3346 = vmax.f32 %v3191, 0.0
      %v3347 = vmax.f32 %v3193, 0.0
      %v3348 = vmax.f32 %v3195, 0.0
      %v3349 = vmax.f32 %v3199, 0.0
      %v3350 = vmax.f32 %v3201, 0.0
      %v3351 = vmax.f32 %v3203, 0.0
      %v3352 = vmax.f32 %v3205, 0.0
      %v3353 = vmax.f32 %v3209, 0.0
      %v3354 = vmax.f32 %v3211, 0.0
      %v3355 = vmax.f32 %v3213, 0.0
      %v3356 = vmax.f32 %v3215, 0.0
      %v3357 = vmax.f32 %v3219, 0.0
      %v3358 = vmax.f32 %v3221, 0.0
      %v3359 = vmax.f32 %v3223, 0.0
      %v3360 = vmax.f32 %v3225, 0.0
      %v3361 = vmax.f32 %v3229, 0.0
      %v3362 = vmax.f32 %v3231, 0.0
      %v3363 = vmax.f32 %v3233, 0.0
      %v3364 = vmax.f32 %v3235, 0.0
      %v3365 = vpack.c.bf16 %v3239, %v3237
      %v3366 = vpack.c.bf16 %v3240, %v3238
      %v3367 = vpack.c.bf16 %v3243, %v3241
      %v3368 = vpack.c.bf16 %v3244, %v3242
      %v3369 = vpack.c.bf16 %v3247, %v3245
      %v3370 = vpack.c.bf16 %v3248, %v3246
      %v3371 = vpack.c.bf16 %v3251, %v3249
      %v3372 = vpack.c.bf16 %v3252, %v3250
      %v3373 = vpack.c.bf16 %v3255, %v3253
      %v3374 = vpack.c.bf16 %v3256, %v3254
      %v3375 = vpack.c.bf16 %v3259, %v3257
      %v3376 = vpack.c.bf16 %v3260, %v3258
      %v3377 = vpack.c.bf16 %v3263, %v3261
      %v3378 = vpack.c.bf16 %v3264, %v3262
      %v3379 = vpack.c.bf16 %v3267, %v3265
      %v3380 = vpack.c.bf16 %v3268, %v3266
      %v3381 = vpack.c.bf16 %v3271, %v3269
      %v3382 = vpack.c.bf16 %v3272, %v3270
      %v3383 = vpack.c.bf16 %v3275, %v3273
      %v3384 = vpack.c.bf16 %v3276, %v3274
      %v3385 = vpack.c.bf16 %v3279, %v3277
      %v3386 = vpack.c.bf16 %v3280, %v3278
      %v3387 = vpack.c.bf16 %v3283, %v3281
      %v3388 = vpack.c.bf16 %v3284, %v3282
      %v3389 = vpack.c.bf16 %v3287, %v3285
      %v3390 = vpack.c.bf16 %v3288, %v3286
      %v3391 = vpack.c.bf16 %v3291, %v3289
      %v3392 = vpack.c.bf16 %v3292, %v3290
      %v3393 = vpack.c.bf16 %v3295, %v3293
      %v3394 = vpack.c.bf16 %v3296, %v3294
      %v3395 = vpack.c.bf16 %v3299, %v3297
      %v3396 = vpack.c.bf16 %v3300, %v3298
      %v3397 = vpack.c.bf16 %v3303, %v3301
      %v3398 = vpack.c.bf16 %v3304, %v3302
      %v3399 = vpack.c.bf16 %v3307, %v3305
      %v3400 = vpack.c.bf16 %v3308, %v3306
      %v3401 = vpack.c.bf16 %v3311, %v3309
      %v3402 = vpack.c.bf16 %v3312, %v3310
      %v3403 = vpack.c.bf16 %v3315, %v3313
      %v3404 = vpack.c.bf16 %v3316, %v3314
      %v3405 = vpack.c.bf16 %v3319, %v3317
      %v3406 = vpack.c.bf16 %v3320, %v3318
      %v3407 = vpack.c.bf16 %v3323, %v3321
      %v3408 = vpack.c.bf16 %v3324, %v3322
      %v3409 = vpack.c.bf16 %v3327, %v3325
      %v3410 = vpack.c.bf16 %v3328, %v3326
      %v3411 = vpack.c.bf16 %v3331, %v3329
      %v3412 = vpack.c.bf16 %v3332, %v3330
      %v3413 = vpack.c.bf16 %v3335, %v3333
      %v3414 = vpack.c.bf16 %v3336, %v3334
      %v3415 = vpack.c.bf16 %v3339, %v3337
      %v3416 = vpack.c.bf16 %v3340, %v3338
      %v3417 = vpack.c.bf16 %v3343, %v3341
      %v3418 = vpack.c.bf16 %v3344, %v3342
      %v3419 = vpack.c.bf16 %v3347, %v3345
      %v3420 = vpack.c.bf16 %v3348, %v3346
      %v3421 = vpack.c.bf16 %v3351, %v3349
      %v3422 = vpack.c.bf16 %v3352, %v3350
      %v3423 = vpack.c.bf16 %v3355, %v3353
      %v3424 = vpack.c.bf16 %v3356, %v3354
      %v3425 = vpack.c.bf16 %v3359, %v3357
      %v3426 = vpack.c.bf16 %v3360, %v3358
      %v3427 = vpack.c.bf16 %v3363, %v3361
      %v3428 = vpack.c.bf16 %v3364, %v3362
      %v3429 = vld [vmem:[%s11] sm:$0xff]
      %v3430 = vld [vmem:[%s11 + $0x8] sm:$0xff]
      %v3431 = vld [vmem:[%s11 + $0x10] sm:$0xff]
      %v3432 = vld [vmem:[%s11 + $0x18] sm:$0xff]
      %v3433 = vld [vmem:[%s11 + $0x20] sm:$0xff]
      %v3434 = vld [vmem:[%s11 + $0x28] sm:$0xff]
      %v3435 = vld [vmem:[%s11 + $0x30] sm:$0xff]
      %v3436 = vld [vmem:[%s11 + $0x38] sm:$0xff]
      %v3437 = vld [vmem:[%s11 + $0x40] sm:$0xff]
      %v3438 = vld [vmem:[%s11 + $0x48] sm:$0xff]
      %v3439 = vld [vmem:[%s11 + $0x50] sm:$0xff]
      %v3440 = vld [vmem:[%s11 + $0x58] sm:$0xff]
      %v3441 = vld [vmem:[%s11 + $0x60] sm:$0xff]
      %v3442 = vld [vmem:[%s11 + $0x68] sm:$0xff]
      %v3443 = vld [vmem:[%s11 + $0x70] sm:$0xff]
      %v3444 = vld [vmem:[%s11 + $0x78] sm:$0xff]
      %v3445 = vld [vmem:[%s11 + $0x80] sm:$0xff]
      %v3446 = vld [vmem:[%s11 + $0x88] sm:$0xff]
      %v3447 = vld [vmem:[%s11 + $0x90] sm:$0xff]
      %v3448 = vld [vmem:[%s11 + $0x98] sm:$0xff]
      %v3449 = vld [vmem:[%s11 + $0xa0] sm:$0xff]
      %v3450 = vld [vmem:[%s11 + $0xa8] sm:$0xff]
      %v3451 = vld [vmem:[%s11 + $0xb0] sm:$0xff]
      %v3452 = vld [vmem:[%s11 + $0xb8] sm:$0xff]
      %v3453 = vld [vmem:[%s11 + $0xc0] sm:$0xff]
      %v3454 = vld [vmem:[%s39] sm:$0x3]
      %v3456 = vlaneseq
      %v3457 = vshrl.u32 %v3456, 7
      %v3458 = vsub.s32 0, %v3457
      %v3459 = vrot.slane %v3454, %v3458
      %v3460 = vlaneseq
      %v3461 = vshrl.u32 %v3460, 7
      %v3462 = vsub.s32 1, %v3461
      %v3463 = vrot.slane %v3454, %v3462
      %v3491 = vunpack.c.l.b16 %v3429
      %v3492 = vunpack.c.h.b16 %v3429
      %v3493 = vunpack.c.l.b16 %v3430
      %v3494 = vunpack.c.h.b16 %v3430
      %v3495 = vunpack.c.l.b16 %v3431
      %v3496 = vunpack.c.h.b16 %v3431
      %v3497 = vunpack.c.l.b16 %v3432
      %v3498 = vunpack.c.h.b16 %v3432
      %v3499 = vunpack.c.l.b16 %v3433
      %v3500 = vunpack.c.h.b16 %v3433
      %v3501 = vunpack.c.l.b16 %v3434
      %v3502 = vunpack.c.h.b16 %v3434
      %v3503 = vunpack.c.l.b16 %v3435
      %v3504 = vunpack.c.h.b16 %v3435
      %v3505 = vunpack.c.l.b16 %v3436
      %v3506 = vunpack.c.h.b16 %v3436
      %v3507 = vunpack.c.l.b16 %v3437
      %v3508 = vunpack.c.h.b16 %v3437
      %v3509 = vunpack.c.l.b16 %v3438
      %v3510 = vunpack.c.h.b16 %v3438
      %v3511 = vunpack.c.l.b16 %v3439
      %v3512 = vunpack.c.h.b16 %v3439
      %v3513 = vunpack.c.l.b16 %v3440
      %v3514 = vunpack.c.h.b16 %v3440
      %v3515 = vunpack.c.l.b16 %v3441
      %v3516 = vunpack.c.h.b16 %v3441
      %v3517 = vunpack.c.l.b16 %v3442
      %v3518 = vunpack.c.h.b16 %v3442
      %v3519 = vunpack.c.l.b16 %v3443
      %v3520 = vunpack.c.h.b16 %v3443
      %v3521 = vunpack.c.l.b16 %v3444
      %v3522 = vunpack.c.h.b16 %v3444
      %v3523 = vunpack.c.l.b16 %v3445
      %v3524 = vunpack.c.h.b16 %v3445
      %v3525 = vunpack.c.l.b16 %v3446
      %v3526 = vunpack.c.h.b16 %v3446
      %v3527 = vunpack.c.l.b16 %v3447
      %v3528 = vunpack.c.h.b16 %v3447
      %v3529 = vunpack.c.l.b16 %v3448
      %v3530 = vunpack.c.h.b16 %v3448
      %v3531 = vunpack.c.l.b16 %v3449
      %v3532 = vunpack.c.h.b16 %v3449
      %v3533 = vunpack.c.l.b16 %v3450
      %v3534 = vunpack.c.h.b16 %v3450
      %v3535 = vunpack.c.l.b16 %v3451
      %v3536 = vunpack.c.h.b16 %v3451
      %v3537 = vunpack.c.l.b16 %v3452
      %v3538 = vunpack.c.h.b16 %v3452
      %v3539 = vunpack.c.l.b16 %v3453
      %v3540 = vunpack.c.h.b16 %v3453
      %v3541 = vpack.c.b16 %v3493, %v3491
      %v3542 = vpack.c.b16 %v3494, %v3492
      %v3543 = vpack.c.b16 %v3497, %v3495
      %v3544 = vpack.c.b16 %v3498, %v3496
      %v3545 = vpack.c.b16 %v3501, %v3499
      %v3546 = vpack.c.b16 %v3502, %v3500
      %v3547 = vpack.c.b16 %v3505, %v3503
      %v3548 = vpack.c.b16 %v3506, %v3504
      %v3549 = vpack.c.b16 %v3509, %v3507
      %v3550 = vpack.c.b16 %v3510, %v3508
      %v3551 = vpack.c.b16 %v3513, %v3511
      %v3552 = vpack.c.b16 %v3514, %v3512
      %v3553 = vpack.c.b16 %v3517, %v3515
      %v3554 = vpack.c.b16 %v3518, %v3516
      %v3555 = vpack.c.b16 %v3521, %v3519
      %v3556 = vpack.c.b16 %v3522, %v3520
      %v3557 = vpack.c.b16 %v3525, %v3523
      %v3558 = vpack.c.b16 %v3526, %v3524
      %v3559 = vpack.c.b16 %v3529, %v3527
      %v3560 = vpack.c.b16 %v3530, %v3528
      %v3561 = vpack.c.b16 %v3533, %v3531
      %v3562 = vpack.c.b16 %v3534, %v3532
      %v3563 = vpack.c.b16 %v3537, %v3535
      %v3564 = vpack.c.b16 %v3538, %v3536
      %v3565 = vpack.c.b16 %v3539, %v3539
      %v3566 = vpack.c.b16 %v3540, %v3540
      %v3592 = vsel %vm1971, %v3366, 0
      %v3595 = vsel %vm1971, %v3368, 0
      %v3598 = vsel %vm1971, %v3370, 0
      %v3601 = vsel %vm1971, %v3372, 0
      %v3604 = vsel %vm1971, %v3374, 0
      %v3607 = vsel %vm1971, %v3376, 0
      %v3610 = vsel %vm1971, %v3378, 0
      %v3613 = vsel %vm1971, %v3380, 0
      %v3616 = vsel %vm1971, %v3382, 0
      %v3619 = vsel %vm1971, %v3384, 0
      %v3622 = vsel %vm1971, %v3386, 0
      %v3625 = vsel %vm1971, %v3388, 0
      %v3628 = vsel %vm1971, %v3390, 0
      %v3631 = vsel %vm1971, %v3392, 0
      %v3634 = vsel %vm1971, %v3394, 0
      %v3637 = vsel %vm1971, %v3396, 0
      %v3640 = vsel %vm1971, %v3398, 0
      %v3643 = vsel %vm1971, %v3400, 0
      %v3646 = vsel %vm1971, %v3402, 0
      %v3649 = vsel %vm1971, %v3404, 0
      %v3652 = vsel %vm1971, %v3406, 0
      %v3655 = vsel %vm1971, %v3408, 0
      %v3658 = vsel %vm1971, %v3410, 0
      %v3661 = vsel %vm1971, %v3412, 0
      %v3664 = vsel %vm1971, %v3414, 0
      %v3667 = vsel %vm1971, %v3416, 0
      %v3670 = vsel %vm1971, %v3418, 0
      %v3673 = vsel %vm1971, %v3420, 0
      %v3676 = vsel %vm1971, %v3422, 0
      %v3679 = vsel %vm1971, %v3424, 0
      %v3682 = vsel %vm1971, %v3426, 0
      %v3685 = vsel %vm1971, %v3428, 0
      %v3688 = vsel %vm2068, %v3565, 0
      %v3691 = vsel %vm2068, %v3566, 0
      %3693 = vmatprep.subr.bf16.mxu0 %v3542
      %3694 = vmatpush1.bf16.msra.mxu0 %v3541
      %3695 = vmatprep.subr.bf16.mxu0 %v3544
      %3696 = vmatpush1.bf16.msra.mxu0 %v3543
      %3697 = vmatprep.subr.bf16.mxu0 %v3546
      %3698 = vmatpush1.bf16.msra.mxu0 %v3545
      %3699 = vmatprep.subr.bf16.mxu0 %v3548
      %3700 = vmatpush1.bf16.msra.mxu0 %v3547
      %3701 = vmatprep.subr.bf16.mxu0 %v3550
      %3702 = vmatpush1.bf16.msra.mxu0 %v3549
      %3703 = vmatprep.subr.bf16.mxu0 %v3552
      %3704 = vmatpush1.bf16.msra.mxu0 %v3551
      %3705 = vmatprep.subr.bf16.mxu0 %v3554
      %3706 = vmatpush1.bf16.msra.mxu0 %v3553
      %3707 = vmatprep.subr.bf16.mxu0 %v3556
      %3708 = vmatpush1.bf16.msra.mxu0 %v3555
      %3709 = vmatprep.subr.bf16.mxu0 %v3558
      %3710 = vmatpush1.bf16.msra.mxu0 %v3557
      %3711 = vmatprep.subr.bf16.mxu0 %v3560
      %3712 = vmatpush1.bf16.msra.mxu0 %v3559
      %3713 = vmatprep.subr.bf16.mxu0 %v3562
      %3714 = vmatpush1.bf16.msra.mxu0 %v3561
      %3715 = vmatprep.subr.bf16.mxu0 %v3564
      %3716 = vmatpush1.bf16.msra.mxu0 %v3563
      %3717 = vmatprep.subr.bf16.mxu0 %v3691
      %3718 = vmatpush1.bf16.msra.mxu0 %v3688
      %3719 = vmatprep.subr.bf16.mxu0 0
      %3720 = vmatpush1.bf16.msra.mxu0 0
      %3721 = vmatprep.subr.bf16.mxu0 0
      %3722 = vmatpush1.bf16.msra.mxu0 0
      %3723 = vmatprep.subr.bf16.mxu0 0
      %3724 = vmatpush1.bf16.msra.mxu0 0
      %3725 = vmatprep.mubr.bf16.mxu0 %v3592
      %3726 = vmatmul.mubr.bf16.gmra.mrb[0].mxu0 %v3365
      %v3727 = vpop.f32.mrb[0].mxu0
      %v3728 = vadd.f32 %v3459, %v3727
      %v3729 = vpop.f32.mrb[0].mxu0
      %v3730 = vadd.f32 %v3463, %v3729
      %v3731 = vpop.f32.mrb[0].mxu0
      %v3732 = vadd.f32 %v3459, %v3731
      %v3733 = vpop.f32.mrb[0].mxu0
      %v3734 = vadd.f32 %v3463, %v3733
      %3735 = vmatprep.mubr.bf16.mxu0 %v3595
      %3736 = vmatmul.mubr.bf16.gmra.mrb[0].mxu0 %v3367
      %v3737 = vpop.f32.mrb[0].mxu0
      %v3738 = vadd.f32 %v3459, %v3737
      %v3739 = vpop.f32.mrb[0].mxu0
      %v3740 = vadd.f32 %v3463, %v3739
      %v3741 = vpop.f32.mrb[0].mxu0
      %v3742 = vadd.f32 %v3459, %v3741
      %v3743 = vpop.f32.mrb[0].mxu0
      %v3744 = vadd.f32 %v3463, %v3743
      %3745 = vmatprep.mubr.bf16.mxu0 %v3598
      %3746 = vmatmul.mubr.bf16.gmra.mrb[0].mxu0 %v3369
      %v3747 = vpop.f32.mrb[0].mxu0
      %v3748 = vadd.f32 %v3459, %v3747
      %v3749 = vpop.f32.mrb[0].mxu0
      %v3750 = vadd.f32 %v3463, %v3749
      %v3751 = vpop.f32.mrb[0].mxu0
      %v3752 = vadd.f32 %v3459, %v3751
      %v3753 = vpop.f32.mrb[0].mxu0
      %v3754 = vadd.f32 %v3463, %v3753
      %3755 = vmatprep.mubr.bf16.mxu0 %v3601
      %3756 = vmatmul.mubr.bf16.gmra.mrb[0].mxu0 %v3371
      %v3757 = vpop.f32.mrb[0].mxu0
      %v3758 = vadd.f32 %v3459, %v3757
      %v3759 = vpop.f32.mrb[0].mxu0
      %v3760 = vadd.f32 %v3463, %v3759
      %v3761 = vpop.f32.mrb[0].mxu0
      %v3762 = vadd.f32 %v3459, %v3761
      %v3763 = vpop.f32.mrb[0].mxu0
      %v3764 = vadd.f32 %v3463, %v3763
      %3765 = vmatprep.mubr.bf16.mxu0 %v3604
      %3766 = vmatmul.mubr.bf16.gmra.mrb[0].mxu0 %v3373
      %v3767 = vpop.f32.mrb[0].mxu0
      %v3768 = vadd.f32 %v3459, %v3767
      %v3769 = vpop.f32.mrb[0].mxu0
      %v3770 = vadd.f32 %v3463, %v3769
      %v3771 = vpop.f32.mrb[0].mxu0
      %v3772 = vadd.f32 %v3459, %v3771
      %v3773 = vpop.f32.mrb[0].mxu0
      %v3774 = vadd.f32 %v3463, %v3773
      %3775 = vmatprep.mubr.bf16.mxu0 %v3607
      %3776 = vmatmul.mubr.bf16.gmra.mrb[0].mxu0 %v3375
      %v3777 = vpop.f32.mrb[0].mxu0
      %v3778 = vadd.f32 %v3459, %v3777
      %v3779 = vpop.f32.mrb[0].mxu0
      %v3780 = vadd.f32 %v3463, %v3779
      %v3781 = vpop.f32.mrb[0].mxu0
      %v3782 = vadd.f32 %v3459, %v3781
      %v3783 = vpop.f32.mrb[0].mxu0
      %v3784 = vadd.f32 %v3463, %v3783
      %3785 = vmatprep.mubr.bf16.mxu0 %v3610
      %3786 = vmatmul.mubr.bf16.gmra.mrb[0].mxu0 %v3377
      %v3787 = vpop.f32.mrb[0].mxu0
      %v3788 = vadd.f32 %v3459, %v3787
      %v3789 = vpop.f32.mrb[0].mxu0
      %v3790 = vadd.f32 %v3463, %v3789
      %v3791 = vpop.f32.mrb[0].mxu0
      %v3792 = vadd.f32 %v3459, %v3791
      %v3793 = vpop.f32.mrb[0].mxu0
      %v3794 = vadd.f32 %v3463, %v3793
      %3795 = vmatprep.mubr.bf16.mxu0 %v3613
      %3796 = vmatmul.mubr.bf16.gmra.mrb[0].mxu0 %v3379
      %v3797 = vpop.f32.mrb[0].mxu0
      %v3798 = vadd.f32 %v3459, %v3797
      %v3799 = vpop.f32.mrb[0].mxu0
      %v3800 = vadd.f32 %v3463, %v3799
      %v3801 = vpop.f32.mrb[0].mxu0
      %v3802 = vadd.f32 %v3459, %v3801
      %v3803 = vpop.f32.mrb[0].mxu0
      %v3804 = vadd.f32 %v3463, %v3803
      %3805 = vmatprep.mubr.bf16.mxu0 %v3616
      %3806 = vmatmul.mubr.bf16.gmra.mrb[0].mxu0 %v3381
      %v3807 = vpop.f32.mrb[0].mxu0
      %v3808 = vadd.f32 %v3459, %v3807
      %v3809 = vpop.f32.mrb[0].mxu0
      %v3810 = vadd.f32 %v3463, %v3809
      %v3811 = vpop.f32.mrb[0].mxu0
      %v3812 = vadd.f32 %v3459, %v3811
      %v3813 = vpop.f32.mrb[0].mxu0
      %v3814 = vadd.f32 %v3463, %v3813
      %3815 = vmatprep.mubr.bf16.mxu0 %v3619
      %3816 = vmatmul.mubr.bf16.gmra.mrb[0].mxu0 %v3383
      %v3817 = vpop.f32.mrb[0].mxu0
      %v3818 = vadd.f32 %v3459, %v3817
      %v3819 = vpop.f32.mrb[0].mxu0
      %v3820 = vadd.f32 %v3463, %v3819
      %v3821 = vpop.f32.mrb[0].mxu0
      %v3822 = vadd.f32 %v3459, %v3821
      %v3823 = vpop.f32.mrb[0].mxu0
      %v3824 = vadd.f32 %v3463, %v3823
      %3825 = vmatprep.mubr.bf16.mxu0 %v3622
      %3826 = vmatmul.mubr.bf16.gmra.mrb[0].mxu0 %v3385
      %v3827 = vpop.f32.mrb[0].mxu0
      %v3828 = vadd.f32 %v3459, %v3827
      %v3829 = vpop.f32.mrb[0].mxu0
      %v3830 = vadd.f32 %v3463, %v3829
      %v3831 = vpop.f32.mrb[0].mxu0
      %v3832 = vadd.f32 %v3459, %v3831
      %v3833 = vpop.f32.mrb[0].mxu0
      %v3834 = vadd.f32 %v3463, %v3833
      %3835 = vmatprep.mubr.bf16.mxu0 %v3625
      %3836 = vmatmul.mubr.bf16.gmra.mrb[0].mxu0 %v3387
      %v3837 = vpop.f32.mrb[0].mxu0
      %v3838 = vadd.f32 %v3459, %v3837
      %v3839 = vpop.f32.mrb[0].mxu0
      %v3840 = vadd.f32 %v3463, %v3839
      %v3841 = vpop.f32.mrb[0].mxu0
      %v3842 = vadd.f32 %v3459, %v3841
      %v3843 = vpop.f32.mrb[0].mxu0
      %v3844 = vadd.f32 %v3463, %v3843
      %3845 = vmatprep.mubr.bf16.mxu0 %v3628
      %3846 = vmatmul.mubr.bf16.gmra.mrb[0].mxu0 %v3389
      %v3847 = vpop.f32.mrb[0].mxu0
      %v3848 = vadd.f32 %v3459, %v3847
      %v3849 = vpop.f32.mrb[0].mxu0
      %v3850 = vadd.f32 %v3463, %v3849
      %v3851 = vpop.f32.mrb[0].mxu0
      %v3852 = vadd.f32 %v3459, %v3851
      %v3853 = vpop.f32.mrb[0].mxu0
      %v3854 = vadd.f32 %v3463, %v3853
      %3855 = vmatprep.mubr.bf16.mxu0 %v3631
      %3856 = vmatmul.mubr.bf16.gmra.mrb[0].mxu0 %v3391
      %v3857 = vpop.f32.mrb[0].mxu0
      %v3858 = vadd.f32 %v3459, %v3857
      %v3859 = vpop.f32.mrb[0].mxu0
      %v3860 = vadd.f32 %v3463, %v3859
      %v3861 = vpop.f32.mrb[0].mxu0
      %v3862 = vadd.f32 %v3459, %v3861
      %v3863 = vpop.f32.mrb[0].mxu0
      %v3864 = vadd.f32 %v3463, %v3863
      %3865 = vmatprep.mubr.bf16.mxu0 %v3634
      %3866 = vmatmul.mubr.bf16.gmra.mrb[0].mxu0 %v3393
      %v3867 = vpop.f32.mrb[0].mxu0
      %v3868 = vadd.f32 %v3459, %v3867
      %v3869 = vpop.f32.mrb[0].mxu0
      %v3870 = vadd.f32 %v3463, %v3869
      %v3871 = vpop.f32.mrb[0].mxu0
      %v3872 = vadd.f32 %v3459, %v3871
      %v3873 = vpop.f32.mrb[0].mxu0
      %v3874 = vadd.f32 %v3463, %v3873
      %3875 = vmatprep.mubr.bf16.mxu0 %v3637
      %3876 = vmatmul.mubr.bf16.gmra.mrb[0].mxu0 %v3395
      %v3877 = vpop.f32.mrb[0].mxu0
      %v3878 = vadd.f32 %v3459, %v3877
      %v3879 = vpop.f32.mrb[0].mxu0
      %v3880 = vadd.f32 %v3463, %v3879
      %v3881 = vpop.f32.mrb[0].mxu0
      %v3882 = vadd.f32 %v3459, %v3881
      %v3883 = vpop.f32.mrb[0].mxu0
      %v3884 = vadd.f32 %v3463, %v3883
      %3885 = vmatprep.mubr.bf16.mxu0 %v3640
      %3886 = vmatmul.mubr.bf16.gmra.mrb[0].mxu0 %v3397
      %v3887 = vpop.f32.mrb[0].mxu0
      %v3888 = vadd.f32 %v3459, %v3887
      %v3889 = vpop.f32.mrb[0].mxu0
      %v3890 = vadd.f32 %v3463, %v3889
      %v3891 = vpop.f32.mrb[0].mxu0
      %v3892 = vadd.f32 %v3459, %v3891
      %v3893 = vpop.f32.mrb[0].mxu0
      %v3894 = vadd.f32 %v3463, %v3893
      %3895 = vmatprep.mubr.bf16.mxu0 %v3643
      %3896 = vmatmul.mubr.bf16.gmra.mrb[0].mxu0 %v3399
      %v3897 = vpop.f32.mrb[0].mxu0
      %v3898 = vadd.f32 %v3459, %v3897
      %v3899 = vpop.f32.mrb[0].mxu0
      %v3900 = vadd.f32 %v3463, %v3899
      %v3901 = vpop.f32.mrb[0].mxu0
      %v3902 = vadd.f32 %v3459, %v3901
      %v3903 = vpop.f32.mrb[0].mxu0
      %v3904 = vadd.f32 %v3463, %v3903
      %3905 = vmatprep.mubr.bf16.mxu0 %v3646
      %3906 = vmatmul.mubr.bf16.gmra.mrb[0].mxu0 %v3401
      %v3907 = vpop.f32.mrb[0].mxu0
      %v3908 = vadd.f32 %v3459, %v3907
      %v3909 = vpop.f32.mrb[0].mxu0
      %v3910 = vadd.f32 %v3463, %v3909
      %v3911 = vpop.f32.mrb[0].mxu0
      %v3912 = vadd.f32 %v3459, %v3911
      %v3913 = vpop.f32.mrb[0].mxu0
      %v3914 = vadd.f32 %v3463, %v3913
      %3915 = vmatprep.mubr.bf16.mxu0 %v3649
      %3916 = vmatmul.mubr.bf16.gmra.mrb[0].mxu0 %v3403
      %v3917 = vpop.f32.mrb[0].mxu0
      %v3918 = vadd.f32 %v3459, %v3917
      %v3919 = vpop.f32.mrb[0].mxu0
      %v3920 = vadd.f32 %v3463, %v3919
      %v3921 = vpop.f32.mrb[0].mxu0
      %v3922 = vadd.f32 %v3459, %v3921
      %v3923 = vpop.f32.mrb[0].mxu0
      %v3924 = vadd.f32 %v3463, %v3923
      %3925 = vmatprep.mubr.bf16.mxu0 %v3652
      %3926 = vmatmul.mubr.bf16.gmra.mrb[0].mxu0 %v3405
      %v3927 = vpop.f32.mrb[0].mxu0
      %v3928 = vadd.f32 %v3459, %v3927
      %v3929 = vpop.f32.mrb[0].mxu0
      %v3930 = vadd.f32 %v3463, %v3929
      %v3931 = vpop.f32.mrb[0].mxu0
      %v3932 = vadd.f32 %v3459, %v3931
      %v3933 = vpop.f32.mrb[0].mxu0
      %v3934 = vadd.f32 %v3463, %v3933
      %3935 = vmatprep.mubr.bf16.mxu0 %v3655
      %3936 = vmatmul.mubr.bf16.gmra.mrb[0].mxu0 %v3407
      %v3937 = vpop.f32.mrb[0].mxu0
      %v3938 = vadd.f32 %v3459, %v3937
      %v3939 = vpop.f32.mrb[0].mxu0
      %v3940 = vadd.f32 %v3463, %v3939
      %v3941 = vpop.f32.mrb[0].mxu0
      %v3942 = vadd.f32 %v3459, %v3941
      %v3943 = vpop.f32.mrb[0].mxu0
      %v3944 = vadd.f32 %v3463, %v3943
      %3945 = vmatprep.mubr.bf16.mxu0 %v3658
      %3946 = vmatmul.mubr.bf16.gmra.mrb[0].mxu0 %v3409
      %v3947 = vpop.f32.mrb[0].mxu0
      %v3948 = vadd.f32 %v3459, %v3947
      %v3949 = vpop.f32.mrb[0].mxu0
      %v3950 = vadd.f32 %v3463, %v3949
      %v3951 = vpop.f32.mrb[0].mxu0
      %v3952 = vadd.f32 %v3459, %v3951
      %v3953 = vpop.f32.mrb[0].mxu0
      %v3954 = vadd.f32 %v3463, %v3953
      %3955 = vmatprep.mubr.bf16.mxu0 %v3661
      %3956 = vmatmul.mubr.bf16.gmra.mrb[0].mxu0 %v3411
      %v3957 = vpop.f32.mrb[0].mxu0
      %v3958 = vadd.f32 %v3459, %v3957
      %v3959 = vpop.f32.mrb[0].mxu0
      %v3960 = vadd.f32 %v3463, %v3959
      %v3961 = vpop.f32.mrb[0].mxu0
      %v3962 = vadd.f32 %v3459, %v3961
      %v3963 = vpop.f32.mrb[0].mxu0
      %v3964 = vadd.f32 %v3463, %v3963
      %3965 = vmatprep.mubr.bf16.mxu0 %v3664
      %3966 = vmatmul.mubr.bf16.gmra.mrb[0].mxu0 %v3413
      %v3967 = vpop.f32.mrb[0].mxu0
      %v3968 = vadd.f32 %v3459, %v3967
      %v3969 = vpop.f32.mrb[0].mxu0
      %v3970 = vadd.f32 %v3463, %v3969
      %v3971 = vpop.f32.mrb[0].mxu0
      %v3972 = vadd.f32 %v3459, %v3971
      %v3973 = vpop.f32.mrb[0].mxu0
      %v3974 = vadd.f32 %v3463, %v3973
      %3975 = vmatprep.mubr.bf16.mxu0 %v3667
      %3976 = vmatmul.mubr.bf16.gmra.mrb[0].mxu0 %v3415
      %v3977 = vpop.f32.mrb[0].mxu0
      %v3978 = vadd.f32 %v3459, %v3977
      %v3979 = vpop.f32.mrb[0].mxu0
      %v3980 = vadd.f32 %v3463, %v3979
      %v3981 = vpop.f32.mrb[0].mxu0
      %v3982 = vadd.f32 %v3459, %v3981
      %v3983 = vpop.f32.mrb[0].mxu0
      %v3984 = vadd.f32 %v3463, %v3983
      %3985 = vmatprep.mubr.bf16.mxu0 %v3670
      %3986 = vmatmul.mubr.bf16.gmra.mrb[0].mxu0 %v3417
      %v3987 = vpop.f32.mrb[0].mxu0
      %v3988 = vadd.f32 %v3459, %v3987
      %v3989 = vpop.f32.mrb[0].mxu0
      %v3990 = vadd.f32 %v3463, %v3989
      %v3991 = vpop.f32.mrb[0].mxu0
      %v3992 = vadd.f32 %v3459, %v3991
      %v3993 = vpop.f32.mrb[0].mxu0
      %v3994 = vadd.f32 %v3463, %v3993
      %3995 = vmatprep.mubr.bf16.mxu0 %v3673
      %3996 = vmatmul.mubr.bf16.gmra.mrb[0].mxu0 %v3419
      %v3997 = vpop.f32.mrb[0].mxu0
      %v3998 = vadd.f32 %v3459, %v3997
      %v3999 = vpop.f32.mrb[0].mxu0
      %v4000 = vadd.f32 %v3463, %v3999
      %v4001 = vpop.f32.mrb[0].mxu0
      %v4002 = vadd.f32 %v3459, %v4001
      %v4003 = vpop.f32.mrb[0].mxu0
      %v4004 = vadd.f32 %v3463, %v4003
      %4005 = vmatprep.mubr.bf16.mxu0 %v3676
      %4006 = vmatmul.mubr.bf16.gmra.mrb[0].mxu0 %v3421
      %v4007 = vpop.f32.mrb[0].mxu0
      %v4008 = vadd.f32 %v3459, %v4007
      %v4009 = vpop.f32.mrb[0].mxu0
      %v4010 = vadd.f32 %v3463, %v4009
      %v4011 = vpop.f32.mrb[0].mxu0
      %v4012 = vadd.f32 %v3459, %v4011
      %v4013 = vpop.f32.mrb[0].mxu0
      %v4014 = vadd.f32 %v3463, %v4013
      %4015 = vmatprep.mubr.bf16.mxu0 %v3679
      %4016 = vmatmul.mubr.bf16.gmra.mrb[0].mxu0 %v3423
      %v4017 = vpop.f32.mrb[0].mxu0
      %v4018 = vadd.f32 %v3459, %v4017
      %v4019 = vpop.f32.mrb[0].mxu0
      %v4020 = vadd.f32 %v3463, %v4019
      %v4021 = vpop.f32.mrb[0].mxu0
      %v4022 = vadd.f32 %v3459, %v4021
      %v4023 = vpop.f32.mrb[0].mxu0
      %v4024 = vadd.f32 %v3463, %v4023
      %4025 = vmatprep.mubr.bf16.mxu0 %v3682
      %4026 = vmatmul.mubr.bf16.gmra.mrb[0].mxu0 %v3425
      %v4027 = vpop.f32.mrb[0].mxu0
      %v4028 = vadd.f32 %v3459, %v4027
      %v4029 = vpop.f32.mrb[0].mxu0
      %v4030 = vadd.f32 %v3463, %v4029
      %v4031 = vpop.f32.mrb[0].mxu0
      %v4032 = vadd.f32 %v3459, %v4031
      %v4033 = vpop.f32.mrb[0].mxu0
      %v4034 = vadd.f32 %v3463, %v4033
      %4035 = vmatprep.mubr.bf16.mxu0 %v3685
      %4036 = vmatmul.mubr.bf16.gmra.mrb[0].mxu0 %v3427
      %v4037 = vpop.f32.mrb[0].mxu0
      %v4038 = vadd.f32 %v3459, %v4037
      %v4039 = vpop.f32.mrb[0].mxu0
      %v4040 = vadd.f32 %v3463, %v4039
      %v4041 = vpop.f32.mrb[0].mxu0
      %v4042 = vadd.f32 %v3459, %v4041
      %v4043 = vpop.f32.mrb[0].mxu0
      %v4044 = vadd.f32 %v3463, %v4043
      %4045 = vdwg.mxu0
      %v4046 = vmax.f32 %v3728, 0.0
      %v4047 = vmax.f32 %v3730, 0.0
      %v4048 = vmax.f32 %v3732, 0.0
      %v4049 = vmax.f32 %v3734, 0.0
      %v4050 = vmax.f32 %v3738, 0.0
      %v4051 = vmax.f32 %v3740, 0.0
      %v4052 = vmax.f32 %v3742, 0.0
      %v4053 = vmax.f32 %v3744, 0.0
      %v4054 = vmax.f32 %v3748, 0.0
      %v4055 = vmax.f32 %v3750, 0.0
      %v4056 = vmax.f32 %v3752, 0.0
      %v4057 = vmax.f32 %v3754, 0.0
      %v4058 = vmax.f32 %v3758, 0.0
      %v4059 = vmax.f32 %v3760, 0.0
      %v4060 = vmax.f32 %v3762, 0.0
      %v4061 = vmax.f32 %v3764, 0.0
      %v4062 = vmax.f32 %v3768, 0.0
      %v4063 = vmax.f32 %v3770, 0.0
      %v4064 = vmax.f32 %v3772, 0.0
      %v4065 = vmax.f32 %v3774, 0.0
      %v4066 = vmax.f32 %v3778, 0.0
      %v4067 = vmax.f32 %v3780, 0.0
      %v4068 = vmax.f32 %v3782, 0.0
      %v4069 = vmax.f32 %v3784, 0.0
      %v4070 = vmax.f32 %v3788, 0.0
      %v4071 = vmax.f32 %v3790, 0.0
      %v4072 = vmax.f32 %v3792, 0.0
      %v4073 = vmax.f32 %v3794, 0.0
      %v4074 = vmax.f32 %v3798, 0.0
      %v4075 = vmax.f32 %v3800, 0.0
      %v4076 = vmax.f32 %v3802, 0.0
      %v4077 = vmax.f32 %v3804, 0.0
      %v4078 = vmax.f32 %v3808, 0.0
      %v4079 = vmax.f32 %v3810, 0.0
      %v4080 = vmax.f32 %v3812, 0.0
      %v4081 = vmax.f32 %v3814, 0.0
      %v4082 = vmax.f32 %v3818, 0.0
      %v4083 = vmax.f32 %v3820, 0.0
      %v4084 = vmax.f32 %v3822, 0.0
      %v4085 = vmax.f32 %v3824, 0.0
      %v4086 = vmax.f32 %v3828, 0.0
      %v4087 = vmax.f32 %v3830, 0.0
      %v4088 = vmax.f32 %v3832, 0.0
      %v4089 = vmax.f32 %v3834, 0.0
      %v4090 = vmax.f32 %v3838, 0.0
      %v4091 = vmax.f32 %v3840, 0.0
      %v4092 = vmax.f32 %v3842, 0.0
      %v4093 = vmax.f32 %v3844, 0.0
      %v4094 = vmax.f32 %v3848, 0.0
      %v4095 = vmax.f32 %v3850, 0.0
      %v4096 = vmax.f32 %v3852, 0.0
      %v4097 = vmax.f32 %v3854, 0.0
      %v4098 = vmax.f32 %v3858, 0.0
      %v4099 = vmax.f32 %v3860, 0.0
      %v4100 = vmax.f32 %v3862, 0.0
      %v4101 = vmax.f32 %v3864, 0.0
      %v4102 = vmax.f32 %v3868, 0.0
      %v4103 = vmax.f32 %v3870, 0.0
      %v4104 = vmax.f32 %v3872, 0.0
      %v4105 = vmax.f32 %v3874, 0.0
      %v4106 = vmax.f32 %v3878, 0.0
      %v4107 = vmax.f32 %v3880, 0.0
      %v4108 = vmax.f32 %v3882, 0.0
      %v4109 = vmax.f32 %v3884, 0.0
      %v4110 = vmax.f32 %v3888, 0.0
      %v4111 = vmax.f32 %v3890, 0.0
      %v4112 = vmax.f32 %v3892, 0.0
      %v4113 = vmax.f32 %v3894, 0.0
      %v4114 = vmax.f32 %v3898, 0.0
      %v4115 = vmax.f32 %v3900, 0.0
      %v4116 = vmax.f32 %v3902, 0.0
      %v4117 = vmax.f32 %v3904, 0.0
      %v4118 = vmax.f32 %v3908, 0.0
      %v4119 = vmax.f32 %v3910, 0.0
      %v4120 = vmax.f32 %v3912, 0.0
      %v4121 = vmax.f32 %v3914, 0.0
      %v4122 = vmax.f32 %v3918, 0.0
      %v4123 = vmax.f32 %v3920, 0.0
      %v4124 = vmax.f32 %v3922, 0.0
      %v4125 = vmax.f32 %v3924, 0.0
      %v4126 = vmax.f32 %v3928, 0.0
      %v4127 = vmax.f32 %v3930, 0.0
      %v4128 = vmax.f32 %v3932, 0.0
      %v4129 = vmax.f32 %v3934, 0.0
      %v4130 = vmax.f32 %v3938, 0.0
      %v4131 = vmax.f32 %v3940, 0.0
      %v4132 = vmax.f32 %v3942, 0.0
      %v4133 = vmax.f32 %v3944, 0.0
      %v4134 = vmax.f32 %v3948, 0.0
      %v4135 = vmax.f32 %v3950, 0.0
      %v4136 = vmax.f32 %v3952, 0.0
      %v4137 = vmax.f32 %v3954, 0.0
      %v4138 = vmax.f32 %v3958, 0.0
      %v4139 = vmax.f32 %v3960, 0.0
      %v4140 = vmax.f32 %v3962, 0.0
      %v4141 = vmax.f32 %v3964, 0.0
      %v4142 = vmax.f32 %v3968, 0.0
      %v4143 = vmax.f32 %v3970, 0.0
      %v4144 = vmax.f32 %v3972, 0.0
      %v4145 = vmax.f32 %v3974, 0.0
      %v4146 = vmax.f32 %v3978, 0.0
      %v4147 = vmax.f32 %v3980, 0.0
      %v4148 = vmax.f32 %v3982, 0.0
      %v4149 = vmax.f32 %v3984, 0.0
      %v4150 = vmax.f32 %v3988, 0.0
      %v4151 = vmax.f32 %v3990, 0.0
      %v4152 = vmax.f32 %v3992, 0.0
      %v4153 = vmax.f32 %v3994, 0.0
      %v4154 = vmax.f32 %v3998, 0.0
      %v4155 = vmax.f32 %v4000, 0.0
      %v4156 = vmax.f32 %v4002, 0.0
      %v4157 = vmax.f32 %v4004, 0.0
      %v4158 = vmax.f32 %v4008, 0.0
      %v4159 = vmax.f32 %v4010, 0.0
      %v4160 = vmax.f32 %v4012, 0.0
      %v4161 = vmax.f32 %v4014, 0.0
      %v4162 = vmax.f32 %v4018, 0.0
      %v4163 = vmax.f32 %v4020, 0.0
      %v4164 = vmax.f32 %v4022, 0.0
      %v4165 = vmax.f32 %v4024, 0.0
      %v4166 = vmax.f32 %v4028, 0.0
      %v4167 = vmax.f32 %v4030, 0.0
      %v4168 = vmax.f32 %v4032, 0.0
      %v4169 = vmax.f32 %v4034, 0.0
      %v4170 = vmax.f32 %v4038, 0.0
      %v4171 = vmax.f32 %v4040, 0.0
      %v4172 = vmax.f32 %v4042, 0.0
      %v4173 = vmax.f32 %v4044, 0.0
      %v4174 = vpack.c.bf16 %v4048, %v4046
      %v4175 = vpack.c.bf16 %v4049, %v4047
      %v4176 = vpack.c.bf16 %v4052, %v4050
      %v4177 = vpack.c.bf16 %v4053, %v4051
      %v4178 = vpack.c.bf16 %v4056, %v4054
      %v4179 = vpack.c.bf16 %v4057, %v4055
      %v4180 = vpack.c.bf16 %v4060, %v4058
      %v4181 = vpack.c.bf16 %v4061, %v4059
      %v4182 = vpack.c.bf16 %v4064, %v4062
      %v4183 = vpack.c.bf16 %v4065, %v4063
      %v4184 = vpack.c.bf16 %v4068, %v4066
      %v4185 = vpack.c.bf16 %v4069, %v4067
      %v4186 = vpack.c.bf16 %v4072, %v4070
      %v4187 = vpack.c.bf16 %v4073, %v4071
      %v4188 = vpack.c.bf16 %v4076, %v4074
      %v4189 = vpack.c.bf16 %v4077, %v4075
      %v4190 = vpack.c.bf16 %v4080, %v4078
      %v4191 = vpack.c.bf16 %v4081, %v4079
      %v4192 = vpack.c.bf16 %v4084, %v4082
      %v4193 = vpack.c.bf16 %v4085, %v4083
      %v4194 = vpack.c.bf16 %v4088, %v4086
      %v4195 = vpack.c.bf16 %v4089, %v4087
      %v4196 = vpack.c.bf16 %v4092, %v4090
      %v4197 = vpack.c.bf16 %v4093, %v4091
      %v4198 = vpack.c.bf16 %v4096, %v4094
      %v4199 = vpack.c.bf16 %v4097, %v4095
      %v4200 = vpack.c.bf16 %v4100, %v4098
      %v4201 = vpack.c.bf16 %v4101, %v4099
      %v4202 = vpack.c.bf16 %v4104, %v4102
      %v4203 = vpack.c.bf16 %v4105, %v4103
      %v4204 = vpack.c.bf16 %v4108, %v4106
      %v4205 = vpack.c.bf16 %v4109, %v4107
      %v4206 = vpack.c.bf16 %v4112, %v4110
      %v4207 = vpack.c.bf16 %v4113, %v4111
      %v4208 = vpack.c.bf16 %v4116, %v4114
      %v4209 = vpack.c.bf16 %v4117, %v4115
      %v4210 = vpack.c.bf16 %v4120, %v4118
      %v4211 = vpack.c.bf16 %v4121, %v4119
      %v4212 = vpack.c.bf16 %v4124, %v4122
      %v4213 = vpack.c.bf16 %v4125, %v4123
      %v4214 = vpack.c.bf16 %v4128, %v4126
      %v4215 = vpack.c.bf16 %v4129, %v4127
      %v4216 = vpack.c.bf16 %v4132, %v4130
      %v4217 = vpack.c.bf16 %v4133, %v4131
      %v4218 = vpack.c.bf16 %v4136, %v4134
      %v4219 = vpack.c.bf16 %v4137, %v4135
      %v4220 = vpack.c.bf16 %v4140, %v4138
      %v4221 = vpack.c.bf16 %v4141, %v4139
      %v4222 = vpack.c.bf16 %v4144, %v4142
      %v4223 = vpack.c.bf16 %v4145, %v4143
      %v4224 = vpack.c.bf16 %v4148, %v4146
      %v4225 = vpack.c.bf16 %v4149, %v4147
      %v4226 = vpack.c.bf16 %v4152, %v4150
      %v4227 = vpack.c.bf16 %v4153, %v4151
      %v4228 = vpack.c.bf16 %v4156, %v4154
      %v4229 = vpack.c.bf16 %v4157, %v4155
      %v4230 = vpack.c.bf16 %v4160, %v4158
      %v4231 = vpack.c.bf16 %v4161, %v4159
      %v4232 = vpack.c.bf16 %v4164, %v4162
      %v4233 = vpack.c.bf16 %v4165, %v4163
      %v4234 = vpack.c.bf16 %v4168, %v4166
      %v4235 = vpack.c.bf16 %v4169, %v4167
      %v4236 = vpack.c.bf16 %v4172, %v4170
      %v4237 = vpack.c.bf16 %v4173, %v4171
      %v4238 = vld [vmem:[%s13] sm:$0xff]
      %v4239 = vld [vmem:[%s13 + $0x8] sm:$0xff]
      %v4240 = vld [vmem:[%s13 + $0x10] sm:$0xff]
      %v4241 = vld [vmem:[%s13 + $0x18] sm:$0xff]
      %v4242 = vld [vmem:[%s13 + $0x20] sm:$0xff]
      %v4243 = vld [vmem:[%s13 + $0x28] sm:$0xff]
      %v4244 = vld [vmem:[%s13 + $0x30] sm:$0xff]
      %v4245 = vld [vmem:[%s13 + $0x38] sm:$0xff]
      %v4246 = vld [vmem:[%s13 + $0x40] sm:$0xff]
      %v4247 = vld [vmem:[%s13 + $0x48] sm:$0xff]
      %v4248 = vld [vmem:[%s13 + $0x50] sm:$0xff]
      %v4249 = vld [vmem:[%s13 + $0x58] sm:$0xff]
      %v4250 = vld [vmem:[%s13 + $0x60] sm:$0xff]
      %v4251 = vld [vmem:[%s13 + $0x68] sm:$0xff]
      %v4252 = vld [vmem:[%s13 + $0x70] sm:$0xff]
      %v4253 = vld [vmem:[%s13 + $0x78] sm:$0xff]
      %v4254 = vld [vmem:[%s13 + $0x80] sm:$0xff]
      %v4255 = vld [vmem:[%s13 + $0x88] sm:$0xff]
      %v4256 = vld [vmem:[%s13 + $0x90] sm:$0xff]
      %v4257 = vld [vmem:[%s13 + $0x98] sm:$0xff]
      %v4258 = vld [vmem:[%s13 + $0xa0] sm:$0xff]
      %v4259 = vld [vmem:[%s13 + $0xa8] sm:$0xff]
      %v4260 = vld [vmem:[%s13 + $0xb0] sm:$0xff]
      %v4261 = vld [vmem:[%s13 + $0xb8] sm:$0xff]
      %v4262 = vld [vmem:[%s13 + $0xc0] sm:$0xff]
      %v4263 = vld [vmem:[%s41] sm:$0x3]
      %v4265 = vlaneseq
      %v4266 = vshrl.u32 %v4265, 7
      %v4267 = vsub.s32 0, %v4266
      %v4268 = vrot.slane %v4263, %v4267
      %v4269 = vlaneseq
      %v4270 = vshrl.u32 %v4269, 7
      %v4271 = vsub.s32 1, %v4270
      %v4272 = vrot.slane %v4263, %v4271
      %v4300 = vunpack.c.l.b16 %v4238
      %v4301 = vunpack.c.h.b16 %v4238
      %v4302 = vunpack.c.l.b16 %v4239
      %v4303 = vunpack.c.h.b16 %v4239
      %v4304 = vunpack.c.l.b16 %v4240
      %v4305 = vunpack.c.h.b16 %v4240
      %v4306 = vunpack.c.l.b16 %v4241
      %v4307 = vunpack.c.h.b16 %v4241
      %v4308 = vunpack.c.l.b16 %v4242
      %v4309 = vunpack.c.h.b16 %v4242
      %v4310 = vunpack.c.l.b16 %v4243
      %v4311 = vunpack.c.h.b16 %v4243
      %v4312 = vunpack.c.l.b16 %v4244
      %v4313 = vunpack.c.h.b16 %v4244
      %v4314 = vunpack.c.l.b16 %v4245
      %v4315 = vunpack.c.h.b16 %v4245
      %v4316 = vunpack.c.l.b16 %v4246
      %v4317 = vunpack.c.h.b16 %v4246
      %v4318 = vunpack.c.l.b16 %v4247
      %v4319 = vunpack.c.h.b16 %v4247
      %v4320 = vunpack.c.l.b16 %v4248
      %v4321 = vunpack.c.h.b16 %v4248
      %v4322 = vunpack.c.l.b16 %v4249
      %v4323 = vunpack.c.h.b16 %v4249
      %v4324 = vunpack.c.l.b16 %v4250
      %v4325 = vunpack.c.h.b16 %v4250
      %v4326 = vunpack.c.l.b16 %v4251
      %v4327 = vunpack.c.h.b16 %v4251
      %v4328 = vunpack.c.l.b16 %v4252
      %v4329 = vunpack.c.h.b16 %v4252
      %v4330 = vunpack.c.l.b16 %v4253
      %v4331 = vunpack.c.h.b16 %v4253
      %v4332 = vunpack.c.l.b16 %v4254
      %v4333 = vunpack.c.h.b16 %v4254
      %v4334 = vunpack.c.l.b16 %v4255
      %v4335 = vunpack.c.h.b16 %v4255
      %v4336 = vunpack.c.l.b16 %v4256
      %v4337 = vunpack.c.h.b16 %v4256
      %v4338 = vunpack.c.l.b16 %v4257
      %v4339 = vunpack.c.h.b16 %v4257
      %v4340 = vunpack.c.l.b16 %v4258
      %v4341 = vunpack.c.h.b16 %v4258
      %v4342 = vunpack.c.l.b16 %v4259
      %v4343 = vunpack.c.h.b16 %v4259
      %v4344 = vunpack.c.l.b16 %v4260
      %v4345 = vunpack.c.h.b16 %v4260
      %v4346 = vunpack.c.l.b16 %v4261
      %v4347 = vunpack.c.h.b16 %v4261
      %v4348 = vunpack.c.l.b16 %v4262
      %v4349 = vunpack.c.h.b16 %v4262
      %v4350 = vpack.c.b16 %v4302, %v4300
      %v4351 = vpack.c.b16 %v4303, %v4301
      %v4352 = vpack.c.b16 %v4306, %v4304
      %v4353 = vpack.c.b16 %v4307, %v4305
      %v4354 = vpack.c.b16 %v4310, %v4308
      %v4355 = vpack.c.b16 %v4311, %v4309
      %v4356 = vpack.c.b16 %v4314, %v4312
      %v4357 = vpack.c.b16 %v4315, %v4313
      %v4358 = vpack.c.b16 %v4318, %v4316
      %v4359 = vpack.c.b16 %v4319, %v4317
      %v4360 = vpack.c.b16 %v4322, %v4320
      %v4361 = vpack.c.b16 %v4323, %v4321
      %v4362 = vpack.c.b16 %v4326, %v4324
      %v4363 = vpack.c.b16 %v4327, %v4325
      %v4364 = vpack.c.b16 %v4330, %v4328
      %v4365 = vpack.c.b16 %v4331, %v4329
      %v4366 = vpack.c.b16 %v4334, %v4332
      %v4367 = vpack.c.b16 %v4335, %v4333
      %v4368 = vpack.c.b16 %v4338, %v4336
      %v4369 = vpack.c.b16 %v4339, %v4337
      %v4370 = vpack.c.b16 %v4342, %v4340
      %v4371 = vpack.c.b16 %v4343, %v4341
      %v4372 = vpack.c.b16 %v4346, %v4344
      %v4373 = vpack.c.b16 %v4347, %v4345
      %v4374 = vpack.c.b16 %v4348, %v4348
      %v4375 = vpack.c.b16 %v4349, %v4349
      %v4401 = vsel %vm1971, %v4175, 0
      %v4404 = vsel %vm1971, %v4177, 0
      %v4407 = vsel %vm1971, %v4179, 0
      %v4410 = vsel %vm1971, %v4181, 0
      %v4413 = vsel %vm1971, %v4183, 0
      %v4416 = vsel %vm1971, %v4185, 0
      %v4419 = vsel %vm1971, %v4187, 0
      %v4422 = vsel %vm1971, %v4189, 0
      %v4425 = vsel %vm1971, %v4191, 0
      %v4428 = vsel %vm1971, %v4193, 0
      %v4431 = vsel %vm1971, %v4195, 0
      %v4434 = vsel %vm1971, %v4197, 0
      %v4437 = vsel %vm1971, %v4199, 0
      %v4440 = vsel %vm1971, %v4201, 0
      %v4443 = vsel %vm1971, %v4203, 0
      %v4446 = vsel %vm1971, %v4205, 0
      %v4449 = vsel %vm1971, %v4207, 0
      %v4452 = vsel %vm1971, %v4209, 0
      %v4455 = vsel %vm1971, %v4211, 0
      %v4458 = vsel %vm1971, %v4213, 0
      %v4461 = vsel %vm1971, %v4215, 0
      %v4464 = vsel %vm1971, %v4217, 0
      %v4467 = vsel %vm1971, %v4219, 0
      %v4470 = vsel %vm1971, %v4221, 0
      %v4473 = vsel %vm1971, %v4223, 0
      %v4476 = vsel %vm1971, %v4225, 0
      %v4479 = vsel %vm1971, %v4227, 0
      %v4482 = vsel %vm1971, %v4229, 0
      %v4485 = vsel %vm1971, %v4231, 0
      %v4488 = vsel %vm1971, %v4233, 0
      %v4491 = vsel %vm1971, %v4235, 0
      %v4494 = vsel %vm1971, %v4237, 0
      %v4497 = vsel %vm2068, %v4374, 0
      %v4500 = vsel %vm2068, %v4375, 0
      %4502 = vmatprep.subr.bf16.mxu0 %v4351
      %4503 = vmatpush1.bf16.msra.mxu0 %v4350
      %4504 = vmatprep.subr.bf16.mxu0 %v4353
      %4505 = vmatpush1.bf16.msra.mxu0 %v4352
      %4506 = vmatprep.subr.bf16.mxu0 %v4355
      %4507 = vmatpush1.bf16.msra.mxu0 %v4354
      %4508 = vmatprep.subr.bf16.mxu0 %v4357
      %4509 = vmatpush1.bf16.msra.mxu0 %v4356
      %4510 = vmatprep.subr.bf16.mxu0 %v4359
      %4511 = vmatpush1.bf16.msra.mxu0 %v4358
      %4512 = vmatprep.subr.bf16.mxu0 %v4361
      %4513 = vmatpush1.bf16.msra.mxu0 %v4360
      %4514 = vmatprep.subr.bf16.mxu0 %v4363
      %4515 = vmatpush1.bf16.msra.mxu0 %v4362
      %4516 = vmatprep.subr.bf16.mxu0 %v4365
      %4517 = vmatpush1.bf16.msra.mxu0 %v4364
      %4518 = vmatprep.subr.bf16.mxu0 %v4367
      %4519 = vmatpush1.bf16.msra.mxu0 %v4366
      %4520 = vmatprep.subr.bf16.mxu0 %v4369
      %4521 = vmatpush1.bf16.msra.mxu0 %v4368
      %4522 = vmatprep.subr.bf16.mxu0 %v4371
      %4523 = vmatpush1.bf16.msra.mxu0 %v4370
      %4524 = vmatprep.subr.bf16.mxu0 %v4373
      %4525 = vmatpush1.bf16.msra.mxu0 %v4372
      %4526 = vmatprep.subr.bf16.mxu0 %v4500
      %4527 = vmatpush1.bf16.msra.mxu0 %v4497
      %4528 = vmatprep.subr.bf16.mxu0 0
      %4529 = vmatpush1.bf16.msra.mxu0 0
      %4530 = vmatprep.subr.bf16.mxu0 0
      %4531 = vmatpush1.bf16.msra.mxu0 0
      %4532 = vmatprep.subr.bf16.mxu0 0
      %4533 = vmatpush1.bf16.msra.mxu0 0
      %4534 = vmatprep.mubr.bf16.mxu0 %v4401
      %4535 = vmatmul.mubr.bf16.gmra.mrb[0].mxu0 %v4174
      %v4536 = vpop.f32.mrb[0].mxu0
      %v4537 = vadd.f32 %v4268, %v4536
      %v4538 = vpop.f32.mrb[0].mxu0
      %v4539 = vadd.f32 %v4272, %v4538
      %v4540 = vpop.f32.mrb[0].mxu0
      %v4541 = vadd.f32 %v4268, %v4540
      %v4542 = vpop.f32.mrb[0].mxu0
      %v4543 = vadd.f32 %v4272, %v4542
      %4544 = vmatprep.mubr.bf16.mxu0 %v4404
      %4545 = vmatmul.mubr.bf16.gmra.mrb[0].mxu0 %v4176
      %v4546 = vpop.f32.mrb[0].mxu0
      %v4547 = vadd.f32 %v4268, %v4546
      %v4548 = vpop.f32.mrb[0].mxu0
      %v4549 = vadd.f32 %v4272, %v4548
      %v4550 = vpop.f32.mrb[0].mxu0
      %v4551 = vadd.f32 %v4268, %v4550
      %v4552 = vpop.f32.mrb[0].mxu0
      %v4553 = vadd.f32 %v4272, %v4552
      %4554 = vmatprep.mubr.bf16.mxu0 %v4407
      %4555 = vmatmul.mubr.bf16.gmra.mrb[0].mxu0 %v4178
      %v4556 = vpop.f32.mrb[0].mxu0
      %v4557 = vadd.f32 %v4268, %v4556
      %v4558 = vpop.f32.mrb[0].mxu0
      %v4559 = vadd.f32 %v4272, %v4558
      %v4560 = vpop.f32.mrb[0].mxu0
      %v4561 = vadd.f32 %v4268, %v4560
      %v4562 = vpop.f32.mrb[0].mxu0
      %v4563 = vadd.f32 %v4272, %v4562
      %4564 = vmatprep.mubr.bf16.mxu0 %v4410
      %4565 = vmatmul.mubr.bf16.gmra.mrb[0].mxu0 %v4180
      %v4566 = vpop.f32.mrb[0].mxu0
      %v4567 = vadd.f32 %v4268, %v4566
      %v4568 = vpop.f32.mrb[0].mxu0
      %v4569 = vadd.f32 %v4272, %v4568
      %v4570 = vpop.f32.mrb[0].mxu0
      %v4571 = vadd.f32 %v4268, %v4570
      %v4572 = vpop.f32.mrb[0].mxu0
      %v4573 = vadd.f32 %v4272, %v4572
      %4574 = vmatprep.mubr.bf16.mxu0 %v4413
      %4575 = vmatmul.mubr.bf16.gmra.mrb[0].mxu0 %v4182
      %v4576 = vpop.f32.mrb[0].mxu0
      %v4577 = vadd.f32 %v4268, %v4576
      %v4578 = vpop.f32.mrb[0].mxu0
      %v4579 = vadd.f32 %v4272, %v4578
      %v4580 = vpop.f32.mrb[0].mxu0
      %v4581 = vadd.f32 %v4268, %v4580
      %v4582 = vpop.f32.mrb[0].mxu0
      %v4583 = vadd.f32 %v4272, %v4582
      %4584 = vmatprep.mubr.bf16.mxu0 %v4416
      %4585 = vmatmul.mubr.bf16.gmra.mrb[0].mxu0 %v4184
      %v4586 = vpop.f32.mrb[0].mxu0
      %v4587 = vadd.f32 %v4268, %v4586
      %v4588 = vpop.f32.mrb[0].mxu0
      %v4589 = vadd.f32 %v4272, %v4588
      %v4590 = vpop.f32.mrb[0].mxu0
      %v4591 = vadd.f32 %v4268, %v4590
      %v4592 = vpop.f32.mrb[0].mxu0
      %v4593 = vadd.f32 %v4272, %v4592
      %4594 = vmatprep.mubr.bf16.mxu0 %v4419
      %4595 = vmatmul.mubr.bf16.gmra.mrb[0].mxu0 %v4186
      %v4596 = vpop.f32.mrb[0].mxu0
      %v4597 = vadd.f32 %v4268, %v4596
      %v4598 = vpop.f32.mrb[0].mxu0
      %v4599 = vadd.f32 %v4272, %v4598
      %v4600 = vpop.f32.mrb[0].mxu0
      %v4601 = vadd.f32 %v4268, %v4600
      %v4602 = vpop.f32.mrb[0].mxu0
      %v4603 = vadd.f32 %v4272, %v4602
      %4604 = vmatprep.mubr.bf16.mxu0 %v4422
      %4605 = vmatmul.mubr.bf16.gmra.mrb[0].mxu0 %v4188
      %v4606 = vpop.f32.mrb[0].mxu0
      %v4607 = vadd.f32 %v4268, %v4606
      %v4608 = vpop.f32.mrb[0].mxu0
      %v4609 = vadd.f32 %v4272, %v4608
      %v4610 = vpop.f32.mrb[0].mxu0
      %v4611 = vadd.f32 %v4268, %v4610
      %v4612 = vpop.f32.mrb[0].mxu0
      %v4613 = vadd.f32 %v4272, %v4612
      %4614 = vmatprep.mubr.bf16.mxu0 %v4425
      %4615 = vmatmul.mubr.bf16.gmra.mrb[0].mxu0 %v4190
      %v4616 = vpop.f32.mrb[0].mxu0
      %v4617 = vadd.f32 %v4268, %v4616
      %v4618 = vpop.f32.mrb[0].mxu0
      %v4619 = vadd.f32 %v4272, %v4618
      %v4620 = vpop.f32.mrb[0].mxu0
      %v4621 = vadd.f32 %v4268, %v4620
      %v4622 = vpop.f32.mrb[0].mxu0
      %v4623 = vadd.f32 %v4272, %v4622
      %4624 = vmatprep.mubr.bf16.mxu0 %v4428
      %4625 = vmatmul.mubr.bf16.gmra.mrb[0].mxu0 %v4192
      %v4626 = vpop.f32.mrb[0].mxu0
      %v4627 = vadd.f32 %v4268, %v4626
      %v4628 = vpop.f32.mrb[0].mxu0
      %v4629 = vadd.f32 %v4272, %v4628
      %v4630 = vpop.f32.mrb[0].mxu0
      %v4631 = vadd.f32 %v4268, %v4630
      %v4632 = vpop.f32.mrb[0].mxu0
      %v4633 = vadd.f32 %v4272, %v4632
      %4634 = vmatprep.mubr.bf16.mxu0 %v4431
      %4635 = vmatmul.mubr.bf16.gmra.mrb[0].mxu0 %v4194
      %v4636 = vpop.f32.mrb[0].mxu0
      %v4637 = vadd.f32 %v4268, %v4636
      %v4638 = vpop.f32.mrb[0].mxu0
      %v4639 = vadd.f32 %v4272, %v4638
      %v4640 = vpop.f32.mrb[0].mxu0
      %v4641 = vadd.f32 %v4268, %v4640
      %v4642 = vpop.f32.mrb[0].mxu0
      %v4643 = vadd.f32 %v4272, %v4642
      %4644 = vmatprep.mubr.bf16.mxu0 %v4434
      %4645 = vmatmul.mubr.bf16.gmra.mrb[0].mxu0 %v4196
      %v4646 = vpop.f32.mrb[0].mxu0
      %v4647 = vadd.f32 %v4268, %v4646
      %v4648 = vpop.f32.mrb[0].mxu0
      %v4649 = vadd.f32 %v4272, %v4648
      %v4650 = vpop.f32.mrb[0].mxu0
      %v4651 = vadd.f32 %v4268, %v4650
      %v4652 = vpop.f32.mrb[0].mxu0
      %v4653 = vadd.f32 %v4272, %v4652
      %4654 = vmatprep.mubr.bf16.mxu0 %v4437
      %4655 = vmatmul.mubr.bf16.gmra.mrb[0].mxu0 %v4198
      %v4656 = vpop.f32.mrb[0].mxu0
      %v4657 = vadd.f32 %v4268, %v4656
      %v4658 = vpop.f32.mrb[0].mxu0
      %v4659 = vadd.f32 %v4272, %v4658
      %v4660 = vpop.f32.mrb[0].mxu0
      %v4661 = vadd.f32 %v4268, %v4660
      %v4662 = vpop.f32.mrb[0].mxu0
      %v4663 = vadd.f32 %v4272, %v4662
      %4664 = vmatprep.mubr.bf16.mxu0 %v4440
      %4665 = vmatmul.mubr.bf16.gmra.mrb[0].mxu0 %v4200
      %v4666 = vpop.f32.mrb[0].mxu0
      %v4667 = vadd.f32 %v4268, %v4666
      %v4668 = vpop.f32.mrb[0].mxu0
      %v4669 = vadd.f32 %v4272, %v4668
      %v4670 = vpop.f32.mrb[0].mxu0
      %v4671 = vadd.f32 %v4268, %v4670
      %v4672 = vpop.f32.mrb[0].mxu0
      %v4673 = vadd.f32 %v4272, %v4672
      %4674 = vmatprep.mubr.bf16.mxu0 %v4443
      %4675 = vmatmul.mubr.bf16.gmra.mrb[0].mxu0 %v4202
      %v4676 = vpop.f32.mrb[0].mxu0
      %v4677 = vadd.f32 %v4268, %v4676
      %v4678 = vpop.f32.mrb[0].mxu0
      %v4679 = vadd.f32 %v4272, %v4678
      %v4680 = vpop.f32.mrb[0].mxu0
      %v4681 = vadd.f32 %v4268, %v4680
      %v4682 = vpop.f32.mrb[0].mxu0
      %v4683 = vadd.f32 %v4272, %v4682
      %4684 = vmatprep.mubr.bf16.mxu0 %v4446
      %4685 = vmatmul.mubr.bf16.gmra.mrb[0].mxu0 %v4204
      %v4686 = vpop.f32.mrb[0].mxu0
      %v4687 = vadd.f32 %v4268, %v4686
      %v4688 = vpop.f32.mrb[0].mxu0
      %v4689 = vadd.f32 %v4272, %v4688
      %v4690 = vpop.f32.mrb[0].mxu0
      %v4691 = vadd.f32 %v4268, %v4690
      %v4692 = vpop.f32.mrb[0].mxu0
      %v4693 = vadd.f32 %v4272, %v4692
      %4694 = vmatprep.mubr.bf16.mxu0 %v4449
      %4695 = vmatmul.mubr.bf16.gmra.mrb[0].mxu0 %v4206
      %v4696 = vpop.f32.mrb[0].mxu0
      %v4697 = vadd.f32 %v4268, %v4696
      %v4698 = vpop.f32.mrb[0].mxu0
      %v4699 = vadd.f32 %v4272, %v4698
      %v4700 = vpop.f32.mrb[0].mxu0
      %v4701 = vadd.f32 %v4268, %v4700
      %v4702 = vpop.f32.mrb[0].mxu0
      %v4703 = vadd.f32 %v4272, %v4702
      %4704 = vmatprep.mubr.bf16.mxu0 %v4452
      %4705 = vmatmul.mubr.bf16.gmra.mrb[0].mxu0 %v4208
      %v4706 = vpop.f32.mrb[0].mxu0
      %v4707 = vadd.f32 %v4268, %v4706
      %v4708 = vpop.f32.mrb[0].mxu0
      %v4709 = vadd.f32 %v4272, %v4708
      %v4710 = vpop.f32.mrb[0].mxu0
      %v4711 = vadd.f32 %v4268, %v4710
      %v4712 = vpop.f32.mrb[0].mxu0
      %v4713 = vadd.f32 %v4272, %v4712
      %4714 = vmatprep.mubr.bf16.mxu0 %v4455
      %4715 = vmatmul.mubr.bf16.gmra.mrb[0].mxu0 %v4210
      %v4716 = vpop.f32.mrb[0].mxu0
      %v4717 = vadd.f32 %v4268, %v4716
      %v4718 = vpop.f32.mrb[0].mxu0
      %v4719 = vadd.f32 %v4272, %v4718
      %v4720 = vpop.f32.mrb[0].mxu0
      %v4721 = vadd.f32 %v4268, %v4720
      %v4722 = vpop.f32.mrb[0].mxu0
      %v4723 = vadd.f32 %v4272, %v4722
      %4724 = vmatprep.mubr.bf16.mxu0 %v4458
      %4725 = vmatmul.mubr.bf16.gmra.mrb[0].mxu0 %v4212
      %v4726 = vpop.f32.mrb[0].mxu0
      %v4727 = vadd.f32 %v4268, %v4726
      %v4728 = vpop.f32.mrb[0].mxu0
      %v4729 = vadd.f32 %v4272, %v4728
      %v4730 = vpop.f32.mrb[0].mxu0
      %v4731 = vadd.f32 %v4268, %v4730
      %v4732 = vpop.f32.mrb[0].mxu0
      %v4733 = vadd.f32 %v4272, %v4732
      %4734 = vmatprep.mubr.bf16.mxu0 %v4461
      %4735 = vmatmul.mubr.bf16.gmra.mrb[0].mxu0 %v4214
      %v4736 = vpop.f32.mrb[0].mxu0
      %v4737 = vadd.f32 %v4268, %v4736
      %v4738 = vpop.f32.mrb[0].mxu0
      %v4739 = vadd.f32 %v4272, %v4738
      %v4740 = vpop.f32.mrb[0].mxu0
      %v4741 = vadd.f32 %v4268, %v4740
      %v4742 = vpop.f32.mrb[0].mxu0
      %v4743 = vadd.f32 %v4272, %v4742
      %4744 = vmatprep.mubr.bf16.mxu0 %v4464
      %4745 = vmatmul.mubr.bf16.gmra.mrb[0].mxu0 %v4216
      %v4746 = vpop.f32.mrb[0].mxu0
      %v4747 = vadd.f32 %v4268, %v4746
      %v4748 = vpop.f32.mrb[0].mxu0
      %v4749 = vadd.f32 %v4272, %v4748
      %v4750 = vpop.f32.mrb[0].mxu0
      %v4751 = vadd.f32 %v4268, %v4750
      %v4752 = vpop.f32.mrb[0].mxu0
      %v4753 = vadd.f32 %v4272, %v4752
      %4754 = vmatprep.mubr.bf16.mxu0 %v4467
      %4755 = vmatmul.mubr.bf16.gmra.mrb[0].mxu0 %v4218
      %v4756 = vpop.f32.mrb[0].mxu0
      %v4757 = vadd.f32 %v4268, %v4756
      %v4758 = vpop.f32.mrb[0].mxu0
      %v4759 = vadd.f32 %v4272, %v4758
      %v4760 = vpop.f32.mrb[0].mxu0
      %v4761 = vadd.f32 %v4268, %v4760
      %v4762 = vpop.f32.mrb[0].mxu0
      %v4763 = vadd.f32 %v4272, %v4762
      %4764 = vmatprep.mubr.bf16.mxu0 %v4470
      %4765 = vmatmul.mubr.bf16.gmra.mrb[0].mxu0 %v4220
      %v4766 = vpop.f32.mrb[0].mxu0
      %v4767 = vadd.f32 %v4268, %v4766
      %v4768 = vpop.f32.mrb[0].mxu0
      %v4769 = vadd.f32 %v4272, %v4768
      %v4770 = vpop.f32.mrb[0].mxu0
      %v4771 = vadd.f32 %v4268, %v4770
      %v4772 = vpop.f32.mrb[0].mxu0
      %v4773 = vadd.f32 %v4272, %v4772
      %4774 = vmatprep.mubr.bf16.mxu0 %v4473
      %4775 = vmatmul.mubr.bf16.gmra.mrb[0].mxu0 %v4222
      %v4776 = vpop.f32.mrb[0].mxu0
      %v4777 = vadd.f32 %v4268, %v4776
      %v4778 = vpop.f32.mrb[0].mxu0
      %v4779 = vadd.f32 %v4272, %v4778
      %v4780 = vpop.f32.mrb[0].mxu0
      %v4781 = vadd.f32 %v4268, %v4780
      %v4782 = vpop.f32.mrb[0].mxu0
      %v4783 = vadd.f32 %v4272, %v4782
      %4784 = vmatprep.mubr.bf16.mxu0 %v4476
      %4785 = vmatmul.mubr.bf16.gmra.mrb[0].mxu0 %v4224
      %v4786 = vpop.f32.mrb[0].mxu0
      %v4787 = vadd.f32 %v4268, %v4786
      %v4788 = vpop.f32.mrb[0].mxu0
      %v4789 = vadd.f32 %v4272, %v4788
      %v4790 = vpop.f32.mrb[0].mxu0
      %v4791 = vadd.f32 %v4268, %v4790
      %v4792 = vpop.f32.mrb[0].mxu0
      %v4793 = vadd.f32 %v4272, %v4792
      %4794 = vmatprep.mubr.bf16.mxu0 %v4479
      %4795 = vmatmul.mubr.bf16.gmra.mrb[0].mxu0 %v4226
      %v4796 = vpop.f32.mrb[0].mxu0
      %v4797 = vadd.f32 %v4268, %v4796
      %v4798 = vpop.f32.mrb[0].mxu0
      %v4799 = vadd.f32 %v4272, %v4798
      %v4800 = vpop.f32.mrb[0].mxu0
      %v4801 = vadd.f32 %v4268, %v4800
      %v4802 = vpop.f32.mrb[0].mxu0
      %v4803 = vadd.f32 %v4272, %v4802
      %4804 = vmatprep.mubr.bf16.mxu0 %v4482
      %4805 = vmatmul.mubr.bf16.gmra.mrb[0].mxu0 %v4228
      %v4806 = vpop.f32.mrb[0].mxu0
      %v4807 = vadd.f32 %v4268, %v4806
      %v4808 = vpop.f32.mrb[0].mxu0
      %v4809 = vadd.f32 %v4272, %v4808
      %v4810 = vpop.f32.mrb[0].mxu0
      %v4811 = vadd.f32 %v4268, %v4810
      %v4812 = vpop.f32.mrb[0].mxu0
      %v4813 = vadd.f32 %v4272, %v4812
      %4814 = vmatprep.mubr.bf16.mxu0 %v4485
      %4815 = vmatmul.mubr.bf16.gmra.mrb[0].mxu0 %v4230
      %v4816 = vpop.f32.mrb[0].mxu0
      %v4817 = vadd.f32 %v4268, %v4816
      %v4818 = vpop.f32.mrb[0].mxu0
      %v4819 = vadd.f32 %v4272, %v4818
      %v4820 = vpop.f32.mrb[0].mxu0
      %v4821 = vadd.f32 %v4268, %v4820
      %v4822 = vpop.f32.mrb[0].mxu0
      %v4823 = vadd.f32 %v4272, %v4822
      %4824 = vmatprep.mubr.bf16.mxu0 %v4488
      %4825 = vmatmul.mubr.bf16.gmra.mrb[0].mxu0 %v4232
      %v4826 = vpop.f32.mrb[0].mxu0
      %v4827 = vadd.f32 %v4268, %v4826
      %v4828 = vpop.f32.mrb[0].mxu0
      %v4829 = vadd.f32 %v4272, %v4828
      %v4830 = vpop.f32.mrb[0].mxu0
      %v4831 = vadd.f32 %v4268, %v4830
      %v4832 = vpop.f32.mrb[0].mxu0
      %v4833 = vadd.f32 %v4272, %v4832
      %4834 = vmatprep.mubr.bf16.mxu0 %v4491
      %4835 = vmatmul.mubr.bf16.gmra.mrb[0].mxu0 %v4234
      %v4836 = vpop.f32.mrb[0].mxu0
      %v4837 = vadd.f32 %v4268, %v4836
      %v4838 = vpop.f32.mrb[0].mxu0
      %v4839 = vadd.f32 %v4272, %v4838
      %v4840 = vpop.f32.mrb[0].mxu0
      %v4841 = vadd.f32 %v4268, %v4840
      %v4842 = vpop.f32.mrb[0].mxu0
      %v4843 = vadd.f32 %v4272, %v4842
      %4844 = vmatprep.mubr.bf16.mxu0 %v4494
      %4845 = vmatmul.mubr.bf16.gmra.mrb[0].mxu0 %v4236
      %v4846 = vpop.f32.mrb[0].mxu0
      %v4847 = vadd.f32 %v4268, %v4846
      %v4848 = vpop.f32.mrb[0].mxu0
      %v4849 = vadd.f32 %v4272, %v4848
      %v4850 = vpop.f32.mrb[0].mxu0
      %v4851 = vadd.f32 %v4268, %v4850
      %v4852 = vpop.f32.mrb[0].mxu0
      %v4853 = vadd.f32 %v4272, %v4852
      %4854 = vdwg.mxu0
      %v4855 = vmax.f32 %v4537, 0.0
      %v4856 = vmax.f32 %v4539, 0.0
      %v4857 = vmax.f32 %v4541, 0.0
      %v4858 = vmax.f32 %v4543, 0.0
      %v4859 = vmax.f32 %v4547, 0.0
      %v4860 = vmax.f32 %v4549, 0.0
      %v4861 = vmax.f32 %v4551, 0.0
      %v4862 = vmax.f32 %v4553, 0.0
      %v4863 = vmax.f32 %v4557, 0.0
      %v4864 = vmax.f32 %v4559, 0.0
      %v4865 = vmax.f32 %v4561, 0.0
      %v4866 = vmax.f32 %v4563, 0.0
      %v4867 = vmax.f32 %v4567, 0.0
      %v4868 = vmax.f32 %v4569, 0.0
      %v4869 = vmax.f32 %v4571, 0.0
      %v4870 = vmax.f32 %v4573, 0.0
      %v4871 = vmax.f32 %v4577, 0.0
      %v4872 = vmax.f32 %v4579, 0.0
      %v4873 = vmax.f32 %v4581, 0.0
      %v4874 = vmax.f32 %v4583, 0.0
      %v4875 = vmax.f32 %v4587, 0.0
      %v4876 = vmax.f32 %v4589, 0.0
      %v4877 = vmax.f32 %v4591, 0.0
      %v4878 = vmax.f32 %v4593, 0.0
      %v4879 = vmax.f32 %v4597, 0.0
      %v4880 = vmax.f32 %v4599, 0.0
      %v4881 = vmax.f32 %v4601, 0.0
      %v4882 = vmax.f32 %v4603, 0.0
      %v4883 = vmax.f32 %v4607, 0.0
      %v4884 = vmax.f32 %v4609, 0.0
      %v4885 = vmax.f32 %v4611, 0.0
      %v4886 = vmax.f32 %v4613, 0.0
      %v4887 = vmax.f32 %v4617, 0.0
      %v4888 = vmax.f32 %v4619, 0.0
      %v4889 = vmax.f32 %v4621, 0.0
      %v4890 = vmax.f32 %v4623, 0.0
      %v4891 = vmax.f32 %v4627, 0.0
      %v4892 = vmax.f32 %v4629, 0.0
      %v4893 = vmax.f32 %v4631, 0.0
      %v4894 = vmax.f32 %v4633, 0.0
      %v4895 = vmax.f32 %v4637, 0.0
      %v4896 = vmax.f32 %v4639, 0.0
      %v4897 = vmax.f32 %v4641, 0.0
      %v4898 = vmax.f32 %v4643, 0.0
      %v4899 = vmax.f32 %v4647, 0.0
      %v4900 = vmax.f32 %v4649, 0.0
      %v4901 = vmax.f32 %v4651, 0.0
      %v4902 = vmax.f32 %v4653, 0.0
      %v4903 = vmax.f32 %v4657, 0.0
      %v4904 = vmax.f32 %v4659, 0.0
      %v4905 = vmax.f32 %v4661, 0.0
      %v4906 = vmax.f32 %v4663, 0.0
      %v4907 = vmax.f32 %v4667, 0.0
      %v4908 = vmax.f32 %v4669, 0.0
      %v4909 = vmax.f32 %v4671, 0.0
      %v4910 = vmax.f32 %v4673, 0.0
      %v4911 = vmax.f32 %v4677, 0.0
      %v4912 = vmax.f32 %v4679, 0.0
      %v4913 = vmax.f32 %v4681, 0.0
      %v4914 = vmax.f32 %v4683, 0.0
      %v4915 = vmax.f32 %v4687, 0.0
      %v4916 = vmax.f32 %v4689, 0.0
      %v4917 = vmax.f32 %v4691, 0.0
      %v4918 = vmax.f32 %v4693, 0.0
      %v4919 = vmax.f32 %v4697, 0.0
      %v4920 = vmax.f32 %v4699, 0.0
      %v4921 = vmax.f32 %v4701, 0.0
      %v4922 = vmax.f32 %v4703, 0.0
      %v4923 = vmax.f32 %v4707, 0.0
      %v4924 = vmax.f32 %v4709, 0.0
      %v4925 = vmax.f32 %v4711, 0.0
      %v4926 = vmax.f32 %v4713, 0.0
      %v4927 = vmax.f32 %v4717, 0.0
      %v4928 = vmax.f32 %v4719, 0.0
      %v4929 = vmax.f32 %v4721, 0.0
      %v4930 = vmax.f32 %v4723, 0.0
      %v4931 = vmax.f32 %v4727, 0.0
      %v4932 = vmax.f32 %v4729, 0.0
      %v4933 = vmax.f32 %v4731, 0.0
      %v4934 = vmax.f32 %v4733, 0.0
      %v4935 = vmax.f32 %v4737, 0.0
      %v4936 = vmax.f32 %v4739, 0.0
      %v4937 = vmax.f32 %v4741, 0.0
      %v4938 = vmax.f32 %v4743, 0.0
      %v4939 = vmax.f32 %v4747, 0.0
      %v4940 = vmax.f32 %v4749, 0.0
      %v4941 = vmax.f32 %v4751, 0.0
      %v4942 = vmax.f32 %v4753, 0.0
      %v4943 = vmax.f32 %v4757, 0.0
      %v4944 = vmax.f32 %v4759, 0.0
      %v4945 = vmax.f32 %v4761, 0.0
      %v4946 = vmax.f32 %v4763, 0.0
      %v4947 = vmax.f32 %v4767, 0.0
      %v4948 = vmax.f32 %v4769, 0.0
      %v4949 = vmax.f32 %v4771, 0.0
      %v4950 = vmax.f32 %v4773, 0.0
      %v4951 = vmax.f32 %v4777, 0.0
      %v4952 = vmax.f32 %v4779, 0.0
      %v4953 = vmax.f32 %v4781, 0.0
      %v4954 = vmax.f32 %v4783, 0.0
      %v4955 = vmax.f32 %v4787, 0.0
      %v4956 = vmax.f32 %v4789, 0.0
      %v4957 = vmax.f32 %v4791, 0.0
      %v4958 = vmax.f32 %v4793, 0.0
      %v4959 = vmax.f32 %v4797, 0.0
      %v4960 = vmax.f32 %v4799, 0.0
      %v4961 = vmax.f32 %v4801, 0.0
      %v4962 = vmax.f32 %v4803, 0.0
      %v4963 = vmax.f32 %v4807, 0.0
      %v4964 = vmax.f32 %v4809, 0.0
      %v4965 = vmax.f32 %v4811, 0.0
      %v4966 = vmax.f32 %v4813, 0.0
      %v4967 = vmax.f32 %v4817, 0.0
      %v4968 = vmax.f32 %v4819, 0.0
      %v4969 = vmax.f32 %v4821, 0.0
      %v4970 = vmax.f32 %v4823, 0.0
      %v4971 = vmax.f32 %v4827, 0.0
      %v4972 = vmax.f32 %v4829, 0.0
      %v4973 = vmax.f32 %v4831, 0.0
      %v4974 = vmax.f32 %v4833, 0.0
      %v4975 = vmax.f32 %v4837, 0.0
      %v4976 = vmax.f32 %v4839, 0.0
      %v4977 = vmax.f32 %v4841, 0.0
      %v4978 = vmax.f32 %v4843, 0.0
      %v4979 = vmax.f32 %v4847, 0.0
      %v4980 = vmax.f32 %v4849, 0.0
      %v4981 = vmax.f32 %v4851, 0.0
      %v4982 = vmax.f32 %v4853, 0.0
      %v4983 = vpack.c.bf16 %v4857, %v4855
      %v4984 = vpack.c.bf16 %v4858, %v4856
      %v4985 = vpack.c.bf16 %v4861, %v4859
      %v4986 = vpack.c.bf16 %v4862, %v4860
      %v4987 = vpack.c.bf16 %v4865, %v4863
      %v4988 = vpack.c.bf16 %v4866, %v4864
      %v4989 = vpack.c.bf16 %v4869, %v4867
      %v4990 = vpack.c.bf16 %v4870, %v4868
      %v4991 = vpack.c.bf16 %v4873, %v4871
      %v4992 = vpack.c.bf16 %v4874, %v4872
      %v4993 = vpack.c.bf16 %v4877, %v4875
      %v4994 = vpack.c.bf16 %v4878, %v4876
      %v4995 = vpack.c.bf16 %v4881, %v4879
      %v4996 = vpack.c.bf16 %v4882, %v4880
      %v4997 = vpack.c.bf16 %v4885, %v4883
      %v4998 = vpack.c.bf16 %v4886, %v4884
      %v4999 = vpack.c.bf16 %v4889, %v4887
      %v5000 = vpack.c.bf16 %v4890, %v4888
      %v5001 = vpack.c.bf16 %v4893, %v4891
      %v5002 = vpack.c.bf16 %v4894, %v4892
      %v5003 = vpack.c.bf16 %v4897, %v4895
      %v5004 = vpack.c.bf16 %v4898, %v4896
      %v5005 = vpack.c.bf16 %v4901, %v4899
      %v5006 = vpack.c.bf16 %v4902, %v4900
      %v5007 = vpack.c.bf16 %v4905, %v4903
      %v5008 = vpack.c.bf16 %v4906, %v4904
      %v5009 = vpack.c.bf16 %v4909, %v4907
      %v5010 = vpack.c.bf16 %v4910, %v4908
      %v5011 = vpack.c.bf16 %v4913, %v4911
      %v5012 = vpack.c.bf16 %v4914, %v4912
      %v5013 = vpack.c.bf16 %v4917, %v4915
      %v5014 = vpack.c.bf16 %v4918, %v4916
      %v5015 = vpack.c.bf16 %v4921, %v4919
      %v5016 = vpack.c.bf16 %v4922, %v4920
      %v5017 = vpack.c.bf16 %v4925, %v4923
      %v5018 = vpack.c.bf16 %v4926, %v4924
      %v5019 = vpack.c.bf16 %v4929, %v4927
      %v5020 = vpack.c.bf16 %v4930, %v4928
      %v5021 = vpack.c.bf16 %v4933, %v4931
      %v5022 = vpack.c.bf16 %v4934, %v4932
      %v5023 = vpack.c.bf16 %v4937, %v4935
      %v5024 = vpack.c.bf16 %v4938, %v4936
      %v5025 = vpack.c.bf16 %v4941, %v4939
      %v5026 = vpack.c.bf16 %v4942, %v4940
      %v5027 = vpack.c.bf16 %v4945, %v4943
      %v5028 = vpack.c.bf16 %v4946, %v4944
      %v5029 = vpack.c.bf16 %v4949, %v4947
      %v5030 = vpack.c.bf16 %v4950, %v4948
      %v5031 = vpack.c.bf16 %v4953, %v4951
      %v5032 = vpack.c.bf16 %v4954, %v4952
      %v5033 = vpack.c.bf16 %v4957, %v4955
      %v5034 = vpack.c.bf16 %v4958, %v4956
      %v5035 = vpack.c.bf16 %v4961, %v4959
      %v5036 = vpack.c.bf16 %v4962, %v4960
      %v5037 = vpack.c.bf16 %v4965, %v4963
      %v5038 = vpack.c.bf16 %v4966, %v4964
      %v5039 = vpack.c.bf16 %v4969, %v4967
      %v5040 = vpack.c.bf16 %v4970, %v4968
      %v5041 = vpack.c.bf16 %v4973, %v4971
      %v5042 = vpack.c.bf16 %v4974, %v4972
      %v5043 = vpack.c.bf16 %v4977, %v4975
      %v5044 = vpack.c.bf16 %v4978, %v4976
      %v5045 = vpack.c.bf16 %v4981, %v4979
      %v5046 = vpack.c.bf16 %v4982, %v4980
      %v5047 = vld [vmem:[%s15] sm:$0xff]
      %v5048 = vld [vmem:[%s15 + $0x8] sm:$0xff]
      %v5049 = vld [vmem:[%s15 + $0x10] sm:$0xff]
      %v5050 = vld [vmem:[%s15 + $0x18] sm:$0xff]
      %v5051 = vld [vmem:[%s15 + $0x20] sm:$0xff]
      %v5052 = vld [vmem:[%s15 + $0x28] sm:$0xff]
      %v5053 = vld [vmem:[%s15 + $0x30] sm:$0xff]
      %v5054 = vld [vmem:[%s15 + $0x38] sm:$0xff]
      %v5055 = vld [vmem:[%s15 + $0x40] sm:$0xff]
      %v5056 = vld [vmem:[%s15 + $0x48] sm:$0xff]
      %v5057 = vld [vmem:[%s15 + $0x50] sm:$0xff]
      %v5058 = vld [vmem:[%s15 + $0x58] sm:$0xff]
      %v5059 = vld [vmem:[%s15 + $0x60] sm:$0xff]
      %v5060 = vld [vmem:[%s15 + $0x68] sm:$0xff]
      %v5061 = vld [vmem:[%s15 + $0x70] sm:$0xff]
      %v5062 = vld [vmem:[%s15 + $0x78] sm:$0xff]
      %v5063 = vld [vmem:[%s15 + $0x80] sm:$0xff]
      %v5064 = vld [vmem:[%s15 + $0x88] sm:$0xff]
      %v5065 = vld [vmem:[%s15 + $0x90] sm:$0xff]
      %v5066 = vld [vmem:[%s15 + $0x98] sm:$0xff]
      %v5067 = vld [vmem:[%s15 + $0xa0] sm:$0xff]
      %v5068 = vld [vmem:[%s15 + $0xa8] sm:$0xff]
      %v5069 = vld [vmem:[%s15 + $0xb0] sm:$0xff]
      %v5070 = vld [vmem:[%s15 + $0xb8] sm:$0xff]
      %v5071 = vld [vmem:[%s15 + $0xc0] sm:$0xff]
      %v5072 = vld [vmem:[%s17] sm:$0xff]
      %v5073 = vld [vmem:[%s17 + $0x8] sm:$0xff]
      %v5074 = vld [vmem:[%s17 + $0x10] sm:$0xff]
      %v5075 = vld [vmem:[%s17 + $0x18] sm:$0x33]
      %v5080 = vunpack.c.l.b16 %v5072
      %v5081 = vunpack.c.h.b16 %v5072
      %v5082 = vunpack.c.l.b16 %v5073
      %v5083 = vunpack.c.h.b16 %v5073
      %v5084 = vunpack.c.l.b16 %v5074
      %v5085 = vunpack.c.h.b16 %v5074
      %v5086 = vunpack.c.l.b16 %v5075
      %v5087 = vunpack.c.h.b16 %v5075
      %v5088 = vpack.c.b16 %v5082, %v5080
      %v5089 = vpack.c.b16 %v5083, %v5081
      %v5090 = vpack.c.b16 %v5086, %v5084
      %v5091 = vpack.c.b16 %v5087, %v5085
      %v5095 = vand.u32 %v5090, %v1257
      %v5098 = vand.u32 %v5091, %v1257
      %5100 = vmatprep.subr.bf16.mxu0 %v5089
      %5101 = vmatpush1.bf16.msra.mxu0 %v5088
      %5102 = vmatprep.subr.bf16.mxu0 %v5098
      %5103 = vmatpush1.bf16.msra.mxu0 %v5095
      %5104 = vmatprep.subr.bf16.mxu0 0
      %5105 = vmatpush1.bf16.msra.mxu0 0
      %5106 = vmatprep.subr.bf16.mxu0 0
      %5107 = vmatpush1.bf16.msra.mxu0 0
      %5108 = vmatprep.subr.bf16.mxu0 0
      %5109 = vmatpush1.bf16.msra.mxu0 0
      %5110 = vmatprep.subr.bf16.mxu0 0
      %5111 = vmatpush1.bf16.msra.mxu0 0
      %5112 = vmatprep.subr.bf16.mxu0 0
      %5113 = vmatpush1.bf16.msra.mxu0 0
      %5114 = vmatprep.subr.bf16.mxu0 0
      %5115 = vmatpush1.bf16.msra.mxu0 0
      %5116 = vmatprep.subr.bf16.mxu0 0
      %5117 = vmatpush1.bf16.msra.mxu0 0
      %5118 = vmatprep.subr.bf16.mxu0 0
      %5119 = vmatpush1.bf16.msra.mxu0 0
      %5120 = vmatprep.subr.bf16.mxu0 0
      %5121 = vmatpush1.bf16.msra.mxu0 0
      %5122 = vmatprep.subr.bf16.mxu0 0
      %5123 = vmatpush1.bf16.msra.mxu0 0
      %5124 = vmatprep.subr.bf16.mxu0 0
      %5125 = vmatpush1.bf16.msra.mxu0 0
      %5126 = vmatprep.subr.bf16.mxu0 0
      %5127 = vmatpush1.bf16.msra.mxu0 0
      %5128 = vmatprep.subr.bf16.mxu0 0
      %5129 = vmatpush1.bf16.msra.mxu0 0
      %5130 = vmatprep.subr.bf16.mxu0 0
      %5131 = vmatpush1.bf16.msra.mxu0 0
      %5132 = vmatprep.mubr.bf16.mxu0 0
      %5133 = vmatmul.mubr.bf16.gmra.mrb[0].mxu0 %v1159
      %v5134 = vpop.f32.mrb[0].mxu0
      %v5135 = vadd.f32 0.0, %v5134
      %v5136 = vpop.f32.mrb[0].mxu0
      %v5137 = vadd.f32 0.0, %v5136
      %v5138 = vpop.f32.mrb[0].mxu0
      %v5139 = vadd.f32 0.0, %v5138
      %v5140 = vpop.f32.mrb[0].mxu0
      %v5141 = vadd.f32 0.0, %v5140
      %5142 = vmatprep.mubr.bf16.mxu0 0
      %5143 = vmatmul.mubr.bf16.gmra.mrb[0].mxu0 %v1162
      %v5144 = vpop.f32.mrb[0].mxu0
      %v5145 = vadd.f32 0.0, %v5144
      %v5146 = vpop.f32.mrb[0].mxu0
      %v5147 = vadd.f32 0.0, %v5146
      %v5148 = vpop.f32.mrb[0].mxu0
      %v5149 = vadd.f32 0.0, %v5148
      %v5150 = vpop.f32.mrb[0].mxu0
      %v5151 = vadd.f32 0.0, %v5150
      %5152 = vmatprep.mubr.bf16.mxu0 0
      %5153 = vmatmul.mubr.bf16.gmra.mrb[0].mxu0 %v1165
      %v5154 = vpop.f32.mrb[0].mxu0
      %v5155 = vadd.f32 0.0, %v5154
      %v5156 = vpop.f32.mrb[0].mxu0
      %v5157 = vadd.f32 0.0, %v5156
      %v5158 = vpop.f32.mrb[0].mxu0
      %v5159 = vadd.f32 0.0, %v5158
      %v5160 = vpop.f32.mrb[0].mxu0
      %v5161 = vadd.f32 0.0, %v5160
      %5162 = vmatprep.mubr.bf16.mxu0 0
      %5163 = vmatmul.mubr.bf16.gmra.mrb[0].mxu0 %v1168
      %v5164 = vpop.f32.mrb[0].mxu0
      %v5165 = vadd.f32 0.0, %v5164
      %v5166 = vpop.f32.mrb[0].mxu0
      %v5167 = vadd.f32 0.0, %v5166
      %v5168 = vpop.f32.mrb[0].mxu0
      %v5169 = vadd.f32 0.0, %v5168
      %v5170 = vpop.f32.mrb[0].mxu0
      %v5171 = vadd.f32 0.0, %v5170
      %5172 = vmatprep.mubr.bf16.mxu0 0
      %5173 = vmatmul.mubr.bf16.gmra.mrb[0].mxu0 %v1171
      %v5174 = vpop.f32.mrb[0].mxu0
      %v5175 = vadd.f32 0.0, %v5174
      %v5176 = vpop.f32.mrb[0].mxu0
      %v5177 = vadd.f32 0.0, %v5176
      %v5178 = vpop.f32.mrb[0].mxu0
      %v5179 = vadd.f32 0.0, %v5178
      %v5180 = vpop.f32.mrb[0].mxu0
      %v5181 = vadd.f32 0.0, %v5180
      %5182 = vmatprep.mubr.bf16.mxu0 0
      %5183 = vmatmul.mubr.bf16.gmra.mrb[0].mxu0 %v1174
      %v5184 = vpop.f32.mrb[0].mxu0
      %v5185 = vadd.f32 0.0, %v5184
      %v5186 = vpop.f32.mrb[0].mxu0
      %v5187 = vadd.f32 0.0, %v5186
      %v5188 = vpop.f32.mrb[0].mxu0
      %v5189 = vadd.f32 0.0, %v5188
      %v5190 = vpop.f32.mrb[0].mxu0
      %v5191 = vadd.f32 0.0, %v5190
      %5192 = vmatprep.mubr.bf16.mxu0 0
      %5193 = vmatmul.mubr.bf16.gmra.mrb[0].mxu0 %v1177
      %v5194 = vpop.f32.mrb[0].mxu0
      %v5195 = vadd.f32 0.0, %v5194
      %v5196 = vpop.f32.mrb[0].mxu0
      %v5197 = vadd.f32 0.0, %v5196
      %v5198 = vpop.f32.mrb[0].mxu0
      %v5199 = vadd.f32 0.0, %v5198
      %v5200 = vpop.f32.mrb[0].mxu0
      %v5201 = vadd.f32 0.0, %v5200
      %5202 = vmatprep.mubr.bf16.mxu0 0
      %5203 = vmatmul.mubr.bf16.gmra.mrb[0].mxu0 %v1180
      %v5204 = vpop.f32.mrb[0].mxu0
      %v5205 = vadd.f32 0.0, %v5204
      %v5206 = vpop.f32.mrb[0].mxu0
      %v5207 = vadd.f32 0.0, %v5206
      %v5208 = vpop.f32.mrb[0].mxu0
      %v5209 = vadd.f32 0.0, %v5208
      %v5210 = vpop.f32.mrb[0].mxu0
      %v5211 = vadd.f32 0.0, %v5210
      %5212 = vmatprep.mubr.bf16.mxu0 0
      %5213 = vmatmul.mubr.bf16.gmra.mrb[0].mxu0 %v1183
      %v5214 = vpop.f32.mrb[0].mxu0
      %v5215 = vadd.f32 0.0, %v5214
      %v5216 = vpop.f32.mrb[0].mxu0
      %v5217 = vadd.f32 0.0, %v5216
      %v5218 = vpop.f32.mrb[0].mxu0
      %v5219 = vadd.f32 0.0, %v5218
      %v5220 = vpop.f32.mrb[0].mxu0
      %v5221 = vadd.f32 0.0, %v5220
      %5222 = vmatprep.mubr.bf16.mxu0 0
      %5223 = vmatmul.mubr.bf16.gmra.mrb[0].mxu0 %v1186
      %v5224 = vpop.f32.mrb[0].mxu0
      %v5225 = vadd.f32 0.0, %v5224
      %v5226 = vpop.f32.mrb[0].mxu0
      %v5227 = vadd.f32 0.0, %v5226
      %v5228 = vpop.f32.mrb[0].mxu0
      %v5229 = vadd.f32 0.0, %v5228
      %v5230 = vpop.f32.mrb[0].mxu0
      %v5231 = vadd.f32 0.0, %v5230
      %5232 = vmatprep.mubr.bf16.mxu0 0
      %5233 = vmatmul.mubr.bf16.gmra.mrb[0].mxu0 %v1189
      %v5234 = vpop.f32.mrb[0].mxu0
      %v5235 = vadd.f32 0.0, %v5234
      %v5236 = vpop.f32.mrb[0].mxu0
      %v5237 = vadd.f32 0.0, %v5236
      %v5238 = vpop.f32.mrb[0].mxu0
      %v5239 = vadd.f32 0.0, %v5238
      %v5240 = vpop.f32.mrb[0].mxu0
      %v5241 = vadd.f32 0.0, %v5240
      %5242 = vmatprep.mubr.bf16.mxu0 0
      %5243 = vmatmul.mubr.bf16.gmra.mrb[0].mxu0 %v1192
      %v5244 = vpop.f32.mrb[0].mxu0
      %v5245 = vadd.f32 0.0, %v5244
      %v5246 = vpop.f32.mrb[0].mxu0
      %v5247 = vadd.f32 0.0, %v5246
      %v5248 = vpop.f32.mrb[0].mxu0
      %v5249 = vadd.f32 0.0, %v5248
      %v5250 = vpop.f32.mrb[0].mxu0
      %v5251 = vadd.f32 0.0, %v5250
      %5252 = vmatprep.mubr.bf16.mxu0 0
      %5253 = vmatmul.mubr.bf16.gmra.mrb[0].mxu0 %v1195
      %v5254 = vpop.f32.mrb[0].mxu0
      %v5255 = vadd.f32 0.0, %v5254
      %v5256 = vpop.f32.mrb[0].mxu0
      %v5257 = vadd.f32 0.0, %v5256
      %v5258 = vpop.f32.mrb[0].mxu0
      %v5259 = vadd.f32 0.0, %v5258
      %v5260 = vpop.f32.mrb[0].mxu0
      %v5261 = vadd.f32 0.0, %v5260
      %5262 = vmatprep.mubr.bf16.mxu0 0
      %5263 = vmatmul.mubr.bf16.gmra.mrb[0].mxu0 %v1198
      %v5264 = vpop.f32.mrb[0].mxu0
      %v5265 = vadd.f32 0.0, %v5264
      %v5266 = vpop.f32.mrb[0].mxu0
      %v5267 = vadd.f32 0.0, %v5266
      %v5268 = vpop.f32.mrb[0].mxu0
      %v5269 = vadd.f32 0.0, %v5268
      %v5270 = vpop.f32.mrb[0].mxu0
      %v5271 = vadd.f32 0.0, %v5270
      %5272 = vmatprep.mubr.bf16.mxu0 0
      %5273 = vmatmul.mubr.bf16.gmra.mrb[0].mxu0 %v1201
      %v5274 = vpop.f32.mrb[0].mxu0
      %v5275 = vadd.f32 0.0, %v5274
      %v5276 = vpop.f32.mrb[0].mxu0
      %v5277 = vadd.f32 0.0, %v5276
      %v5278 = vpop.f32.mrb[0].mxu0
      %v5279 = vadd.f32 0.0, %v5278
      %v5280 = vpop.f32.mrb[0].mxu0
      %v5281 = vadd.f32 0.0, %v5280
      %5282 = vmatprep.mubr.bf16.mxu0 0
      %5283 = vmatmul.mubr.bf16.gmra.mrb[0].mxu0 %v1204
      %v5284 = vpop.f32.mrb[0].mxu0
      %v5285 = vadd.f32 0.0, %v5284
      %v5286 = vpop.f32.mrb[0].mxu0
      %v5287 = vadd.f32 0.0, %v5286
      %v5288 = vpop.f32.mrb[0].mxu0
      %v5289 = vadd.f32 0.0, %v5288
      %v5290 = vpop.f32.mrb[0].mxu0
      %v5291 = vadd.f32 0.0, %v5290
      %5292 = vmatprep.mubr.bf16.mxu0 0
      %5293 = vmatmul.mubr.bf16.gmra.mrb[0].mxu0 %v1207
      %v5294 = vpop.f32.mrb[0].mxu0
      %v5295 = vadd.f32 0.0, %v5294
      %v5296 = vpop.f32.mrb[0].mxu0
      %v5297 = vadd.f32 0.0, %v5296
      %v5298 = vpop.f32.mrb[0].mxu0
      %v5299 = vadd.f32 0.0, %v5298
      %v5300 = vpop.f32.mrb[0].mxu0
      %v5301 = vadd.f32 0.0, %v5300
      %5302 = vmatprep.mubr.bf16.mxu0 0
      %5303 = vmatmul.mubr.bf16.gmra.mrb[0].mxu0 %v1210
      %v5304 = vpop.f32.mrb[0].mxu0
      %v5305 = vadd.f32 0.0, %v5304
      %v5306 = vpop.f32.mrb[0].mxu0
      %v5307 = vadd.f32 0.0, %v5306
      %v5308 = vpop.f32.mrb[0].mxu0
      %v5309 = vadd.f32 0.0, %v5308
      %v5310 = vpop.f32.mrb[0].mxu0
      %v5311 = vadd.f32 0.0, %v5310
      %5312 = vmatprep.mubr.bf16.mxu0 0
      %5313 = vmatmul.mubr.bf16.gmra.mrb[0].mxu0 %v1213
      %v5314 = vpop.f32.mrb[0].mxu0
      %v5315 = vadd.f32 0.0, %v5314
      %v5316 = vpop.f32.mrb[0].mxu0
      %v5317 = vadd.f32 0.0, %v5316
      %v5318 = vpop.f32.mrb[0].mxu0
      %v5319 = vadd.f32 0.0, %v5318
      %v5320 = vpop.f32.mrb[0].mxu0
      %v5321 = vadd.f32 0.0, %v5320
      %5322 = vmatprep.mubr.bf16.mxu0 0
      %5323 = vmatmul.mubr.bf16.gmra.mrb[0].mxu0 %v1216
      %v5324 = vpop.f32.mrb[0].mxu0
      %v5325 = vadd.f32 0.0, %v5324
      %v5326 = vpop.f32.mrb[0].mxu0
      %v5327 = vadd.f32 0.0, %v5326
      %v5328 = vpop.f32.mrb[0].mxu0
      %v5329 = vadd.f32 0.0, %v5328
      %v5330 = vpop.f32.mrb[0].mxu0
      %v5331 = vadd.f32 0.0, %v5330
      %5332 = vmatprep.mubr.bf16.mxu0 0
      %5333 = vmatmul.mubr.bf16.gmra.mrb[0].mxu0 %v1219
      %v5334 = vpop.f32.mrb[0].mxu0
      %v5335 = vadd.f32 0.0, %v5334
      %v5336 = vpop.f32.mrb[0].mxu0
      %v5337 = vadd.f32 0.0, %v5336
      %v5338 = vpop.f32.mrb[0].mxu0
      %v5339 = vadd.f32 0.0, %v5338
      %v5340 = vpop.f32.mrb[0].mxu0
      %v5341 = vadd.f32 0.0, %v5340
      %5342 = vmatprep.mubr.bf16.mxu0 0
      %5343 = vmatmul.mubr.bf16.gmra.mrb[0].mxu0 %v1222
      %v5344 = vpop.f32.mrb[0].mxu0
      %v5345 = vadd.f32 0.0, %v5344
      %v5346 = vpop.f32.mrb[0].mxu0
      %v5347 = vadd.f32 0.0, %v5346
      %v5348 = vpop.f32.mrb[0].mxu0
      %v5349 = vadd.f32 0.0, %v5348
      %v5350 = vpop.f32.mrb[0].mxu0
      %v5351 = vadd.f32 0.0, %v5350
      %5352 = vmatprep.mubr.bf16.mxu0 0
      %5353 = vmatmul.mubr.bf16.gmra.mrb[0].mxu0 %v1225
      %v5354 = vpop.f32.mrb[0].mxu0
      %v5355 = vadd.f32 0.0, %v5354
      %v5356 = vpop.f32.mrb[0].mxu0
      %v5357 = vadd.f32 0.0, %v5356
      %v5358 = vpop.f32.mrb[0].mxu0
      %v5359 = vadd.f32 0.0, %v5358
      %v5360 = vpop.f32.mrb[0].mxu0
      %v5361 = vadd.f32 0.0, %v5360
      %5362 = vmatprep.mubr.bf16.mxu0 0
      %5363 = vmatmul.mubr.bf16.gmra.mrb[0].mxu0 %v1228
      %v5364 = vpop.f32.mrb[0].mxu0
      %v5365 = vadd.f32 0.0, %v5364
      %v5366 = vpop.f32.mrb[0].mxu0
      %v5367 = vadd.f32 0.0, %v5366
      %v5368 = vpop.f32.mrb[0].mxu0
      %v5369 = vadd.f32 0.0, %v5368
      %v5370 = vpop.f32.mrb[0].mxu0
      %v5371 = vadd.f32 0.0, %v5370
      %5372 = vmatprep.mubr.bf16.mxu0 0
      %5373 = vmatmul.mubr.bf16.gmra.mrb[0].mxu0 %v1231
      %v5374 = vpop.f32.mrb[0].mxu0
      %v5375 = vadd.f32 0.0, %v5374
      %v5376 = vpop.f32.mrb[0].mxu0
      %v5377 = vadd.f32 0.0, %v5376
      %v5378 = vpop.f32.mrb[0].mxu0
      %v5379 = vadd.f32 0.0, %v5378
      %v5380 = vpop.f32.mrb[0].mxu0
      %v5381 = vadd.f32 0.0, %v5380
      %5382 = vmatprep.mubr.bf16.mxu0 0
      %5383 = vmatmul.mubr.bf16.gmra.mrb[0].mxu0 %v1234
      %v5384 = vpop.f32.mrb[0].mxu0
      %v5385 = vadd.f32 0.0, %v5384
      %v5386 = vpop.f32.mrb[0].mxu0
      %v5387 = vadd.f32 0.0, %v5386
      %v5388 = vpop.f32.mrb[0].mxu0
      %v5389 = vadd.f32 0.0, %v5388
      %v5390 = vpop.f32.mrb[0].mxu0
      %v5391 = vadd.f32 0.0, %v5390
      %5392 = vmatprep.mubr.bf16.mxu0 0
      %5393 = vmatmul.mubr.bf16.gmra.mrb[0].mxu0 %v1237
      %v5394 = vpop.f32.mrb[0].mxu0
      %v5395 = vadd.f32 0.0, %v5394
      %v5396 = vpop.f32.mrb[0].mxu0
      %v5397 = vadd.f32 0.0, %v5396
      %v5398 = vpop.f32.mrb[0].mxu0
      %v5399 = vadd.f32 0.0, %v5398
      %v5400 = vpop.f32.mrb[0].mxu0
      %v5401 = vadd.f32 0.0, %v5400
      %5402 = vmatprep.mubr.bf16.mxu0 0
      %5403 = vmatmul.mubr.bf16.gmra.mrb[0].mxu0 %v1240
      %v5404 = vpop.f32.mrb[0].mxu0
      %v5405 = vadd.f32 0.0, %v5404
      %v5406 = vpop.f32.mrb[0].mxu0
      %v5407 = vadd.f32 0.0, %v5406
      %v5408 = vpop.f32.mrb[0].mxu0
      %v5409 = vadd.f32 0.0, %v5408
      %v5410 = vpop.f32.mrb[0].mxu0
      %v5411 = vadd.f32 0.0, %v5410
      %5412 = vmatprep.mubr.bf16.mxu0 0
      %5413 = vmatmul.mubr.bf16.gmra.mrb[0].mxu0 %v1243
      %v5414 = vpop.f32.mrb[0].mxu0
      %v5415 = vadd.f32 0.0, %v5414
      %v5416 = vpop.f32.mrb[0].mxu0
      %v5417 = vadd.f32 0.0, %v5416
      %v5418 = vpop.f32.mrb[0].mxu0
      %v5419 = vadd.f32 0.0, %v5418
      %v5420 = vpop.f32.mrb[0].mxu0
      %v5421 = vadd.f32 0.0, %v5420
      %5422 = vmatprep.mubr.bf16.mxu0 0
      %5423 = vmatmul.mubr.bf16.gmra.mrb[0].mxu0 %v1246
      %v5424 = vpop.f32.mrb[0].mxu0
      %v5425 = vadd.f32 0.0, %v5424
      %v5426 = vpop.f32.mrb[0].mxu0
      %v5427 = vadd.f32 0.0, %v5426
      %v5428 = vpop.f32.mrb[0].mxu0
      %v5429 = vadd.f32 0.0, %v5428
      %v5430 = vpop.f32.mrb[0].mxu0
      %v5431 = vadd.f32 0.0, %v5430
      %5432 = vmatprep.mubr.bf16.mxu0 0
      %5433 = vmatmul.mubr.bf16.gmra.mrb[0].mxu0 %v1249
      %v5434 = vpop.f32.mrb[0].mxu0
      %v5435 = vadd.f32 0.0, %v5434
      %v5436 = vpop.f32.mrb[0].mxu0
      %v5437 = vadd.f32 0.0, %v5436
      %v5438 = vpop.f32.mrb[0].mxu0
      %v5439 = vadd.f32 0.0, %v5438
      %v5440 = vpop.f32.mrb[0].mxu0
      %v5441 = vadd.f32 0.0, %v5440
      %5442 = vmatprep.mubr.bf16.mxu0 0
      %5443 = vmatmul.mubr.bf16.gmra.mrb[0].mxu0 %v1252
      %v5444 = vpop.f32.mrb[0].mxu0
      %v5445 = vadd.f32 0.0, %v5444
      %v5446 = vpop.f32.mrb[0].mxu0
      %v5447 = vadd.f32 0.0, %v5446
      %v5448 = vpop.f32.mrb[0].mxu0
      %v5449 = vadd.f32 0.0, %v5448
      %v5450 = vpop.f32.mrb[0].mxu0
      %v5451 = vadd.f32 0.0, %v5450
      %5452 = vdwg.mxu0
      %v5478 = vunpack.c.l.b16 %v5047
      %v5479 = vunpack.c.h.b16 %v5047
      %v5480 = vunpack.c.l.b16 %v5048
      %v5481 = vunpack.c.h.b16 %v5048
      %v5482 = vunpack.c.l.b16 %v5049
      %v5483 = vunpack.c.h.b16 %v5049
      %v5484 = vunpack.c.l.b16 %v5050
      %v5485 = vunpack.c.h.b16 %v5050
      %v5486 = vunpack.c.l.b16 %v5051
      %v5487 = vunpack.c.h.b16 %v5051
      %v5488 = vunpack.c.l.b16 %v5052
      %v5489 = vunpack.c.h.b16 %v5052
      %v5490 = vunpack.c.l.b16 %v5053
      %v5491 = vunpack.c.h.b16 %v5053
      %v5492 = vunpack.c.l.b16 %v5054
      %v5493 = vunpack.c.h.b16 %v5054
      %v5494 = vunpack.c.l.b16 %v5055
      %v5495 = vunpack.c.h.b16 %v5055
      %v5496 = vunpack.c.l.b16 %v5056
      %v5497 = vunpack.c.h.b16 %v5056
      %v5498 = vunpack.c.l.b16 %v5057
      %v5499 = vunpack.c.h.b16 %v5057
      %v5500 = vunpack.c.l.b16 %v5058
      %v5501 = vunpack.c.h.b16 %v5058
      %v5502 = vunpack.c.l.b16 %v5059
      %v5503 = vunpack.c.h.b16 %v5059
      %v5504 = vunpack.c.l.b16 %v5060
      %v5505 = vunpack.c.h.b16 %v5060
      %v5506 = vunpack.c.l.b16 %v5061
      %v5507 = vunpack.c.h.b16 %v5061
      %v5508 = vunpack.c.l.b16 %v5062
      %v5509 = vunpack.c.h.b16 %v5062
      %v5510 = vunpack.c.l.b16 %v5063
      %v5511 = vunpack.c.h.b16 %v5063
      %v5512 = vunpack.c.l.b16 %v5064
      %v5513 = vunpack.c.h.b16 %v5064
      %v5514 = vunpack.c.l.b16 %v5065
      %v5515 = vunpack.c.h.b16 %v5065
      %v5516 = vunpack.c.l.b16 %v5066
      %v5517 = vunpack.c.h.b16 %v5066
      %v5518 = vunpack.c.l.b16 %v5067
      %v5519 = vunpack.c.h.b16 %v5067
      %v5520 = vunpack.c.l.b16 %v5068
      %v5521 = vunpack.c.h.b16 %v5068
      %v5522 = vunpack.c.l.b16 %v5069
      %v5523 = vunpack.c.h.b16 %v5069
      %v5524 = vunpack.c.l.b16 %v5070
      %v5525 = vunpack.c.h.b16 %v5070
      %v5526 = vunpack.c.l.b16 %v5071
      %v5527 = vunpack.c.h.b16 %v5071
      %v5528 = vpack.c.b16 %v5480, %v5478
      %v5529 = vpack.c.b16 %v5481, %v5479
      %v5530 = vpack.c.b16 %v5484, %v5482
      %v5531 = vpack.c.b16 %v5485, %v5483
      %v5532 = vpack.c.b16 %v5488, %v5486
      %v5533 = vpack.c.b16 %v5489, %v5487
      %v5534 = vpack.c.b16 %v5492, %v5490
      %v5535 = vpack.c.b16 %v5493, %v5491
      %v5536 = vpack.c.b16 %v5496, %v5494
      %v5537 = vpack.c.b16 %v5497, %v5495
      %v5538 = vpack.c.b16 %v5500, %v5498
      %v5539 = vpack.c.b16 %v5501, %v5499
      %v5540 = vpack.c.b16 %v5504, %v5502
      %v5541 = vpack.c.b16 %v5505, %v5503
      %v5542 = vpack.c.b16 %v5508, %v5506
      %v5543 = vpack.c.b16 %v5509, %v5507
      %v5544 = vpack.c.b16 %v5512, %v5510
      %v5545 = vpack.c.b16 %v5513, %v5511
      %v5546 = vpack.c.b16 %v5516, %v5514
      %v5547 = vpack.c.b16 %v5517, %v5515
      %v5548 = vpack.c.b16 %v5520, %v5518
      %v5549 = vpack.c.b16 %v5521, %v5519
      %v5550 = vpack.c.b16 %v5524, %v5522
      %v5551 = vpack.c.b16 %v5525, %v5523
      %v5552 = vpack.c.b16 %v5526, %v5526
      %v5553 = vpack.c.b16 %v5527, %v5527
      %v5579 = vsel %vm1971, %v4984, 0
      %v5582 = vsel %vm1971, %v4986, 0
      %v5585 = vsel %vm1971, %v4988, 0
      %v5588 = vsel %vm1971, %v4990, 0
      %v5591 = vsel %vm1971, %v4992, 0
      %v5594 = vsel %vm1971, %v4994, 0
      %v5597 = vsel %vm1971, %v4996, 0
      %v5600 = vsel %vm1971, %v4998, 0
      %v5603 = vsel %vm1971, %v5000, 0
      %v5606 = vsel %vm1971, %v5002, 0
      %v5609 = vsel %vm1971, %v5004, 0
      %v5612 = vsel %vm1971, %v5006, 0
      %v5615 = vsel %vm1971, %v5008, 0
      %v5618 = vsel %vm1971, %v5010, 0
      %v5621 = vsel %vm1971, %v5012, 0
      %v5624 = vsel %vm1971, %v5014, 0
      %v5627 = vsel %vm1971, %v5016, 0
      %v5630 = vsel %vm1971, %v5018, 0
      %v5633 = vsel %vm1971, %v5020, 0
      %v5636 = vsel %vm1971, %v5022, 0
      %v5639 = vsel %vm1971, %v5024, 0
      %v5642 = vsel %vm1971, %v5026, 0
      %v5645 = vsel %vm1971, %v5028, 0
      %v5648 = vsel %vm1971, %v5030, 0
      %v5651 = vsel %vm1971, %v5032, 0
      %v5654 = vsel %vm1971, %v5034, 0
      %v5657 = vsel %vm1971, %v5036, 0
      %v5660 = vsel %vm1971, %v5038, 0
      %v5663 = vsel %vm1971, %v5040, 0
      %v5666 = vsel %vm1971, %v5042, 0
      %v5669 = vsel %vm1971, %v5044, 0
      %v5672 = vsel %vm1971, %v5046, 0
      %v5675 = vsel %vm2068, %v5552, 0
      %v5678 = vsel %vm2068, %v5553, 0
      %5680 = vmatprep.subr.bf16.mxu0 %v5529
      %5681 = vmatpush1.bf16.msra.mxu0 %v5528
      %5682 = vmatprep.subr.bf16.mxu0 %v5531
      %5683 = vmatpush1.bf16.msra.mxu0 %v5530
      %5684 = vmatprep.subr.bf16.mxu0 %v5533
      %5685 = vmatpush1.bf16.msra.mxu0 %v5532
      %5686 = vmatprep.subr.bf16.mxu0 %v5535
      %5687 = vmatpush1.bf16.msra.mxu0 %v5534
      %5688 = vmatprep.subr.bf16.mxu0 %v5537
      %5689 = vmatpush1.bf16.msra.mxu0 %v5536
      %5690 = vmatprep.subr.bf16.mxu0 %v5539
      %5691 = vmatpush1.bf16.msra.mxu0 %v5538
      %5692 = vmatprep.subr.bf16.mxu0 %v5541
      %5693 = vmatpush1.bf16.msra.mxu0 %v5540
      %5694 = vmatprep.subr.bf16.mxu0 %v5543
      %5695 = vmatpush1.bf16.msra.mxu0 %v5542
      %5696 = vmatprep.subr.bf16.mxu0 %v5545
      %5697 = vmatpush1.bf16.msra.mxu0 %v5544
      %5698 = vmatprep.subr.bf16.mxu0 %v5547
      %5699 = vmatpush1.bf16.msra.mxu0 %v5546
      %5700 = vmatprep.subr.bf16.mxu0 %v5549
      %5701 = vmatpush1.bf16.msra.mxu0 %v5548
      %5702 = vmatprep.subr.bf16.mxu0 %v5551
      %5703 = vmatpush1.bf16.msra.mxu0 %v5550
      %5704 = vmatprep.subr.bf16.mxu0 %v5678
      %5705 = vmatpush1.bf16.msra.mxu0 %v5675
      %5706 = vmatprep.subr.bf16.mxu0 0
      %5707 = vmatpush1.bf16.msra.mxu0 0
      %5708 = vmatprep.subr.bf16.mxu0 0
      %5709 = vmatpush1.bf16.msra.mxu0 0
      %5710 = vmatprep.subr.bf16.mxu0 0
      %5711 = vmatpush1.bf16.msra.mxu0 0
      %5712 = vmatprep.mubr.bf16.mxu0 %v5579
      %5713 = vmatmul.mubr.bf16.gmra.mrb[0].mxu0 %v4983
      %v5714 = vpop.f32.mrb[0].mxu0
      %v5715 = vadd.f32 %v5135, %v5714
      %v5716 = vpop.f32.mrb[0].mxu0
      %v5717 = vadd.f32 %v5137, %v5716
      %v5718 = vpop.f32.mrb[0].mxu0
      %v5719 = vadd.f32 %v5139, %v5718
      %v5720 = vpop.f32.mrb[0].mxu0
      %v5721 = vadd.f32 %v5141, %v5720
      %5722 = vmatprep.mubr.bf16.mxu0 %v5582
      %5723 = vmatmul.mubr.bf16.gmra.mrb[0].mxu0 %v4985
      %v5724 = vpop.f32.mrb[0].mxu0
      %v5725 = vadd.f32 %v5145, %v5724
      %v5726 = vpop.f32.mrb[0].mxu0
      %v5727 = vadd.f32 %v5147, %v5726
      %v5728 = vpop.f32.mrb[0].mxu0
      %v5729 = vadd.f32 %v5149, %v5728
      %v5730 = vpop.f32.mrb[0].mxu0
      %v5731 = vadd.f32 %v5151, %v5730
      %5732 = vmatprep.mubr.bf16.mxu0 %v5585
      %5733 = vmatmul.mubr.bf16.gmra.mrb[0].mxu0 %v4987
      %v5734 = vpop.f32.mrb[0].mxu0
      %v5735 = vadd.f32 %v5155, %v5734
      %v5736 = vpop.f32.mrb[0].mxu0
      %v5737 = vadd.f32 %v5157, %v5736
      %v5738 = vpop.f32.mrb[0].mxu0
      %v5739 = vadd.f32 %v5159, %v5738
      %v5740 = vpop.f32.mrb[0].mxu0
      %v5741 = vadd.f32 %v5161, %v5740
      %5742 = vmatprep.mubr.bf16.mxu0 %v5588
      %5743 = vmatmul.mubr.bf16.gmra.mrb[0].mxu0 %v4989
      %v5744 = vpop.f32.mrb[0].mxu0
      %v5745 = vadd.f32 %v5165, %v5744
      %v5746 = vpop.f32.mrb[0].mxu0
      %v5747 = vadd.f32 %v5167, %v5746
      %v5748 = vpop.f32.mrb[0].mxu0
      %v5749 = vadd.f32 %v5169, %v5748
      %v5750 = vpop.f32.mrb[0].mxu0
      %v5751 = vadd.f32 %v5171, %v5750
      %5752 = vmatprep.mubr.bf16.mxu0 %v5591
      %5753 = vmatmul.mubr.bf16.gmra.mrb[0].mxu0 %v4991
      %v5754 = vpop.f32.mrb[0].mxu0
      %v5755 = vadd.f32 %v5175, %v5754
      %v5756 = vpop.f32.mrb[0].mxu0
      %v5757 = vadd.f32 %v5177, %v5756
      %v5758 = vpop.f32.mrb[0].mxu0
      %v5759 = vadd.f32 %v5179, %v5758
      %v5760 = vpop.f32.mrb[0].mxu0
      %v5761 = vadd.f32 %v5181, %v5760
      %5762 = vmatprep.mubr.bf16.mxu0 %v5594
      %5763 = vmatmul.mubr.bf16.gmra.mrb[0].mxu0 %v4993
      %v5764 = vpop.f32.mrb[0].mxu0
      %v5765 = vadd.f32 %v5185, %v5764
      %v5766 = vpop.f32.mrb[0].mxu0
      %v5767 = vadd.f32 %v5187, %v5766
      %v5768 = vpop.f32.mrb[0].mxu0
      %v5769 = vadd.f32 %v5189, %v5768
      %v5770 = vpop.f32.mrb[0].mxu0
      %v5771 = vadd.f32 %v5191, %v5770
      %5772 = vmatprep.mubr.bf16.mxu0 %v5597
      %5773 = vmatmul.mubr.bf16.gmra.mrb[0].mxu0 %v4995
      %v5774 = vpop.f32.mrb[0].mxu0
      %v5775 = vadd.f32 %v5195, %v5774
      %v5776 = vpop.f32.mrb[0].mxu0
      %v5777 = vadd.f32 %v5197, %v5776
      %v5778 = vpop.f32.mrb[0].mxu0
      %v5779 = vadd.f32 %v5199, %v5778
      %v5780 = vpop.f32.mrb[0].mxu0
      %v5781 = vadd.f32 %v5201, %v5780
      %5782 = vmatprep.mubr.bf16.mxu0 %v5600
      %5783 = vmatmul.mubr.bf16.gmra.mrb[0].mxu0 %v4997
      %v5784 = vpop.f32.mrb[0].mxu0
      %v5785 = vadd.f32 %v5205, %v5784
      %v5786 = vpop.f32.mrb[0].mxu0
      %v5787 = vadd.f32 %v5207, %v5786
      %v5788 = vpop.f32.mrb[0].mxu0
      %v5789 = vadd.f32 %v5209, %v5788
      %v5790 = vpop.f32.mrb[0].mxu0
      %v5791 = vadd.f32 %v5211, %v5790
      %5792 = vmatprep.mubr.bf16.mxu0 %v5603
      %5793 = vmatmul.mubr.bf16.gmra.mrb[0].mxu0 %v4999
      %v5794 = vpop.f32.mrb[0].mxu0
      %v5795 = vadd.f32 %v5215, %v5794
      %v5796 = vpop.f32.mrb[0].mxu0
      %v5797 = vadd.f32 %v5217, %v5796
      %v5798 = vpop.f32.mrb[0].mxu0
      %v5799 = vadd.f32 %v5219, %v5798
      %v5800 = vpop.f32.mrb[0].mxu0
      %v5801 = vadd.f32 %v5221, %v5800
      %5802 = vmatprep.mubr.bf16.mxu0 %v5606
      %5803 = vmatmul.mubr.bf16.gmra.mrb[0].mxu0 %v5001
      %v5804 = vpop.f32.mrb[0].mxu0
      %v5805 = vadd.f32 %v5225, %v5804
      %v5806 = vpop.f32.mrb[0].mxu0
      %v5807 = vadd.f32 %v5227, %v5806
      %v5808 = vpop.f32.mrb[0].mxu0
      %v5809 = vadd.f32 %v5229, %v5808
      %v5810 = vpop.f32.mrb[0].mxu0
      %v5811 = vadd.f32 %v5231, %v5810
      %5812 = vmatprep.mubr.bf16.mxu0 %v5609
      %5813 = vmatmul.mubr.bf16.gmra.mrb[0].mxu0 %v5003
      %v5814 = vpop.f32.mrb[0].mxu0
      %v5815 = vadd.f32 %v5235, %v5814
      %v5816 = vpop.f32.mrb[0].mxu0
      %v5817 = vadd.f32 %v5237, %v5816
      %v5818 = vpop.f32.mrb[0].mxu0
      %v5819 = vadd.f32 %v5239, %v5818
      %v5820 = vpop.f32.mrb[0].mxu0
      %v5821 = vadd.f32 %v5241, %v5820
      %5822 = vmatprep.mubr.bf16.mxu0 %v5612
      %5823 = vmatmul.mubr.bf16.gmra.mrb[0].mxu0 %v5005
      %v5824 = vpop.f32.mrb[0].mxu0
      %v5825 = vadd.f32 %v5245, %v5824
      %v5826 = vpop.f32.mrb[0].mxu0
      %v5827 = vadd.f32 %v5247, %v5826
      %v5828 = vpop.f32.mrb[0].mxu0
      %v5829 = vadd.f32 %v5249, %v5828
      %v5830 = vpop.f32.mrb[0].mxu0
      %v5831 = vadd.f32 %v5251, %v5830
      %5832 = vmatprep.mubr.bf16.mxu0 %v5615
      %5833 = vmatmul.mubr.bf16.gmra.mrb[0].mxu0 %v5007
      %v5834 = vpop.f32.mrb[0].mxu0
      %v5835 = vadd.f32 %v5255, %v5834
      %v5836 = vpop.f32.mrb[0].mxu0
      %v5837 = vadd.f32 %v5257, %v5836
      %v5838 = vpop.f32.mrb[0].mxu0
      %v5839 = vadd.f32 %v5259, %v5838
      %v5840 = vpop.f32.mrb[0].mxu0
      %v5841 = vadd.f32 %v5261, %v5840
      %5842 = vmatprep.mubr.bf16.mxu0 %v5618
      %5843 = vmatmul.mubr.bf16.gmra.mrb[0].mxu0 %v5009
      %v5844 = vpop.f32.mrb[0].mxu0
      %v5845 = vadd.f32 %v5265, %v5844
      %v5846 = vpop.f32.mrb[0].mxu0
      %v5847 = vadd.f32 %v5267, %v5846
      %v5848 = vpop.f32.mrb[0].mxu0
      %v5849 = vadd.f32 %v5269, %v5848
      %v5850 = vpop.f32.mrb[0].mxu0
      %v5851 = vadd.f32 %v5271, %v5850
      %5852 = vmatprep.mubr.bf16.mxu0 %v5621
      %5853 = vmatmul.mubr.bf16.gmra.mrb[0].mxu0 %v5011
      %v5854 = vpop.f32.mrb[0].mxu0
      %v5855 = vadd.f32 %v5275, %v5854
      %v5856 = vpop.f32.mrb[0].mxu0
      %v5857 = vadd.f32 %v5277, %v5856
      %v5858 = vpop.f32.mrb[0].mxu0
      %v5859 = vadd.f32 %v5279, %v5858
      %v5860 = vpop.f32.mrb[0].mxu0
      %v5861 = vadd.f32 %v5281, %v5860
      %5862 = vmatprep.mubr.bf16.mxu0 %v5624
      %5863 = vmatmul.mubr.bf16.gmra.mrb[0].mxu0 %v5013
      %v5864 = vpop.f32.mrb[0].mxu0
      %v5865 = vadd.f32 %v5285, %v5864
      %v5866 = vpop.f32.mrb[0].mxu0
      %v5867 = vadd.f32 %v5287, %v5866
      %v5868 = vpop.f32.mrb[0].mxu0
      %v5869 = vadd.f32 %v5289, %v5868
      %v5870 = vpop.f32.mrb[0].mxu0
      %v5871 = vadd.f32 %v5291, %v5870
      %5872 = vmatprep.mubr.bf16.mxu0 %v5627
      %5873 = vmatmul.mubr.bf16.gmra.mrb[0].mxu0 %v5015
      %v5874 = vpop.f32.mrb[0].mxu0
      %v5875 = vadd.f32 %v5295, %v5874
      %v5876 = vpop.f32.mrb[0].mxu0
      %v5877 = vadd.f32 %v5297, %v5876
      %v5878 = vpop.f32.mrb[0].mxu0
      %v5879 = vadd.f32 %v5299, %v5878
      %v5880 = vpop.f32.mrb[0].mxu0
      %v5881 = vadd.f32 %v5301, %v5880
      %5882 = vmatprep.mubr.bf16.mxu0 %v5630
      %5883 = vmatmul.mubr.bf16.gmra.mrb[0].mxu0 %v5017
      %v5884 = vpop.f32.mrb[0].mxu0
      %v5885 = vadd.f32 %v5305, %v5884
      %v5886 = vpop.f32.mrb[0].mxu0
      %v5887 = vadd.f32 %v5307, %v5886
      %v5888 = vpop.f32.mrb[0].mxu0
      %v5889 = vadd.f32 %v5309, %v5888
      %v5890 = vpop.f32.mrb[0].mxu0
      %v5891 = vadd.f32 %v5311, %v5890
      %5892 = vmatprep.mubr.bf16.mxu0 %v5633
      %5893 = vmatmul.mubr.bf16.gmra.mrb[0].mxu0 %v5019
      %v5894 = vpop.f32.mrb[0].mxu0
      %v5895 = vadd.f32 %v5315, %v5894
      %v5896 = vpop.f32.mrb[0].mxu0
      %v5897 = vadd.f32 %v5317, %v5896
      %v5898 = vpop.f32.mrb[0].mxu0
      %v5899 = vadd.f32 %v5319, %v5898
      %v5900 = vpop.f32.mrb[0].mxu0
      %v5901 = vadd.f32 %v5321, %v5900
      %5902 = vmatprep.mubr.bf16.mxu0 %v5636
      %5903 = vmatmul.mubr.bf16.gmra.mrb[0].mxu0 %v5021
      %v5904 = vpop.f32.mrb[0].mxu0
      %v5905 = vadd.f32 %v5325, %v5904
      %v5906 = vpop.f32.mrb[0].mxu0
      %v5907 = vadd.f32 %v5327, %v5906
      %v5908 = vpop.f32.mrb[0].mxu0
      %v5909 = vadd.f32 %v5329, %v5908
      %v5910 = vpop.f32.mrb[0].mxu0
      %v5911 = vadd.f32 %v5331, %v5910
      %5912 = vmatprep.mubr.bf16.mxu0 %v5639
      %5913 = vmatmul.mubr.bf16.gmra.mrb[0].mxu0 %v5023
      %v5914 = vpop.f32.mrb[0].mxu0
      %v5915 = vadd.f32 %v5335, %v5914
      %v5916 = vpop.f32.mrb[0].mxu0
      %v5917 = vadd.f32 %v5337, %v5916
      %v5918 = vpop.f32.mrb[0].mxu0
      %v5919 = vadd.f32 %v5339, %v5918
      %v5920 = vpop.f32.mrb[0].mxu0
      %v5921 = vadd.f32 %v5341, %v5920
      %5922 = vmatprep.mubr.bf16.mxu0 %v5642
      %5923 = vmatmul.mubr.bf16.gmra.mrb[0].mxu0 %v5025
      %v5924 = vpop.f32.mrb[0].mxu0
      %v5925 = vadd.f32 %v5345, %v5924
      %v5926 = vpop.f32.mrb[0].mxu0
      %v5927 = vadd.f32 %v5347, %v5926
      %v5928 = vpop.f32.mrb[0].mxu0
      %v5929 = vadd.f32 %v5349, %v5928
      %v5930 = vpop.f32.mrb[0].mxu0
      %v5931 = vadd.f32 %v5351, %v5930
      %5932 = vmatprep.mubr.bf16.mxu0 %v5645
      %5933 = vmatmul.mubr.bf16.gmra.mrb[0].mxu0 %v5027
      %v5934 = vpop.f32.mrb[0].mxu0
      %v5935 = vadd.f32 %v5355, %v5934
      %v5936 = vpop.f32.mrb[0].mxu0
      %v5937 = vadd.f32 %v5357, %v5936
      %v5938 = vpop.f32.mrb[0].mxu0
      %v5939 = vadd.f32 %v5359, %v5938
      %v5940 = vpop.f32.mrb[0].mxu0
      %v5941 = vadd.f32 %v5361, %v5940
      %5942 = vmatprep.mubr.bf16.mxu0 %v5648
      %5943 = vmatmul.mubr.bf16.gmra.mrb[0].mxu0 %v5029
      %v5944 = vpop.f32.mrb[0].mxu0
      %v5945 = vadd.f32 %v5365, %v5944
      %v5946 = vpop.f32.mrb[0].mxu0
      %v5947 = vadd.f32 %v5367, %v5946
      %v5948 = vpop.f32.mrb[0].mxu0
      %v5949 = vadd.f32 %v5369, %v5948
      %v5950 = vpop.f32.mrb[0].mxu0
      %v5951 = vadd.f32 %v5371, %v5950
      %5952 = vmatprep.mubr.bf16.mxu0 %v5651
      %5953 = vmatmul.mubr.bf16.gmra.mrb[0].mxu0 %v5031
      %v5954 = vpop.f32.mrb[0].mxu0
      %v5955 = vadd.f32 %v5375, %v5954
      %v5956 = vpop.f32.mrb[0].mxu0
      %v5957 = vadd.f32 %v5377, %v5956
      %v5958 = vpop.f32.mrb[0].mxu0
      %v5959 = vadd.f32 %v5379, %v5958
      %v5960 = vpop.f32.mrb[0].mxu0
      %v5961 = vadd.f32 %v5381, %v5960
      %5962 = vmatprep.mubr.bf16.mxu0 %v5654
      %5963 = vmatmul.mubr.bf16.gmra.mrb[0].mxu0 %v5033
      %v5964 = vpop.f32.mrb[0].mxu0
      %v5965 = vadd.f32 %v5385, %v5964
      %v5966 = vpop.f32.mrb[0].mxu0
      %v5967 = vadd.f32 %v5387, %v5966
      %v5968 = vpop.f32.mrb[0].mxu0
      %v5969 = vadd.f32 %v5389, %v5968
      %v5970 = vpop.f32.mrb[0].mxu0
      %v5971 = vadd.f32 %v5391, %v5970
      %5972 = vmatprep.mubr.bf16.mxu0 %v5657
      %5973 = vmatmul.mubr.bf16.gmra.mrb[0].mxu0 %v5035
      %v5974 = vpop.f32.mrb[0].mxu0
      %v5975 = vadd.f32 %v5395, %v5974
      %v5976 = vpop.f32.mrb[0].mxu0
      %v5977 = vadd.f32 %v5397, %v5976
      %v5978 = vpop.f32.mrb[0].mxu0
      %v5979 = vadd.f32 %v5399, %v5978
      %v5980 = vpop.f32.mrb[0].mxu0
      %v5981 = vadd.f32 %v5401, %v5980
      %5982 = vmatprep.mubr.bf16.mxu0 %v5660
      %5983 = vmatmul.mubr.bf16.gmra.mrb[0].mxu0 %v5037
      %v5984 = vpop.f32.mrb[0].mxu0
      %v5985 = vadd.f32 %v5405, %v5984
      %v5986 = vpop.f32.mrb[0].mxu0
      %v5987 = vadd.f32 %v5407, %v5986
      %v5988 = vpop.f32.mrb[0].mxu0
      %v5989 = vadd.f32 %v5409, %v5988
      %v5990 = vpop.f32.mrb[0].mxu0
      %v5991 = vadd.f32 %v5411, %v5990
      %5992 = vmatprep.mubr.bf16.mxu0 %v5663
      %5993 = vmatmul.mubr.bf16.gmra.mrb[0].mxu0 %v5039
      %v5994 = vpop.f32.mrb[0].mxu0
      %v5995 = vadd.f32 %v5415, %v5994
      %v5996 = vpop.f32.mrb[0].mxu0
      %v5997 = vadd.f32 %v5417, %v5996
      %v5998 = vpop.f32.mrb[0].mxu0
      %v5999 = vadd.f32 %v5419, %v5998
      %v6000 = vpop.f32.mrb[0].mxu0
      %v6001 = vadd.f32 %v5421, %v6000
      %6002 = vmatprep.mubr.bf16.mxu0 %v5666
      %6003 = vmatmul.mubr.bf16.gmra.mrb[0].mxu0 %v5041
      %v6004 = vpop.f32.mrb[0].mxu0
      %v6005 = vadd.f32 %v5425, %v6004
      %v6006 = vpop.f32.mrb[0].mxu0
      %v6007 = vadd.f32 %v5427, %v6006
      %v6008 = vpop.f32.mrb[0].mxu0
      %v6009 = vadd.f32 %v5429, %v6008
      %v6010 = vpop.f32.mrb[0].mxu0
      %v6011 = vadd.f32 %v5431, %v6010
      %6012 = vmatprep.mubr.bf16.mxu0 %v5669
      %6013 = vmatmul.mubr.bf16.gmra.mrb[0].mxu0 %v5043
      %v6014 = vpop.f32.mrb[0].mxu0
      %v6015 = vadd.f32 %v5435, %v6014
      %v6016 = vpop.f32.mrb[0].mxu0
      %v6017 = vadd.f32 %v5437, %v6016
      %v6018 = vpop.f32.mrb[0].mxu0
      %v6019 = vadd.f32 %v5439, %v6018
      %v6020 = vpop.f32.mrb[0].mxu0
      %v6021 = vadd.f32 %v5441, %v6020
      %6022 = vmatprep.mubr.bf16.mxu0 %v5672
      %6023 = vmatmul.mubr.bf16.gmra.mrb[0].mxu0 %v5045
      %v6024 = vpop.f32.mrb[0].mxu0
      %v6025 = vadd.f32 %v5445, %v6024
      %v6026 = vpop.f32.mrb[0].mxu0
      %v6027 = vadd.f32 %v5447, %v6026
      %v6028 = vpop.f32.mrb[0].mxu0
      %v6029 = vadd.f32 %v5449, %v6028
      %v6030 = vpop.f32.mrb[0].mxu0
      %v6031 = vadd.f32 %v5451, %v6030
      %6032 = vdwg.mxu0
      %v6033 = vld [vmem:[%s43] sm:$0x3]
      %v6035 = vlaneseq
      %v6036 = vshrl.u32 %v6035, 7
      %v6037 = vsub.s32 0, %v6036
      %v6038 = vrot.slane %v6033, %v6037
      %v6039 = vlaneseq
      %v6040 = vshrl.u32 %v6039, 7
      %v6041 = vsub.s32 1, %v6040
      %v6042 = vrot.slane %v6033, %v6041
      %v6045 = vadd.f32 %v5715, %v6038
      %v6046 = vadd.f32 %v5717, %v6042
      %v6047 = vadd.f32 %v5719, %v6038
      %v6048 = vadd.f32 %v5721, %v6042
      %v6049 = vadd.f32 %v5725, %v6038
      %v6050 = vadd.f32 %v5727, %v6042
      %v6051 = vadd.f32 %v5729, %v6038
      %v6052 = vadd.f32 %v5731, %v6042
      %v6053 = vadd.f32 %v5735, %v6038
      %v6054 = vadd.f32 %v5737, %v6042
      %v6055 = vadd.f32 %v5739, %v6038
      %v6056 = vadd.f32 %v5741, %v6042
      %v6057 = vadd.f32 %v5745, %v6038
      %v6058 = vadd.f32 %v5747, %v6042
      %v6059 = vadd.f32 %v5749, %v6038
      %v6060 = vadd.f32 %v5751, %v6042
      %v6061 = vadd.f32 %v5755, %v6038
      %v6062 = vadd.f32 %v5757, %v6042
      %v6063 = vadd.f32 %v5759, %v6038
      %v6064 = vadd.f32 %v5761, %v6042
      %v6065 = vadd.f32 %v5765, %v6038
      %v6066 = vadd.f32 %v5767, %v6042
      %v6067 = vadd.f32 %v5769, %v6038
      %v6068 = vadd.f32 %v5771, %v6042
      %v6069 = vadd.f32 %v5775, %v6038
      %v6070 = vadd.f32 %v5777, %v6042
      %v6071 = vadd.f32 %v5779, %v6038
      %v6072 = vadd.f32 %v5781, %v6042
      %v6073 = vadd.f32 %v5785, %v6038
      %v6074 = vadd.f32 %v5787, %v6042
      %v6075 = vadd.f32 %v5789, %v6038
      %v6076 = vadd.f32 %v5791, %v6042
      %v6077 = vadd.f32 %v5795, %v6038
      %v6078 = vadd.f32 %v5797, %v6042
      %v6079 = vadd.f32 %v5799, %v6038
      %v6080 = vadd.f32 %v5801, %v6042
      %v6081 = vadd.f32 %v5805, %v6038
      %v6082 = vadd.f32 %v5807, %v6042
      %v6083 = vadd.f32 %v5809, %v6038
      %v6084 = vadd.f32 %v5811, %v6042
      %v6085 = vadd.f32 %v5815, %v6038
      %v6086 = vadd.f32 %v5817, %v6042
      %v6087 = vadd.f32 %v5819, %v6038
      %v6088 = vadd.f32 %v5821, %v6042
      %v6089 = vadd.f32 %v5825, %v6038
      %v6090 = vadd.f32 %v5827, %v6042
      %v6091 = vadd.f32 %v5829, %v6038
      %v6092 = vadd.f32 %v5831, %v6042
      %v6093 = vadd.f32 %v5835, %v6038
      %v6094 = vadd.f32 %v5837, %v6042
      %v6095 = vadd.f32 %v5839, %v6038
      %v6096 = vadd.f32 %v5841, %v6042
      %v6097 = vadd.f32 %v5845, %v6038
      %v6098 = vadd.f32 %v5847, %v6042
      %v6099 = vadd.f32 %v5849, %v6038
      %v6100 = vadd.f32 %v5851, %v6042
      %v6101 = vadd.f32 %v5855, %v6038
      %v6102 = vadd.f32 %v5857, %v6042
      %v6103 = vadd.f32 %v5859, %v6038
      %v6104 = vadd.f32 %v5861, %v6042
      %v6105 = vadd.f32 %v5865, %v6038
      %v6106 = vadd.f32 %v5867, %v6042
      %v6107 = vadd.f32 %v5869, %v6038
      %v6108 = vadd.f32 %v5871, %v6042
      %v6109 = vadd.f32 %v5875, %v6038
      %v6110 = vadd.f32 %v5877, %v6042
      %v6111 = vadd.f32 %v5879, %v6038
      %v6112 = vadd.f32 %v5881, %v6042
      %v6113 = vadd.f32 %v5885, %v6038
      %v6114 = vadd.f32 %v5887, %v6042
      %v6115 = vadd.f32 %v5889, %v6038
      %v6116 = vadd.f32 %v5891, %v6042
      %v6117 = vadd.f32 %v5895, %v6038
      %v6118 = vadd.f32 %v5897, %v6042
      %v6119 = vadd.f32 %v5899, %v6038
      %v6120 = vadd.f32 %v5901, %v6042
      %v6121 = vadd.f32 %v5905, %v6038
      %v6122 = vadd.f32 %v5907, %v6042
      %v6123 = vadd.f32 %v5909, %v6038
      %v6124 = vadd.f32 %v5911, %v6042
      %v6125 = vadd.f32 %v5915, %v6038
      %v6126 = vadd.f32 %v5917, %v6042
      %v6127 = vadd.f32 %v5919, %v6038
      %v6128 = vadd.f32 %v5921, %v6042
      %v6129 = vadd.f32 %v5925, %v6038
      %v6130 = vadd.f32 %v5927, %v6042
      %v6131 = vadd.f32 %v5929, %v6038
      %v6132 = vadd.f32 %v5931, %v6042
      %v6133 = vadd.f32 %v5935, %v6038
      %v6134 = vadd.f32 %v5937, %v6042
      %v6135 = vadd.f32 %v5939, %v6038
      %v6136 = vadd.f32 %v5941, %v6042
      %v6137 = vadd.f32 %v5945, %v6038
      %v6138 = vadd.f32 %v5947, %v6042
      %v6139 = vadd.f32 %v5949, %v6038
      %v6140 = vadd.f32 %v5951, %v6042
      %v6141 = vadd.f32 %v5955, %v6038
      %v6142 = vadd.f32 %v5957, %v6042
      %v6143 = vadd.f32 %v5959, %v6038
      %v6144 = vadd.f32 %v5961, %v6042
      %v6145 = vadd.f32 %v5965, %v6038
      %v6146 = vadd.f32 %v5967, %v6042
      %v6147 = vadd.f32 %v5969, %v6038
      %v6148 = vadd.f32 %v5971, %v6042
      %v6149 = vadd.f32 %v5975, %v6038
      %v6150 = vadd.f32 %v5977, %v6042
      %v6151 = vadd.f32 %v5979, %v6038
      %v6152 = vadd.f32 %v5981, %v6042
      %v6153 = vadd.f32 %v5985, %v6038
      %v6154 = vadd.f32 %v5987, %v6042
      %v6155 = vadd.f32 %v5989, %v6038
      %v6156 = vadd.f32 %v5991, %v6042
      %v6157 = vadd.f32 %v5995, %v6038
      %v6158 = vadd.f32 %v5997, %v6042
      %v6159 = vadd.f32 %v5999, %v6038
      %v6160 = vadd.f32 %v6001, %v6042
      %v6161 = vadd.f32 %v6005, %v6038
      %v6162 = vadd.f32 %v6007, %v6042
      %v6163 = vadd.f32 %v6009, %v6038
      %v6164 = vadd.f32 %v6011, %v6042
      %v6165 = vadd.f32 %v6015, %v6038
      %v6166 = vadd.f32 %v6017, %v6042
      %v6167 = vadd.f32 %v6019, %v6038
      %v6168 = vadd.f32 %v6021, %v6042
      %v6169 = vadd.f32 %v6025, %v6038
      %v6170 = vadd.f32 %v6027, %v6042
      %v6171 = vadd.f32 %v6029, %v6038
      %v6172 = vadd.f32 %v6031, %v6042
      %v6173 = vmax.f32 %v6045, 0.0
      %v6174 = vmax.f32 %v6046, 0.0
      %v6175 = vmax.f32 %v6047, 0.0
      %v6176 = vmax.f32 %v6048, 0.0
      %v6177 = vmax.f32 %v6049, 0.0
      %v6178 = vmax.f32 %v6050, 0.0
      %v6179 = vmax.f32 %v6051, 0.0
      %v6180 = vmax.f32 %v6052, 0.0
      %v6181 = vmax.f32 %v6053, 0.0
      %v6182 = vmax.f32 %v6054, 0.0
      %v6183 = vmax.f32 %v6055, 0.0
      %v6184 = vmax.f32 %v6056, 0.0
      %v6185 = vmax.f32 %v6057, 0.0
      %v6186 = vmax.f32 %v6058, 0.0
      %v6187 = vmax.f32 %v6059, 0.0
      %v6188 = vmax.f32 %v6060, 0.0
      %v6189 = vmax.f32 %v6061, 0.0
      %v6190 = vmax.f32 %v6062, 0.0
      %v6191 = vmax.f32 %v6063, 0.0
      %v6192 = vmax.f32 %v6064, 0.0
      %v6193 = vmax.f32 %v6065, 0.0
      %v6194 = vmax.f32 %v6066, 0.0
      %v6195 = vmax.f32 %v6067, 0.0
      %v6196 = vmax.f32 %v6068, 0.0
      %v6197 = vmax.f32 %v6069, 0.0
      %v6198 = vmax.f32 %v6070, 0.0
      %v6199 = vmax.f32 %v6071, 0.0
      %v6200 = vmax.f32 %v6072, 0.0
      %v6201 = vmax.f32 %v6073, 0.0
      %v6202 = vmax.f32 %v6074, 0.0
      %v6203 = vmax.f32 %v6075, 0.0
      %v6204 = vmax.f32 %v6076, 0.0
      %v6205 = vmax.f32 %v6077, 0.0
      %v6206 = vmax.f32 %v6078, 0.0
      %v6207 = vmax.f32 %v6079, 0.0
      %v6208 = vmax.f32 %v6080, 0.0
      %v6209 = vmax.f32 %v6081, 0.0
      %v6210 = vmax.f32 %v6082, 0.0
      %v6211 = vmax.f32 %v6083, 0.0
      %v6212 = vmax.f32 %v6084, 0.0
      %v6213 = vmax.f32 %v6085, 0.0
      %v6214 = vmax.f32 %v6086, 0.0
      %v6215 = vmax.f32 %v6087, 0.0
      %v6216 = vmax.f32 %v6088, 0.0
      %v6217 = vmax.f32 %v6089, 0.0
      %v6218 = vmax.f32 %v6090, 0.0
      %v6219 = vmax.f32 %v6091, 0.0
      %v6220 = vmax.f32 %v6092, 0.0
      %v6221 = vmax.f32 %v6093, 0.0
      %v6222 = vmax.f32 %v6094, 0.0
      %v6223 = vmax.f32 %v6095, 0.0
      %v6224 = vmax.f32 %v6096, 0.0
      %v6225 = vmax.f32 %v6097, 0.0
      %v6226 = vmax.f32 %v6098, 0.0
      %v6227 = vmax.f32 %v6099, 0.0
      %v6228 = vmax.f32 %v6100, 0.0
      %v6229 = vmax.f32 %v6101, 0.0
      %v6230 = vmax.f32 %v6102, 0.0
      %v6231 = vmax.f32 %v6103, 0.0
      %v6232 = vmax.f32 %v6104, 0.0
      %v6233 = vmax.f32 %v6105, 0.0
      %v6234 = vmax.f32 %v6106, 0.0
      %v6235 = vmax.f32 %v6107, 0.0
      %v6236 = vmax.f32 %v6108, 0.0
      %v6237 = vmax.f32 %v6109, 0.0
      %v6238 = vmax.f32 %v6110, 0.0
      %v6239 = vmax.f32 %v6111, 0.0
      %v6240 = vmax.f32 %v6112, 0.0
      %v6241 = vmax.f32 %v6113, 0.0
      %v6242 = vmax.f32 %v6114, 0.0
      %v6243 = vmax.f32 %v6115, 0.0
      %v6244 = vmax.f32 %v6116, 0.0
      %v6245 = vmax.f32 %v6117, 0.0
      %v6246 = vmax.f32 %v6118, 0.0
      %v6247 = vmax.f32 %v6119, 0.0
      %v6248 = vmax.f32 %v6120, 0.0
      %v6249 = vmax.f32 %v6121, 0.0
      %v6250 = vmax.f32 %v6122, 0.0
      %v6251 = vmax.f32 %v6123, 0.0
      %v6252 = vmax.f32 %v6124, 0.0
      %v6253 = vmax.f32 %v6125, 0.0
      %v6254 = vmax.f32 %v6126, 0.0
      %v6255 = vmax.f32 %v6127, 0.0
      %v6256 = vmax.f32 %v6128, 0.0
      %v6257 = vmax.f32 %v6129, 0.0
      %v6258 = vmax.f32 %v6130, 0.0
      %v6259 = vmax.f32 %v6131, 0.0
      %v6260 = vmax.f32 %v6132, 0.0
      %v6261 = vmax.f32 %v6133, 0.0
      %v6262 = vmax.f32 %v6134, 0.0
      %v6263 = vmax.f32 %v6135, 0.0
      %v6264 = vmax.f32 %v6136, 0.0
      %v6265 = vmax.f32 %v6137, 0.0
      %v6266 = vmax.f32 %v6138, 0.0
      %v6267 = vmax.f32 %v6139, 0.0
      %v6268 = vmax.f32 %v6140, 0.0
      %v6269 = vmax.f32 %v6141, 0.0
      %v6270 = vmax.f32 %v6142, 0.0
      %v6271 = vmax.f32 %v6143, 0.0
      %v6272 = vmax.f32 %v6144, 0.0
      %v6273 = vmax.f32 %v6145, 0.0
      %v6274 = vmax.f32 %v6146, 0.0
      %v6275 = vmax.f32 %v6147, 0.0
      %v6276 = vmax.f32 %v6148, 0.0
      %v6277 = vmax.f32 %v6149, 0.0
      %v6278 = vmax.f32 %v6150, 0.0
      %v6279 = vmax.f32 %v6151, 0.0
      %v6280 = vmax.f32 %v6152, 0.0
      %v6281 = vmax.f32 %v6153, 0.0
      %v6282 = vmax.f32 %v6154, 0.0
      %v6283 = vmax.f32 %v6155, 0.0
      %v6284 = vmax.f32 %v6156, 0.0
      %v6285 = vmax.f32 %v6157, 0.0
      %v6286 = vmax.f32 %v6158, 0.0
      %v6287 = vmax.f32 %v6159, 0.0
      %v6288 = vmax.f32 %v6160, 0.0
      %v6289 = vmax.f32 %v6161, 0.0
      %v6290 = vmax.f32 %v6162, 0.0
      %v6291 = vmax.f32 %v6163, 0.0
      %v6292 = vmax.f32 %v6164, 0.0
      %v6293 = vmax.f32 %v6165, 0.0
      %v6294 = vmax.f32 %v6166, 0.0
      %v6295 = vmax.f32 %v6167, 0.0
      %v6296 = vmax.f32 %v6168, 0.0
      %v6297 = vmax.f32 %v6169, 0.0
      %v6298 = vmax.f32 %v6170, 0.0
      %v6299 = vmax.f32 %v6171, 0.0
      %v6300 = vmax.f32 %v6172, 0.0
      %v6301 = vpack.c.bf16 %v6175, %v6173
      %v6302 = vpack.c.bf16 %v6176, %v6174
      %v6303 = vpack.c.bf16 %v6179, %v6177
      %v6304 = vpack.c.bf16 %v6180, %v6178
      %v6305 = vpack.c.bf16 %v6183, %v6181
      %v6306 = vpack.c.bf16 %v6184, %v6182
      %v6307 = vpack.c.bf16 %v6187, %v6185
      %v6308 = vpack.c.bf16 %v6188, %v6186
      %v6309 = vpack.c.bf16 %v6191, %v6189
      %v6310 = vpack.c.bf16 %v6192, %v6190
      %v6311 = vpack.c.bf16 %v6195, %v6193
      %v6312 = vpack.c.bf16 %v6196, %v6194
      %v6313 = vpack.c.bf16 %v6199, %v6197
      %v6314 = vpack.c.bf16 %v6200, %v6198
      %v6315 = vpack.c.bf16 %v6203, %v6201
      %v6316 = vpack.c.bf16 %v6204, %v6202
      %v6317 = vpack.c.bf16 %v6207, %v6205
      %v6318 = vpack.c.bf16 %v6208, %v6206
      %v6319 = vpack.c.bf16 %v6211, %v6209
      %v6320 = vpack.c.bf16 %v6212, %v6210
      %v6321 = vpack.c.bf16 %v6215, %v6213
      %v6322 = vpack.c.bf16 %v6216, %v6214
      %v6323 = vpack.c.bf16 %v6219, %v6217
      %v6324 = vpack.c.bf16 %v6220, %v6218
      %v6325 = vpack.c.bf16 %v6223, %v6221
      %v6326 = vpack.c.bf16 %v6224, %v6222
      %v6327 = vpack.c.bf16 %v6227, %v6225
      %v6328 = vpack.c.bf16 %v6228, %v6226
      %v6329 = vpack.c.bf16 %v6231, %v6229
      %v6330 = vpack.c.bf16 %v6232, %v6230
      %v6331 = vpack.c.bf16 %v6235, %v6233
      %v6332 = vpack.c.bf16 %v6236, %v6234
      %v6333 = vpack.c.bf16 %v6239, %v6237
      %v6334 = vpack.c.bf16 %v6240, %v6238
      %v6335 = vpack.c.bf16 %v6243, %v6241
      %v6336 = vpack.c.bf16 %v6244, %v6242
      %v6337 = vpack.c.bf16 %v6247, %v6245
      %v6338 = vpack.c.bf16 %v6248, %v6246
      %v6339 = vpack.c.bf16 %v6251, %v6249
      %v6340 = vpack.c.bf16 %v6252, %v6250
      %v6341 = vpack.c.bf16 %v6255, %v6253
      %v6342 = vpack.c.bf16 %v6256, %v6254
      %v6343 = vpack.c.bf16 %v6259, %v6257
      %v6344 = vpack.c.bf16 %v6260, %v6258
      %v6345 = vpack.c.bf16 %v6263, %v6261
      %v6346 = vpack.c.bf16 %v6264, %v6262
      %v6347 = vpack.c.bf16 %v6267, %v6265
      %v6348 = vpack.c.bf16 %v6268, %v6266
      %v6349 = vpack.c.bf16 %v6271, %v6269
      %v6350 = vpack.c.bf16 %v6272, %v6270
      %v6351 = vpack.c.bf16 %v6275, %v6273
      %v6352 = vpack.c.bf16 %v6276, %v6274
      %v6353 = vpack.c.bf16 %v6279, %v6277
      %v6354 = vpack.c.bf16 %v6280, %v6278
      %v6355 = vpack.c.bf16 %v6283, %v6281
      %v6356 = vpack.c.bf16 %v6284, %v6282
      %v6357 = vpack.c.bf16 %v6287, %v6285
      %v6358 = vpack.c.bf16 %v6288, %v6286
      %v6359 = vpack.c.bf16 %v6291, %v6289
      %v6360 = vpack.c.bf16 %v6292, %v6290
      %v6361 = vpack.c.bf16 %v6295, %v6293
      %v6362 = vpack.c.bf16 %v6296, %v6294
      %v6363 = vpack.c.bf16 %v6299, %v6297
      %v6364 = vpack.c.bf16 %v6300, %v6298
      %v6365 = vld [vmem:[%s19] sm:$0xff]
      %v6366 = vld [vmem:[%s19 + $0x8] sm:$0xff]
      %v6367 = vld [vmem:[%s19 + $0x10] sm:$0xff]
      %v6368 = vld [vmem:[%s19 + $0x18] sm:$0xff]
      %v6369 = vld [vmem:[%s19 + $0x20] sm:$0xff]
      %v6370 = vld [vmem:[%s19 + $0x28] sm:$0xff]
      %v6371 = vld [vmem:[%s19 + $0x30] sm:$0xff]
      %v6372 = vld [vmem:[%s19 + $0x38] sm:$0xff]
      %v6373 = vld [vmem:[%s19 + $0x40] sm:$0xff]
      %v6374 = vld [vmem:[%s19 + $0x48] sm:$0xff]
      %v6375 = vld [vmem:[%s19 + $0x50] sm:$0xff]
      %v6376 = vld [vmem:[%s19 + $0x58] sm:$0xff]
      %v6377 = vld [vmem:[%s19 + $0x60] sm:$0xff]
      %v6378 = vld [vmem:[%s19 + $0x68] sm:$0xff]
      %v6379 = vld [vmem:[%s19 + $0x70] sm:$0xff]
      %v6380 = vld [vmem:[%s19 + $0x78] sm:$0xff]
      %v6381 = vld [vmem:[%s19 + $0x80] sm:$0xff]
      %v6382 = vld [vmem:[%s19 + $0x88] sm:$0xff]
      %v6383 = vld [vmem:[%s19 + $0x90] sm:$0xff]
      %v6384 = vld [vmem:[%s19 + $0x98] sm:$0xff]
      %v6385 = vld [vmem:[%s19 + $0xa0] sm:$0xff]
      %v6386 = vld [vmem:[%s19 + $0xa8] sm:$0xff]
      %v6387 = vld [vmem:[%s19 + $0xb0] sm:$0xff]
      %v6388 = vld [vmem:[%s19 + $0xb8] sm:$0xff]
      %v6389 = vld [vmem:[%s19 + $0xc0] sm:$0xff]
      %v6390 = vld [vmem:[%s45] sm:$0x3]
      %v6392 = vlaneseq
      %v6393 = vshrl.u32 %v6392, 7
      %v6394 = vsub.s32 0, %v6393
      %v6395 = vrot.slane %v6390, %v6394
      %v6396 = vlaneseq
      %v6397 = vshrl.u32 %v6396, 7
      %v6398 = vsub.s32 1, %v6397
      %v6399 = vrot.slane %v6390, %v6398
      %v6427 = vunpack.c.l.b16 %v6365
      %v6428 = vunpack.c.h.b16 %v6365
      %v6429 = vunpack.c.l.b16 %v6366
      %v6430 = vunpack.c.h.b16 %v6366
      %v6431 = vunpack.c.l.b16 %v6367
      %v6432 = vunpack.c.h.b16 %v6367
      %v6433 = vunpack.c.l.b16 %v6368
      %v6434 = vunpack.c.h.b16 %v6368
      %v6435 = vunpack.c.l.b16 %v6369
      %v6436 = vunpack.c.h.b16 %v6369
      %v6437 = vunpack.c.l.b16 %v6370
      %v6438 = vunpack.c.h.b16 %v6370
      %v6439 = vunpack.c.l.b16 %v6371
      %v6440 = vunpack.c.h.b16 %v6371
      %v6441 = vunpack.c.l.b16 %v6372
      %v6442 = vunpack.c.h.b16 %v6372
      %v6443 = vunpack.c.l.b16 %v6373
      %v6444 = vunpack.c.h.b16 %v6373
      %v6445 = vunpack.c.l.b16 %v6374
      %v6446 = vunpack.c.h.b16 %v6374
      %v6447 = vunpack.c.l.b16 %v6375
      %v6448 = vunpack.c.h.b16 %v6375
      %v6449 = vunpack.c.l.b16 %v6376
      %v6450 = vunpack.c.h.b16 %v6376
      %v6451 = vunpack.c.l.b16 %v6377
      %v6452 = vunpack.c.h.b16 %v6377
      %v6453 = vunpack.c.l.b16 %v6378
      %v6454 = vunpack.c.h.b16 %v6378
      %v6455 = vunpack.c.l.b16 %v6379
      %v6456 = vunpack.c.h.b16 %v6379
      %v6457 = vunpack.c.l.b16 %v6380
      %v6458 = vunpack.c.h.b16 %v6380
      %v6459 = vunpack.c.l.b16 %v6381
      %v6460 = vunpack.c.h.b16 %v6381
      %v6461 = vunpack.c.l.b16 %v6382
      %v6462 = vunpack.c.h.b16 %v6382
      %v6463 = vunpack.c.l.b16 %v6383
      %v6464 = vunpack.c.h.b16 %v6383
      %v6465 = vunpack.c.l.b16 %v6384
      %v6466 = vunpack.c.h.b16 %v6384
      %v6467 = vunpack.c.l.b16 %v6385
      %v6468 = vunpack.c.h.b16 %v6385
      %v6469 = vunpack.c.l.b16 %v6386
      %v6470 = vunpack.c.h.b16 %v6386
      %v6471 = vunpack.c.l.b16 %v6387
      %v6472 = vunpack.c.h.b16 %v6387
      %v6473 = vunpack.c.l.b16 %v6388
      %v6474 = vunpack.c.h.b16 %v6388
      %v6475 = vunpack.c.l.b16 %v6389
      %v6476 = vunpack.c.h.b16 %v6389
      %v6477 = vpack.c.b16 %v6429, %v6427
      %v6478 = vpack.c.b16 %v6430, %v6428
      %v6479 = vpack.c.b16 %v6433, %v6431
      %v6480 = vpack.c.b16 %v6434, %v6432
      %v6481 = vpack.c.b16 %v6437, %v6435
      %v6482 = vpack.c.b16 %v6438, %v6436
      %v6483 = vpack.c.b16 %v6441, %v6439
      %v6484 = vpack.c.b16 %v6442, %v6440
      %v6485 = vpack.c.b16 %v6445, %v6443
      %v6486 = vpack.c.b16 %v6446, %v6444
      %v6487 = vpack.c.b16 %v6449, %v6447
      %v6488 = vpack.c.b16 %v6450, %v6448
      %v6489 = vpack.c.b16 %v6453, %v6451
      %v6490 = vpack.c.b16 %v6454, %v6452
      %v6491 = vpack.c.b16 %v6457, %v6455
      %v6492 = vpack.c.b16 %v6458, %v6456
      %v6493 = vpack.c.b16 %v6461, %v6459
      %v6494 = vpack.c.b16 %v6462, %v6460
      %v6495 = vpack.c.b16 %v6465, %v6463
      %v6496 = vpack.c.b16 %v6466, %v6464
      %v6497 = vpack.c.b16 %v6469, %v6467
      %v6498 = vpack.c.b16 %v6470, %v6468
      %v6499 = vpack.c.b16 %v6473, %v6471
      %v6500 = vpack.c.b16 %v6474, %v6472
      %v6501 = vpack.c.b16 %v6475, %v6475
      %v6502 = vpack.c.b16 %v6476, %v6476
      %v6528 = vsel %vm1971, %v6302, 0
      %v6531 = vsel %vm1971, %v6304, 0
      %v6534 = vsel %vm1971, %v6306, 0
      %v6537 = vsel %vm1971, %v6308, 0
      %v6540 = vsel %vm1971, %v6310, 0
      %v6543 = vsel %vm1971, %v6312, 0
      %v6546 = vsel %vm1971, %v6314, 0
      %v6549 = vsel %vm1971, %v6316, 0
      %v6552 = vsel %vm1971, %v6318, 0
      %v6555 = vsel %vm1971, %v6320, 0
      %v6558 = vsel %vm1971, %v6322, 0
      %v6561 = vsel %vm1971, %v6324, 0
      %v6564 = vsel %vm1971, %v6326, 0
      %v6567 = vsel %vm1971, %v6328, 0
      %v6570 = vsel %vm1971, %v6330, 0
      %v6573 = vsel %vm1971, %v6332, 0
      %v6576 = vsel %vm1971, %v6334, 0
      %v6579 = vsel %vm1971, %v6336, 0
      %v6582 = vsel %vm1971, %v6338, 0
      %v6585 = vsel %vm1971, %v6340, 0
      %v6588 = vsel %vm1971, %v6342, 0
      %v6591 = vsel %vm1971, %v6344, 0
      %v6594 = vsel %vm1971, %v6346, 0
      %v6597 = vsel %vm1971, %v6348, 0
      %v6600 = vsel %vm1971, %v6350, 0
      %v6603 = vsel %vm1971, %v6352, 0
      %v6606 = vsel %vm1971, %v6354, 0
      %v6609 = vsel %vm1971, %v6356, 0
      %v6612 = vsel %vm1971, %v6358, 0
      %v6615 = vsel %vm1971, %v6360, 0
      %v6618 = vsel %vm1971, %v6362, 0
      %v6621 = vsel %vm1971, %v6364, 0
      %v6624 = vsel %vm2068, %v6501, 0
      %v6627 = vsel %vm2068, %v6502, 0
      %6629 = vmatprep.subr.bf16.mxu0 %v6478
      %6630 = vmatpush1.bf16.msra.mxu0 %v6477
      %6631 = vmatprep.subr.bf16.mxu0 %v6480
      %6632 = vmatpush1.bf16.msra.mxu0 %v6479
      %6633 = vmatprep.subr.bf16.mxu0 %v6482
      %6634 = vmatpush1.bf16.msra.mxu0 %v6481
      %6635 = vmatprep.subr.bf16.mxu0 %v6484
      %6636 = vmatpush1.bf16.msra.mxu0 %v6483
      %6637 = vmatprep.subr.bf16.mxu0 %v6486
      %6638 = vmatpush1.bf16.msra.mxu0 %v6485
      %6639 = vmatprep.subr.bf16.mxu0 %v6488
      %6640 = vmatpush1.bf16.msra.mxu0 %v6487
      %6641 = vmatprep.subr.bf16.mxu0 %v6490
      %6642 = vmatpush1.bf16.msra.mxu0 %v6489
      %6643 = vmatprep.subr.bf16.mxu0 %v6492
      %6644 = vmatpush1.bf16.msra.mxu0 %v6491
      %6645 = vmatprep.subr.bf16.mxu0 %v6494
      %6646 = vmatpush1.bf16.msra.mxu0 %v6493
      %6647 = vmatprep.subr.bf16.mxu0 %v6496
      %6648 = vmatpush1.bf16.msra.mxu0 %v6495
      %6649 = vmatprep.subr.bf16.mxu0 %v6498
      %6650 = vmatpush1.bf16.msra.mxu0 %v6497
      %6651 = vmatprep.subr.bf16.mxu0 %v6500
      %6652 = vmatpush1.bf16.msra.mxu0 %v6499
      %6653 = vmatprep.subr.bf16.mxu0 %v6627
      %6654 = vmatpush1.bf16.msra.mxu0 %v6624
      %6655 = vmatprep.subr.bf16.mxu0 0
      %6656 = vmatpush1.bf16.msra.mxu0 0
      %6657 = vmatprep.subr.bf16.mxu0 0
      %6658 = vmatpush1.bf16.msra.mxu0 0
      %6659 = vmatprep.subr.bf16.mxu0 0
      %6660 = vmatpush1.bf16.msra.mxu0 0
      %6661 = vmatprep.mubr.bf16.mxu0 %v6528
      %6662 = vmatmul.mubr.bf16.gmra.mrb[0].mxu0 %v6301
      %v6663 = vpop.f32.mrb[0].mxu0
      %v6664 = vadd.f32 %v6395, %v6663
      %v6665 = vpop.f32.mrb[0].mxu0
      %v6666 = vadd.f32 %v6399, %v6665
      %v6667 = vpop.f32.mrb[0].mxu0
      %v6668 = vadd.f32 %v6395, %v6667
      %v6669 = vpop.f32.mrb[0].mxu0
      %v6670 = vadd.f32 %v6399, %v6669
      %6671 = vmatprep.mubr.bf16.mxu0 %v6531
      %6672 = vmatmul.mubr.bf16.gmra.mrb[0].mxu0 %v6303
      %v6673 = vpop.f32.mrb[0].mxu0
      %v6674 = vadd.f32 %v6395, %v6673
      %v6675 = vpop.f32.mrb[0].mxu0
      %v6676 = vadd.f32 %v6399, %v6675
      %v6677 = vpop.f32.mrb[0].mxu0
      %v6678 = vadd.f32 %v6395, %v6677
      %v6679 = vpop.f32.mrb[0].mxu0
      %v6680 = vadd.f32 %v6399, %v6679
      %6681 = vmatprep.mubr.bf16.mxu0 %v6534
      %6682 = vmatmul.mubr.bf16.gmra.mrb[0].mxu0 %v6305
      %v6683 = vpop.f32.mrb[0].mxu0
      %v6684 = vadd.f32 %v6395, %v6683
      %v6685 = vpop.f32.mrb[0].mxu0
      %v6686 = vadd.f32 %v6399, %v6685
      %v6687 = vpop.f32.mrb[0].mxu0
      %v6688 = vadd.f32 %v6395, %v6687
      %v6689 = vpop.f32.mrb[0].mxu0
      %v6690 = vadd.f32 %v6399, %v6689
      %6691 = vmatprep.mubr.bf16.mxu0 %v6537
      %6692 = vmatmul.mubr.bf16.gmra.mrb[0].mxu0 %v6307
      %v6693 = vpop.f32.mrb[0].mxu0
      %v6694 = vadd.f32 %v6395, %v6693
      %v6695 = vpop.f32.mrb[0].mxu0
      %v6696 = vadd.f32 %v6399, %v6695
      %v6697 = vpop.f32.mrb[0].mxu0
      %v6698 = vadd.f32 %v6395, %v6697
      %v6699 = vpop.f32.mrb[0].mxu0
      %v6700 = vadd.f32 %v6399, %v6699
      %6701 = vmatprep.mubr.bf16.mxu0 %v6540
      %6702 = vmatmul.mubr.bf16.gmra.mrb[0].mxu0 %v6309
      %v6703 = vpop.f32.mrb[0].mxu0
      %v6704 = vadd.f32 %v6395, %v6703
      %v6705 = vpop.f32.mrb[0].mxu0
      %v6706 = vadd.f32 %v6399, %v6705
      %v6707 = vpop.f32.mrb[0].mxu0
      %v6708 = vadd.f32 %v6395, %v6707
      %v6709 = vpop.f32.mrb[0].mxu0
      %v6710 = vadd.f32 %v6399, %v6709
      %6711 = vmatprep.mubr.bf16.mxu0 %v6543
      %6712 = vmatmul.mubr.bf16.gmra.mrb[0].mxu0 %v6311
      %v6713 = vpop.f32.mrb[0].mxu0
      %v6714 = vadd.f32 %v6395, %v6713
      %v6715 = vpop.f32.mrb[0].mxu0
      %v6716 = vadd.f32 %v6399, %v6715
      %v6717 = vpop.f32.mrb[0].mxu0
      %v6718 = vadd.f32 %v6395, %v6717
      %v6719 = vpop.f32.mrb[0].mxu0
      %v6720 = vadd.f32 %v6399, %v6719
      %6721 = vmatprep.mubr.bf16.mxu0 %v6546
      %6722 = vmatmul.mubr.bf16.gmra.mrb[0].mxu0 %v6313
      %v6723 = vpop.f32.mrb[0].mxu0
      %v6724 = vadd.f32 %v6395, %v6723
      %v6725 = vpop.f32.mrb[0].mxu0
      %v6726 = vadd.f32 %v6399, %v6725
      %v6727 = vpop.f32.mrb[0].mxu0
      %v6728 = vadd.f32 %v6395, %v6727
      %v6729 = vpop.f32.mrb[0].mxu0
      %v6730 = vadd.f32 %v6399, %v6729
      %6731 = vmatprep.mubr.bf16.mxu0 %v6549
      %6732 = vmatmul.mubr.bf16.gmra.mrb[0].mxu0 %v6315
      %v6733 = vpop.f32.mrb[0].mxu0
      %v6734 = vadd.f32 %v6395, %v6733
      %v6735 = vpop.f32.mrb[0].mxu0
      %v6736 = vadd.f32 %v6399, %v6735
      %v6737 = vpop.f32.mrb[0].mxu0
      %v6738 = vadd.f32 %v6395, %v6737
      %v6739 = vpop.f32.mrb[0].mxu0
      %v6740 = vadd.f32 %v6399, %v6739
      %6741 = vmatprep.mubr.bf16.mxu0 %v6552
      %6742 = vmatmul.mubr.bf16.gmra.mrb[0].mxu0 %v6317
      %v6743 = vpop.f32.mrb[0].mxu0
      %v6744 = vadd.f32 %v6395, %v6743
      %v6745 = vpop.f32.mrb[0].mxu0
      %v6746 = vadd.f32 %v6399, %v6745
      %v6747 = vpop.f32.mrb[0].mxu0
      %v6748 = vadd.f32 %v6395, %v6747
      %v6749 = vpop.f32.mrb[0].mxu0
      %v6750 = vadd.f32 %v6399, %v6749
      %6751 = vmatprep.mubr.bf16.mxu0 %v6555
      %6752 = vmatmul.mubr.bf16.gmra.mrb[0].mxu0 %v6319
      %v6753 = vpop.f32.mrb[0].mxu0
      %v6754 = vadd.f32 %v6395, %v6753
      %v6755 = vpop.f32.mrb[0].mxu0
      %v6756 = vadd.f32 %v6399, %v6755
      %v6757 = vpop.f32.mrb[0].mxu0
      %v6758 = vadd.f32 %v6395, %v6757
      %v6759 = vpop.f32.mrb[0].mxu0
      %v6760 = vadd.f32 %v6399, %v6759
      %6761 = vmatprep.mubr.bf16.mxu0 %v6558
      %6762 = vmatmul.mubr.bf16.gmra.mrb[0].mxu0 %v6321
      %v6763 = vpop.f32.mrb[0].mxu0
      %v6764 = vadd.f32 %v6395, %v6763
      %v6765 = vpop.f32.mrb[0].mxu0
      %v6766 = vadd.f32 %v6399, %v6765
      %v6767 = vpop.f32.mrb[0].mxu0
      %v6768 = vadd.f32 %v6395, %v6767
      %v6769 = vpop.f32.mrb[0].mxu0
      %v6770 = vadd.f32 %v6399, %v6769
      %6771 = vmatprep.mubr.bf16.mxu0 %v6561
      %6772 = vmatmul.mubr.bf16.gmra.mrb[0].mxu0 %v6323
      %v6773 = vpop.f32.mrb[0].mxu0
      %v6774 = vadd.f32 %v6395, %v6773
      %v6775 = vpop.f32.mrb[0].mxu0
      %v6776 = vadd.f32 %v6399, %v6775
      %v6777 = vpop.f32.mrb[0].mxu0
      %v6778 = vadd.f32 %v6395, %v6777
      %v6779 = vpop.f32.mrb[0].mxu0
      %v6780 = vadd.f32 %v6399, %v6779
      %6781 = vmatprep.mubr.bf16.mxu0 %v6564
      %6782 = vmatmul.mubr.bf16.gmra.mrb[0].mxu0 %v6325
      %v6783 = vpop.f32.mrb[0].mxu0
      %v6784 = vadd.f32 %v6395, %v6783
      %v6785 = vpop.f32.mrb[0].mxu0
      %v6786 = vadd.f32 %v6399, %v6785
      %v6787 = vpop.f32.mrb[0].mxu0
      %v6788 = vadd.f32 %v6395, %v6787
      %v6789 = vpop.f32.mrb[0].mxu0
      %v6790 = vadd.f32 %v6399, %v6789
      %6791 = vmatprep.mubr.bf16.mxu0 %v6567
      %6792 = vmatmul.mubr.bf16.gmra.mrb[0].mxu0 %v6327
      %v6793 = vpop.f32.mrb[0].mxu0
      %v6794 = vadd.f32 %v6395, %v6793
      %v6795 = vpop.f32.mrb[0].mxu0
      %v6796 = vadd.f32 %v6399, %v6795
      %v6797 = vpop.f32.mrb[0].mxu0
      %v6798 = vadd.f32 %v6395, %v6797
      %v6799 = vpop.f32.mrb[0].mxu0
      %v6800 = vadd.f32 %v6399, %v6799
      %6801 = vmatprep.mubr.bf16.mxu0 %v6570
      %6802 = vmatmul.mubr.bf16.gmra.mrb[0].mxu0 %v6329
      %v6803 = vpop.f32.mrb[0].mxu0
      %v6804 = vadd.f32 %v6395, %v6803
      %v6805 = vpop.f32.mrb[0].mxu0
      %v6806 = vadd.f32 %v6399, %v6805
      %v6807 = vpop.f32.mrb[0].mxu0
      %v6808 = vadd.f32 %v6395, %v6807
      %v6809 = vpop.f32.mrb[0].mxu0
      %v6810 = vadd.f32 %v6399, %v6809
      %6811 = vmatprep.mubr.bf16.mxu0 %v6573
      %6812 = vmatmul.mubr.bf16.gmra.mrb[0].mxu0 %v6331
      %v6813 = vpop.f32.mrb[0].mxu0
      %v6814 = vadd.f32 %v6395, %v6813
      %v6815 = vpop.f32.mrb[0].mxu0
      %v6816 = vadd.f32 %v6399, %v6815
      %v6817 = vpop.f32.mrb[0].mxu0
      %v6818 = vadd.f32 %v6395, %v6817
      %v6819 = vpop.f32.mrb[0].mxu0
      %v6820 = vadd.f32 %v6399, %v6819
      %6821 = vmatprep.mubr.bf16.mxu0 %v6576
      %6822 = vmatmul.mubr.bf16.gmra.mrb[0].mxu0 %v6333
      %v6823 = vpop.f32.mrb[0].mxu0
      %v6824 = vadd.f32 %v6395, %v6823
      %v6825 = vpop.f32.mrb[0].mxu0
      %v6826 = vadd.f32 %v6399, %v6825
      %v6827 = vpop.f32.mrb[0].mxu0
      %v6828 = vadd.f32 %v6395, %v6827
      %v6829 = vpop.f32.mrb[0].mxu0
      %v6830 = vadd.f32 %v6399, %v6829
      %6831 = vmatprep.mubr.bf16.mxu0 %v6579
      %6832 = vmatmul.mubr.bf16.gmra.mrb[0].mxu0 %v6335
      %v6833 = vpop.f32.mrb[0].mxu0
      %v6834 = vadd.f32 %v6395, %v6833
      %v6835 = vpop.f32.mrb[0].mxu0
      %v6836 = vadd.f32 %v6399, %v6835
      %v6837 = vpop.f32.mrb[0].mxu0
      %v6838 = vadd.f32 %v6395, %v6837
      %v6839 = vpop.f32.mrb[0].mxu0
      %v6840 = vadd.f32 %v6399, %v6839
      %6841 = vmatprep.mubr.bf16.mxu0 %v6582
      %6842 = vmatmul.mubr.bf16.gmra.mrb[0].mxu0 %v6337
      %v6843 = vpop.f32.mrb[0].mxu0
      %v6844 = vadd.f32 %v6395, %v6843
      %v6845 = vpop.f32.mrb[0].mxu0
      %v6846 = vadd.f32 %v6399, %v6845
      %v6847 = vpop.f32.mrb[0].mxu0
      %v6848 = vadd.f32 %v6395, %v6847
      %v6849 = vpop.f32.mrb[0].mxu0
      %v6850 = vadd.f32 %v6399, %v6849
      %6851 = vmatprep.mubr.bf16.mxu0 %v6585
      %6852 = vmatmul.mubr.bf16.gmra.mrb[0].mxu0 %v6339
      %v6853 = vpop.f32.mrb[0].mxu0
      %v6854 = vadd.f32 %v6395, %v6853
      %v6855 = vpop.f32.mrb[0].mxu0
      %v6856 = vadd.f32 %v6399, %v6855
      %v6857 = vpop.f32.mrb[0].mxu0
      %v6858 = vadd.f32 %v6395, %v6857
      %v6859 = vpop.f32.mrb[0].mxu0
      %v6860 = vadd.f32 %v6399, %v6859
      %6861 = vmatprep.mubr.bf16.mxu0 %v6588
      %6862 = vmatmul.mubr.bf16.gmra.mrb[0].mxu0 %v6341
      %v6863 = vpop.f32.mrb[0].mxu0
      %v6864 = vadd.f32 %v6395, %v6863
      %v6865 = vpop.f32.mrb[0].mxu0
      %v6866 = vadd.f32 %v6399, %v6865
      %v6867 = vpop.f32.mrb[0].mxu0
      %v6868 = vadd.f32 %v6395, %v6867
      %v6869 = vpop.f32.mrb[0].mxu0
      %v6870 = vadd.f32 %v6399, %v6869
      %6871 = vmatprep.mubr.bf16.mxu0 %v6591
      %6872 = vmatmul.mubr.bf16.gmra.mrb[0].mxu0 %v6343
      %v6873 = vpop.f32.mrb[0].mxu0
      %v6874 = vadd.f32 %v6395, %v6873
      %v6875 = vpop.f32.mrb[0].mxu0
      %v6876 = vadd.f32 %v6399, %v6875
      %v6877 = vpop.f32.mrb[0].mxu0
      %v6878 = vadd.f32 %v6395, %v6877
      %v6879 = vpop.f32.mrb[0].mxu0
      %v6880 = vadd.f32 %v6399, %v6879
      %6881 = vmatprep.mubr.bf16.mxu0 %v6594
      %6882 = vmatmul.mubr.bf16.gmra.mrb[0].mxu0 %v6345
      %v6883 = vpop.f32.mrb[0].mxu0
      %v6884 = vadd.f32 %v6395, %v6883
      %v6885 = vpop.f32.mrb[0].mxu0
      %v6886 = vadd.f32 %v6399, %v6885
      %v6887 = vpop.f32.mrb[0].mxu0
      %v6888 = vadd.f32 %v6395, %v6887
      %v6889 = vpop.f32.mrb[0].mxu0
      %v6890 = vadd.f32 %v6399, %v6889
      %6891 = vmatprep.mubr.bf16.mxu0 %v6597
      %6892 = vmatmul.mubr.bf16.gmra.mrb[0].mxu0 %v6347
      %v6893 = vpop.f32.mrb[0].mxu0
      %v6894 = vadd.f32 %v6395, %v6893
      %v6895 = vpop.f32.mrb[0].mxu0
      %v6896 = vadd.f32 %v6399, %v6895
      %v6897 = vpop.f32.mrb[0].mxu0
      %v6898 = vadd.f32 %v6395, %v6897
      %v6899 = vpop.f32.mrb[0].mxu0
      %v6900 = vadd.f32 %v6399, %v6899
      %6901 = vmatprep.mubr.bf16.mxu0 %v6600
      %6902 = vmatmul.mubr.bf16.gmra.mrb[0].mxu0 %v6349
      %v6903 = vpop.f32.mrb[0].mxu0
      %v6904 = vadd.f32 %v6395, %v6903
      %v6905 = vpop.f32.mrb[0].mxu0
      %v6906 = vadd.f32 %v6399, %v6905
      %v6907 = vpop.f32.mrb[0].mxu0
      %v6908 = vadd.f32 %v6395, %v6907
      %v6909 = vpop.f32.mrb[0].mxu0
      %v6910 = vadd.f32 %v6399, %v6909
      %6911 = vmatprep.mubr.bf16.mxu0 %v6603
      %6912 = vmatmul.mubr.bf16.gmra.mrb[0].mxu0 %v6351
      %v6913 = vpop.f32.mrb[0].mxu0
      %v6914 = vadd.f32 %v6395, %v6913
      %v6915 = vpop.f32.mrb[0].mxu0
      %v6916 = vadd.f32 %v6399, %v6915
      %v6917 = vpop.f32.mrb[0].mxu0
      %v6918 = vadd.f32 %v6395, %v6917
      %v6919 = vpop.f32.mrb[0].mxu0
      %v6920 = vadd.f32 %v6399, %v6919
      %6921 = vmatprep.mubr.bf16.mxu0 %v6606
      %6922 = vmatmul.mubr.bf16.gmra.mrb[0].mxu0 %v6353
      %v6923 = vpop.f32.mrb[0].mxu0
      %v6924 = vadd.f32 %v6395, %v6923
      %v6925 = vpop.f32.mrb[0].mxu0
      %v6926 = vadd.f32 %v6399, %v6925
      %v6927 = vpop.f32.mrb[0].mxu0
      %v6928 = vadd.f32 %v6395, %v6927
      %v6929 = vpop.f32.mrb[0].mxu0
      %v6930 = vadd.f32 %v6399, %v6929
      %6931 = vmatprep.mubr.bf16.mxu0 %v6609
      %6932 = vmatmul.mubr.bf16.gmra.mrb[0].mxu0 %v6355
      %v6933 = vpop.f32.mrb[0].mxu0
      %v6934 = vadd.f32 %v6395, %v6933
      %v6935 = vpop.f32.mrb[0].mxu0
      %v6936 = vadd.f32 %v6399, %v6935
      %v6937 = vpop.f32.mrb[0].mxu0
      %v6938 = vadd.f32 %v6395, %v6937
      %v6939 = vpop.f32.mrb[0].mxu0
      %v6940 = vadd.f32 %v6399, %v6939
      %6941 = vmatprep.mubr.bf16.mxu0 %v6612
      %6942 = vmatmul.mubr.bf16.gmra.mrb[0].mxu0 %v6357
      %v6943 = vpop.f32.mrb[0].mxu0
      %v6944 = vadd.f32 %v6395, %v6943
      %v6945 = vpop.f32.mrb[0].mxu0
      %v6946 = vadd.f32 %v6399, %v6945
      %v6947 = vpop.f32.mrb[0].mxu0
      %v6948 = vadd.f32 %v6395, %v6947
      %v6949 = vpop.f32.mrb[0].mxu0
      %v6950 = vadd.f32 %v6399, %v6949
      %6951 = vmatprep.mubr.bf16.mxu0 %v6615
      %6952 = vmatmul.mubr.bf16.gmra.mrb[0].mxu0 %v6359
      %v6953 = vpop.f32.mrb[0].mxu0
      %v6954 = vadd.f32 %v6395, %v6953
      %v6955 = vpop.f32.mrb[0].mxu0
      %v6956 = vadd.f32 %v6399, %v6955
      %v6957 = vpop.f32.mrb[0].mxu0
      %v6958 = vadd.f32 %v6395, %v6957
      %v6959 = vpop.f32.mrb[0].mxu0
      %v6960 = vadd.f32 %v6399, %v6959
      %6961 = vmatprep.mubr.bf16.mxu0 %v6618
      %6962 = vmatmul.mubr.bf16.gmra.mrb[0].mxu0 %v6361
      %v6963 = vpop.f32.mrb[0].mxu0
      %v6964 = vadd.f32 %v6395, %v6963
      %v6965 = vpop.f32.mrb[0].mxu0
      %v6966 = vadd.f32 %v6399, %v6965
      %v6967 = vpop.f32.mrb[0].mxu0
      %v6968 = vadd.f32 %v6395, %v6967
      %v6969 = vpop.f32.mrb[0].mxu0
      %v6970 = vadd.f32 %v6399, %v6969
      %6971 = vmatprep.mubr.bf16.mxu0 %v6621
      %6972 = vmatmul.mubr.bf16.gmra.mrb[0].mxu0 %v6363
      %v6973 = vpop.f32.mrb[0].mxu0
      %v6974 = vadd.f32 %v6395, %v6973
      %v6975 = vpop.f32.mrb[0].mxu0
      %v6976 = vadd.f32 %v6399, %v6975
      %v6977 = vpop.f32.mrb[0].mxu0
      %v6978 = vadd.f32 %v6395, %v6977
      %v6979 = vpop.f32.mrb[0].mxu0
      %v6980 = vadd.f32 %v6399, %v6979
      %6981 = vdwg.mxu0
      %v6982 = vmax.f32 %v6664, 0.0
      %v6983 = vmax.f32 %v6666, 0.0
      %v6984 = vmax.f32 %v6668, 0.0
      %v6985 = vmax.f32 %v6670, 0.0
      %v6986 = vmax.f32 %v6674, 0.0
      %v6987 = vmax.f32 %v6676, 0.0
      %v6988 = vmax.f32 %v6678, 0.0
      %v6989 = vmax.f32 %v6680, 0.0
      %v6990 = vmax.f32 %v6684, 0.0
      %v6991 = vmax.f32 %v6686, 0.0
      %v6992 = vmax.f32 %v6688, 0.0
      %v6993 = vmax.f32 %v6690, 0.0
      %v6994 = vmax.f32 %v6694, 0.0
      %v6995 = vmax.f32 %v6696, 0.0
      %v6996 = vmax.f32 %v6698, 0.0
      %v6997 = vmax.f32 %v6700, 0.0
      %v6998 = vmax.f32 %v6704, 0.0
      %v6999 = vmax.f32 %v6706, 0.0
      %v7000 = vmax.f32 %v6708, 0.0
      %v7001 = vmax.f32 %v6710, 0.0
      %v7002 = vmax.f32 %v6714, 0.0
      %v7003 = vmax.f32 %v6716, 0.0
      %v7004 = vmax.f32 %v6718, 0.0
      %v7005 = vmax.f32 %v6720, 0.0
      %v7006 = vmax.f32 %v6724, 0.0
      %v7007 = vmax.f32 %v6726, 0.0
      %v7008 = vmax.f32 %v6728, 0.0
      %v7009 = vmax.f32 %v6730, 0.0
      %v7010 = vmax.f32 %v6734, 0.0
      %v7011 = vmax.f32 %v6736, 0.0
      %v7012 = vmax.f32 %v6738, 0.0
      %v7013 = vmax.f32 %v6740, 0.0
      %v7014 = vmax.f32 %v6744, 0.0
      %v7015 = vmax.f32 %v6746, 0.0
      %v7016 = vmax.f32 %v6748, 0.0
      %v7017 = vmax.f32 %v6750, 0.0
      %v7018 = vmax.f32 %v6754, 0.0
      %v7019 = vmax.f32 %v6756, 0.0
      %v7020 = vmax.f32 %v6758, 0.0
      %v7021 = vmax.f32 %v6760, 0.0
      %v7022 = vmax.f32 %v6764, 0.0
      %v7023 = vmax.f32 %v6766, 0.0
      %v7024 = vmax.f32 %v6768, 0.0
      %v7025 = vmax.f32 %v6770, 0.0
      %v7026 = vmax.f32 %v6774, 0.0
      %v7027 = vmax.f32 %v6776, 0.0
      %v7028 = vmax.f32 %v6778, 0.0
      %v7029 = vmax.f32 %v6780, 0.0
      %v7030 = vmax.f32 %v6784, 0.0
      %v7031 = vmax.f32 %v6786, 0.0
      %v7032 = vmax.f32 %v6788, 0.0
      %v7033 = vmax.f32 %v6790, 0.0
      %v7034 = vmax.f32 %v6794, 0.0
      %v7035 = vmax.f32 %v6796, 0.0
      %v7036 = vmax.f32 %v6798, 0.0
      %v7037 = vmax.f32 %v6800, 0.0
      %v7038 = vmax.f32 %v6804, 0.0
      %v7039 = vmax.f32 %v6806, 0.0
      %v7040 = vmax.f32 %v6808, 0.0
      %v7041 = vmax.f32 %v6810, 0.0
      %v7042 = vmax.f32 %v6814, 0.0
      %v7043 = vmax.f32 %v6816, 0.0
      %v7044 = vmax.f32 %v6818, 0.0
      %v7045 = vmax.f32 %v6820, 0.0
      %v7046 = vmax.f32 %v6824, 0.0
      %v7047 = vmax.f32 %v6826, 0.0
      %v7048 = vmax.f32 %v6828, 0.0
      %v7049 = vmax.f32 %v6830, 0.0
      %v7050 = vmax.f32 %v6834, 0.0
      %v7051 = vmax.f32 %v6836, 0.0
      %v7052 = vmax.f32 %v6838, 0.0
      %v7053 = vmax.f32 %v6840, 0.0
      %v7054 = vmax.f32 %v6844, 0.0
      %v7055 = vmax.f32 %v6846, 0.0
      %v7056 = vmax.f32 %v6848, 0.0
      %v7057 = vmax.f32 %v6850, 0.0
      %v7058 = vmax.f32 %v6854, 0.0
      %v7059 = vmax.f32 %v6856, 0.0
      %v7060 = vmax.f32 %v6858, 0.0
      %v7061 = vmax.f32 %v6860, 0.0
      %v7062 = vmax.f32 %v6864, 0.0
      %v7063 = vmax.f32 %v6866, 0.0
      %v7064 = vmax.f32 %v6868, 0.0
      %v7065 = vmax.f32 %v6870, 0.0
      %v7066 = vmax.f32 %v6874, 0.0
      %v7067 = vmax.f32 %v6876, 0.0
      %v7068 = vmax.f32 %v6878, 0.0
      %v7069 = vmax.f32 %v6880, 0.0
      %v7070 = vmax.f32 %v6884, 0.0
      %v7071 = vmax.f32 %v6886, 0.0
      %v7072 = vmax.f32 %v6888, 0.0
      %v7073 = vmax.f32 %v6890, 0.0
      %v7074 = vmax.f32 %v6894, 0.0
      %v7075 = vmax.f32 %v6896, 0.0
      %v7076 = vmax.f32 %v6898, 0.0
      %v7077 = vmax.f32 %v6900, 0.0
      %v7078 = vmax.f32 %v6904, 0.0
      %v7079 = vmax.f32 %v6906, 0.0
      %v7080 = vmax.f32 %v6908, 0.0
      %v7081 = vmax.f32 %v6910, 0.0
      %v7082 = vmax.f32 %v6914, 0.0
      %v7083 = vmax.f32 %v6916, 0.0
      %v7084 = vmax.f32 %v6918, 0.0
      %v7085 = vmax.f32 %v6920, 0.0
      %v7086 = vmax.f32 %v6924, 0.0
      %v7087 = vmax.f32 %v6926, 0.0
      %v7088 = vmax.f32 %v6928, 0.0
      %v7089 = vmax.f32 %v6930, 0.0
      %v7090 = vmax.f32 %v6934, 0.0
      %v7091 = vmax.f32 %v6936, 0.0
      %v7092 = vmax.f32 %v6938, 0.0
      %v7093 = vmax.f32 %v6940, 0.0
      %v7094 = vmax.f32 %v6944, 0.0
      %v7095 = vmax.f32 %v6946, 0.0
      %v7096 = vmax.f32 %v6948, 0.0
      %v7097 = vmax.f32 %v6950, 0.0
      %v7098 = vmax.f32 %v6954, 0.0
      %v7099 = vmax.f32 %v6956, 0.0
      %v7100 = vmax.f32 %v6958, 0.0
      %v7101 = vmax.f32 %v6960, 0.0
      %v7102 = vmax.f32 %v6964, 0.0
      %v7103 = vmax.f32 %v6966, 0.0
      %v7104 = vmax.f32 %v6968, 0.0
      %v7105 = vmax.f32 %v6970, 0.0
      %v7106 = vmax.f32 %v6974, 0.0
      %v7107 = vmax.f32 %v6976, 0.0
      %v7108 = vmax.f32 %v6978, 0.0
      %v7109 = vmax.f32 %v6980, 0.0
      %v7110 = vpack.c.bf16 %v6984, %v6982
      %v7111 = vpack.c.bf16 %v6985, %v6983
      %v7112 = vpack.c.bf16 %v6988, %v6986
      %v7113 = vpack.c.bf16 %v6989, %v6987
      %v7114 = vpack.c.bf16 %v6992, %v6990
      %v7115 = vpack.c.bf16 %v6993, %v6991
      %v7116 = vpack.c.bf16 %v6996, %v6994
      %v7117 = vpack.c.bf16 %v6997, %v6995
      %v7118 = vpack.c.bf16 %v7000, %v6998
      %v7119 = vpack.c.bf16 %v7001, %v6999
      %v7120 = vpack.c.bf16 %v7004, %v7002
      %v7121 = vpack.c.bf16 %v7005, %v7003
      %v7122 = vpack.c.bf16 %v7008, %v7006
      %v7123 = vpack.c.bf16 %v7009, %v7007
      %v7124 = vpack.c.bf16 %v7012, %v7010
      %v7125 = vpack.c.bf16 %v7013, %v7011
      %v7126 = vpack.c.bf16 %v7016, %v7014
      %v7127 = vpack.c.bf16 %v7017, %v7015
      %v7128 = vpack.c.bf16 %v7020, %v7018
      %v7129 = vpack.c.bf16 %v7021, %v7019
      %v7130 = vpack.c.bf16 %v7024, %v7022
      %v7131 = vpack.c.bf16 %v7025, %v7023
      %v7132 = vpack.c.bf16 %v7028, %v7026
      %v7133 = vpack.c.bf16 %v7029, %v7027
      %v7134 = vpack.c.bf16 %v7032, %v7030
      %v7135 = vpack.c.bf16 %v7033, %v7031
      %v7136 = vpack.c.bf16 %v7036, %v7034
      %v7137 = vpack.c.bf16 %v7037, %v7035
      %v7138 = vpack.c.bf16 %v7040, %v7038
      %v7139 = vpack.c.bf16 %v7041, %v7039
      %v7140 = vpack.c.bf16 %v7044, %v7042
      %v7141 = vpack.c.bf16 %v7045, %v7043
      %v7142 = vpack.c.bf16 %v7048, %v7046
      %v7143 = vpack.c.bf16 %v7049, %v7047
      %v7144 = vpack.c.bf16 %v7052, %v7050
      %v7145 = vpack.c.bf16 %v7053, %v7051
      %v7146 = vpack.c.bf16 %v7056, %v7054
      %v7147 = vpack.c.bf16 %v7057, %v7055
      %v7148 = vpack.c.bf16 %v7060, %v7058
      %v7149 = vpack.c.bf16 %v7061, %v7059
      %v7150 = vpack.c.bf16 %v7064, %v7062
      %v7151 = vpack.c.bf16 %v7065, %v7063
      %v7152 = vpack.c.bf16 %v7068, %v7066
      %v7153 = vpack.c.bf16 %v7069, %v7067
      %v7154 = vpack.c.bf16 %v7072, %v7070
      %v7155 = vpack.c.bf16 %v7073, %v7071
      %v7156 = vpack.c.bf16 %v7076, %v7074
      %v7157 = vpack.c.bf16 %v7077, %v7075
      %v7158 = vpack.c.bf16 %v7080, %v7078
      %v7159 = vpack.c.bf16 %v7081, %v7079
      %v7160 = vpack.c.bf16 %v7084, %v7082
      %v7161 = vpack.c.bf16 %v7085, %v7083
      %v7162 = vpack.c.bf16 %v7088, %v7086
      %v7163 = vpack.c.bf16 %v7089, %v7087
      %v7164 = vpack.c.bf16 %v7092, %v7090
      %v7165 = vpack.c.bf16 %v7093, %v7091
      %v7166 = vpack.c.bf16 %v7096, %v7094
      %v7167 = vpack.c.bf16 %v7097, %v7095
      %v7168 = vpack.c.bf16 %v7100, %v7098
      %v7169 = vpack.c.bf16 %v7101, %v7099
      %v7170 = vpack.c.bf16 %v7104, %v7102
      %v7171 = vpack.c.bf16 %v7105, %v7103
      %v7172 = vpack.c.bf16 %v7108, %v7106
      %v7173 = vpack.c.bf16 %v7109, %v7107
      %v7174 = vld [vmem:[%s21] sm:$0xff]
      %v7175 = vld [vmem:[%s21 + $0x8] sm:$0xff]
      %v7176 = vld [vmem:[%s21 + $0x10] sm:$0xff]
      %v7177 = vld [vmem:[%s21 + $0x18] sm:$0xff]
      %v7178 = vld [vmem:[%s21 + $0x20] sm:$0xff]
      %v7179 = vld [vmem:[%s21 + $0x28] sm:$0xff]
      %v7180 = vld [vmem:[%s21 + $0x30] sm:$0xff]
      %v7181 = vld [vmem:[%s21 + $0x38] sm:$0xff]
      %v7182 = vld [vmem:[%s21 + $0x40] sm:$0xff]
      %v7183 = vld [vmem:[%s21 + $0x48] sm:$0xff]
      %v7184 = vld [vmem:[%s21 + $0x50] sm:$0xff]
      %v7185 = vld [vmem:[%s21 + $0x58] sm:$0xff]
      %v7186 = vld [vmem:[%s21 + $0x60] sm:$0xff]
      %v7187 = vld [vmem:[%s21 + $0x68] sm:$0xff]
      %v7188 = vld [vmem:[%s21 + $0x70] sm:$0xff]
      %v7189 = vld [vmem:[%s21 + $0x78] sm:$0xff]
      %v7190 = vld [vmem:[%s21 + $0x80] sm:$0xff]
      %v7191 = vld [vmem:[%s21 + $0x88] sm:$0xff]
      %v7192 = vld [vmem:[%s21 + $0x90] sm:$0xff]
      %v7193 = vld [vmem:[%s21 + $0x98] sm:$0xff]
      %v7194 = vld [vmem:[%s21 + $0xa0] sm:$0xff]
      %v7195 = vld [vmem:[%s21 + $0xa8] sm:$0xff]
      %v7196 = vld [vmem:[%s21 + $0xb0] sm:$0xff]
      %v7197 = vld [vmem:[%s21 + $0xb8] sm:$0xff]
      %v7198 = vld [vmem:[%s21 + $0xc0] sm:$0xff]
      %v7199 = vld [vmem:[%s47] sm:$0x3]
      %v7201 = vlaneseq
      %v7202 = vshrl.u32 %v7201, 7
      %v7203 = vsub.s32 0, %v7202
      %v7204 = vrot.slane %v7199, %v7203
      %v7205 = vlaneseq
      %v7206 = vshrl.u32 %v7205, 7
      %v7207 = vsub.s32 1, %v7206
      %v7208 = vrot.slane %v7199, %v7207
      %v7236 = vunpack.c.l.b16 %v7174
      %v7237 = vunpack.c.h.b16 %v7174
      %v7238 = vunpack.c.l.b16 %v7175
      %v7239 = vunpack.c.h.b16 %v7175
      %v7240 = vunpack.c.l.b16 %v7176
      %v7241 = vunpack.c.h.b16 %v7176
      %v7242 = vunpack.c.l.b16 %v7177
      %v7243 = vunpack.c.h.b16 %v7177
      %v7244 = vunpack.c.l.b16 %v7178
      %v7245 = vunpack.c.h.b16 %v7178
      %v7246 = vunpack.c.l.b16 %v7179
      %v7247 = vunpack.c.h.b16 %v7179
      %v7248 = vunpack.c.l.b16 %v7180
      %v7249 = vunpack.c.h.b16 %v7180
      %v7250 = vunpack.c.l.b16 %v7181
      %v7251 = vunpack.c.h.b16 %v7181
      %v7252 = vunpack.c.l.b16 %v7182
      %v7253 = vunpack.c.h.b16 %v7182
      %v7254 = vunpack.c.l.b16 %v7183
      %v7255 = vunpack.c.h.b16 %v7183
      %v7256 = vunpack.c.l.b16 %v7184
      %v7257 = vunpack.c.h.b16 %v7184
      %v7258 = vunpack.c.l.b16 %v7185
      %v7259 = vunpack.c.h.b16 %v7185
      %v7260 = vunpack.c.l.b16 %v7186
      %v7261 = vunpack.c.h.b16 %v7186
      %v7262 = vunpack.c.l.b16 %v7187
      %v7263 = vunpack.c.h.b16 %v7187
      %v7264 = vunpack.c.l.b16 %v7188
      %v7265 = vunpack.c.h.b16 %v7188
      %v7266 = vunpack.c.l.b16 %v7189
      %v7267 = vunpack.c.h.b16 %v7189
      %v7268 = vunpack.c.l.b16 %v7190
      %v7269 = vunpack.c.h.b16 %v7190
      %v7270 = vunpack.c.l.b16 %v7191
      %v7271 = vunpack.c.h.b16 %v7191
      %v7272 = vunpack.c.l.b16 %v7192
      %v7273 = vunpack.c.h.b16 %v7192
      %v7274 = vunpack.c.l.b16 %v7193
      %v7275 = vunpack.c.h.b16 %v7193
      %v7276 = vunpack.c.l.b16 %v7194
      %v7277 = vunpack.c.h.b16 %v7194
      %v7278 = vunpack.c.l.b16 %v7195
      %v7279 = vunpack.c.h.b16 %v7195
      %v7280 = vunpack.c.l.b16 %v7196
      %v7281 = vunpack.c.h.b16 %v7196
      %v7282 = vunpack.c.l.b16 %v7197
      %v7283 = vunpack.c.h.b16 %v7197
      %v7284 = vunpack.c.l.b16 %v7198
      %v7285 = vunpack.c.h.b16 %v7198
      %v7286 = vpack.c.b16 %v7238, %v7236
      %v7287 = vpack.c.b16 %v7239, %v7237
      %v7288 = vpack.c.b16 %v7242, %v7240
      %v7289 = vpack.c.b16 %v7243, %v7241
      %v7290 = vpack.c.b16 %v7246, %v7244
      %v7291 = vpack.c.b16 %v7247, %v7245
      %v7292 = vpack.c.b16 %v7250, %v7248
      %v7293 = vpack.c.b16 %v7251, %v7249
      %v7294 = vpack.c.b16 %v7254, %v7252
      %v7295 = vpack.c.b16 %v7255, %v7253
      %v7296 = vpack.c.b16 %v7258, %v7256
      %v7297 = vpack.c.b16 %v7259, %v7257
      %v7298 = vpack.c.b16 %v7262, %v7260
      %v7299 = vpack.c.b16 %v7263, %v7261
      %v7300 = vpack.c.b16 %v7266, %v7264
      %v7301 = vpack.c.b16 %v7267, %v7265
      %v7302 = vpack.c.b16 %v7270, %v7268
      %v7303 = vpack.c.b16 %v7271, %v7269
      %v7304 = vpack.c.b16 %v7274, %v7272
      %v7305 = vpack.c.b16 %v7275, %v7273
      %v7306 = vpack.c.b16 %v7278, %v7276
      %v7307 = vpack.c.b16 %v7279, %v7277
      %v7308 = vpack.c.b16 %v7282, %v7280
      %v7309 = vpack.c.b16 %v7283, %v7281
      %v7310 = vpack.c.b16 %v7284, %v7284
      %v7311 = vpack.c.b16 %v7285, %v7285
      %v7337 = vsel %vm1971, %v7111, 0
      %v7340 = vsel %vm1971, %v7113, 0
      %v7343 = vsel %vm1971, %v7115, 0
      %v7346 = vsel %vm1971, %v7117, 0
      %v7349 = vsel %vm1971, %v7119, 0
      %v7352 = vsel %vm1971, %v7121, 0
      %v7355 = vsel %vm1971, %v7123, 0
      %v7358 = vsel %vm1971, %v7125, 0
      %v7361 = vsel %vm1971, %v7127, 0
      %v7364 = vsel %vm1971, %v7129, 0
      %v7367 = vsel %vm1971, %v7131, 0
      %v7370 = vsel %vm1971, %v7133, 0
      %v7373 = vsel %vm1971, %v7135, 0
      %v7376 = vsel %vm1971, %v7137, 0
      %v7379 = vsel %vm1971, %v7139, 0
      %v7382 = vsel %vm1971, %v7141, 0
      %v7385 = vsel %vm1971, %v7143, 0
      %v7388 = vsel %vm1971, %v7145, 0
      %v7391 = vsel %vm1971, %v7147, 0
      %v7394 = vsel %vm1971, %v7149, 0
      %v7397 = vsel %vm1971, %v7151, 0
      %v7400 = vsel %vm1971, %v7153, 0
      %v7403 = vsel %vm1971, %v7155, 0
      %v7406 = vsel %vm1971, %v7157, 0
      %v7409 = vsel %vm1971, %v7159, 0
      %v7412 = vsel %vm1971, %v7161, 0
      %v7415 = vsel %vm1971, %v7163, 0
      %v7418 = vsel %vm1971, %v7165, 0
      %v7421 = vsel %vm1971, %v7167, 0
      %v7424 = vsel %vm1971, %v7169, 0
      %v7427 = vsel %vm1971, %v7171, 0
      %v7430 = vsel %vm1971, %v7173, 0
      %v7433 = vsel %vm2068, %v7310, 0
      %v7436 = vsel %vm2068, %v7311, 0
      %7438 = vmatprep.subr.bf16.mxu0 %v7287
      %7439 = vmatpush1.bf16.msra.mxu0 %v7286
      %7440 = vmatprep.subr.bf16.mxu0 %v7289
      %7441 = vmatpush1.bf16.msra.mxu0 %v7288
      %7442 = vmatprep.subr.bf16.mxu0 %v7291
      %7443 = vmatpush1.bf16.msra.mxu0 %v7290
      %7444 = vmatprep.subr.bf16.mxu0 %v7293
      %7445 = vmatpush1.bf16.msra.mxu0 %v7292
      %7446 = vmatprep.subr.bf16.mxu0 %v7295
      %7447 = vmatpush1.bf16.msra.mxu0 %v7294
      %7448 = vmatprep.subr.bf16.mxu0 %v7297
      %7449 = vmatpush1.bf16.msra.mxu0 %v7296
      %7450 = vmatprep.subr.bf16.mxu0 %v7299
      %7451 = vmatpush1.bf16.msra.mxu0 %v7298
      %7452 = vmatprep.subr.bf16.mxu0 %v7301
      %7453 = vmatpush1.bf16.msra.mxu0 %v7300
      %7454 = vmatprep.subr.bf16.mxu0 %v7303
      %7455 = vmatpush1.bf16.msra.mxu0 %v7302
      %7456 = vmatprep.subr.bf16.mxu0 %v7305
      %7457 = vmatpush1.bf16.msra.mxu0 %v7304
      %7458 = vmatprep.subr.bf16.mxu0 %v7307
      %7459 = vmatpush1.bf16.msra.mxu0 %v7306
      %7460 = vmatprep.subr.bf16.mxu0 %v7309
      %7461 = vmatpush1.bf16.msra.mxu0 %v7308
      %7462 = vmatprep.subr.bf16.mxu0 %v7436
      %7463 = vmatpush1.bf16.msra.mxu0 %v7433
      %7464 = vmatprep.subr.bf16.mxu0 0
      %7465 = vmatpush1.bf16.msra.mxu0 0
      %7466 = vmatprep.subr.bf16.mxu0 0
      %7467 = vmatpush1.bf16.msra.mxu0 0
      %7468 = vmatprep.subr.bf16.mxu0 0
      %7469 = vmatpush1.bf16.msra.mxu0 0
      %7470 = vmatprep.mubr.bf16.mxu0 %v7337
      %7471 = vmatmul.mubr.bf16.gmra.mrb[0].mxu0 %v7110
      %v7472 = vpop.f32.mrb[0].mxu0
      %v7473 = vadd.f32 %v7204, %v7472
      %v7474 = vpop.f32.mrb[0].mxu0
      %v7475 = vadd.f32 %v7208, %v7474
      %v7476 = vpop.f32.mrb[0].mxu0
      %v7477 = vadd.f32 %v7204, %v7476
      %v7478 = vpop.f32.mrb[0].mxu0
      %v7479 = vadd.f32 %v7208, %v7478
      %7480 = vmatprep.mubr.bf16.mxu0 %v7340
      %7481 = vmatmul.mubr.bf16.gmra.mrb[0].mxu0 %v7112
      %v7482 = vpop.f32.mrb[0].mxu0
      %v7483 = vadd.f32 %v7204, %v7482
      %v7484 = vpop.f32.mrb[0].mxu0
      %v7485 = vadd.f32 %v7208, %v7484
      %v7486 = vpop.f32.mrb[0].mxu0
      %v7487 = vadd.f32 %v7204, %v7486
      %v7488 = vpop.f32.mrb[0].mxu0
      %v7489 = vadd.f32 %v7208, %v7488
      %7490 = vmatprep.mubr.bf16.mxu0 %v7343
      %7491 = vmatmul.mubr.bf16.gmra.mrb[0].mxu0 %v7114
      %v7492 = vpop.f32.mrb[0].mxu0
      %v7493 = vadd.f32 %v7204, %v7492
      %v7494 = vpop.f32.mrb[0].mxu0
      %v7495 = vadd.f32 %v7208, %v7494
      %v7496 = vpop.f32.mrb[0].mxu0
      %v7497 = vadd.f32 %v7204, %v7496
      %v7498 = vpop.f32.mrb[0].mxu0
      %v7499 = vadd.f32 %v7208, %v7498
      %7500 = vmatprep.mubr.bf16.mxu0 %v7346
      %7501 = vmatmul.mubr.bf16.gmra.mrb[0].mxu0 %v7116
      %v7502 = vpop.f32.mrb[0].mxu0
      %v7503 = vadd.f32 %v7204, %v7502
      %v7504 = vpop.f32.mrb[0].mxu0
      %v7505 = vadd.f32 %v7208, %v7504
      %v7506 = vpop.f32.mrb[0].mxu0
      %v7507 = vadd.f32 %v7204, %v7506
      %v7508 = vpop.f32.mrb[0].mxu0
      %v7509 = vadd.f32 %v7208, %v7508
      %7510 = vmatprep.mubr.bf16.mxu0 %v7349
      %7511 = vmatmul.mubr.bf16.gmra.mrb[0].mxu0 %v7118
      %v7512 = vpop.f32.mrb[0].mxu0
      %v7513 = vadd.f32 %v7204, %v7512
      %v7514 = vpop.f32.mrb[0].mxu0
      %v7515 = vadd.f32 %v7208, %v7514
      %v7516 = vpop.f32.mrb[0].mxu0
      %v7517 = vadd.f32 %v7204, %v7516
      %v7518 = vpop.f32.mrb[0].mxu0
      %v7519 = vadd.f32 %v7208, %v7518
      %7520 = vmatprep.mubr.bf16.mxu0 %v7352
      %7521 = vmatmul.mubr.bf16.gmra.mrb[0].mxu0 %v7120
      %v7522 = vpop.f32.mrb[0].mxu0
      %v7523 = vadd.f32 %v7204, %v7522
      %v7524 = vpop.f32.mrb[0].mxu0
      %v7525 = vadd.f32 %v7208, %v7524
      %v7526 = vpop.f32.mrb[0].mxu0
      %v7527 = vadd.f32 %v7204, %v7526
      %v7528 = vpop.f32.mrb[0].mxu0
      %v7529 = vadd.f32 %v7208, %v7528
      %7530 = vmatprep.mubr.bf16.mxu0 %v7355
      %7531 = vmatmul.mubr.bf16.gmra.mrb[0].mxu0 %v7122
      %v7532 = vpop.f32.mrb[0].mxu0
      %v7533 = vadd.f32 %v7204, %v7532
      %v7534 = vpop.f32.mrb[0].mxu0
      %v7535 = vadd.f32 %v7208, %v7534
      %v7536 = vpop.f32.mrb[0].mxu0
      %v7537 = vadd.f32 %v7204, %v7536
      %v7538 = vpop.f32.mrb[0].mxu0
      %v7539 = vadd.f32 %v7208, %v7538
      %7540 = vmatprep.mubr.bf16.mxu0 %v7358
      %7541 = vmatmul.mubr.bf16.gmra.mrb[0].mxu0 %v7124
      %v7542 = vpop.f32.mrb[0].mxu0
      %v7543 = vadd.f32 %v7204, %v7542
      %v7544 = vpop.f32.mrb[0].mxu0
      %v7545 = vadd.f32 %v7208, %v7544
      %v7546 = vpop.f32.mrb[0].mxu0
      %v7547 = vadd.f32 %v7204, %v7546
      %v7548 = vpop.f32.mrb[0].mxu0
      %v7549 = vadd.f32 %v7208, %v7548
      %7550 = vmatprep.mubr.bf16.mxu0 %v7361
      %7551 = vmatmul.mubr.bf16.gmra.mrb[0].mxu0 %v7126
      %v7552 = vpop.f32.mrb[0].mxu0
      %v7553 = vadd.f32 %v7204, %v7552
      %v7554 = vpop.f32.mrb[0].mxu0
      %v7555 = vadd.f32 %v7208, %v7554
      %v7556 = vpop.f32.mrb[0].mxu0
      %v7557 = vadd.f32 %v7204, %v7556
      %v7558 = vpop.f32.mrb[0].mxu0
      %v7559 = vadd.f32 %v7208, %v7558
      %7560 = vmatprep.mubr.bf16.mxu0 %v7364
      %7561 = vmatmul.mubr.bf16.gmra.mrb[0].mxu0 %v7128
      %v7562 = vpop.f32.mrb[0].mxu0
      %v7563 = vadd.f32 %v7204, %v7562
      %v7564 = vpop.f32.mrb[0].mxu0
      %v7565 = vadd.f32 %v7208, %v7564
      %v7566 = vpop.f32.mrb[0].mxu0
      %v7567 = vadd.f32 %v7204, %v7566
      %v7568 = vpop.f32.mrb[0].mxu0
      %v7569 = vadd.f32 %v7208, %v7568
      %7570 = vmatprep.mubr.bf16.mxu0 %v7367
      %7571 = vmatmul.mubr.bf16.gmra.mrb[0].mxu0 %v7130
      %v7572 = vpop.f32.mrb[0].mxu0
      %v7573 = vadd.f32 %v7204, %v7572
      %v7574 = vpop.f32.mrb[0].mxu0
      %v7575 = vadd.f32 %v7208, %v7574
      %v7576 = vpop.f32.mrb[0].mxu0
      %v7577 = vadd.f32 %v7204, %v7576
      %v7578 = vpop.f32.mrb[0].mxu0
      %v7579 = vadd.f32 %v7208, %v7578
      %7580 = vmatprep.mubr.bf16.mxu0 %v7370
      %7581 = vmatmul.mubr.bf16.gmra.mrb[0].mxu0 %v7132
      %v7582 = vpop.f32.mrb[0].mxu0
      %v7583 = vadd.f32 %v7204, %v7582
      %v7584 = vpop.f32.mrb[0].mxu0
      %v7585 = vadd.f32 %v7208, %v7584
      %v7586 = vpop.f32.mrb[0].mxu0
      %v7587 = vadd.f32 %v7204, %v7586
      %v7588 = vpop.f32.mrb[0].mxu0
      %v7589 = vadd.f32 %v7208, %v7588
      %7590 = vmatprep.mubr.bf16.mxu0 %v7373
      %7591 = vmatmul.mubr.bf16.gmra.mrb[0].mxu0 %v7134
      %v7592 = vpop.f32.mrb[0].mxu0
      %v7593 = vadd.f32 %v7204, %v7592
      %v7594 = vpop.f32.mrb[0].mxu0
      %v7595 = vadd.f32 %v7208, %v7594
      %v7596 = vpop.f32.mrb[0].mxu0
      %v7597 = vadd.f32 %v7204, %v7596
      %v7598 = vpop.f32.mrb[0].mxu0
      %v7599 = vadd.f32 %v7208, %v7598
      %7600 = vmatprep.mubr.bf16.mxu0 %v7376
      %7601 = vmatmul.mubr.bf16.gmra.mrb[0].mxu0 %v7136
      %v7602 = vpop.f32.mrb[0].mxu0
      %v7603 = vadd.f32 %v7204, %v7602
      %v7604 = vpop.f32.mrb[0].mxu0
      %v7605 = vadd.f32 %v7208, %v7604
      %v7606 = vpop.f32.mrb[0].mxu0
      %v7607 = vadd.f32 %v7204, %v7606
      %v7608 = vpop.f32.mrb[0].mxu0
      %v7609 = vadd.f32 %v7208, %v7608
      %7610 = vmatprep.mubr.bf16.mxu0 %v7379
      %7611 = vmatmul.mubr.bf16.gmra.mrb[0].mxu0 %v7138
      %v7612 = vpop.f32.mrb[0].mxu0
      %v7613 = vadd.f32 %v7204, %v7612
      %v7614 = vpop.f32.mrb[0].mxu0
      %v7615 = vadd.f32 %v7208, %v7614
      %v7616 = vpop.f32.mrb[0].mxu0
      %v7617 = vadd.f32 %v7204, %v7616
      %v7618 = vpop.f32.mrb[0].mxu0
      %v7619 = vadd.f32 %v7208, %v7618
      %7620 = vmatprep.mubr.bf16.mxu0 %v7382
      %7621 = vmatmul.mubr.bf16.gmra.mrb[0].mxu0 %v7140
      %v7622 = vpop.f32.mrb[0].mxu0
      %v7623 = vadd.f32 %v7204, %v7622
      %v7624 = vpop.f32.mrb[0].mxu0
      %v7625 = vadd.f32 %v7208, %v7624
      %v7626 = vpop.f32.mrb[0].mxu0
      %v7627 = vadd.f32 %v7204, %v7626
      %v7628 = vpop.f32.mrb[0].mxu0
      %v7629 = vadd.f32 %v7208, %v7628
      %7630 = vmatprep.mubr.bf16.mxu0 %v7385
      %7631 = vmatmul.mubr.bf16.gmra.mrb[0].mxu0 %v7142
      %v7632 = vpop.f32.mrb[0].mxu0
      %v7633 = vadd.f32 %v7204, %v7632
      %v7634 = vpop.f32.mrb[0].mxu0
      %v7635 = vadd.f32 %v7208, %v7634
      %v7636 = vpop.f32.mrb[0].mxu0
      %v7637 = vadd.f32 %v7204, %v7636
      %v7638 = vpop.f32.mrb[0].mxu0
      %v7639 = vadd.f32 %v7208, %v7638
      %7640 = vmatprep.mubr.bf16.mxu0 %v7388
      %7641 = vmatmul.mubr.bf16.gmra.mrb[0].mxu0 %v7144
      %v7642 = vpop.f32.mrb[0].mxu0
      %v7643 = vadd.f32 %v7204, %v7642
      %v7644 = vpop.f32.mrb[0].mxu0
      %v7645 = vadd.f32 %v7208, %v7644
      %v7646 = vpop.f32.mrb[0].mxu0
      %v7647 = vadd.f32 %v7204, %v7646
      %v7648 = vpop.f32.mrb[0].mxu0
      %v7649 = vadd.f32 %v7208, %v7648
      %7650 = vmatprep.mubr.bf16.mxu0 %v7391
      %7651 = vmatmul.mubr.bf16.gmra.mrb[0].mxu0 %v7146
      %v7652 = vpop.f32.mrb[0].mxu0
      %v7653 = vadd.f32 %v7204, %v7652
      %v7654 = vpop.f32.mrb[0].mxu0
      %v7655 = vadd.f32 %v7208, %v7654
      %v7656 = vpop.f32.mrb[0].mxu0
      %v7657 = vadd.f32 %v7204, %v7656
      %v7658 = vpop.f32.mrb[0].mxu0
      %v7659 = vadd.f32 %v7208, %v7658
      %7660 = vmatprep.mubr.bf16.mxu0 %v7394
      %7661 = vmatmul.mubr.bf16.gmra.mrb[0].mxu0 %v7148
      %v7662 = vpop.f32.mrb[0].mxu0
      %v7663 = vadd.f32 %v7204, %v7662
      %v7664 = vpop.f32.mrb[0].mxu0
      %v7665 = vadd.f32 %v7208, %v7664
      %v7666 = vpop.f32.mrb[0].mxu0
      %v7667 = vadd.f32 %v7204, %v7666
      %v7668 = vpop.f32.mrb[0].mxu0
      %v7669 = vadd.f32 %v7208, %v7668
      %7670 = vmatprep.mubr.bf16.mxu0 %v7397
      %7671 = vmatmul.mubr.bf16.gmra.mrb[0].mxu0 %v7150
      %v7672 = vpop.f32.mrb[0].mxu0
      %v7673 = vadd.f32 %v7204, %v7672
      %v7674 = vpop.f32.mrb[0].mxu0
      %v7675 = vadd.f32 %v7208, %v7674
      %v7676 = vpop.f32.mrb[0].mxu0
      %v7677 = vadd.f32 %v7204, %v7676
      %v7678 = vpop.f32.mrb[0].mxu0
      %v7679 = vadd.f32 %v7208, %v7678
      %7680 = vmatprep.mubr.bf16.mxu0 %v7400
      %7681 = vmatmul.mubr.bf16.gmra.mrb[0].mxu0 %v7152
      %v7682 = vpop.f32.mrb[0].mxu0
      %v7683 = vadd.f32 %v7204, %v7682
      %v7684 = vpop.f32.mrb[0].mxu0
      %v7685 = vadd.f32 %v7208, %v7684
      %v7686 = vpop.f32.mrb[0].mxu0
      %v7687 = vadd.f32 %v7204, %v7686
      %v7688 = vpop.f32.mrb[0].mxu0
      %v7689 = vadd.f32 %v7208, %v7688
      %7690 = vmatprep.mubr.bf16.mxu0 %v7403
      %7691 = vmatmul.mubr.bf16.gmra.mrb[0].mxu0 %v7154
      %v7692 = vpop.f32.mrb[0].mxu0
      %v7693 = vadd.f32 %v7204, %v7692
      %v7694 = vpop.f32.mrb[0].mxu0
      %v7695 = vadd.f32 %v7208, %v7694
      %v7696 = vpop.f32.mrb[0].mxu0
      %v7697 = vadd.f32 %v7204, %v7696
      %v7698 = vpop.f32.mrb[0].mxu0
      %v7699 = vadd.f32 %v7208, %v7698
      %7700 = vmatprep.mubr.bf16.mxu0 %v7406
      %7701 = vmatmul.mubr.bf16.gmra.mrb[0].mxu0 %v7156
      %v7702 = vpop.f32.mrb[0].mxu0
      %v7703 = vadd.f32 %v7204, %v7702
      %v7704 = vpop.f32.mrb[0].mxu0
      %v7705 = vadd.f32 %v7208, %v7704
      %v7706 = vpop.f32.mrb[0].mxu0
      %v7707 = vadd.f32 %v7204, %v7706
      %v7708 = vpop.f32.mrb[0].mxu0
      %v7709 = vadd.f32 %v7208, %v7708
      %7710 = vmatprep.mubr.bf16.mxu0 %v7409
      %7711 = vmatmul.mubr.bf16.gmra.mrb[0].mxu0 %v7158
      %v7712 = vpop.f32.mrb[0].mxu0
      %v7713 = vadd.f32 %v7204, %v7712
      %v7714 = vpop.f32.mrb[0].mxu0
      %v7715 = vadd.f32 %v7208, %v7714
      %v7716 = vpop.f32.mrb[0].mxu0
      %v7717 = vadd.f32 %v7204, %v7716
      %v7718 = vpop.f32.mrb[0].mxu0
      %v7719 = vadd.f32 %v7208, %v7718
      %7720 = vmatprep.mubr.bf16.mxu0 %v7412
      %7721 = vmatmul.mubr.bf16.gmra.mrb[0].mxu0 %v7160
      %v7722 = vpop.f32.mrb[0].mxu0
      %v7723 = vadd.f32 %v7204, %v7722
      %v7724 = vpop.f32.mrb[0].mxu0
      %v7725 = vadd.f32 %v7208, %v7724
      %v7726 = vpop.f32.mrb[0].mxu0
      %v7727 = vadd.f32 %v7204, %v7726
      %v7728 = vpop.f32.mrb[0].mxu0
      %v7729 = vadd.f32 %v7208, %v7728
      %7730 = vmatprep.mubr.bf16.mxu0 %v7415
      %7731 = vmatmul.mubr.bf16.gmra.mrb[0].mxu0 %v7162
      %v7732 = vpop.f32.mrb[0].mxu0
      %v7733 = vadd.f32 %v7204, %v7732
      %v7734 = vpop.f32.mrb[0].mxu0
      %v7735 = vadd.f32 %v7208, %v7734
      %v7736 = vpop.f32.mrb[0].mxu0
      %v7737 = vadd.f32 %v7204, %v7736
      %v7738 = vpop.f32.mrb[0].mxu0
      %v7739 = vadd.f32 %v7208, %v7738
      %7740 = vmatprep.mubr.bf16.mxu0 %v7418
      %7741 = vmatmul.mubr.bf16.gmra.mrb[0].mxu0 %v7164
      %v7742 = vpop.f32.mrb[0].mxu0
      %v7743 = vadd.f32 %v7204, %v7742
      %v7744 = vpop.f32.mrb[0].mxu0
      %v7745 = vadd.f32 %v7208, %v7744
      %v7746 = vpop.f32.mrb[0].mxu0
      %v7747 = vadd.f32 %v7204, %v7746
      %v7748 = vpop.f32.mrb[0].mxu0
      %v7749 = vadd.f32 %v7208, %v7748
      %7750 = vmatprep.mubr.bf16.mxu0 %v7421
      %7751 = vmatmul.mubr.bf16.gmra.mrb[0].mxu0 %v7166
      %v7752 = vpop.f32.mrb[0].mxu0
      %v7753 = vadd.f32 %v7204, %v7752
      %v7754 = vpop.f32.mrb[0].mxu0
      %v7755 = vadd.f32 %v7208, %v7754
      %v7756 = vpop.f32.mrb[0].mxu0
      %v7757 = vadd.f32 %v7204, %v7756
      %v7758 = vpop.f32.mrb[0].mxu0
      %v7759 = vadd.f32 %v7208, %v7758
      %7760 = vmatprep.mubr.bf16.mxu0 %v7424
      %7761 = vmatmul.mubr.bf16.gmra.mrb[0].mxu0 %v7168
      %v7762 = vpop.f32.mrb[0].mxu0
      %v7763 = vadd.f32 %v7204, %v7762
      %v7764 = vpop.f32.mrb[0].mxu0
      %v7765 = vadd.f32 %v7208, %v7764
      %v7766 = vpop.f32.mrb[0].mxu0
      %v7767 = vadd.f32 %v7204, %v7766
      %v7768 = vpop.f32.mrb[0].mxu0
      %v7769 = vadd.f32 %v7208, %v7768
      %7770 = vmatprep.mubr.bf16.mxu0 %v7427
      %7771 = vmatmul.mubr.bf16.gmra.mrb[0].mxu0 %v7170
      %v7772 = vpop.f32.mrb[0].mxu0
      %v7773 = vadd.f32 %v7204, %v7772
      %v7774 = vpop.f32.mrb[0].mxu0
      %v7775 = vadd.f32 %v7208, %v7774
      %v7776 = vpop.f32.mrb[0].mxu0
      %v7777 = vadd.f32 %v7204, %v7776
      %v7778 = vpop.f32.mrb[0].mxu0
      %v7779 = vadd.f32 %v7208, %v7778
      %7780 = vmatprep.mubr.bf16.mxu0 %v7430
      %7781 = vmatmul.mubr.bf16.gmra.mrb[0].mxu0 %v7172
      %v7782 = vpop.f32.mrb[0].mxu0
      %v7783 = vadd.f32 %v7204, %v7782
      %v7784 = vpop.f32.mrb[0].mxu0
      %v7785 = vadd.f32 %v7208, %v7784
      %v7786 = vpop.f32.mrb[0].mxu0
      %v7787 = vadd.f32 %v7204, %v7786
      %v7788 = vpop.f32.mrb[0].mxu0
      %v7789 = vadd.f32 %v7208, %v7788
      %7790 = vdwg.mxu0
      %v7791 = vmax.f32 %v7473, 0.0
      %v7792 = vmax.f32 %v7475, 0.0
      %v7793 = vmax.f32 %v7477, 0.0
      %v7794 = vmax.f32 %v7479, 0.0
      %v7795 = vmax.f32 %v7483, 0.0
      %v7796 = vmax.f32 %v7485, 0.0
      %v7797 = vmax.f32 %v7487, 0.0
      %v7798 = vmax.f32 %v7489, 0.0
      %v7799 = vmax.f32 %v7493, 0.0
      %v7800 = vmax.f32 %v7495, 0.0
      %v7801 = vmax.f32 %v7497, 0.0
      %v7802 = vmax.f32 %v7499, 0.0
      %v7803 = vmax.f32 %v7503, 0.0
      %v7804 = vmax.f32 %v7505, 0.0
      %v7805 = vmax.f32 %v7507, 0.0
      %v7806 = vmax.f32 %v7509, 0.0
      %v7807 = vmax.f32 %v7513, 0.0
      %v7808 = vmax.f32 %v7515, 0.0
      %v7809 = vmax.f32 %v7517, 0.0
      %v7810 = vmax.f32 %v7519, 0.0
      %v7811 = vmax.f32 %v7523, 0.0
      %v7812 = vmax.f32 %v7525, 0.0
      %v7813 = vmax.f32 %v7527, 0.0
      %v7814 = vmax.f32 %v7529, 0.0
      %v7815 = vmax.f32 %v7533, 0.0
      %v7816 = vmax.f32 %v7535, 0.0
      %v7817 = vmax.f32 %v7537, 0.0
      %v7818 = vmax.f32 %v7539, 0.0
      %v7819 = vmax.f32 %v7543, 0.0
      %v7820 = vmax.f32 %v7545, 0.0
      %v7821 = vmax.f32 %v7547, 0.0
      %v7822 = vmax.f32 %v7549, 0.0
      %v7823 = vmax.f32 %v7553, 0.0
      %v7824 = vmax.f32 %v7555, 0.0
      %v7825 = vmax.f32 %v7557, 0.0
      %v7826 = vmax.f32 %v7559, 0.0
      %v7827 = vmax.f32 %v7563, 0.0
      %v7828 = vmax.f32 %v7565, 0.0
      %v7829 = vmax.f32 %v7567, 0.0
      %v7830 = vmax.f32 %v7569, 0.0
      %v7831 = vmax.f32 %v7573, 0.0
      %v7832 = vmax.f32 %v7575, 0.0
      %v7833 = vmax.f32 %v7577, 0.0
      %v7834 = vmax.f32 %v7579, 0.0
      %v7835 = vmax.f32 %v7583, 0.0
      %v7836 = vmax.f32 %v7585, 0.0
      %v7837 = vmax.f32 %v7587, 0.0
      %v7838 = vmax.f32 %v7589, 0.0
      %v7839 = vmax.f32 %v7593, 0.0
      %v7840 = vmax.f32 %v7595, 0.0
      %v7841 = vmax.f32 %v7597, 0.0
      %v7842 = vmax.f32 %v7599, 0.0
      %v7843 = vmax.f32 %v7603, 0.0
      %v7844 = vmax.f32 %v7605, 0.0
      %v7845 = vmax.f32 %v7607, 0.0
      %v7846 = vmax.f32 %v7609, 0.0
      %v7847 = vmax.f32 %v7613, 0.0
      %v7848 = vmax.f32 %v7615, 0.0
      %v7849 = vmax.f32 %v7617, 0.0
      %v7850 = vmax.f32 %v7619, 0.0
      %v7851 = vmax.f32 %v7623, 0.0
      %v7852 = vmax.f32 %v7625, 0.0
      %v7853 = vmax.f32 %v7627, 0.0
      %v7854 = vmax.f32 %v7629, 0.0
      %v7855 = vmax.f32 %v7633, 0.0
      %v7856 = vmax.f32 %v7635, 0.0
      %v7857 = vmax.f32 %v7637, 0.0
      %v7858 = vmax.f32 %v7639, 0.0
      %v7859 = vmax.f32 %v7643, 0.0
      %v7860 = vmax.f32 %v7645, 0.0
      %v7861 = vmax.f32 %v7647, 0.0
      %v7862 = vmax.f32 %v7649, 0.0
      %v7863 = vmax.f32 %v7653, 0.0
      %v7864 = vmax.f32 %v7655, 0.0
      %v7865 = vmax.f32 %v7657, 0.0
      %v7866 = vmax.f32 %v7659, 0.0
      %v7867 = vmax.f32 %v7663, 0.0
      %v7868 = vmax.f32 %v7665, 0.0
      %v7869 = vmax.f32 %v7667, 0.0
      %v7870 = vmax.f32 %v7669, 0.0
      %v7871 = vmax.f32 %v7673, 0.0
      %v7872 = vmax.f32 %v7675, 0.0
      %v7873 = vmax.f32 %v7677, 0.0
      %v7874 = vmax.f32 %v7679, 0.0
      %v7875 = vmax.f32 %v7683, 0.0
      %v7876 = vmax.f32 %v7685, 0.0
      %v7877 = vmax.f32 %v7687, 0.0
      %v7878 = vmax.f32 %v7689, 0.0
      %v7879 = vmax.f32 %v7693, 0.0
      %v7880 = vmax.f32 %v7695, 0.0
      %v7881 = vmax.f32 %v7697, 0.0
      %v7882 = vmax.f32 %v7699, 0.0
      %v7883 = vmax.f32 %v7703, 0.0
      %v7884 = vmax.f32 %v7705, 0.0
      %v7885 = vmax.f32 %v7707, 0.0
      %v7886 = vmax.f32 %v7709, 0.0
      %v7887 = vmax.f32 %v7713, 0.0
      %v7888 = vmax.f32 %v7715, 0.0
      %v7889 = vmax.f32 %v7717, 0.0
      %v7890 = vmax.f32 %v7719, 0.0
      %v7891 = vmax.f32 %v7723, 0.0
      %v7892 = vmax.f32 %v7725, 0.0
      %v7893 = vmax.f32 %v7727, 0.0
      %v7894 = vmax.f32 %v7729, 0.0
      %v7895 = vmax.f32 %v7733, 0.0
      %v7896 = vmax.f32 %v7735, 0.0
      %v7897 = vmax.f32 %v7737, 0.0
      %v7898 = vmax.f32 %v7739, 0.0
      %v7899 = vmax.f32 %v7743, 0.0
      %v7900 = vmax.f32 %v7745, 0.0
      %v7901 = vmax.f32 %v7747, 0.0
      %v7902 = vmax.f32 %v7749, 0.0
      %v7903 = vmax.f32 %v7753, 0.0
      %v7904 = vmax.f32 %v7755, 0.0
      %v7905 = vmax.f32 %v7757, 0.0
      %v7906 = vmax.f32 %v7759, 0.0
      %v7907 = vmax.f32 %v7763, 0.0
      %v7908 = vmax.f32 %v7765, 0.0
      %v7909 = vmax.f32 %v7767, 0.0
      %v7910 = vmax.f32 %v7769, 0.0
      %v7911 = vmax.f32 %v7773, 0.0
      %v7912 = vmax.f32 %v7775, 0.0
      %v7913 = vmax.f32 %v7777, 0.0
      %v7914 = vmax.f32 %v7779, 0.0
      %v7915 = vmax.f32 %v7783, 0.0
      %v7916 = vmax.f32 %v7785, 0.0
      %v7917 = vmax.f32 %v7787, 0.0
      %v7918 = vmax.f32 %v7789, 0.0
      %v7919 = vpack.c.bf16 %v7793, %v7791
      %v7920 = vpack.c.bf16 %v7794, %v7792
      %v7921 = vpack.c.bf16 %v7797, %v7795
      %v7922 = vpack.c.bf16 %v7798, %v7796
      %v7923 = vpack.c.bf16 %v7801, %v7799
      %v7924 = vpack.c.bf16 %v7802, %v7800
      %v7925 = vpack.c.bf16 %v7805, %v7803
      %v7926 = vpack.c.bf16 %v7806, %v7804
      %v7927 = vpack.c.bf16 %v7809, %v7807
      %v7928 = vpack.c.bf16 %v7810, %v7808
      %v7929 = vpack.c.bf16 %v7813, %v7811
      %v7930 = vpack.c.bf16 %v7814, %v7812
      %v7931 = vpack.c.bf16 %v7817, %v7815
      %v7932 = vpack.c.bf16 %v7818, %v7816
      %v7933 = vpack.c.bf16 %v7821, %v7819
      %v7934 = vpack.c.bf16 %v7822, %v7820
      %v7935 = vpack.c.bf16 %v7825, %v7823
      %v7936 = vpack.c.bf16 %v7826, %v7824
      %v7937 = vpack.c.bf16 %v7829, %v7827
      %v7938 = vpack.c.bf16 %v7830, %v7828
      %v7939 = vpack.c.bf16 %v7833, %v7831
      %v7940 = vpack.c.bf16 %v7834, %v7832
      %v7941 = vpack.c.bf16 %v7837, %v7835
      %v7942 = vpack.c.bf16 %v7838, %v7836
      %v7943 = vpack.c.bf16 %v7841, %v7839
      %v7944 = vpack.c.bf16 %v7842, %v7840
      %v7945 = vpack.c.bf16 %v7845, %v7843
      %v7946 = vpack.c.bf16 %v7846, %v7844
      %v7947 = vpack.c.bf16 %v7849, %v7847
      %v7948 = vpack.c.bf16 %v7850, %v7848
      %v7949 = vpack.c.bf16 %v7853, %v7851
      %v7950 = vpack.c.bf16 %v7854, %v7852
      %v7951 = vpack.c.bf16 %v7857, %v7855
      %v7952 = vpack.c.bf16 %v7858, %v7856
      %v7953 = vpack.c.bf16 %v7861, %v7859
      %v7954 = vpack.c.bf16 %v7862, %v7860
      %v7955 = vpack.c.bf16 %v7865, %v7863
      %v7956 = vpack.c.bf16 %v7866, %v7864
      %v7957 = vpack.c.bf16 %v7869, %v7867
      %v7958 = vpack.c.bf16 %v7870, %v7868
      %v7959 = vpack.c.bf16 %v7873, %v7871
      %v7960 = vpack.c.bf16 %v7874, %v7872
      %v7961 = vpack.c.bf16 %v7877, %v7875
      %v7962 = vpack.c.bf16 %v7878, %v7876
      %v7963 = vpack.c.bf16 %v7881, %v7879
      %v7964 = vpack.c.bf16 %v7882, %v7880
      %v7965 = vpack.c.bf16 %v7885, %v7883
      %v7966 = vpack.c.bf16 %v7886, %v7884
      %v7967 = vpack.c.bf16 %v7889, %v7887
      %v7968 = vpack.c.bf16 %v7890, %v7888
      %v7969 = vpack.c.bf16 %v7893, %v7891
      %v7970 = vpack.c.bf16 %v7894, %v7892
      %v7971 = vpack.c.bf16 %v7897, %v7895
      %v7972 = vpack.c.bf16 %v7898, %v7896
      %v7973 = vpack.c.bf16 %v7901, %v7899
      %v7974 = vpack.c.bf16 %v7902, %v7900
      %v7975 = vpack.c.bf16 %v7905, %v7903
      %v7976 = vpack.c.bf16 %v7906, %v7904
      %v7977 = vpack.c.bf16 %v7909, %v7907
      %v7978 = vpack.c.bf16 %v7910, %v7908
      %v7979 = vpack.c.bf16 %v7913, %v7911
      %v7980 = vpack.c.bf16 %v7914, %v7912
      %v7981 = vpack.c.bf16 %v7917, %v7915
      %v7982 = vpack.c.bf16 %v7918, %v7916
      %v7983 = vld [vmem:[%s23] sm:$0xff]
      %v7984 = vld [vmem:[%s23 + $0x8] sm:$0xff]
      %v7985 = vld [vmem:[%s23 + $0x10] sm:$0xff]
      %v7986 = vld [vmem:[%s23 + $0x18] sm:$0xff]
      %v7987 = vld [vmem:[%s23 + $0x20] sm:$0xff]
      %v7988 = vld [vmem:[%s23 + $0x28] sm:$0xff]
      %v7989 = vld [vmem:[%s23 + $0x30] sm:$0xff]
      %v7990 = vld [vmem:[%s23 + $0x38] sm:$0xff]
      %v7991 = vld [vmem:[%s23 + $0x40] sm:$0xff]
      %v7992 = vld [vmem:[%s23 + $0x48] sm:$0xff]
      %v7993 = vld [vmem:[%s23 + $0x50] sm:$0xff]
      %v7994 = vld [vmem:[%s23 + $0x58] sm:$0xff]
      %v7995 = vld [vmem:[%s23 + $0x60] sm:$0xff]
      %v7996 = vld [vmem:[%s23 + $0x68] sm:$0xff]
      %v7997 = vld [vmem:[%s23 + $0x70] sm:$0xff]
      %v7998 = vld [vmem:[%s23 + $0x78] sm:$0xff]
      %v7999 = vld [vmem:[%s23 + $0x80] sm:$0xff]
      %v8000 = vld [vmem:[%s23 + $0x88] sm:$0xff]
      %v8001 = vld [vmem:[%s23 + $0x90] sm:$0xff]
      %v8002 = vld [vmem:[%s23 + $0x98] sm:$0xff]
      %v8003 = vld [vmem:[%s23 + $0xa0] sm:$0xff]
      %v8004 = vld [vmem:[%s23 + $0xa8] sm:$0xff]
      %v8005 = vld [vmem:[%s23 + $0xb0] sm:$0xff]
      %v8006 = vld [vmem:[%s23 + $0xb8] sm:$0xff]
      %v8007 = vld [vmem:[%s23 + $0xc0] sm:$0xff]
      %v8008 = vld [vmem:[%s49] sm:$0x3]
      %v8010 = vlaneseq
      %v8011 = vshrl.u32 %v8010, 7
      %v8012 = vsub.s32 0, %v8011
      %v8013 = vrot.slane %v8008, %v8012
      %v8014 = vlaneseq
      %v8015 = vshrl.u32 %v8014, 7
      %v8016 = vsub.s32 1, %v8015
      %v8017 = vrot.slane %v8008, %v8016
      %v8045 = vunpack.c.l.b16 %v7983
      %v8046 = vunpack.c.h.b16 %v7983
      %v8047 = vunpack.c.l.b16 %v7984
      %v8048 = vunpack.c.h.b16 %v7984
      %v8049 = vunpack.c.l.b16 %v7985
      %v8050 = vunpack.c.h.b16 %v7985
      %v8051 = vunpack.c.l.b16 %v7986
      %v8052 = vunpack.c.h.b16 %v7986
      %v8053 = vunpack.c.l.b16 %v7987
      %v8054 = vunpack.c.h.b16 %v7987
      %v8055 = vunpack.c.l.b16 %v7988
      %v8056 = vunpack.c.h.b16 %v7988
      %v8057 = vunpack.c.l.b16 %v7989
      %v8058 = vunpack.c.h.b16 %v7989
      %v8059 = vunpack.c.l.b16 %v7990
      %v8060 = vunpack.c.h.b16 %v7990
      %v8061 = vunpack.c.l.b16 %v7991
      %v8062 = vunpack.c.h.b16 %v7991
      %v8063 = vunpack.c.l.b16 %v7992
      %v8064 = vunpack.c.h.b16 %v7992
      %v8065 = vunpack.c.l.b16 %v7993
      %v8066 = vunpack.c.h.b16 %v7993
      %v8067 = vunpack.c.l.b16 %v7994
      %v8068 = vunpack.c.h.b16 %v7994
      %v8069 = vunpack.c.l.b16 %v7995
      %v8070 = vunpack.c.h.b16 %v7995
      %v8071 = vunpack.c.l.b16 %v7996
      %v8072 = vunpack.c.h.b16 %v7996
      %v8073 = vunpack.c.l.b16 %v7997
      %v8074 = vunpack.c.h.b16 %v7997
      %v8075 = vunpack.c.l.b16 %v7998
      %v8076 = vunpack.c.h.b16 %v7998
      %v8077 = vunpack.c.l.b16 %v7999
      %v8078 = vunpack.c.h.b16 %v7999
      %v8079 = vunpack.c.l.b16 %v8000
      %v8080 = vunpack.c.h.b16 %v8000
      %v8081 = vunpack.c.l.b16 %v8001
      %v8082 = vunpack.c.h.b16 %v8001
      %v8083 = vunpack.c.l.b16 %v8002
      %v8084 = vunpack.c.h.b16 %v8002
      %v8085 = vunpack.c.l.b16 %v8003
      %v8086 = vunpack.c.h.b16 %v8003
      %v8087 = vunpack.c.l.b16 %v8004
      %v8088 = vunpack.c.h.b16 %v8004
      %v8089 = vunpack.c.l.b16 %v8005
      %v8090 = vunpack.c.h.b16 %v8005
      %v8091 = vunpack.c.l.b16 %v8006
      %v8092 = vunpack.c.h.b16 %v8006
      %v8093 = vunpack.c.l.b16 %v8007
      %v8094 = vunpack.c.h.b16 %v8007
      %v8095 = vpack.c.b16 %v8047, %v8045
      %v8096 = vpack.c.b16 %v8048, %v8046
      %v8097 = vpack.c.b16 %v8051, %v8049
      %v8098 = vpack.c.b16 %v8052, %v8050
      %v8099 = vpack.c.b16 %v8055, %v8053
      %v8100 = vpack.c.b16 %v8056, %v8054
      %v8101 = vpack.c.b16 %v8059, %v8057
      %v8102 = vpack.c.b16 %v8060, %v8058
      %v8103 = vpack.c.b16 %v8063, %v8061
      %v8104 = vpack.c.b16 %v8064, %v8062
      %v8105 = vpack.c.b16 %v8067, %v8065
      %v8106 = vpack.c.b16 %v8068, %v8066
      %v8107 = vpack.c.b16 %v8071, %v8069
      %v8108 = vpack.c.b16 %v8072, %v8070
      %v8109 = vpack.c.b16 %v8075, %v8073
      %v8110 = vpack.c.b16 %v8076, %v8074
      %v8111 = vpack.c.b16 %v8079, %v8077
      %v8112 = vpack.c.b16 %v8080, %v8078
      %v8113 = vpack.c.b16 %v8083, %v8081
      %v8114 = vpack.c.b16 %v8084, %v8082
      %v8115 = vpack.c.b16 %v8087, %v8085
      %v8116 = vpack.c.b16 %v8088, %v8086
      %v8117 = vpack.c.b16 %v8091, %v8089
      %v8118 = vpack.c.b16 %v8092, %v8090
      %v8119 = vpack.c.b16 %v8093, %v8093
      %v8120 = vpack.c.b16 %v8094, %v8094
      %v8146 = vsel %vm1971, %v7920, 0
      %v8149 = vsel %vm1971, %v7922, 0
      %v8152 = vsel %vm1971, %v7924, 0
      %v8155 = vsel %vm1971, %v7926, 0
      %v8158 = vsel %vm1971, %v7928, 0
      %v8161 = vsel %vm1971, %v7930, 0
      %v8164 = vsel %vm1971, %v7932, 0
      %v8167 = vsel %vm1971, %v7934, 0
      %v8170 = vsel %vm1971, %v7936, 0
      %v8173 = vsel %vm1971, %v7938, 0
      %v8176 = vsel %vm1971, %v7940, 0
      %v8179 = vsel %vm1971, %v7942, 0
      %v8182 = vsel %vm1971, %v7944, 0
      %v8185 = vsel %vm1971, %v7946, 0
      %v8188 = vsel %vm1971, %v7948, 0
      %v8191 = vsel %vm1971, %v7950, 0
      %v8194 = vsel %vm1971, %v7952, 0
      %v8197 = vsel %vm1971, %v7954, 0
      %v8200 = vsel %vm1971, %v7956, 0
      %v8203 = vsel %vm1971, %v7958, 0
      %v8206 = vsel %vm1971, %v7960, 0
      %v8209 = vsel %vm1971, %v7962, 0
      %v8212 = vsel %vm1971, %v7964, 0
      %v8215 = vsel %vm1971, %v7966, 0
      %v8218 = vsel %vm1971, %v7968, 0
      %v8221 = vsel %vm1971, %v7970, 0
      %v8224 = vsel %vm1971, %v7972, 0
      %v8227 = vsel %vm1971, %v7974, 0
      %v8230 = vsel %vm1971, %v7976, 0
      %v8233 = vsel %vm1971, %v7978, 0
      %v8236 = vsel %vm1971, %v7980, 0
      %v8239 = vsel %vm1971, %v7982, 0
      %v8242 = vsel %vm2068, %v8119, 0
      %v8245 = vsel %vm2068, %v8120, 0
      %8247 = vmatprep.subr.bf16.mxu0 %v8096
      %8248 = vmatpush1.bf16.msra.mxu0 %v8095
      %8249 = vmatprep.subr.bf16.mxu0 %v8098
      %8250 = vmatpush1.bf16.msra.mxu0 %v8097
      %8251 = vmatprep.subr.bf16.mxu0 %v8100
      %8252 = vmatpush1.bf16.msra.mxu0 %v8099
      %8253 = vmatprep.subr.bf16.mxu0 %v8102
      %8254 = vmatpush1.bf16.msra.mxu0 %v8101
      %8255 = vmatprep.subr.bf16.mxu0 %v8104
      %8256 = vmatpush1.bf16.msra.mxu0 %v8103
      %8257 = vmatprep.subr.bf16.mxu0 %v8106
      %8258 = vmatpush1.bf16.msra.mxu0 %v8105
      %8259 = vmatprep.subr.bf16.mxu0 %v8108
      %8260 = vmatpush1.bf16.msra.mxu0 %v8107
      %8261 = vmatprep.subr.bf16.mxu0 %v8110
      %8262 = vmatpush1.bf16.msra.mxu0 %v8109
      %8263 = vmatprep.subr.bf16.mxu0 %v8112
      %8264 = vmatpush1.bf16.msra.mxu0 %v8111
      %8265 = vmatprep.subr.bf16.mxu0 %v8114
      %8266 = vmatpush1.bf16.msra.mxu0 %v8113
      %8267 = vmatprep.subr.bf16.mxu0 %v8116
      %8268 = vmatpush1.bf16.msra.mxu0 %v8115
      %8269 = vmatprep.subr.bf16.mxu0 %v8118
      %8270 = vmatpush1.bf16.msra.mxu0 %v8117
      %8271 = vmatprep.subr.bf16.mxu0 %v8245
      %8272 = vmatpush1.bf16.msra.mxu0 %v8242
      %8273 = vmatprep.subr.bf16.mxu0 0
      %8274 = vmatpush1.bf16.msra.mxu0 0
      %8275 = vmatprep.subr.bf16.mxu0 0
      %8276 = vmatpush1.bf16.msra.mxu0 0
      %8277 = vmatprep.subr.bf16.mxu0 0
      %8278 = vmatpush1.bf16.msra.mxu0 0
      %8279 = vmatprep.mubr.bf16.mxu0 %v8146
      %8280 = vmatmul.mubr.bf16.gmra.mrb[0].mxu0 %v7919
      %v8281 = vpop.f32.mrb[0].mxu0
      %v8282 = vadd.f32 %v8013, %v8281
      %v8283 = vpop.f32.mrb[0].mxu0
      %v8284 = vadd.f32 %v8017, %v8283
      %v8285 = vpop.f32.mrb[0].mxu0
      %v8286 = vadd.f32 %v8013, %v8285
      %v8287 = vpop.f32.mrb[0].mxu0
      %v8288 = vadd.f32 %v8017, %v8287
      %8289 = vmatprep.mubr.bf16.mxu0 %v8149
      %8290 = vmatmul.mubr.bf16.gmra.mrb[0].mxu0 %v7921
      %v8291 = vpop.f32.mrb[0].mxu0
      %v8292 = vadd.f32 %v8013, %v8291
      %v8293 = vpop.f32.mrb[0].mxu0
      %v8294 = vadd.f32 %v8017, %v8293
      %v8295 = vpop.f32.mrb[0].mxu0
      %v8296 = vadd.f32 %v8013, %v8295
      %v8297 = vpop.f32.mrb[0].mxu0
      %v8298 = vadd.f32 %v8017, %v8297
      %8299 = vmatprep.mubr.bf16.mxu0 %v8152
      %8300 = vmatmul.mubr.bf16.gmra.mrb[0].mxu0 %v7923
      %v8301 = vpop.f32.mrb[0].mxu0
      %v8302 = vadd.f32 %v8013, %v8301
      %v8303 = vpop.f32.mrb[0].mxu0
      %v8304 = vadd.f32 %v8017, %v8303
      %v8305 = vpop.f32.mrb[0].mxu0
      %v8306 = vadd.f32 %v8013, %v8305
      %v8307 = vpop.f32.mrb[0].mxu0
      %v8308 = vadd.f32 %v8017, %v8307
      %8309 = vmatprep.mubr.bf16.mxu0 %v8155
      %8310 = vmatmul.mubr.bf16.gmra.mrb[0].mxu0 %v7925
      %v8311 = vpop.f32.mrb[0].mxu0
      %v8312 = vadd.f32 %v8013, %v8311
      %v8313 = vpop.f32.mrb[0].mxu0
      %v8314 = vadd.f32 %v8017, %v8313
      %v8315 = vpop.f32.mrb[0].mxu0
      %v8316 = vadd.f32 %v8013, %v8315
      %v8317 = vpop.f32.mrb[0].mxu0
      %v8318 = vadd.f32 %v8017, %v8317
      %8319 = vmatprep.mubr.bf16.mxu0 %v8158
      %8320 = vmatmul.mubr.bf16.gmra.mrb[0].mxu0 %v7927
      %v8321 = vpop.f32.mrb[0].mxu0
      %v8322 = vadd.f32 %v8013, %v8321
      %v8323 = vpop.f32.mrb[0].mxu0
      %v8324 = vadd.f32 %v8017, %v8323
      %v8325 = vpop.f32.mrb[0].mxu0
      %v8326 = vadd.f32 %v8013, %v8325
      %v8327 = vpop.f32.mrb[0].mxu0
      %v8328 = vadd.f32 %v8017, %v8327
      %8329 = vmatprep.mubr.bf16.mxu0 %v8161
      %8330 = vmatmul.mubr.bf16.gmra.mrb[0].mxu0 %v7929
      %v8331 = vpop.f32.mrb[0].mxu0
      %v8332 = vadd.f32 %v8013, %v8331
      %v8333 = vpop.f32.mrb[0].mxu0
      %v8334 = vadd.f32 %v8017, %v8333
      %v8335 = vpop.f32.mrb[0].mxu0
      %v8336 = vadd.f32 %v8013, %v8335
      %v8337 = vpop.f32.mrb[0].mxu0
      %v8338 = vadd.f32 %v8017, %v8337
      %8339 = vmatprep.mubr.bf16.mxu0 %v8164
      %8340 = vmatmul.mubr.bf16.gmra.mrb[0].mxu0 %v7931
      %v8341 = vpop.f32.mrb[0].mxu0
      %v8342 = vadd.f32 %v8013, %v8341
      %v8343 = vpop.f32.mrb[0].mxu0
      %v8344 = vadd.f32 %v8017, %v8343
      %v8345 = vpop.f32.mrb[0].mxu0
      %v8346 = vadd.f32 %v8013, %v8345
      %v8347 = vpop.f32.mrb[0].mxu0
      %v8348 = vadd.f32 %v8017, %v8347
      %8349 = vmatprep.mubr.bf16.mxu0 %v8167
      %8350 = vmatmul.mubr.bf16.gmra.mrb[0].mxu0 %v7933
      %v8351 = vpop.f32.mrb[0].mxu0
      %v8352 = vadd.f32 %v8013, %v8351
      %v8353 = vpop.f32.mrb[0].mxu0
      %v8354 = vadd.f32 %v8017, %v8353
      %v8355 = vpop.f32.mrb[0].mxu0
      %v8356 = vadd.f32 %v8013, %v8355
      %v8357 = vpop.f32.mrb[0].mxu0
      %v8358 = vadd.f32 %v8017, %v8357
      %8359 = vmatprep.mubr.bf16.mxu0 %v8170
      %8360 = vmatmul.mubr.bf16.gmra.mrb[0].mxu0 %v7935
      %v8361 = vpop.f32.mrb[0].mxu0
      %v8362 = vadd.f32 %v8013, %v8361
      %v8363 = vpop.f32.mrb[0].mxu0
      %v8364 = vadd.f32 %v8017, %v8363
      %v8365 = vpop.f32.mrb[0].mxu0
      %v8366 = vadd.f32 %v8013, %v8365
      %v8367 = vpop.f32.mrb[0].mxu0
      %v8368 = vadd.f32 %v8017, %v8367
      %8369 = vmatprep.mubr.bf16.mxu0 %v8173
      %8370 = vmatmul.mubr.bf16.gmra.mrb[0].mxu0 %v7937
      %v8371 = vpop.f32.mrb[0].mxu0
      %v8372 = vadd.f32 %v8013, %v8371
      %v8373 = vpop.f32.mrb[0].mxu0
      %v8374 = vadd.f32 %v8017, %v8373
      %v8375 = vpop.f32.mrb[0].mxu0
      %v8376 = vadd.f32 %v8013, %v8375
      %v8377 = vpop.f32.mrb[0].mxu0
      %v8378 = vadd.f32 %v8017, %v8377
      %8379 = vmatprep.mubr.bf16.mxu0 %v8176
      %8380 = vmatmul.mubr.bf16.gmra.mrb[0].mxu0 %v7939
      %v8381 = vpop.f32.mrb[0].mxu0
      %v8382 = vadd.f32 %v8013, %v8381
      %v8383 = vpop.f32.mrb[0].mxu0
      %v8384 = vadd.f32 %v8017, %v8383
      %v8385 = vpop.f32.mrb[0].mxu0
      %v8386 = vadd.f32 %v8013, %v8385
      %v8387 = vpop.f32.mrb[0].mxu0
      %v8388 = vadd.f32 %v8017, %v8387
      %8389 = vmatprep.mubr.bf16.mxu0 %v8179
      %8390 = vmatmul.mubr.bf16.gmra.mrb[0].mxu0 %v7941
      %v8391 = vpop.f32.mrb[0].mxu0
      %v8392 = vadd.f32 %v8013, %v8391
      %v8393 = vpop.f32.mrb[0].mxu0
      %v8394 = vadd.f32 %v8017, %v8393
      %v8395 = vpop.f32.mrb[0].mxu0
      %v8396 = vadd.f32 %v8013, %v8395
      %v8397 = vpop.f32.mrb[0].mxu0
      %v8398 = vadd.f32 %v8017, %v8397
      %8399 = vmatprep.mubr.bf16.mxu0 %v8182
      %8400 = vmatmul.mubr.bf16.gmra.mrb[0].mxu0 %v7943
      %v8401 = vpop.f32.mrb[0].mxu0
      %v8402 = vadd.f32 %v8013, %v8401
      %v8403 = vpop.f32.mrb[0].mxu0
      %v8404 = vadd.f32 %v8017, %v8403
      %v8405 = vpop.f32.mrb[0].mxu0
      %v8406 = vadd.f32 %v8013, %v8405
      %v8407 = vpop.f32.mrb[0].mxu0
      %v8408 = vadd.f32 %v8017, %v8407
      %8409 = vmatprep.mubr.bf16.mxu0 %v8185
      %8410 = vmatmul.mubr.bf16.gmra.mrb[0].mxu0 %v7945
      %v8411 = vpop.f32.mrb[0].mxu0
      %v8412 = vadd.f32 %v8013, %v8411
      %v8413 = vpop.f32.mrb[0].mxu0
      %v8414 = vadd.f32 %v8017, %v8413
      %v8415 = vpop.f32.mrb[0].mxu0
      %v8416 = vadd.f32 %v8013, %v8415
      %v8417 = vpop.f32.mrb[0].mxu0
      %v8418 = vadd.f32 %v8017, %v8417
      %8419 = vmatprep.mubr.bf16.mxu0 %v8188
      %8420 = vmatmul.mubr.bf16.gmra.mrb[0].mxu0 %v7947
      %v8421 = vpop.f32.mrb[0].mxu0
      %v8422 = vadd.f32 %v8013, %v8421
      %v8423 = vpop.f32.mrb[0].mxu0
      %v8424 = vadd.f32 %v8017, %v8423
      %v8425 = vpop.f32.mrb[0].mxu0
      %v8426 = vadd.f32 %v8013, %v8425
      %v8427 = vpop.f32.mrb[0].mxu0
      %v8428 = vadd.f32 %v8017, %v8427
      %8429 = vmatprep.mubr.bf16.mxu0 %v8191
      %8430 = vmatmul.mubr.bf16.gmra.mrb[0].mxu0 %v7949
      %v8431 = vpop.f32.mrb[0].mxu0
      %v8432 = vadd.f32 %v8013, %v8431
      %v8433 = vpop.f32.mrb[0].mxu0
      %v8434 = vadd.f32 %v8017, %v8433
      %v8435 = vpop.f32.mrb[0].mxu0
      %v8436 = vadd.f32 %v8013, %v8435
      %v8437 = vpop.f32.mrb[0].mxu0
      %v8438 = vadd.f32 %v8017, %v8437
      %8439 = vmatprep.mubr.bf16.mxu0 %v8194
      %8440 = vmatmul.mubr.bf16.gmra.mrb[0].mxu0 %v7951
      %v8441 = vpop.f32.mrb[0].mxu0
      %v8442 = vadd.f32 %v8013, %v8441
      %v8443 = vpop.f32.mrb[0].mxu0
      %v8444 = vadd.f32 %v8017, %v8443
      %v8445 = vpop.f32.mrb[0].mxu0
      %v8446 = vadd.f32 %v8013, %v8445
      %v8447 = vpop.f32.mrb[0].mxu0
      %v8448 = vadd.f32 %v8017, %v8447
      %8449 = vmatprep.mubr.bf16.mxu0 %v8197
      %8450 = vmatmul.mubr.bf16.gmra.mrb[0].mxu0 %v7953
      %v8451 = vpop.f32.mrb[0].mxu0
      %v8452 = vadd.f32 %v8013, %v8451
      %v8453 = vpop.f32.mrb[0].mxu0
      %v8454 = vadd.f32 %v8017, %v8453
      %v8455 = vpop.f32.mrb[0].mxu0
      %v8456 = vadd.f32 %v8013, %v8455
      %v8457 = vpop.f32.mrb[0].mxu0
      %v8458 = vadd.f32 %v8017, %v8457
      %8459 = vmatprep.mubr.bf16.mxu0 %v8200
      %8460 = vmatmul.mubr.bf16.gmra.mrb[0].mxu0 %v7955
      %v8461 = vpop.f32.mrb[0].mxu0
      %v8462 = vadd.f32 %v8013, %v8461
      %v8463 = vpop.f32.mrb[0].mxu0
      %v8464 = vadd.f32 %v8017, %v8463
      %v8465 = vpop.f32.mrb[0].mxu0
      %v8466 = vadd.f32 %v8013, %v8465
      %v8467 = vpop.f32.mrb[0].mxu0
      %v8468 = vadd.f32 %v8017, %v8467
      %8469 = vmatprep.mubr.bf16.mxu0 %v8203
      %8470 = vmatmul.mubr.bf16.gmra.mrb[0].mxu0 %v7957
      %v8471 = vpop.f32.mrb[0].mxu0
      %v8472 = vadd.f32 %v8013, %v8471
      %v8473 = vpop.f32.mrb[0].mxu0
      %v8474 = vadd.f32 %v8017, %v8473
      %v8475 = vpop.f32.mrb[0].mxu0
      %v8476 = vadd.f32 %v8013, %v8475
      %v8477 = vpop.f32.mrb[0].mxu0
      %v8478 = vadd.f32 %v8017, %v8477
      %8479 = vmatprep.mubr.bf16.mxu0 %v8206
      %8480 = vmatmul.mubr.bf16.gmra.mrb[0].mxu0 %v7959
      %v8481 = vpop.f32.mrb[0].mxu0
      %v8482 = vadd.f32 %v8013, %v8481
      %v8483 = vpop.f32.mrb[0].mxu0
      %v8484 = vadd.f32 %v8017, %v8483
      %v8485 = vpop.f32.mrb[0].mxu0
      %v8486 = vadd.f32 %v8013, %v8485
      %v8487 = vpop.f32.mrb[0].mxu0
      %v8488 = vadd.f32 %v8017, %v8487
      %8489 = vmatprep.mubr.bf16.mxu0 %v8209
      %8490 = vmatmul.mubr.bf16.gmra.mrb[0].mxu0 %v7961
      %v8491 = vpop.f32.mrb[0].mxu0
      %v8492 = vadd.f32 %v8013, %v8491
      %v8493 = vpop.f32.mrb[0].mxu0
      %v8494 = vadd.f32 %v8017, %v8493
      %v8495 = vpop.f32.mrb[0].mxu0
      %v8496 = vadd.f32 %v8013, %v8495
      %v8497 = vpop.f32.mrb[0].mxu0
      %v8498 = vadd.f32 %v8017, %v8497
      %8499 = vmatprep.mubr.bf16.mxu0 %v8212
      %8500 = vmatmul.mubr.bf16.gmra.mrb[0].mxu0 %v7963
      %v8501 = vpop.f32.mrb[0].mxu0
      %v8502 = vadd.f32 %v8013, %v8501
      %v8503 = vpop.f32.mrb[0].mxu0
      %v8504 = vadd.f32 %v8017, %v8503
      %v8505 = vpop.f32.mrb[0].mxu0
      %v8506 = vadd.f32 %v8013, %v8505
      %v8507 = vpop.f32.mrb[0].mxu0
      %v8508 = vadd.f32 %v8017, %v8507
      %8509 = vmatprep.mubr.bf16.mxu0 %v8215
      %8510 = vmatmul.mubr.bf16.gmra.mrb[0].mxu0 %v7965
      %v8511 = vpop.f32.mrb[0].mxu0
      %v8512 = vadd.f32 %v8013, %v8511
      %v8513 = vpop.f32.mrb[0].mxu0
      %v8514 = vadd.f32 %v8017, %v8513
      %v8515 = vpop.f32.mrb[0].mxu0
      %v8516 = vadd.f32 %v8013, %v8515
      %v8517 = vpop.f32.mrb[0].mxu0
      %v8518 = vadd.f32 %v8017, %v8517
      %8519 = vmatprep.mubr.bf16.mxu0 %v8218
      %8520 = vmatmul.mubr.bf16.gmra.mrb[0].mxu0 %v7967
      %v8521 = vpop.f32.mrb[0].mxu0
      %v8522 = vadd.f32 %v8013, %v8521
      %v8523 = vpop.f32.mrb[0].mxu0
      %v8524 = vadd.f32 %v8017, %v8523
      %v8525 = vpop.f32.mrb[0].mxu0
      %v8526 = vadd.f32 %v8013, %v8525
      %v8527 = vpop.f32.mrb[0].mxu0
      %v8528 = vadd.f32 %v8017, %v8527
      %8529 = vmatprep.mubr.bf16.mxu0 %v8221
      %8530 = vmatmul.mubr.bf16.gmra.mrb[0].mxu0 %v7969
      %v8531 = vpop.f32.mrb[0].mxu0
      %v8532 = vadd.f32 %v8013, %v8531
      %v8533 = vpop.f32.mrb[0].mxu0
      %v8534 = vadd.f32 %v8017, %v8533
      %v8535 = vpop.f32.mrb[0].mxu0
      %v8536 = vadd.f32 %v8013, %v8535
      %v8537 = vpop.f32.mrb[0].mxu0
      %v8538 = vadd.f32 %v8017, %v8537
      %8539 = vmatprep.mubr.bf16.mxu0 %v8224
      %8540 = vmatmul.mubr.bf16.gmra.mrb[0].mxu0 %v7971
      %v8541 = vpop.f32.mrb[0].mxu0
      %v8542 = vadd.f32 %v8013, %v8541
      %v8543 = vpop.f32.mrb[0].mxu0
      %v8544 = vadd.f32 %v8017, %v8543
      %v8545 = vpop.f32.mrb[0].mxu0
      %v8546 = vadd.f32 %v8013, %v8545
      %v8547 = vpop.f32.mrb[0].mxu0
      %v8548 = vadd.f32 %v8017, %v8547
      %8549 = vmatprep.mubr.bf16.mxu0 %v8227
      %8550 = vmatmul.mubr.bf16.gmra.mrb[0].mxu0 %v7973
      %v8551 = vpop.f32.mrb[0].mxu0
      %v8552 = vadd.f32 %v8013, %v8551
      %v8553 = vpop.f32.mrb[0].mxu0
      %v8554 = vadd.f32 %v8017, %v8553
      %v8555 = vpop.f32.mrb[0].mxu0
      %v8556 = vadd.f32 %v8013, %v8555
      %v8557 = vpop.f32.mrb[0].mxu0
      %v8558 = vadd.f32 %v8017, %v8557
      %8559 = vmatprep.mubr.bf16.mxu0 %v8230
      %8560 = vmatmul.mubr.bf16.gmra.mrb[0].mxu0 %v7975
      %v8561 = vpop.f32.mrb[0].mxu0
      %v8562 = vadd.f32 %v8013, %v8561
      %v8563 = vpop.f32.mrb[0].mxu0
      %v8564 = vadd.f32 %v8017, %v8563
      %v8565 = vpop.f32.mrb[0].mxu0
      %v8566 = vadd.f32 %v8013, %v8565
      %v8567 = vpop.f32.mrb[0].mxu0
      %v8568 = vadd.f32 %v8017, %v8567
      %8569 = vmatprep.mubr.bf16.mxu0 %v8233
      %8570 = vmatmul.mubr.bf16.gmra.mrb[0].mxu0 %v7977
      %v8571 = vpop.f32.mrb[0].mxu0
      %v8572 = vadd.f32 %v8013, %v8571
      %v8573 = vpop.f32.mrb[0].mxu0
      %v8574 = vadd.f32 %v8017, %v8573
      %v8575 = vpop.f32.mrb[0].mxu0
      %v8576 = vadd.f32 %v8013, %v8575
      %v8577 = vpop.f32.mrb[0].mxu0
      %v8578 = vadd.f32 %v8017, %v8577
      %8579 = vmatprep.mubr.bf16.mxu0 %v8236
      %8580 = vmatmul.mubr.bf16.gmra.mrb[0].mxu0 %v7979
      %v8581 = vpop.f32.mrb[0].mxu0
      %v8582 = vadd.f32 %v8013, %v8581
      %v8583 = vpop.f32.mrb[0].mxu0
      %v8584 = vadd.f32 %v8017, %v8583
      %v8585 = vpop.f32.mrb[0].mxu0
      %v8586 = vadd.f32 %v8013, %v8585
      %v8587 = vpop.f32.mrb[0].mxu0
      %v8588 = vadd.f32 %v8017, %v8587
      %8589 = vmatprep.mubr.bf16.mxu0 %v8239
      %8590 = vmatmul.mubr.bf16.gmra.mrb[0].mxu0 %v7981
      %v8591 = vpop.f32.mrb[0].mxu0
      %v8592 = vadd.f32 %v8013, %v8591
      %v8593 = vpop.f32.mrb[0].mxu0
      %v8594 = vadd.f32 %v8017, %v8593
      %v8595 = vpop.f32.mrb[0].mxu0
      %v8596 = vadd.f32 %v8013, %v8595
      %v8597 = vpop.f32.mrb[0].mxu0
      %v8598 = vadd.f32 %v8017, %v8597
      %8599 = vdwg.mxu0
      %v8600 = vmax.f32 %v8282, 0.0
      %v8601 = vmax.f32 %v8284, 0.0
      %v8602 = vmax.f32 %v8286, 0.0
      %v8603 = vmax.f32 %v8288, 0.0
      %v8604 = vmax.f32 %v8292, 0.0
      %v8605 = vmax.f32 %v8294, 0.0
      %v8606 = vmax.f32 %v8296, 0.0
      %v8607 = vmax.f32 %v8298, 0.0
      %v8608 = vmax.f32 %v8302, 0.0
      %v8609 = vmax.f32 %v8304, 0.0
      %v8610 = vmax.f32 %v8306, 0.0
      %v8611 = vmax.f32 %v8308, 0.0
      %v8612 = vmax.f32 %v8312, 0.0
      %v8613 = vmax.f32 %v8314, 0.0
      %v8614 = vmax.f32 %v8316, 0.0
      %v8615 = vmax.f32 %v8318, 0.0
      %v8616 = vmax.f32 %v8322, 0.0
      %v8617 = vmax.f32 %v8324, 0.0
      %v8618 = vmax.f32 %v8326, 0.0
      %v8619 = vmax.f32 %v8328, 0.0
      %v8620 = vmax.f32 %v8332, 0.0
      %v8621 = vmax.f32 %v8334, 0.0
      %v8622 = vmax.f32 %v8336, 0.0
      %v8623 = vmax.f32 %v8338, 0.0
      %v8624 = vmax.f32 %v8342, 0.0
      %v8625 = vmax.f32 %v8344, 0.0
      %v8626 = vmax.f32 %v8346, 0.0
      %v8627 = vmax.f32 %v8348, 0.0
      %v8628 = vmax.f32 %v8352, 0.0
      %v8629 = vmax.f32 %v8354, 0.0
      %v8630 = vmax.f32 %v8356, 0.0
      %v8631 = vmax.f32 %v8358, 0.0
      %v8632 = vmax.f32 %v8362, 0.0
      %v8633 = vmax.f32 %v8364, 0.0
      %v8634 = vmax.f32 %v8366, 0.0
      %v8635 = vmax.f32 %v8368, 0.0
      %v8636 = vmax.f32 %v8372, 0.0
      %v8637 = vmax.f32 %v8374, 0.0
      %v8638 = vmax.f32 %v8376, 0.0
      %v8639 = vmax.f32 %v8378, 0.0
      %v8640 = vmax.f32 %v8382, 0.0
      %v8641 = vmax.f32 %v8384, 0.0
      %v8642 = vmax.f32 %v8386, 0.0
      %v8643 = vmax.f32 %v8388, 0.0
      %v8644 = vmax.f32 %v8392, 0.0
      %v8645 = vmax.f32 %v8394, 0.0
      %v8646 = vmax.f32 %v8396, 0.0
      %v8647 = vmax.f32 %v8398, 0.0
      %v8648 = vmax.f32 %v8402, 0.0
      %v8649 = vmax.f32 %v8404, 0.0
      %v8650 = vmax.f32 %v8406, 0.0
      %v8651 = vmax.f32 %v8408, 0.0
      %v8652 = vmax.f32 %v8412, 0.0
      %v8653 = vmax.f32 %v8414, 0.0
      %v8654 = vmax.f32 %v8416, 0.0
      %v8655 = vmax.f32 %v8418, 0.0
      %v8656 = vmax.f32 %v8422, 0.0
      %v8657 = vmax.f32 %v8424, 0.0
      %v8658 = vmax.f32 %v8426, 0.0
      %v8659 = vmax.f32 %v8428, 0.0
      %v8660 = vmax.f32 %v8432, 0.0
      %v8661 = vmax.f32 %v8434, 0.0
      %v8662 = vmax.f32 %v8436, 0.0
      %v8663 = vmax.f32 %v8438, 0.0
      %v8664 = vmax.f32 %v8442, 0.0
      %v8665 = vmax.f32 %v8444, 0.0
      %v8666 = vmax.f32 %v8446, 0.0
      %v8667 = vmax.f32 %v8448, 0.0
      %v8668 = vmax.f32 %v8452, 0.0
      %v8669 = vmax.f32 %v8454, 0.0
      %v8670 = vmax.f32 %v8456, 0.0
      %v8671 = vmax.f32 %v8458, 0.0
      %v8672 = vmax.f32 %v8462, 0.0
      %v8673 = vmax.f32 %v8464, 0.0
      %v8674 = vmax.f32 %v8466, 0.0
      %v8675 = vmax.f32 %v8468, 0.0
      %v8676 = vmax.f32 %v8472, 0.0
      %v8677 = vmax.f32 %v8474, 0.0
      %v8678 = vmax.f32 %v8476, 0.0
      %v8679 = vmax.f32 %v8478, 0.0
      %v8680 = vmax.f32 %v8482, 0.0
      %v8681 = vmax.f32 %v8484, 0.0
      %v8682 = vmax.f32 %v8486, 0.0
      %v8683 = vmax.f32 %v8488, 0.0
      %v8684 = vmax.f32 %v8492, 0.0
      %v8685 = vmax.f32 %v8494, 0.0
      %v8686 = vmax.f32 %v8496, 0.0
      %v8687 = vmax.f32 %v8498, 0.0
      %v8688 = vmax.f32 %v8502, 0.0
      %v8689 = vmax.f32 %v8504, 0.0
      %v8690 = vmax.f32 %v8506, 0.0
      %v8691 = vmax.f32 %v8508, 0.0
      %v8692 = vmax.f32 %v8512, 0.0
      %v8693 = vmax.f32 %v8514, 0.0
      %v8694 = vmax.f32 %v8516, 0.0
      %v8695 = vmax.f32 %v8518, 0.0
      %v8696 = vmax.f32 %v8522, 0.0
      %v8697 = vmax.f32 %v8524, 0.0
      %v8698 = vmax.f32 %v8526, 0.0
      %v8699 = vmax.f32 %v8528, 0.0
      %v8700 = vmax.f32 %v8532, 0.0
      %v8701 = vmax.f32 %v8534, 0.0
      %v8702 = vmax.f32 %v8536, 0.0
      %v8703 = vmax.f32 %v8538, 0.0
      %v8704 = vmax.f32 %v8542, 0.0
      %v8705 = vmax.f32 %v8544, 0.0
      %v8706 = vmax.f32 %v8546, 0.0
      %v8707 = vmax.f32 %v8548, 0.0
      %v8708 = vmax.f32 %v8552, 0.0
      %v8709 = vmax.f32 %v8554, 0.0
      %v8710 = vmax.f32 %v8556, 0.0
      %v8711 = vmax.f32 %v8558, 0.0
      %v8712 = vmax.f32 %v8562, 0.0
      %v8713 = vmax.f32 %v8564, 0.0
      %v8714 = vmax.f32 %v8566, 0.0
      %v8715 = vmax.f32 %v8568, 0.0
      %v8716 = vmax.f32 %v8572, 0.0
      %v8717 = vmax.f32 %v8574, 0.0
      %v8718 = vmax.f32 %v8576, 0.0
      %v8719 = vmax.f32 %v8578, 0.0
      %v8720 = vmax.f32 %v8582, 0.0
      %v8721 = vmax.f32 %v8584, 0.0
      %v8722 = vmax.f32 %v8586, 0.0
      %v8723 = vmax.f32 %v8588, 0.0
      %v8724 = vmax.f32 %v8592, 0.0
      %v8725 = vmax.f32 %v8594, 0.0
      %v8726 = vmax.f32 %v8596, 0.0
      %v8727 = vmax.f32 %v8598, 0.0
      %v8728 = vpack.c.bf16 %v8602, %v8600
      %v8729 = vpack.c.bf16 %v8603, %v8601
      %v8730 = vpack.c.bf16 %v8606, %v8604
      %v8731 = vpack.c.bf16 %v8607, %v8605
      %v8732 = vpack.c.bf16 %v8610, %v8608
      %v8733 = vpack.c.bf16 %v8611, %v8609
      %v8734 = vpack.c.bf16 %v8614, %v8612
      %v8735 = vpack.c.bf16 %v8615, %v8613
      %v8736 = vpack.c.bf16 %v8618, %v8616
      %v8737 = vpack.c.bf16 %v8619, %v8617
      %v8738 = vpack.c.bf16 %v8622, %v8620
      %v8739 = vpack.c.bf16 %v8623, %v8621
      %v8740 = vpack.c.bf16 %v8626, %v8624
      %v8741 = vpack.c.bf16 %v8627, %v8625
      %v8742 = vpack.c.bf16 %v8630, %v8628
      %v8743 = vpack.c.bf16 %v8631, %v8629
      %v8744 = vpack.c.bf16 %v8634, %v8632
      %v8745 = vpack.c.bf16 %v8635, %v8633
      %v8746 = vpack.c.bf16 %v8638, %v8636
      %v8747 = vpack.c.bf16 %v8639, %v8637
      %v8748 = vpack.c.bf16 %v8642, %v8640
      %v8749 = vpack.c.bf16 %v8643, %v8641
      %v8750 = vpack.c.bf16 %v8646, %v8644
      %v8751 = vpack.c.bf16 %v8647, %v8645
      %v8752 = vpack.c.bf16 %v8650, %v8648
      %v8753 = vpack.c.bf16 %v8651, %v8649
      %v8754 = vpack.c.bf16 %v8654, %v8652
      %v8755 = vpack.c.bf16 %v8655, %v8653
      %v8756 = vpack.c.bf16 %v8658, %v8656
      %v8757 = vpack.c.bf16 %v8659, %v8657
      %v8758 = vpack.c.bf16 %v8662, %v8660
      %v8759 = vpack.c.bf16 %v8663, %v8661
      %v8760 = vpack.c.bf16 %v8666, %v8664
      %v8761 = vpack.c.bf16 %v8667, %v8665
      %v8762 = vpack.c.bf16 %v8670, %v8668
      %v8763 = vpack.c.bf16 %v8671, %v8669
      %v8764 = vpack.c.bf16 %v8674, %v8672
      %v8765 = vpack.c.bf16 %v8675, %v8673
      %v8766 = vpack.c.bf16 %v8678, %v8676
      %v8767 = vpack.c.bf16 %v8679, %v8677
      %v8768 = vpack.c.bf16 %v8682, %v8680
      %v8769 = vpack.c.bf16 %v8683, %v8681
      %v8770 = vpack.c.bf16 %v8686, %v8684
      %v8771 = vpack.c.bf16 %v8687, %v8685
      %v8772 = vpack.c.bf16 %v8690, %v8688
      %v8773 = vpack.c.bf16 %v8691, %v8689
      %v8774 = vpack.c.bf16 %v8694, %v8692
      %v8775 = vpack.c.bf16 %v8695, %v8693
      %v8776 = vpack.c.bf16 %v8698, %v8696
      %v8777 = vpack.c.bf16 %v8699, %v8697
      %v8778 = vpack.c.bf16 %v8702, %v8700
      %v8779 = vpack.c.bf16 %v8703, %v8701
      %v8780 = vpack.c.bf16 %v8706, %v8704
      %v8781 = vpack.c.bf16 %v8707, %v8705
      %v8782 = vpack.c.bf16 %v8710, %v8708
      %v8783 = vpack.c.bf16 %v8711, %v8709
      %v8784 = vpack.c.bf16 %v8714, %v8712
      %v8785 = vpack.c.bf16 %v8715, %v8713
      %v8786 = vpack.c.bf16 %v8718, %v8716
      %v8787 = vpack.c.bf16 %v8719, %v8717
      %v8788 = vpack.c.bf16 %v8722, %v8720
      %v8789 = vpack.c.bf16 %v8723, %v8721
      %v8790 = vpack.c.bf16 %v8726, %v8724
      %v8791 = vpack.c.bf16 %v8727, %v8725
      %v8792 = vld [vmem:[%s25] sm:$0xff]
      %v8793 = vld [vmem:[%s25 + $0x8] sm:$0xff]
      %v8794 = vld [vmem:[%s25 + $0x10] sm:$0xff]
      %v8795 = vld [vmem:[%s25 + $0x18] sm:$0xff]
      %v8796 = vld [vmem:[%s25 + $0x20] sm:$0xff]
      %v8797 = vld [vmem:[%s25 + $0x28] sm:$0xff]
      %v8798 = vld [vmem:[%s25 + $0x30] sm:$0xff]
      %v8799 = vld [vmem:[%s25 + $0x38] sm:$0xff]
      %v8800 = vld [vmem:[%s25 + $0x40] sm:$0xff]
      %v8801 = vld [vmem:[%s25 + $0x48] sm:$0xff]
      %v8802 = vld [vmem:[%s25 + $0x50] sm:$0xff]
      %v8803 = vld [vmem:[%s25 + $0x58] sm:$0xff]
      %v8804 = vld [vmem:[%s25 + $0x60] sm:$0xff]
      %v8805 = vld [vmem:[%s25 + $0x68] sm:$0xff]
      %v8806 = vld [vmem:[%s25 + $0x70] sm:$0xff]
      %v8807 = vld [vmem:[%s25 + $0x78] sm:$0xff]
      %v8808 = vld [vmem:[%s25 + $0x80] sm:$0xff]
      %v8809 = vld [vmem:[%s25 + $0x88] sm:$0xff]
      %v8810 = vld [vmem:[%s25 + $0x90] sm:$0xff]
      %v8811 = vld [vmem:[%s25 + $0x98] sm:$0xff]
      %v8812 = vld [vmem:[%s25 + $0xa0] sm:$0xff]
      %v8813 = vld [vmem:[%s25 + $0xa8] sm:$0xff]
      %v8814 = vld [vmem:[%s25 + $0xb0] sm:$0xff]
      %v8815 = vld [vmem:[%s25 + $0xb8] sm:$0xff]
      %v8816 = vld [vmem:[%s25 + $0xc0] sm:$0xff]
      %v8842 = vunpack.c.l.b16 %v8792
      %v8843 = vunpack.c.h.b16 %v8792
      %v8844 = vunpack.c.l.b16 %v8793
      %v8845 = vunpack.c.h.b16 %v8793
      %v8846 = vunpack.c.l.b16 %v8794
      %v8847 = vunpack.c.h.b16 %v8794
      %v8848 = vunpack.c.l.b16 %v8795
      %v8849 = vunpack.c.h.b16 %v8795
      %v8850 = vunpack.c.l.b16 %v8796
      %v8851 = vunpack.c.h.b16 %v8796
      %v8852 = vunpack.c.l.b16 %v8797
      %v8853 = vunpack.c.h.b16 %v8797
      %v8854 = vunpack.c.l.b16 %v8798
      %v8855 = vunpack.c.h.b16 %v8798
      %v8856 = vunpack.c.l.b16 %v8799
      %v8857 = vunpack.c.h.b16 %v8799
      %v8858 = vunpack.c.l.b16 %v8800
      %v8859 = vunpack.c.h.b16 %v8800
      %v8860 = vunpack.c.l.b16 %v8801
      %v8861 = vunpack.c.h.b16 %v8801
      %v8862 = vunpack.c.l.b16 %v8802
      %v8863 = vunpack.c.h.b16 %v8802
      %v8864 = vunpack.c.l.b16 %v8803
      %v8865 = vunpack.c.h.b16 %v8803
      %v8866 = vunpack.c.l.b16 %v8804
      %v8867 = vunpack.c.h.b16 %v8804
      %v8868 = vunpack.c.l.b16 %v8805
      %v8869 = vunpack.c.h.b16 %v8805
      %v8870 = vunpack.c.l.b16 %v8806
      %v8871 = vunpack.c.h.b16 %v8806
      %v8872 = vunpack.c.l.b16 %v8807
      %v8873 = vunpack.c.h.b16 %v8807
      %v8874 = vunpack.c.l.b16 %v8808
      %v8875 = vunpack.c.h.b16 %v8808
      %v8876 = vunpack.c.l.b16 %v8809
      %v8877 = vunpack.c.h.b16 %v8809
      %v8878 = vunpack.c.l.b16 %v8810
      %v8879 = vunpack.c.h.b16 %v8810
      %v8880 = vunpack.c.l.b16 %v8811
      %v8881 = vunpack.c.h.b16 %v8811
      %v8882 = vunpack.c.l.b16 %v8812
      %v8883 = vunpack.c.h.b16 %v8812
      %v8884 = vunpack.c.l.b16 %v8813
      %v8885 = vunpack.c.h.b16 %v8813
      %v8886 = vunpack.c.l.b16 %v8814
      %v8887 = vunpack.c.h.b16 %v8814
      %v8888 = vunpack.c.l.b16 %v8815
      %v8889 = vunpack.c.h.b16 %v8815
      %v8890 = vunpack.c.l.b16 %v8816
      %v8891 = vunpack.c.h.b16 %v8816
      %v8892 = vpack.c.b16 %v8844, %v8842
      %v8893 = vpack.c.b16 %v8845, %v8843
      %v8894 = vpack.c.b16 %v8848, %v8846
      %v8895 = vpack.c.b16 %v8849, %v8847
      %v8896 = vpack.c.b16 %v8852, %v8850
      %v8897 = vpack.c.b16 %v8853, %v8851
      %v8898 = vpack.c.b16 %v8856, %v8854
      %v8899 = vpack.c.b16 %v8857, %v8855
      %v8900 = vpack.c.b16 %v8860, %v8858
      %v8901 = vpack.c.b16 %v8861, %v8859
      %v8902 = vpack.c.b16 %v8864, %v8862
      %v8903 = vpack.c.b16 %v8865, %v8863
      %v8904 = vpack.c.b16 %v8868, %v8866
      %v8905 = vpack.c.b16 %v8869, %v8867
      %v8906 = vpack.c.b16 %v8872, %v8870
      %v8907 = vpack.c.b16 %v8873, %v8871
      %v8908 = vpack.c.b16 %v8876, %v8874
      %v8909 = vpack.c.b16 %v8877, %v8875
      %v8910 = vpack.c.b16 %v8880, %v8878
      %v8911 = vpack.c.b16 %v8881, %v8879
      %v8912 = vpack.c.b16 %v8884, %v8882
      %v8913 = vpack.c.b16 %v8885, %v8883
      %v8914 = vpack.c.b16 %v8888, %v8886
      %v8915 = vpack.c.b16 %v8889, %v8887
      %v8916 = vpack.c.b16 %v8890, %v8890
      %v8917 = vpack.c.b16 %v8891, %v8891
      %v8943 = vsel %vm1971, %v8729, 0
      %v8946 = vsel %vm1971, %v8731, 0
      %v8949 = vsel %vm1971, %v8733, 0
      %v8952 = vsel %vm1971, %v8735, 0
      %v8955 = vsel %vm1971, %v8737, 0
      %v8958 = vsel %vm1971, %v8739, 0
      %v8961 = vsel %vm1971, %v8741, 0
      %v8964 = vsel %vm1971, %v8743, 0
      %v8967 = vsel %vm1971, %v8745, 0
      %v8970 = vsel %vm1971, %v8747, 0
      %v8973 = vsel %vm1971, %v8749, 0
      %v8976 = vsel %vm1971, %v8751, 0
      %v8979 = vsel %vm1971, %v8753, 0
      %v8982 = vsel %vm1971, %v8755, 0
      %v8985 = vsel %vm1971, %v8757, 0
      %v8988 = vsel %vm1971, %v8759, 0
      %v8991 = vsel %vm1971, %v8761, 0
      %v8994 = vsel %vm1971, %v8763, 0
      %v8997 = vsel %vm1971, %v8765, 0
      %v9000 = vsel %vm1971, %v8767, 0
      %v9003 = vsel %vm1971, %v8769, 0
      %v9006 = vsel %vm1971, %v8771, 0
      %v9009 = vsel %vm1971, %v8773, 0
      %v9012 = vsel %vm1971, %v8775, 0
      %v9015 = vsel %vm1971, %v8777, 0
      %v9018 = vsel %vm1971, %v8779, 0
      %v9021 = vsel %vm1971, %v8781, 0
      %v9024 = vsel %vm1971, %v8783, 0
      %v9027 = vsel %vm1971, %v8785, 0
      %v9030 = vsel %vm1971, %v8787, 0
      %v9033 = vsel %vm1971, %v8789, 0
      %v9036 = vsel %vm1971, %v8791, 0
      %v9039 = vsel %vm2068, %v8916, 0
      %v9042 = vsel %vm2068, %v8917, 0
      %9044 = vmatprep.subr.bf16.mxu0 %v8893
      %9045 = vmatpush1.bf16.msra.mxu0 %v8892
      %9046 = vmatprep.subr.bf16.mxu0 %v8895
      %9047 = vmatpush1.bf16.msra.mxu0 %v8894
      %9048 = vmatprep.subr.bf16.mxu0 %v8897
      %9049 = vmatpush1.bf16.msra.mxu0 %v8896
      %9050 = vmatprep.subr.bf16.mxu0 %v8899
      %9051 = vmatpush1.bf16.msra.mxu0 %v8898
      %9052 = vmatprep.subr.bf16.mxu0 %v8901
      %9053 = vmatpush1.bf16.msra.mxu0 %v8900
      %9054 = vmatprep.subr.bf16.mxu0 %v8903
      %9055 = vmatpush1.bf16.msra.mxu0 %v8902
      %9056 = vmatprep.subr.bf16.mxu0 %v8905
      %9057 = vmatpush1.bf16.msra.mxu0 %v8904
      %9058 = vmatprep.subr.bf16.mxu0 %v8907
      %9059 = vmatpush1.bf16.msra.mxu0 %v8906
      %9060 = vmatprep.subr.bf16.mxu0 %v8909
      %9061 = vmatpush1.bf16.msra.mxu0 %v8908
      %9062 = vmatprep.subr.bf16.mxu0 %v8911
      %9063 = vmatpush1.bf16.msra.mxu0 %v8910
      %9064 = vmatprep.subr.bf16.mxu0 %v8913
      %9065 = vmatpush1.bf16.msra.mxu0 %v8912
      %9066 = vmatprep.subr.bf16.mxu0 %v8915
      %9067 = vmatpush1.bf16.msra.mxu0 %v8914
      %9068 = vmatprep.subr.bf16.mxu0 %v9042
      %9069 = vmatpush1.bf16.msra.mxu0 %v9039
      %9070 = vmatprep.subr.bf16.mxu0 0
      %9071 = vmatpush1.bf16.msra.mxu0 0
      %9072 = vmatprep.subr.bf16.mxu0 0
      %9073 = vmatpush1.bf16.msra.mxu0 0
      %9074 = vmatprep.subr.bf16.mxu0 0
      %9075 = vmatpush1.bf16.msra.mxu0 0
      %9076 = vmatprep.mubr.bf16.mxu0 %v8943
      %9077 = vmatmul.mubr.bf16.gmra.mrb[0].mxu0 %v8728
      %v9078 = vpop.f32.mrb[0].mxu0
      %v9079 = vadd.f32 0.0, %v9078
      %v9080 = vpop.f32.mrb[0].mxu0
      %v9081 = vadd.f32 0.0, %v9080
      %v9082 = vpop.f32.mrb[0].mxu0
      %v9083 = vadd.f32 0.0, %v9082
      %v9084 = vpop.f32.mrb[0].mxu0
      %v9085 = vadd.f32 0.0, %v9084
      %9086 = vmatprep.mubr.bf16.mxu0 %v8946
      %9087 = vmatmul.mubr.bf16.gmra.mrb[0].mxu0 %v8730
      %v9088 = vpop.f32.mrb[0].mxu0
      %v9089 = vadd.f32 0.0, %v9088
      %v9090 = vpop.f32.mrb[0].mxu0
      %v9091 = vadd.f32 0.0, %v9090
      %v9092 = vpop.f32.mrb[0].mxu0
      %v9093 = vadd.f32 0.0, %v9092
      %v9094 = vpop.f32.mrb[0].mxu0
      %v9095 = vadd.f32 0.0, %v9094
      %9096 = vmatprep.mubr.bf16.mxu0 %v8949
      %9097 = vmatmul.mubr.bf16.gmra.mrb[0].mxu0 %v8732
      %v9098 = vpop.f32.mrb[0].mxu0
      %v9099 = vadd.f32 0.0, %v9098
      %v9100 = vpop.f32.mrb[0].mxu0
      %v9101 = vadd.f32 0.0, %v9100
      %v9102 = vpop.f32.mrb[0].mxu0
      %v9103 = vadd.f32 0.0, %v9102
      %v9104 = vpop.f32.mrb[0].mxu0
      %v9105 = vadd.f32 0.0, %v9104
      %9106 = vmatprep.mubr.bf16.mxu0 %v8952
      %9107 = vmatmul.mubr.bf16.gmra.mrb[0].mxu0 %v8734
      %v9108 = vpop.f32.mrb[0].mxu0
      %v9109 = vadd.f32 0.0, %v9108
      %v9110 = vpop.f32.mrb[0].mxu0
      %v9111 = vadd.f32 0.0, %v9110
      %v9112 = vpop.f32.mrb[0].mxu0
      %v9113 = vadd.f32 0.0, %v9112
      %v9114 = vpop.f32.mrb[0].mxu0
      %v9115 = vadd.f32 0.0, %v9114
      %9116 = vmatprep.mubr.bf16.mxu0 %v8955
      %9117 = vmatmul.mubr.bf16.gmra.mrb[0].mxu0 %v8736
      %v9118 = vpop.f32.mrb[0].mxu0
      %v9119 = vadd.f32 0.0, %v9118
      %v9120 = vpop.f32.mrb[0].mxu0
      %v9121 = vadd.f32 0.0, %v9120
      %v9122 = vpop.f32.mrb[0].mxu0
      %v9123 = vadd.f32 0.0, %v9122
      %v9124 = vpop.f32.mrb[0].mxu0
      %v9125 = vadd.f32 0.0, %v9124
      %9126 = vmatprep.mubr.bf16.mxu0 %v8958
      %9127 = vmatmul.mubr.bf16.gmra.mrb[0].mxu0 %v8738
      %v9128 = vpop.f32.mrb[0].mxu0
      %v9129 = vadd.f32 0.0, %v9128
      %v9130 = vpop.f32.mrb[0].mxu0
      %v9131 = vadd.f32 0.0, %v9130
      %v9132 = vpop.f32.mrb[0].mxu0
      %v9133 = vadd.f32 0.0, %v9132
      %v9134 = vpop.f32.mrb[0].mxu0
      %v9135 = vadd.f32 0.0, %v9134
      %9136 = vmatprep.mubr.bf16.mxu0 %v8961
      %9137 = vmatmul.mubr.bf16.gmra.mrb[0].mxu0 %v8740
      %v9138 = vpop.f32.mrb[0].mxu0
      %v9139 = vadd.f32 0.0, %v9138
      %v9140 = vpop.f32.mrb[0].mxu0
      %v9141 = vadd.f32 0.0, %v9140
      %v9142 = vpop.f32.mrb[0].mxu0
      %v9143 = vadd.f32 0.0, %v9142
      %v9144 = vpop.f32.mrb[0].mxu0
      %v9145 = vadd.f32 0.0, %v9144
      %9146 = vmatprep.mubr.bf16.mxu0 %v8964
      %9147 = vmatmul.mubr.bf16.gmra.mrb[0].mxu0 %v8742
      %v9148 = vpop.f32.mrb[0].mxu0
      %v9149 = vadd.f32 0.0, %v9148
      %v9150 = vpop.f32.mrb[0].mxu0
      %v9151 = vadd.f32 0.0, %v9150
      %v9152 = vpop.f32.mrb[0].mxu0
      %v9153 = vadd.f32 0.0, %v9152
      %v9154 = vpop.f32.mrb[0].mxu0
      %v9155 = vadd.f32 0.0, %v9154
      %9156 = vmatprep.mubr.bf16.mxu0 %v8967
      %9157 = vmatmul.mubr.bf16.gmra.mrb[0].mxu0 %v8744
      %v9158 = vpop.f32.mrb[0].mxu0
      %v9159 = vadd.f32 0.0, %v9158
      %v9160 = vpop.f32.mrb[0].mxu0
      %v9161 = vadd.f32 0.0, %v9160
      %v9162 = vpop.f32.mrb[0].mxu0
      %v9163 = vadd.f32 0.0, %v9162
      %v9164 = vpop.f32.mrb[0].mxu0
      %v9165 = vadd.f32 0.0, %v9164
      %9166 = vmatprep.mubr.bf16.mxu0 %v8970
      %9167 = vmatmul.mubr.bf16.gmra.mrb[0].mxu0 %v8746
      %v9168 = vpop.f32.mrb[0].mxu0
      %v9169 = vadd.f32 0.0, %v9168
      %v9170 = vpop.f32.mrb[0].mxu0
      %v9171 = vadd.f32 0.0, %v9170
      %v9172 = vpop.f32.mrb[0].mxu0
      %v9173 = vadd.f32 0.0, %v9172
      %v9174 = vpop.f32.mrb[0].mxu0
      %v9175 = vadd.f32 0.0, %v9174
      %9176 = vmatprep.mubr.bf16.mxu0 %v8973
      %9177 = vmatmul.mubr.bf16.gmra.mrb[0].mxu0 %v8748
      %v9178 = vpop.f32.mrb[0].mxu0
      %v9179 = vadd.f32 0.0, %v9178
      %v9180 = vpop.f32.mrb[0].mxu0
      %v9181 = vadd.f32 0.0, %v9180
      %v9182 = vpop.f32.mrb[0].mxu0
      %v9183 = vadd.f32 0.0, %v9182
      %v9184 = vpop.f32.mrb[0].mxu0
      %v9185 = vadd.f32 0.0, %v9184
      %9186 = vmatprep.mubr.bf16.mxu0 %v8976
      %9187 = vmatmul.mubr.bf16.gmra.mrb[0].mxu0 %v8750
      %v9188 = vpop.f32.mrb[0].mxu0
      %v9189 = vadd.f32 0.0, %v9188
      %v9190 = vpop.f32.mrb[0].mxu0
      %v9191 = vadd.f32 0.0, %v9190
      %v9192 = vpop.f32.mrb[0].mxu0
      %v9193 = vadd.f32 0.0, %v9192
      %v9194 = vpop.f32.mrb[0].mxu0
      %v9195 = vadd.f32 0.0, %v9194
      %9196 = vmatprep.mubr.bf16.mxu0 %v8979
      %9197 = vmatmul.mubr.bf16.gmra.mrb[0].mxu0 %v8752
      %v9198 = vpop.f32.mrb[0].mxu0
      %v9199 = vadd.f32 0.0, %v9198
      %v9200 = vpop.f32.mrb[0].mxu0
      %v9201 = vadd.f32 0.0, %v9200
      %v9202 = vpop.f32.mrb[0].mxu0
      %v9203 = vadd.f32 0.0, %v9202
      %v9204 = vpop.f32.mrb[0].mxu0
      %v9205 = vadd.f32 0.0, %v9204
      %9206 = vmatprep.mubr.bf16.mxu0 %v8982
      %9207 = vmatmul.mubr.bf16.gmra.mrb[0].mxu0 %v8754
      %v9208 = vpop.f32.mrb[0].mxu0
      %v9209 = vadd.f32 0.0, %v9208
      %v9210 = vpop.f32.mrb[0].mxu0
      %v9211 = vadd.f32 0.0, %v9210
      %v9212 = vpop.f32.mrb[0].mxu0
      %v9213 = vadd.f32 0.0, %v9212
      %v9214 = vpop.f32.mrb[0].mxu0
      %v9215 = vadd.f32 0.0, %v9214
      %9216 = vmatprep.mubr.bf16.mxu0 %v8985
      %9217 = vmatmul.mubr.bf16.gmra.mrb[0].mxu0 %v8756
      %v9218 = vpop.f32.mrb[0].mxu0
      %v9219 = vadd.f32 0.0, %v9218
      %v9220 = vpop.f32.mrb[0].mxu0
      %v9221 = vadd.f32 0.0, %v9220
      %v9222 = vpop.f32.mrb[0].mxu0
      %v9223 = vadd.f32 0.0, %v9222
      %v9224 = vpop.f32.mrb[0].mxu0
      %v9225 = vadd.f32 0.0, %v9224
      %9226 = vmatprep.mubr.bf16.mxu0 %v8988
      %9227 = vmatmul.mubr.bf16.gmra.mrb[0].mxu0 %v8758
      %v9228 = vpop.f32.mrb[0].mxu0
      %v9229 = vadd.f32 0.0, %v9228
      %v9230 = vpop.f32.mrb[0].mxu0
      %v9231 = vadd.f32 0.0, %v9230
      %v9232 = vpop.f32.mrb[0].mxu0
      %v9233 = vadd.f32 0.0, %v9232
      %v9234 = vpop.f32.mrb[0].mxu0
      %v9235 = vadd.f32 0.0, %v9234
      %9236 = vmatprep.mubr.bf16.mxu0 %v8991
      %9237 = vmatmul.mubr.bf16.gmra.mrb[0].mxu0 %v8760
      %v9238 = vpop.f32.mrb[0].mxu0
      %v9239 = vadd.f32 0.0, %v9238
      %v9240 = vpop.f32.mrb[0].mxu0
      %v9241 = vadd.f32 0.0, %v9240
      %v9242 = vpop.f32.mrb[0].mxu0
      %v9243 = vadd.f32 0.0, %v9242
      %v9244 = vpop.f32.mrb[0].mxu0
      %v9245 = vadd.f32 0.0, %v9244
      %9246 = vmatprep.mubr.bf16.mxu0 %v8994
      %9247 = vmatmul.mubr.bf16.gmra.mrb[0].mxu0 %v8762
      %v9248 = vpop.f32.mrb[0].mxu0
      %v9249 = vadd.f32 0.0, %v9248
      %v9250 = vpop.f32.mrb[0].mxu0
      %v9251 = vadd.f32 0.0, %v9250
      %v9252 = vpop.f32.mrb[0].mxu0
      %v9253 = vadd.f32 0.0, %v9252
      %v9254 = vpop.f32.mrb[0].mxu0
      %v9255 = vadd.f32 0.0, %v9254
      %9256 = vmatprep.mubr.bf16.mxu0 %v8997
      %9257 = vmatmul.mubr.bf16.gmra.mrb[0].mxu0 %v8764
      %v9258 = vpop.f32.mrb[0].mxu0
      %v9259 = vadd.f32 0.0, %v9258
      %v9260 = vpop.f32.mrb[0].mxu0
      %v9261 = vadd.f32 0.0, %v9260
      %v9262 = vpop.f32.mrb[0].mxu0
      %v9263 = vadd.f32 0.0, %v9262
      %v9264 = vpop.f32.mrb[0].mxu0
      %v9265 = vadd.f32 0.0, %v9264
      %9266 = vmatprep.mubr.bf16.mxu0 %v9000
      %9267 = vmatmul.mubr.bf16.gmra.mrb[0].mxu0 %v8766
      %v9268 = vpop.f32.mrb[0].mxu0
      %v9269 = vadd.f32 0.0, %v9268
      %v9270 = vpop.f32.mrb[0].mxu0
      %v9271 = vadd.f32 0.0, %v9270
      %v9272 = vpop.f32.mrb[0].mxu0
      %v9273 = vadd.f32 0.0, %v9272
      %v9274 = vpop.f32.mrb[0].mxu0
      %v9275 = vadd.f32 0.0, %v9274
      %9276 = vmatprep.mubr.bf16.mxu0 %v9003
      %9277 = vmatmul.mubr.bf16.gmra.mrb[0].mxu0 %v8768
      %v9278 = vpop.f32.mrb[0].mxu0
      %v9279 = vadd.f32 0.0, %v9278
      %v9280 = vpop.f32.mrb[0].mxu0
      %v9281 = vadd.f32 0.0, %v9280
      %v9282 = vpop.f32.mrb[0].mxu0
      %v9283 = vadd.f32 0.0, %v9282
      %v9284 = vpop.f32.mrb[0].mxu0
      %v9285 = vadd.f32 0.0, %v9284
      %9286 = vmatprep.mubr.bf16.mxu0 %v9006
      %9287 = vmatmul.mubr.bf16.gmra.mrb[0].mxu0 %v8770
      %v9288 = vpop.f32.mrb[0].mxu0
      %v9289 = vadd.f32 0.0, %v9288
      %v9290 = vpop.f32.mrb[0].mxu0
      %v9291 = vadd.f32 0.0, %v9290
      %v9292 = vpop.f32.mrb[0].mxu0
      %v9293 = vadd.f32 0.0, %v9292
      %v9294 = vpop.f32.mrb[0].mxu0
      %v9295 = vadd.f32 0.0, %v9294
      %9296 = vmatprep.mubr.bf16.mxu0 %v9009
      %9297 = vmatmul.mubr.bf16.gmra.mrb[0].mxu0 %v8772
      %v9298 = vpop.f32.mrb[0].mxu0
      %v9299 = vadd.f32 0.0, %v9298
      %v9300 = vpop.f32.mrb[0].mxu0
      %v9301 = vadd.f32 0.0, %v9300
      %v9302 = vpop.f32.mrb[0].mxu0
      %v9303 = vadd.f32 0.0, %v9302
      %v9304 = vpop.f32.mrb[0].mxu0
      %v9305 = vadd.f32 0.0, %v9304
      %9306 = vmatprep.mubr.bf16.mxu0 %v9012
      %9307 = vmatmul.mubr.bf16.gmra.mrb[0].mxu0 %v8774
      %v9308 = vpop.f32.mrb[0].mxu0
      %v9309 = vadd.f32 0.0, %v9308
      %v9310 = vpop.f32.mrb[0].mxu0
      %v9311 = vadd.f32 0.0, %v9310
      %v9312 = vpop.f32.mrb[0].mxu0
      %v9313 = vadd.f32 0.0, %v9312
      %v9314 = vpop.f32.mrb[0].mxu0
      %v9315 = vadd.f32 0.0, %v9314
      %9316 = vmatprep.mubr.bf16.mxu0 %v9015
      %9317 = vmatmul.mubr.bf16.gmra.mrb[0].mxu0 %v8776
      %v9318 = vpop.f32.mrb[0].mxu0
      %v9319 = vadd.f32 0.0, %v9318
      %v9320 = vpop.f32.mrb[0].mxu0
      %v9321 = vadd.f32 0.0, %v9320
      %v9322 = vpop.f32.mrb[0].mxu0
      %v9323 = vadd.f32 0.0, %v9322
      %v9324 = vpop.f32.mrb[0].mxu0
      %v9325 = vadd.f32 0.0, %v9324
      %9326 = vmatprep.mubr.bf16.mxu0 %v9018
      %9327 = vmatmul.mubr.bf16.gmra.mrb[0].mxu0 %v8778
      %v9328 = vpop.f32.mrb[0].mxu0
      %v9329 = vadd.f32 0.0, %v9328
      %v9330 = vpop.f32.mrb[0].mxu0
      %v9331 = vadd.f32 0.0, %v9330
      %v9332 = vpop.f32.mrb[0].mxu0
      %v9333 = vadd.f32 0.0, %v9332
      %v9334 = vpop.f32.mrb[0].mxu0
      %v9335 = vadd.f32 0.0, %v9334
      %9336 = vmatprep.mubr.bf16.mxu0 %v9021
      %9337 = vmatmul.mubr.bf16.gmra.mrb[0].mxu0 %v8780
      %v9338 = vpop.f32.mrb[0].mxu0
      %v9339 = vadd.f32 0.0, %v9338
      %v9340 = vpop.f32.mrb[0].mxu0
      %v9341 = vadd.f32 0.0, %v9340
      %v9342 = vpop.f32.mrb[0].mxu0
      %v9343 = vadd.f32 0.0, %v9342
      %v9344 = vpop.f32.mrb[0].mxu0
      %v9345 = vadd.f32 0.0, %v9344
      %9346 = vmatprep.mubr.bf16.mxu0 %v9024
      %9347 = vmatmul.mubr.bf16.gmra.mrb[0].mxu0 %v8782
      %v9348 = vpop.f32.mrb[0].mxu0
      %v9349 = vadd.f32 0.0, %v9348
      %v9350 = vpop.f32.mrb[0].mxu0
      %v9351 = vadd.f32 0.0, %v9350
      %v9352 = vpop.f32.mrb[0].mxu0
      %v9353 = vadd.f32 0.0, %v9352
      %v9354 = vpop.f32.mrb[0].mxu0
      %v9355 = vadd.f32 0.0, %v9354
      %9356 = vmatprep.mubr.bf16.mxu0 %v9027
      %9357 = vmatmul.mubr.bf16.gmra.mrb[0].mxu0 %v8784
      %v9358 = vpop.f32.mrb[0].mxu0
      %v9359 = vadd.f32 0.0, %v9358
      %v9360 = vpop.f32.mrb[0].mxu0
      %v9361 = vadd.f32 0.0, %v9360
      %v9362 = vpop.f32.mrb[0].mxu0
      %v9363 = vadd.f32 0.0, %v9362
      %v9364 = vpop.f32.mrb[0].mxu0
      %v9365 = vadd.f32 0.0, %v9364
      %9366 = vmatprep.mubr.bf16.mxu0 %v9030
      %9367 = vmatmul.mubr.bf16.gmra.mrb[0].mxu0 %v8786
      %v9368 = vpop.f32.mrb[0].mxu0
      %v9369 = vadd.f32 0.0, %v9368
      %v9370 = vpop.f32.mrb[0].mxu0
      %v9371 = vadd.f32 0.0, %v9370
      %v9372 = vpop.f32.mrb[0].mxu0
      %v9373 = vadd.f32 0.0, %v9372
      %v9374 = vpop.f32.mrb[0].mxu0
      %v9375 = vadd.f32 0.0, %v9374
      %9376 = vmatprep.mubr.bf16.mxu0 %v9033
      %9377 = vmatmul.mubr.bf16.gmra.mrb[0].mxu0 %v8788
      %v9378 = vpop.f32.mrb[0].mxu0
      %v9379 = vadd.f32 0.0, %v9378
      %v9380 = vpop.f32.mrb[0].mxu0
      %v9381 = vadd.f32 0.0, %v9380
      %v9382 = vpop.f32.mrb[0].mxu0
      %v9383 = vadd.f32 0.0, %v9382
      %v9384 = vpop.f32.mrb[0].mxu0
      %v9385 = vadd.f32 0.0, %v9384
      %9386 = vmatprep.mubr.bf16.mxu0 %v9036
      %9387 = vmatmul.mubr.bf16.gmra.mrb[0].mxu0 %v8790
      %v9388 = vpop.f32.mrb[0].mxu0
      %v9389 = vadd.f32 0.0, %v9388
      %v9390 = vpop.f32.mrb[0].mxu0
      %v9391 = vadd.f32 0.0, %v9390
      %v9392 = vpop.f32.mrb[0].mxu0
      %v9393 = vadd.f32 0.0, %v9392
      %v9394 = vpop.f32.mrb[0].mxu0
      %v9395 = vadd.f32 0.0, %v9394
      %9396 = vdwg.mxu0
      %v9397 = vld [vmem:[#allocation2] sm:$0x1]
      %v9399 = vlaneseq
      %v9400 = vshrl.u32 %v9399, 7
      %v9401 = vsub.s32 0, %v9400
      %v9402 = vrot.slane %v9397, %v9401
      %9403 = vrot.lane.b32.xlu0 %v9402, 72
      %v9404 = vpop.permute.xlu0 %9403
      %v9406 = vadd.f32 %v9081, %v9404
      %v9407 = vadd.f32 %v9085, %v9404
      %v9408 = vadd.f32 %v9091, %v9404
      %v9409 = vadd.f32 %v9095, %v9404
      %v9410 = vadd.f32 %v9101, %v9404
      %v9411 = vadd.f32 %v9105, %v9404
      %v9412 = vadd.f32 %v9111, %v9404
      %v9413 = vadd.f32 %v9115, %v9404
      %v9414 = vadd.f32 %v9121, %v9404
      %v9415 = vadd.f32 %v9125, %v9404
      %v9416 = vadd.f32 %v9131, %v9404
      %v9417 = vadd.f32 %v9135, %v9404
      %v9418 = vadd.f32 %v9141, %v9404
      %v9419 = vadd.f32 %v9145, %v9404
      %v9420 = vadd.f32 %v9151, %v9404
      %v9421 = vadd.f32 %v9155, %v9404
      %v9422 = vadd.f32 %v9161, %v9404
      %v9423 = vadd.f32 %v9165, %v9404
      %v9424 = vadd.f32 %v9171, %v9404
      %v9425 = vadd.f32 %v9175, %v9404
      %v9426 = vadd.f32 %v9181, %v9404
      %v9427 = vadd.f32 %v9185, %v9404
      %v9428 = vadd.f32 %v9191, %v9404
      %v9429 = vadd.f32 %v9195, %v9404
      %v9430 = vadd.f32 %v9201, %v9404
      %v9431 = vadd.f32 %v9205, %v9404
      %v9432 = vadd.f32 %v9211, %v9404
      %v9433 = vadd.f32 %v9215, %v9404
      %v9434 = vadd.f32 %v9221, %v9404
      %v9435 = vadd.f32 %v9225, %v9404
      %v9436 = vadd.f32 %v9231, %v9404
      %v9437 = vadd.f32 %v9235, %v9404
      %v9438 = vadd.f32 %v9241, %v9404
      %v9439 = vadd.f32 %v9245, %v9404
      %v9440 = vadd.f32 %v9251, %v9404
      %v9441 = vadd.f32 %v9255, %v9404
      %v9442 = vadd.f32 %v9261, %v9404
      %v9443 = vadd.f32 %v9265, %v9404
      %v9444 = vadd.f32 %v9271, %v9404
      %v9445 = vadd.f32 %v9275, %v9404
      %v9446 = vadd.f32 %v9281, %v9404
      %v9447 = vadd.f32 %v9285, %v9404
      %v9448 = vadd.f32 %v9291, %v9404
      %v9449 = vadd.f32 %v9295, %v9404
      %v9450 = vadd.f32 %v9301, %v9404
      %v9451 = vadd.f32 %v9305, %v9404
      %v9452 = vadd.f32 %v9311, %v9404
      %v9453 = vadd.f32 %v9315, %v9404
      %v9454 = vadd.f32 %v9321, %v9404
      %v9455 = vadd.f32 %v9325, %v9404
      %v9456 = vadd.f32 %v9331, %v9404
      %v9457 = vadd.f32 %v9335, %v9404
      %v9458 = vadd.f32 %v9341, %v9404
      %v9459 = vadd.f32 %v9345, %v9404
      %v9460 = vadd.f32 %v9351, %v9404
      %v9461 = vadd.f32 %v9355, %v9404
      %v9462 = vadd.f32 %v9361, %v9404
      %v9463 = vadd.f32 %v9365, %v9404
      %v9464 = vadd.f32 %v9371, %v9404
      %v9465 = vadd.f32 %v9375, %v9404
      %v9466 = vadd.f32 %v9381, %v9404
      %v9467 = vadd.f32 %v9385, %v9404
      %v9468 = vadd.f32 %v9391, %v9404
      %v9469 = vadd.f32 %v9395, %v9404
      %v9470 = vmax.f32 %v9406, 0.0
      %v9471 = vmax.f32 %v9407, 0.0
      %v9472 = vmax.f32 %v9408, 0.0
      %v9473 = vmax.f32 %v9409, 0.0
      %v9474 = vmax.f32 %v9410, 0.0
      %v9475 = vmax.f32 %v9411, 0.0
      %v9476 = vmax.f32 %v9412, 0.0
      %v9477 = vmax.f32 %v9413, 0.0
      %v9478 = vmax.f32 %v9414, 0.0
      %v9479 = vmax.f32 %v9415, 0.0
      %v9480 = vmax.f32 %v9416, 0.0
      %v9481 = vmax.f32 %v9417, 0.0
      %v9482 = vmax.f32 %v9418, 0.0
      %v9483 = vmax.f32 %v9419, 0.0
      %v9484 = vmax.f32 %v9420, 0.0
      %v9485 = vmax.f32 %v9421, 0.0
      %v9486 = vmax.f32 %v9422, 0.0
      %v9487 = vmax.f32 %v9423, 0.0
      %v9488 = vmax.f32 %v9424, 0.0
      %v9489 = vmax.f32 %v9425, 0.0
      %v9490 = vmax.f32 %v9426, 0.0
      %v9491 = vmax.f32 %v9427, 0.0
      %v9492 = vmax.f32 %v9428, 0.0
      %v9493 = vmax.f32 %v9429, 0.0
      %v9494 = vmax.f32 %v9430, 0.0
      %v9495 = vmax.f32 %v9431, 0.0
      %v9496 = vmax.f32 %v9432, 0.0
      %v9497 = vmax.f32 %v9433, 0.0
      %v9498 = vmax.f32 %v9434, 0.0
      %v9499 = vmax.f32 %v9435, 0.0
      %v9500 = vmax.f32 %v9436, 0.0
      %v9501 = vmax.f32 %v9437, 0.0
      %v9502 = vmax.f32 %v9438, 0.0
      %v9503 = vmax.f32 %v9439, 0.0
      %v9504 = vmax.f32 %v9440, 0.0
      %v9505 = vmax.f32 %v9441, 0.0
      %v9506 = vmax.f32 %v9442, 0.0
      %v9507 = vmax.f32 %v9443, 0.0
      %v9508 = vmax.f32 %v9444, 0.0
      %v9509 = vmax.f32 %v9445, 0.0
      %v9510 = vmax.f32 %v9446, 0.0
      %v9511 = vmax.f32 %v9447, 0.0
      %v9512 = vmax.f32 %v9448, 0.0
      %v9513 = vmax.f32 %v9449, 0.0
      %v9514 = vmax.f32 %v9450, 0.0
      %v9515 = vmax.f32 %v9451, 0.0
      %v9516 = vmax.f32 %v9452, 0.0
      %v9517 = vmax.f32 %v9453, 0.0
      %v9518 = vmax.f32 %v9454, 0.0
      %v9519 = vmax.f32 %v9455, 0.0
      %v9520 = vmax.f32 %v9456, 0.0
      %v9521 = vmax.f32 %v9457, 0.0
      %v9522 = vmax.f32 %v9458, 0.0
      %v9523 = vmax.f32 %v9459, 0.0
      %v9524 = vmax.f32 %v9460, 0.0
      %v9525 = vmax.f32 %v9461, 0.0
      %v9526 = vmax.f32 %v9462, 0.0
      %v9527 = vmax.f32 %v9463, 0.0
      %v9528 = vmax.f32 %v9464, 0.0
      %v9529 = vmax.f32 %v9465, 0.0
      %v9530 = vmax.f32 %v9466, 0.0
      %v9531 = vmax.f32 %v9467, 0.0
      %v9532 = vmax.f32 %v9468, 0.0
      %v9533 = vmax.f32 %v9469, 0.0
      %v9534 = vld [vmem:[%s27] sm:$0xff]
      %v9535 = vld [vmem:[%s27 + $0x8] sm:$0xff]
      %v9538 = vunpack.c.l.b16 %v9534
      %v9539 = vunpack.c.h.b16 %v9534
      %v9540 = vunpack.c.l.b16 %v9535
      %v9541 = vunpack.c.h.b16 %v9535
      %v9542 = vpack.c.b16 %v9540, %v9538
      %v9543 = vpack.c.b16 %v9541, %v9539
      %vm9544 = vcmask 121856
      %v9546 = vsel %vm9544, %v1091, 0
      %v9549 = vsel %vm9544, %v1092, 0
      %v9552 = vsel %vm9544, %v1093, 0
      %v9555 = vsel %vm9544, %v1094, 0
      %v9558 = vsel %vm9544, %v1095, 0
      %v9561 = vsel %vm9544, %v1096, 0
      %v9564 = vsel %vm9544, %v1097, 0
      %v9567 = vsel %vm9544, %v1098, 0
      %v9570 = vsel %vm9544, %v1099, 0
      %v9573 = vsel %vm9544, %v1100, 0
      %v9576 = vsel %vm9544, %v1101, 0
      %v9579 = vsel %vm9544, %v1102, 0
      %v9582 = vsel %vm9544, %v1103, 0
      %v9585 = vsel %vm9544, %v1104, 0
      %v9588 = vsel %vm9544, %v1105, 0
      %v9591 = vsel %vm9544, %v1106, 0
      %v9594 = vsel %vm9544, %v1107, 0
      %v9597 = vsel %vm9544, %v1108, 0
      %v9600 = vsel %vm9544, %v1109, 0
      %v9603 = vsel %vm9544, %v1110, 0
      %v9606 = vsel %vm9544, %v1111, 0
      %v9609 = vsel %vm9544, %v1112, 0
      %v9612 = vsel %vm9544, %v1113, 0
      %v9615 = vsel %vm9544, %v1114, 0
      %v9618 = vsel %vm9544, %v1115, 0
      %v9621 = vsel %vm9544, %v1116, 0
      %v9624 = vsel %vm9544, %v1117, 0
      %v9627 = vsel %vm9544, %v1118, 0
      %v9630 = vsel %vm9544, %v1119, 0
      %v9633 = vsel %vm9544, %v1120, 0
      %v9636 = vsel %vm9544, %v1121, 0
      %v9639 = vsel %vm9544, %v1122, 0
      %vm9641 = vcmask 1046528
      %vm9642 = vcmask 1047552
      %v9643 = vsel %vm9641, 4294967295, 65535
      %v9644 = vsel %vm9642, %v9643, 0
      %v9646 = vand.u32 %v9542, %v9644
      %v9649 = vand.u32 %v9543, %v9644
      %9651 = vmatprep.subr.bf16.mxu0 %v9649
      %9652 = vmatpush1.bf16.msra.mxu0 %v9646
      %9653 = vmatprep.subr.bf16.mxu0 0
      %9654 = vmatpush1.bf16.msra.mxu0 0
      %9655 = vmatprep.subr.bf16.mxu0 0
      %9656 = vmatpush1.bf16.msra.mxu0 0
      %9657 = vmatprep.subr.bf16.mxu0 0
      %9658 = vmatpush1.bf16.msra.mxu0 0
      %9659 = vmatprep.subr.bf16.mxu0 0
      %9660 = vmatpush1.bf16.msra.mxu0 0
      %9661 = vmatprep.subr.bf16.mxu0 0
      %9662 = vmatpush1.bf16.msra.mxu0 0
      %9663 = vmatprep.subr.bf16.mxu0 0
      %9664 = vmatpush1.bf16.msra.mxu0 0
      %9665 = vmatprep.subr.bf16.mxu0 0
      %9666 = vmatpush1.bf16.msra.mxu0 0
      %9667 = vmatprep.subr.bf16.mxu0 0
      %9668 = vmatpush1.bf16.msra.mxu0 0
      %9669 = vmatprep.subr.bf16.mxu0 0
      %9670 = vmatpush1.bf16.msra.mxu0 0
      %9671 = vmatprep.subr.bf16.mxu0 0
      %9672 = vmatpush1.bf16.msra.mxu0 0
      %9673 = vmatprep.subr.bf16.mxu0 0
      %9674 = vmatpush1.bf16.msra.mxu0 0
      %9675 = vmatprep.subr.bf16.mxu0 0
      %9676 = vmatpush1.bf16.msra.mxu0 0
      %9677 = vmatprep.subr.bf16.mxu0 0
      %9678 = vmatpush1.bf16.msra.mxu0 0
      %9679 = vmatprep.subr.bf16.mxu0 0
      %9680 = vmatpush1.bf16.msra.mxu0 0
      %9681 = vmatprep.subr.bf16.mxu0 0
      %9682 = vmatpush1.bf16.msra.mxu0 0
      %9683 = vmatprep.mubr.bf16.mxu0 0
      %9684 = vmatmul.mubr.bf16.gmra.mrb[0].mxu0 %v9546
      %v9685 = vpop.f32.mrb[0].mxu0
      %v9686 = vadd.f32 0.0, %v9685
      %v9687 = vpop.f32.mrb[0].mxu0
      %v9688 = vadd.f32 0.0, %v9687
      %v9689 = vpop.f32.mrb[0].mxu0
      %v9690 = vadd.f32 0.0, %v9689
      %v9691 = vpop.f32.mrb[0].mxu0
      %v9692 = vadd.f32 0.0, %v9691
      %9693 = vmatprep.mubr.bf16.mxu0 0
      %9694 = vmatmul.mubr.bf16.gmra.mrb[0].mxu0 %v9549
      %v9695 = vpop.f32.mrb[0].mxu0
      %v9696 = vadd.f32 0.0, %v9695
      %v9697 = vpop.f32.mrb[0].mxu0
      %v9698 = vadd.f32 0.0, %v9697
      %v9699 = vpop.f32.mrb[0].mxu0
      %v9700 = vadd.f32 0.0, %v9699
      %v9701 = vpop.f32.mrb[0].mxu0
      %v9702 = vadd.f32 0.0, %v9701
      %9703 = vmatprep.mubr.bf16.mxu0 0
      %9704 = vmatmul.mubr.bf16.gmra.mrb[0].mxu0 %v9552
      %v9705 = vpop.f32.mrb[0].mxu0
      %v9706 = vadd.f32 0.0, %v9705
      %v9707 = vpop.f32.mrb[0].mxu0
      %v9708 = vadd.f32 0.0, %v9707
      %v9709 = vpop.f32.mrb[0].mxu0
      %v9710 = vadd.f32 0.0, %v9709
      %v9711 = vpop.f32.mrb[0].mxu0
      %v9712 = vadd.f32 0.0, %v9711
      %9713 = vmatprep.mubr.bf16.mxu0 0
      %9714 = vmatmul.mubr.bf16.gmra.mrb[0].mxu0 %v9555
      %v9715 = vpop.f32.mrb[0].mxu0
      %v9716 = vadd.f32 0.0, %v9715
      %v9717 = vpop.f32.mrb[0].mxu0
      %v9718 = vadd.f32 0.0, %v9717
      %v9719 = vpop.f32.mrb[0].mxu0
      %v9720 = vadd.f32 0.0, %v9719
      %v9721 = vpop.f32.mrb[0].mxu0
      %v9722 = vadd.f32 0.0, %v9721
      %9723 = vmatprep.mubr.bf16.mxu0 0
      %9724 = vmatmul.mubr.bf16.gmra.mrb[0].mxu0 %v9558
      %v9725 = vpop.f32.mrb[0].mxu0
      %v9726 = vadd.f32 0.0, %v9725
      %v9727 = vpop.f32.mrb[0].mxu0
      %v9728 = vadd.f32 0.0, %v9727
      %v9729 = vpop.f32.mrb[0].mxu0
      %v9730 = vadd.f32 0.0, %v9729
      %v9731 = vpop.f32.mrb[0].mxu0
      %v9732 = vadd.f32 0.0, %v9731
      %9733 = vmatprep.mubr.bf16.mxu0 0
      %9734 = vmatmul.mubr.bf16.gmra.mrb[0].mxu0 %v9561
      %v9735 = vpop.f32.mrb[0].mxu0
      %v9736 = vadd.f32 0.0, %v9735
      %v9737 = vpop.f32.mrb[0].mxu0
      %v9738 = vadd.f32 0.0, %v9737
      %v9739 = vpop.f32.mrb[0].mxu0
      %v9740 = vadd.f32 0.0, %v9739
      %v9741 = vpop.f32.mrb[0].mxu0
      %v9742 = vadd.f32 0.0, %v9741
      %9743 = vmatprep.mubr.bf16.mxu0 0
      %9744 = vmatmul.mubr.bf16.gmra.mrb[0].mxu0 %v9564
      %v9745 = vpop.f32.mrb[0].mxu0
      %v9746 = vadd.f32 0.0, %v9745
      %v9747 = vpop.f32.mrb[0].mxu0
      %v9748 = vadd.f32 0.0, %v9747
      %v9749 = vpop.f32.mrb[0].mxu0
      %v9750 = vadd.f32 0.0, %v9749
      %v9751 = vpop.f32.mrb[0].mxu0
      %v9752 = vadd.f32 0.0, %v9751
      %9753 = vmatprep.mubr.bf16.mxu0 0
      %9754 = vmatmul.mubr.bf16.gmra.mrb[0].mxu0 %v9567
      %v9755 = vpop.f32.mrb[0].mxu0
      %v9756 = vadd.f32 0.0, %v9755
      %v9757 = vpop.f32.mrb[0].mxu0
      %v9758 = vadd.f32 0.0, %v9757
      %v9759 = vpop.f32.mrb[0].mxu0
      %v9760 = vadd.f32 0.0, %v9759
      %v9761 = vpop.f32.mrb[0].mxu0
      %v9762 = vadd.f32 0.0, %v9761
      %9763 = vmatprep.mubr.bf16.mxu0 0
      %9764 = vmatmul.mubr.bf16.gmra.mrb[0].mxu0 %v9570
      %v9765 = vpop.f32.mrb[0].mxu0
      %v9766 = vadd.f32 0.0, %v9765
      %v9767 = vpop.f32.mrb[0].mxu0
      %v9768 = vadd.f32 0.0, %v9767
      %v9769 = vpop.f32.mrb[0].mxu0
      %v9770 = vadd.f32 0.0, %v9769
      %v9771 = vpop.f32.mrb[0].mxu0
      %v9772 = vadd.f32 0.0, %v9771
      %9773 = vmatprep.mubr.bf16.mxu0 0
      %9774 = vmatmul.mubr.bf16.gmra.mrb[0].mxu0 %v9573
      %v9775 = vpop.f32.mrb[0].mxu0
      %v9776 = vadd.f32 0.0, %v9775
      %v9777 = vpop.f32.mrb[0].mxu0
      %v9778 = vadd.f32 0.0, %v9777
      %v9779 = vpop.f32.mrb[0].mxu0
      %v9780 = vadd.f32 0.0, %v9779
      %v9781 = vpop.f32.mrb[0].mxu0
      %v9782 = vadd.f32 0.0, %v9781
      %9783 = vmatprep.mubr.bf16.mxu0 0
      %9784 = vmatmul.mubr.bf16.gmra.mrb[0].mxu0 %v9576
      %v9785 = vpop.f32.mrb[0].mxu0
      %v9786 = vadd.f32 0.0, %v9785
      %v9787 = vpop.f32.mrb[0].mxu0
      %v9788 = vadd.f32 0.0, %v9787
      %v9789 = vpop.f32.mrb[0].mxu0
      %v9790 = vadd.f32 0.0, %v9789
      %v9791 = vpop.f32.mrb[0].mxu0
      %v9792 = vadd.f32 0.0, %v9791
      %9793 = vmatprep.mubr.bf16.mxu0 0
      %9794 = vmatmul.mubr.bf16.gmra.mrb[0].mxu0 %v9579
      %v9795 = vpop.f32.mrb[0].mxu0
      %v9796 = vadd.f32 0.0, %v9795
      %v9797 = vpop.f32.mrb[0].mxu0
      %v9798 = vadd.f32 0.0, %v9797
      %v9799 = vpop.f32.mrb[0].mxu0
      %v9800 = vadd.f32 0.0, %v9799
      %v9801 = vpop.f32.mrb[0].mxu0
      %v9802 = vadd.f32 0.0, %v9801
      %9803 = vmatprep.mubr.bf16.mxu0 0
      %9804 = vmatmul.mubr.bf16.gmra.mrb[0].mxu0 %v9582
      %v9805 = vpop.f32.mrb[0].mxu0
      %v9806 = vadd.f32 0.0, %v9805
      %v9807 = vpop.f32.mrb[0].mxu0
      %v9808 = vadd.f32 0.0, %v9807
      %v9809 = vpop.f32.mrb[0].mxu0
      %v9810 = vadd.f32 0.0, %v9809
      %v9811 = vpop.f32.mrb[0].mxu0
      %v9812 = vadd.f32 0.0, %v9811
      %9813 = vmatprep.mubr.bf16.mxu0 0
      %9814 = vmatmul.mubr.bf16.gmra.mrb[0].mxu0 %v9585
      %v9815 = vpop.f32.mrb[0].mxu0
      %v9816 = vadd.f32 0.0, %v9815
      %v9817 = vpop.f32.mrb[0].mxu0
      %v9818 = vadd.f32 0.0, %v9817
      %v9819 = vpop.f32.mrb[0].mxu0
      %v9820 = vadd.f32 0.0, %v9819
      %v9821 = vpop.f32.mrb[0].mxu0
      %v9822 = vadd.f32 0.0, %v9821
      %9823 = vmatprep.mubr.bf16.mxu0 0
      %9824 = vmatmul.mubr.bf16.gmra.mrb[0].mxu0 %v9588
      %v9825 = vpop.f32.mrb[0].mxu0
      %v9826 = vadd.f32 0.0, %v9825
      %v9827 = vpop.f32.mrb[0].mxu0
      %v9828 = vadd.f32 0.0, %v9827
      %v9829 = vpop.f32.mrb[0].mxu0
      %v9830 = vadd.f32 0.0, %v9829
      %v9831 = vpop.f32.mrb[0].mxu0
      %v9832 = vadd.f32 0.0, %v9831
      %9833 = vmatprep.mubr.bf16.mxu0 0
      %9834 = vmatmul.mubr.bf16.gmra.mrb[0].mxu0 %v9591
      %v9835 = vpop.f32.mrb[0].mxu0
      %v9836 = vadd.f32 0.0, %v9835
      %v9837 = vpop.f32.mrb[0].mxu0
      %v9838 = vadd.f32 0.0, %v9837
      %v9839 = vpop.f32.mrb[0].mxu0
      %v9840 = vadd.f32 0.0, %v9839
      %v9841 = vpop.f32.mrb[0].mxu0
      %v9842 = vadd.f32 0.0, %v9841
      %9843 = vmatprep.mubr.bf16.mxu0 0
      %9844 = vmatmul.mubr.bf16.gmra.mrb[0].mxu0 %v9594
      %v9845 = vpop.f32.mrb[0].mxu0
      %v9846 = vadd.f32 0.0, %v9845
      %v9847 = vpop.f32.mrb[0].mxu0
      %v9848 = vadd.f32 0.0, %v9847
      %v9849 = vpop.f32.mrb[0].mxu0
      %v9850 = vadd.f32 0.0, %v9849
      %v9851 = vpop.f32.mrb[0].mxu0
      %v9852 = vadd.f32 0.0, %v9851
      %9853 = vmatprep.mubr.bf16.mxu0 0
      %9854 = vmatmul.mubr.bf16.gmra.mrb[0].mxu0 %v9597
      %v9855 = vpop.f32.mrb[0].mxu0
      %v9856 = vadd.f32 0.0, %v9855
      %v9857 = vpop.f32.mrb[0].mxu0
      %v9858 = vadd.f32 0.0, %v9857
      %v9859 = vpop.f32.mrb[0].mxu0
      %v9860 = vadd.f32 0.0, %v9859
      %v9861 = vpop.f32.mrb[0].mxu0
      %v9862 = vadd.f32 0.0, %v9861
      %9863 = vmatprep.mubr.bf16.mxu0 0
      %9864 = vmatmul.mubr.bf16.gmra.mrb[0].mxu0 %v9600
      %v9865 = vpop.f32.mrb[0].mxu0
      %v9866 = vadd.f32 0.0, %v9865
      %v9867 = vpop.f32.mrb[0].mxu0
      %v9868 = vadd.f32 0.0, %v9867
      %v9869 = vpop.f32.mrb[0].mxu0
      %v9870 = vadd.f32 0.0, %v9869
      %v9871 = vpop.f32.mrb[0].mxu0
      %v9872 = vadd.f32 0.0, %v9871
      %9873 = vmatprep.mubr.bf16.mxu0 0
      %9874 = vmatmul.mubr.bf16.gmra.mrb[0].mxu0 %v9603
      %v9875 = vpop.f32.mrb[0].mxu0
      %v9876 = vadd.f32 0.0, %v9875
      %v9877 = vpop.f32.mrb[0].mxu0
      %v9878 = vadd.f32 0.0, %v9877
      %v9879 = vpop.f32.mrb[0].mxu0
      %v9880 = vadd.f32 0.0, %v9879
      %v9881 = vpop.f32.mrb[0].mxu0
      %v9882 = vadd.f32 0.0, %v9881
      %9883 = vmatprep.mubr.bf16.mxu0 0
      %9884 = vmatmul.mubr.bf16.gmra.mrb[0].mxu0 %v9606
      %v9885 = vpop.f32.mrb[0].mxu0
      %v9886 = vadd.f32 0.0, %v9885
      %v9887 = vpop.f32.mrb[0].mxu0
      %v9888 = vadd.f32 0.0, %v9887
      %v9889 = vpop.f32.mrb[0].mxu0
      %v9890 = vadd.f32 0.0, %v9889
      %v9891 = vpop.f32.mrb[0].mxu0
      %v9892 = vadd.f32 0.0, %v9891
      %9893 = vmatprep.mubr.bf16.mxu0 0
      %9894 = vmatmul.mubr.bf16.gmra.mrb[0].mxu0 %v9609
      %v9895 = vpop.f32.mrb[0].mxu0
      %v9896 = vadd.f32 0.0, %v9895
      %v9897 = vpop.f32.mrb[0].mxu0
      %v9898 = vadd.f32 0.0, %v9897
      %v9899 = vpop.f32.mrb[0].mxu0
      %v9900 = vadd.f32 0.0, %v9899
      %v9901 = vpop.f32.mrb[0].mxu0
      %v9902 = vadd.f32 0.0, %v9901
      %9903 = vmatprep.mubr.bf16.mxu0 0
      %9904 = vmatmul.mubr.bf16.gmra.mrb[0].mxu0 %v9612
      %v9905 = vpop.f32.mrb[0].mxu0
      %v9906 = vadd.f32 0.0, %v9905
      %v9907 = vpop.f32.mrb[0].mxu0
      %v9908 = vadd.f32 0.0, %v9907
      %v9909 = vpop.f32.mrb[0].mxu0
      %v9910 = vadd.f32 0.0, %v9909
      %v9911 = vpop.f32.mrb[0].mxu0
      %v9912 = vadd.f32 0.0, %v9911
      %9913 = vmatprep.mubr.bf16.mxu0 0
      %9914 = vmatmul.mubr.bf16.gmra.mrb[0].mxu0 %v9615
      %v9915 = vpop.f32.mrb[0].mxu0
      %v9916 = vadd.f32 0.0, %v9915
      %v9917 = vpop.f32.mrb[0].mxu0
      %v9918 = vadd.f32 0.0, %v9917
      %v9919 = vpop.f32.mrb[0].mxu0
      %v9920 = vadd.f32 0.0, %v9919
      %v9921 = vpop.f32.mrb[0].mxu0
      %v9922 = vadd.f32 0.0, %v9921
      %9923 = vmatprep.mubr.bf16.mxu0 0
      %9924 = vmatmul.mubr.bf16.gmra.mrb[0].mxu0 %v9618
      %v9925 = vpop.f32.mrb[0].mxu0
      %v9926 = vadd.f32 0.0, %v9925
      %v9927 = vpop.f32.mrb[0].mxu0
      %v9928 = vadd.f32 0.0, %v9927
      %v9929 = vpop.f32.mrb[0].mxu0
      %v9930 = vadd.f32 0.0, %v9929
      %v9931 = vpop.f32.mrb[0].mxu0
      %v9932 = vadd.f32 0.0, %v9931
      %9933 = vmatprep.mubr.bf16.mxu0 0
      %9934 = vmatmul.mubr.bf16.gmra.mrb[0].mxu0 %v9621
      %v9935 = vpop.f32.mrb[0].mxu0
      %v9936 = vadd.f32 0.0, %v9935
      %v9937 = vpop.f32.mrb[0].mxu0
      %v9938 = vadd.f32 0.0, %v9937
      %v9939 = vpop.f32.mrb[0].mxu0
      %v9940 = vadd.f32 0.0, %v9939
      %v9941 = vpop.f32.mrb[0].mxu0
      %v9942 = vadd.f32 0.0, %v9941
      %9943 = vmatprep.mubr.bf16.mxu0 0
      %9944 = vmatmul.mubr.bf16.gmra.mrb[0].mxu0 %v9624
      %v9945 = vpop.f32.mrb[0].mxu0
      %v9946 = vadd.f32 0.0, %v9945
      %v9947 = vpop.f32.mrb[0].mxu0
      %v9948 = vadd.f32 0.0, %v9947
      %v9949 = vpop.f32.mrb[0].mxu0
      %v9950 = vadd.f32 0.0, %v9949
      %v9951 = vpop.f32.mrb[0].mxu0
      %v9952 = vadd.f32 0.0, %v9951
      %9953 = vmatprep.mubr.bf16.mxu0 0
      %9954 = vmatmul.mubr.bf16.gmra.mrb[0].mxu0 %v9627
      %v9955 = vpop.f32.mrb[0].mxu0
      %v9956 = vadd.f32 0.0, %v9955
      %v9957 = vpop.f32.mrb[0].mxu0
      %v9958 = vadd.f32 0.0, %v9957
      %v9959 = vpop.f32.mrb[0].mxu0
      %v9960 = vadd.f32 0.0, %v9959
      %v9961 = vpop.f32.mrb[0].mxu0
      %v9962 = vadd.f32 0.0, %v9961
      %9963 = vmatprep.mubr.bf16.mxu0 0
      %9964 = vmatmul.mubr.bf16.gmra.mrb[0].mxu0 %v9630
      %v9965 = vpop.f32.mrb[0].mxu0
      %v9966 = vadd.f32 0.0, %v9965
      %v9967 = vpop.f32.mrb[0].mxu0
      %v9968 = vadd.f32 0.0, %v9967
      %v9969 = vpop.f32.mrb[0].mxu0
      %v9970 = vadd.f32 0.0, %v9969
      %v9971 = vpop.f32.mrb[0].mxu0
      %v9972 = vadd.f32 0.0, %v9971
      %9973 = vmatprep.mubr.bf16.mxu0 0
      %9974 = vmatmul.mubr.bf16.gmra.mrb[0].mxu0 %v9633
      %v9975 = vpop.f32.mrb[0].mxu0
      %v9976 = vadd.f32 0.0, %v9975
      %v9977 = vpop.f32.mrb[0].mxu0
      %v9978 = vadd.f32 0.0, %v9977
      %v9979 = vpop.f32.mrb[0].mxu0
      %v9980 = vadd.f32 0.0, %v9979
      %v9981 = vpop.f32.mrb[0].mxu0
      %v9982 = vadd.f32 0.0, %v9981
      %9983 = vmatprep.mubr.bf16.mxu0 0
      %9984 = vmatmul.mubr.bf16.gmra.mrb[0].mxu0 %v9636
      %v9985 = vpop.f32.mrb[0].mxu0
      %v9986 = vadd.f32 0.0, %v9985
      %v9987 = vpop.f32.mrb[0].mxu0
      %v9988 = vadd.f32 0.0, %v9987
      %v9989 = vpop.f32.mrb[0].mxu0
      %v9990 = vadd.f32 0.0, %v9989
      %v9991 = vpop.f32.mrb[0].mxu0
      %v9992 = vadd.f32 0.0, %v9991
      %9993 = vmatprep.mubr.bf16.mxu0 0
      %9994 = vmatmul.mubr.bf16.gmra.mrb[0].mxu0 %v9639
      %v9995 = vpop.f32.mrb[0].mxu0
      %v9996 = vadd.f32 0.0, %v9995
      %v9997 = vpop.f32.mrb[0].mxu0
      %v9998 = vadd.f32 0.0, %v9997
      %v9999 = vpop.f32.mrb[0].mxu0
      %v10000 = vadd.f32 0.0, %v9999
      %v10001 = vpop.f32.mrb[0].mxu0
      %v10002 = vadd.f32 0.0, %v10001
      %10003 = vdwg.mxu0
      %v10004 = vadd.f32 %v9079, %v9686
      %v10005 = vadd.f32 %v9081, %v9688
      %v10006 = vadd.f32 %v9083, %v9690
      %v10007 = vadd.f32 %v9085, %v9692
      %v10008 = vadd.f32 %v9089, %v9696
      %v10009 = vadd.f32 %v9091, %v9698
      %v10010 = vadd.f32 %v9093, %v9700
      %v10011 = vadd.f32 %v9095, %v9702
      %v10012 = vadd.f32 %v9099, %v9706
      %v10013 = vadd.f32 %v9101, %v9708
      %v10014 = vadd.f32 %v9103, %v9710
      %v10015 = vadd.f32 %v9105, %v9712
      %v10016 = vadd.f32 %v9109, %v9716
      %v10017 = vadd.f32 %v9111, %v9718
      %v10018 = vadd.f32 %v9113, %v9720
      %v10019 = vadd.f32 %v9115, %v9722
      %v10020 = vadd.f32 %v9119, %v9726
      %v10021 = vadd.f32 %v9121, %v9728
      %v10022 = vadd.f32 %v9123, %v9730
      %v10023 = vadd.f32 %v9125, %v9732
      %v10024 = vadd.f32 %v9129, %v9736
      %v10025 = vadd.f32 %v9131, %v9738
      %v10026 = vadd.f32 %v9133, %v9740
      %v10027 = vadd.f32 %v9135, %v9742
      %v10028 = vadd.f32 %v9139, %v9746
      %v10029 = vadd.f32 %v9141, %v9748
      %v10030 = vadd.f32 %v9143, %v9750
      %v10031 = vadd.f32 %v9145, %v9752
      %v10032 = vadd.f32 %v9149, %v9756
      %v10033 = vadd.f32 %v9151, %v9758
      %v10034 = vadd.f32 %v9153, %v9760
      %v10035 = vadd.f32 %v9155, %v9762
      %v10036 = vadd.f32 %v9159, %v9766
      %v10037 = vadd.f32 %v9161, %v9768
      %v10038 = vadd.f32 %v9163, %v9770
      %v10039 = vadd.f32 %v9165, %v9772
      %v10040 = vadd.f32 %v9169, %v9776
      %v10041 = vadd.f32 %v9171, %v9778
      %v10042 = vadd.f32 %v9173, %v9780
      %v10043 = vadd.f32 %v9175, %v9782
      %v10044 = vadd.f32 %v9179, %v9786
      %v10045 = vadd.f32 %v9181, %v9788
      %v10046 = vadd.f32 %v9183, %v9790
      %v10047 = vadd.f32 %v9185, %v9792
      %v10048 = vadd.f32 %v9189, %v9796
      %v10049 = vadd.f32 %v9191, %v9798
      %v10050 = vadd.f32 %v9193, %v9800
      %v10051 = vadd.f32 %v9195, %v9802
      %v10052 = vadd.f32 %v9199, %v9806
      %v10053 = vadd.f32 %v9201, %v9808
      %v10054 = vadd.f32 %v9203, %v9810
      %v10055 = vadd.f32 %v9205, %v9812
      %v10056 = vadd.f32 %v9209, %v9816
      %v10057 = vadd.f32 %v9211, %v9818
      %v10058 = vadd.f32 %v9213, %v9820
      %v10059 = vadd.f32 %v9215, %v9822
      %v10060 = vadd.f32 %v9219, %v9826
      %v10061 = vadd.f32 %v9221, %v9828
      %v10062 = vadd.f32 %v9223, %v9830
      %v10063 = vadd.f32 %v9225, %v9832
      %v10064 = vadd.f32 %v9229, %v9836
      %v10065 = vadd.f32 %v9231, %v9838
      %v10066 = vadd.f32 %v9233, %v9840
      %v10067 = vadd.f32 %v9235, %v9842
      %v10068 = vadd.f32 %v9239, %v9846
      %v10069 = vadd.f32 %v9241, %v9848
      %v10070 = vadd.f32 %v9243, %v9850
      %v10071 = vadd.f32 %v9245, %v9852
      %v10072 = vadd.f32 %v9249, %v9856
      %v10073 = vadd.f32 %v9251, %v9858
      %v10074 = vadd.f32 %v9253, %v9860
      %v10075 = vadd.f32 %v9255, %v9862
      %v10076 = vadd.f32 %v9259, %v9866
      %v10077 = vadd.f32 %v9261, %v9868
      %v10078 = vadd.f32 %v9263, %v9870
      %v10079 = vadd.f32 %v9265, %v9872
      %v10080 = vadd.f32 %v9269, %v9876
      %v10081 = vadd.f32 %v9271, %v9878
      %v10082 = vadd.f32 %v9273, %v9880
      %v10083 = vadd.f32 %v9275, %v9882
      %v10084 = vadd.f32 %v9279, %v9886
      %v10085 = vadd.f32 %v9281, %v9888
      %v10086 = vadd.f32 %v9283, %v9890
      %v10087 = vadd.f32 %v9285, %v9892
      %v10088 = vadd.f32 %v9289, %v9896
      %v10089 = vadd.f32 %v9291, %v9898
      %v10090 = vadd.f32 %v9293, %v9900
      %v10091 = vadd.f32 %v9295, %v9902
      %v10092 = vadd.f32 %v9299, %v9906
      %v10093 = vadd.f32 %v9301, %v9908
      %v10094 = vadd.f32 %v9303, %v9910
      %v10095 = vadd.f32 %v9305, %v9912
      %v10096 = vadd.f32 %v9309, %v9916
      %v10097 = vadd.f32 %v9311, %v9918
      %v10098 = vadd.f32 %v9313, %v9920
      %v10099 = vadd.f32 %v9315, %v9922
      %v10100 = vadd.f32 %v9319, %v9926
      %v10101 = vadd.f32 %v9321, %v9928
      %v10102 = vadd.f32 %v9323, %v9930
      %v10103 = vadd.f32 %v9325, %v9932
      %v10104 = vadd.f32 %v9329, %v9936
      %v10105 = vadd.f32 %v9331, %v9938
      %v10106 = vadd.f32 %v9333, %v9940
      %v10107 = vadd.f32 %v9335, %v9942
      %v10108 = vadd.f32 %v9339, %v9946
      %v10109 = vadd.f32 %v9341, %v9948
      %v10110 = vadd.f32 %v9343, %v9950
      %v10111 = vadd.f32 %v9345, %v9952
      %v10112 = vadd.f32 %v9349, %v9956
      %v10113 = vadd.f32 %v9351, %v9958
      %v10114 = vadd.f32 %v9353, %v9960
      %v10115 = vadd.f32 %v9355, %v9962
      %v10116 = vadd.f32 %v9359, %v9966
      %v10117 = vadd.f32 %v9361, %v9968
      %v10118 = vadd.f32 %v9363, %v9970
      %v10119 = vadd.f32 %v9365, %v9972
      %v10120 = vadd.f32 %v9369, %v9976
      %v10121 = vadd.f32 %v9371, %v9978
      %v10122 = vadd.f32 %v9373, %v9980
      %v10123 = vadd.f32 %v9375, %v9982
      %v10124 = vadd.f32 %v9379, %v9986
      %v10125 = vadd.f32 %v9381, %v9988
      %v10126 = vadd.f32 %v9383, %v9990
      %v10127 = vadd.f32 %v9385, %v9992
      %v10128 = vadd.f32 %v9389, %v9996
      %v10129 = vadd.f32 %v9391, %v9998
      %v10130 = vadd.f32 %v9393, %v10000
      %v10131 = vadd.f32 %v9395, %v10002
      %v10132 = vld [vmem:[%s51] sm:$0x3]
      %v10134 = vlaneseq
      %v10135 = vshrl.u32 %v10134, 7
      %v10136 = vsub.s32 0, %v10135
      %v10137 = vrot.slane %v10132, %v10136
      %v10138 = vlaneseq
      %v10139 = vshrl.u32 %v10138, 7
      %v10140 = vsub.s32 1, %v10139
      %v10141 = vrot.slane %v10132, %v10140
      %v10144 = vadd.f32 %v10004, %v10137
      %v10145 = vadd.f32 %v10005, %v10141
      %v10146 = vadd.f32 %v10006, %v10137
      %v10147 = vadd.f32 %v10007, %v10141
      %v10148 = vadd.f32 %v10008, %v10137
      %v10149 = vadd.f32 %v10009, %v10141
      %v10150 = vadd.f32 %v10010, %v10137
      %v10151 = vadd.f32 %v10011, %v10141
      %v10152 = vadd.f32 %v10012, %v10137
      %v10153 = vadd.f32 %v10013, %v10141
      %v10154 = vadd.f32 %v10014, %v10137
      %v10155 = vadd.f32 %v10015, %v10141
      %v10156 = vadd.f32 %v10016, %v10137
      %v10157 = vadd.f32 %v10017, %v10141
      %v10158 = vadd.f32 %v10018, %v10137
      %v10159 = vadd.f32 %v10019, %v10141
      %v10160 = vadd.f32 %v10020, %v10137
      %v10161 = vadd.f32 %v10021, %v10141
      %v10162 = vadd.f32 %v10022, %v10137
      %v10163 = vadd.f32 %v10023, %v10141
      %v10164 = vadd.f32 %v10024, %v10137
      %v10165 = vadd.f32 %v10025, %v10141
      %v10166 = vadd.f32 %v10026, %v10137
      %v10167 = vadd.f32 %v10027, %v10141
      %v10168 = vadd.f32 %v10028, %v10137
      %v10169 = vadd.f32 %v10029, %v10141
      %v10170 = vadd.f32 %v10030, %v10137
      %v10171 = vadd.f32 %v10031, %v10141
      %v10172 = vadd.f32 %v10032, %v10137
      %v10173 = vadd.f32 %v10033, %v10141
      %v10174 = vadd.f32 %v10034, %v10137
      %v10175 = vadd.f32 %v10035, %v10141
      %v10176 = vadd.f32 %v10036, %v10137
      %v10177 = vadd.f32 %v10037, %v10141
      %v10178 = vadd.f32 %v10038, %v10137
      %v10179 = vadd.f32 %v10039, %v10141
      %v10180 = vadd.f32 %v10040, %v10137
      %v10181 = vadd.f32 %v10041, %v10141
      %v10182 = vadd.f32 %v10042, %v10137
      %v10183 = vadd.f32 %v10043, %v10141
      %v10184 = vadd.f32 %v10044, %v10137
      %v10185 = vadd.f32 %v10045, %v10141
      %v10186 = vadd.f32 %v10046, %v10137
      %v10187 = vadd.f32 %v10047, %v10141
      %v10188 = vadd.f32 %v10048, %v10137
      %v10189 = vadd.f32 %v10049, %v10141
      %v10190 = vadd.f32 %v10050, %v10137
      %v10191 = vadd.f32 %v10051, %v10141
      %v10192 = vadd.f32 %v10052, %v10137
      %v10193 = vadd.f32 %v10053, %v10141
      %v10194 = vadd.f32 %v10054, %v10137
      %v10195 = vadd.f32 %v10055, %v10141
      %v10196 = vadd.f32 %v10056, %v10137
      %v10197 = vadd.f32 %v10057, %v10141
      %v10198 = vadd.f32 %v10058, %v10137
      %v10199 = vadd.f32 %v10059, %v10141
      %v10200 = vadd.f32 %v10060, %v10137
      %v10201 = vadd.f32 %v10061, %v10141
      %v10202 = vadd.f32 %v10062, %v10137
      %v10203 = vadd.f32 %v10063, %v10141
      %v10204 = vadd.f32 %v10064, %v10137
      %v10205 = vadd.f32 %v10065, %v10141
      %v10206 = vadd.f32 %v10066, %v10137
      %v10207 = vadd.f32 %v10067, %v10141
      %v10208 = vadd.f32 %v10068, %v10137
      %v10209 = vadd.f32 %v10069, %v10141
      %v10210 = vadd.f32 %v10070, %v10137
      %v10211 = vadd.f32 %v10071, %v10141
      %v10212 = vadd.f32 %v10072, %v10137
      %v10213 = vadd.f32 %v10073, %v10141
      %v10214 = vadd.f32 %v10074, %v10137
      %v10215 = vadd.f32 %v10075, %v10141
      %v10216 = vadd.f32 %v10076, %v10137
      %v10217 = vadd.f32 %v10077, %v10141
      %v10218 = vadd.f32 %v10078, %v10137
      %v10219 = vadd.f32 %v10079, %v10141
      %v10220 = vadd.f32 %v10080, %v10137
      %v10221 = vadd.f32 %v10081, %v10141
      %v10222 = vadd.f32 %v10082, %v10137
      %v10223 = vadd.f32 %v10083, %v10141
      %v10224 = vadd.f32 %v10084, %v10137
      %v10225 = vadd.f32 %v10085, %v10141
      %v10226 = vadd.f32 %v10086, %v10137
      %v10227 = vadd.f32 %v10087, %v10141
      %v10228 = vadd.f32 %v10088, %v10137
      %v10229 = vadd.f32 %v10089, %v10141
      %v10230 = vadd.f32 %v10090, %v10137
      %v10231 = vadd.f32 %v10091, %v10141
      %v10232 = vadd.f32 %v10092, %v10137
      %v10233 = vadd.f32 %v10093, %v10141
      %v10234 = vadd.f32 %v10094, %v10137
      %v10235 = vadd.f32 %v10095, %v10141
      %v10236 = vadd.f32 %v10096, %v10137
      %v10237 = vadd.f32 %v10097, %v10141
      %v10238 = vadd.f32 %v10098, %v10137
      %v10239 = vadd.f32 %v10099, %v10141
      %v10240 = vadd.f32 %v10100, %v10137
      %v10241 = vadd.f32 %v10101, %v10141
      %v10242 = vadd.f32 %v10102, %v10137
      %v10243 = vadd.f32 %v10103, %v10141
      %v10244 = vadd.f32 %v10104, %v10137
      %v10245 = vadd.f32 %v10105, %v10141
      %v10246 = vadd.f32 %v10106, %v10137
      %v10247 = vadd.f32 %v10107, %v10141
      %v10248 = vadd.f32 %v10108, %v10137
      %v10249 = vadd.f32 %v10109, %v10141
      %v10250 = vadd.f32 %v10110, %v10137
      %v10251 = vadd.f32 %v10111, %v10141
      %v10252 = vadd.f32 %v10112, %v10137
      %v10253 = vadd.f32 %v10113, %v10141
      %v10254 = vadd.f32 %v10114, %v10137
      %v10255 = vadd.f32 %v10115, %v10141
      %v10256 = vadd.f32 %v10116, %v10137
      %v10257 = vadd.f32 %v10117, %v10141
      %v10258 = vadd.f32 %v10118, %v10137
      %v10259 = vadd.f32 %v10119, %v10141
      %v10260 = vadd.f32 %v10120, %v10137
      %v10261 = vadd.f32 %v10121, %v10141
      %v10262 = vadd.f32 %v10122, %v10137
      %v10263 = vadd.f32 %v10123, %v10141
      %v10264 = vadd.f32 %v10124, %v10137
      %v10265 = vadd.f32 %v10125, %v10141
      %v10266 = vadd.f32 %v10126, %v10137
      %v10267 = vadd.f32 %v10127, %v10141
      %v10268 = vadd.f32 %v10128, %v10137
      %v10269 = vadd.f32 %v10129, %v10141
      %v10270 = vadd.f32 %v10130, %v10137
      %v10271 = vadd.f32 %v10131, %v10141
      %v10272 = vmax.f32 %v10144, 0.0
      %v10273 = vmax.f32 %v10145, 0.0
      %v10274 = vmax.f32 %v10146, 0.0
      %v10275 = vmax.f32 %v10147, 0.0
      %v10276 = vmax.f32 %v10148, 0.0
      %v10277 = vmax.f32 %v10149, 0.0
      %v10278 = vmax.f32 %v10150, 0.0
      %v10279 = vmax.f32 %v10151, 0.0
      %v10280 = vmax.f32 %v10152, 0.0
      %v10281 = vmax.f32 %v10153, 0.0
      %v10282 = vmax.f32 %v10154, 0.0
      %v10283 = vmax.f32 %v10155, 0.0
      %v10284 = vmax.f32 %v10156, 0.0
      %v10285 = vmax.f32 %v10157, 0.0
      %v10286 = vmax.f32 %v10158, 0.0
      %v10287 = vmax.f32 %v10159, 0.0
      %v10288 = vmax.f32 %v10160, 0.0
      %v10289 = vmax.f32 %v10161, 0.0
      %v10290 = vmax.f32 %v10162, 0.0
      %v10291 = vmax.f32 %v10163, 0.0
      %v10292 = vmax.f32 %v10164, 0.0
      %v10293 = vmax.f32 %v10165, 0.0
      %v10294 = vmax.f32 %v10166, 0.0
      %v10295 = vmax.f32 %v10167, 0.0
      %v10296 = vmax.f32 %v10168, 0.0
      %v10297 = vmax.f32 %v10169, 0.0
      %v10298 = vmax.f32 %v10170, 0.0
      %v10299 = vmax.f32 %v10171, 0.0
      %v10300 = vmax.f32 %v10172, 0.0
      %v10301 = vmax.f32 %v10173, 0.0
      %v10302 = vmax.f32 %v10174, 0.0
      %v10303 = vmax.f32 %v10175, 0.0
      %v10304 = vmax.f32 %v10176, 0.0
      %v10305 = vmax.f32 %v10177, 0.0
      %v10306 = vmax.f32 %v10178, 0.0
      %v10307 = vmax.f32 %v10179, 0.0
      %v10308 = vmax.f32 %v10180, 0.0
      %v10309 = vmax.f32 %v10181, 0.0
      %v10310 = vmax.f32 %v10182, 0.0
      %v10311 = vmax.f32 %v10183, 0.0
      %v10312 = vmax.f32 %v10184, 0.0
      %v10313 = vmax.f32 %v10185, 0.0
      %v10314 = vmax.f32 %v10186, 0.0
      %v10315 = vmax.f32 %v10187, 0.0
      %v10316 = vmax.f32 %v10188, 0.0
      %v10317 = vmax.f32 %v10189, 0.0
      %v10318 = vmax.f32 %v10190, 0.0
      %v10319 = vmax.f32 %v10191, 0.0
      %v10320 = vmax.f32 %v10192, 0.0
      %v10321 = vmax.f32 %v10193, 0.0
      %v10322 = vmax.f32 %v10194, 0.0
      %v10323 = vmax.f32 %v10195, 0.0
      %v10324 = vmax.f32 %v10196, 0.0
      %v10325 = vmax.f32 %v10197, 0.0
      %v10326 = vmax.f32 %v10198, 0.0
      %v10327 = vmax.f32 %v10199, 0.0
      %v10328 = vmax.f32 %v10200, 0.0
      %v10329 = vmax.f32 %v10201, 0.0
      %v10330 = vmax.f32 %v10202, 0.0
      %v10331 = vmax.f32 %v10203, 0.0
      %v10332 = vmax.f32 %v10204, 0.0
      %v10333 = vmax.f32 %v10205, 0.0
      %v10334 = vmax.f32 %v10206, 0.0
      %v10335 = vmax.f32 %v10207, 0.0
      %v10336 = vmax.f32 %v10208, 0.0
      %v10337 = vmax.f32 %v10209, 0.0
      %v10338 = vmax.f32 %v10210, 0.0
      %v10339 = vmax.f32 %v10211, 0.0
      %v10340 = vmax.f32 %v10212, 0.0
      %v10341 = vmax.f32 %v10213, 0.0
      %v10342 = vmax.f32 %v10214, 0.0
      %v10343 = vmax.f32 %v10215, 0.0
      %v10344 = vmax.f32 %v10216, 0.0
      %v10345 = vmax.f32 %v10217, 0.0
      %v10346 = vmax.f32 %v10218, 0.0
      %v10347 = vmax.f32 %v10219, 0.0
      %v10348 = vmax.f32 %v10220, 0.0
      %v10349 = vmax.f32 %v10221, 0.0
      %v10350 = vmax.f32 %v10222, 0.0
      %v10351 = vmax.f32 %v10223, 0.0
      %v10352 = vmax.f32 %v10224, 0.0
      %v10353 = vmax.f32 %v10225, 0.0
      %v10354 = vmax.f32 %v10226, 0.0
      %v10355 = vmax.f32 %v10227, 0.0
      %v10356 = vmax.f32 %v10228, 0.0
      %v10357 = vmax.f32 %v10229, 0.0
      %v10358 = vmax.f32 %v10230, 0.0
      %v10359 = vmax.f32 %v10231, 0.0
      %v10360 = vmax.f32 %v10232, 0.0
      %v10361 = vmax.f32 %v10233, 0.0
      %v10362 = vmax.f32 %v10234, 0.0
      %v10363 = vmax.f32 %v10235, 0.0
      %v10364 = vmax.f32 %v10236, 0.0
      %v10365 = vmax.f32 %v10237, 0.0
      %v10366 = vmax.f32 %v10238, 0.0
      %v10367 = vmax.f32 %v10239, 0.0
      %v10368 = vmax.f32 %v10240, 0.0
      %v10369 = vmax.f32 %v10241, 0.0
      %v10370 = vmax.f32 %v10242, 0.0
      %v10371 = vmax.f32 %v10243, 0.0
      %v10372 = vmax.f32 %v10244, 0.0
      %v10373 = vmax.f32 %v10245, 0.0
      %v10374 = vmax.f32 %v10246, 0.0
      %v10375 = vmax.f32 %v10247, 0.0
      %v10376 = vmax.f32 %v10248, 0.0
      %v10377 = vmax.f32 %v10249, 0.0
      %v10378 = vmax.f32 %v10250, 0.0
      %v10379 = vmax.f32 %v10251, 0.0
      %v10380 = vmax.f32 %v10252, 0.0
      %v10381 = vmax.f32 %v10253, 0.0
      %v10382 = vmax.f32 %v10254, 0.0
      %v10383 = vmax.f32 %v10255, 0.0
      %v10384 = vmax.f32 %v10256, 0.0
      %v10385 = vmax.f32 %v10257, 0.0
      %v10386 = vmax.f32 %v10258, 0.0
      %v10387 = vmax.f32 %v10259, 0.0
      %v10388 = vmax.f32 %v10260, 0.0
      %v10389 = vmax.f32 %v10261, 0.0
      %v10390 = vmax.f32 %v10262, 0.0
      %v10391 = vmax.f32 %v10263, 0.0
      %v10392 = vmax.f32 %v10264, 0.0
      %v10393 = vmax.f32 %v10265, 0.0
      %v10394 = vmax.f32 %v10266, 0.0
      %v10395 = vmax.f32 %v10267, 0.0
      %v10396 = vmax.f32 %v10268, 0.0
      %v10397 = vmax.f32 %v10269, 0.0
      %v10398 = vmax.f32 %v10270, 0.0
      %v10399 = vmax.f32 %v10271, 0.0
      %v10400 = vpack.c.bf16 %v10274, %v10272
      %v10401 = vpack.c.bf16 %v10275, %v10273
      %v10402 = vpack.c.bf16 %v10278, %v10276
      %v10403 = vpack.c.bf16 %v10279, %v10277
      %v10404 = vpack.c.bf16 %v10282, %v10280
      %v10405 = vpack.c.bf16 %v10283, %v10281
      %v10406 = vpack.c.bf16 %v10286, %v10284
      %v10407 = vpack.c.bf16 %v10287, %v10285
      %v10408 = vpack.c.bf16 %v10290, %v10288
      %v10409 = vpack.c.bf16 %v10291, %v10289
      %v10410 = vpack.c.bf16 %v10294, %v10292
      %v10411 = vpack.c.bf16 %v10295, %v10293
      %v10412 = vpack.c.bf16 %v10298, %v10296
      %v10413 = vpack.c.bf16 %v10299, %v10297
      %v10414 = vpack.c.bf16 %v10302, %v10300
      %v10415 = vpack.c.bf16 %v10303, %v10301
      %v10416 = vpack.c.bf16 %v10306, %v10304
      %v10417 = vpack.c.bf16 %v10307, %v10305
      %v10418 = vpack.c.bf16 %v10310, %v10308
      %v10419 = vpack.c.bf16 %v10311, %v10309
      %v10420 = vpack.c.bf16 %v10314, %v10312
      %v10421 = vpack.c.bf16 %v10315, %v10313
      %v10422 = vpack.c.bf16 %v10318, %v10316
      %v10423 = vpack.c.bf16 %v10319, %v10317
      %v10424 = vpack.c.bf16 %v10322, %v10320
      %v10425 = vpack.c.bf16 %v10323, %v10321
      %v10426 = vpack.c.bf16 %v10326, %v10324
      %v10427 = vpack.c.bf16 %v10327, %v10325
      %v10428 = vpack.c.bf16 %v10330, %v10328
      %v10429 = vpack.c.bf16 %v10331, %v10329
      %v10430 = vpack.c.bf16 %v10334, %v10332
      %v10431 = vpack.c.bf16 %v10335, %v10333
      %v10432 = vpack.c.bf16 %v10338, %v10336
      %v10433 = vpack.c.bf16 %v10339, %v10337
      %v10434 = vpack.c.bf16 %v10342, %v10340
      %v10435 = vpack.c.bf16 %v10343, %v10341
      %v10436 = vpack.c.bf16 %v10346, %v10344
      %v10437 = vpack.c.bf16 %v10347, %v10345
      %v10438 = vpack.c.bf16 %v10350, %v10348
      %v10439 = vpack.c.bf16 %v10351, %v10349
      %v10440 = vpack.c.bf16 %v10354, %v10352
      %v10441 = vpack.c.bf16 %v10355, %v10353
      %v10442 = vpack.c.bf16 %v10358, %v10356
      %v10443 = vpack.c.bf16 %v10359, %v10357
      %v10444 = vpack.c.bf16 %v10362, %v10360
      %v10445 = vpack.c.bf16 %v10363, %v10361
      %v10446 = vpack.c.bf16 %v10366, %v10364
      %v10447 = vpack.c.bf16 %v10367, %v10365
      %v10448 = vpack.c.bf16 %v10370, %v10368
      %v10449 = vpack.c.bf16 %v10371, %v10369
      %v10450 = vpack.c.bf16 %v10374, %v10372
      %v10451 = vpack.c.bf16 %v10375, %v10373
      %v10452 = vpack.c.bf16 %v10378, %v10376
      %v10453 = vpack.c.bf16 %v10379, %v10377
      %v10454 = vpack.c.bf16 %v10382, %v10380
      %v10455 = vpack.c.bf16 %v10383, %v10381
      %v10456 = vpack.c.bf16 %v10386, %v10384
      %v10457 = vpack.c.bf16 %v10387, %v10385
      %v10458 = vpack.c.bf16 %v10390, %v10388
      %v10459 = vpack.c.bf16 %v10391, %v10389
      %v10460 = vpack.c.bf16 %v10394, %v10392
      %v10461 = vpack.c.bf16 %v10395, %v10393
      %v10462 = vpack.c.bf16 %v10398, %v10396
      %v10463 = vpack.c.bf16 %v10399, %v10397
      %v10464 = vld [vmem:[%s29] sm:$0xff]
      %v10465 = vld [vmem:[%s29 + $0x8] sm:$0xff]
      %v10466 = vld [vmem:[%s29 + $0x10] sm:$0xff]
      %v10467 = vld [vmem:[%s29 + $0x18] sm:$0xff]
      %v10468 = vld [vmem:[%s29 + $0x20] sm:$0xff]
      %v10469 = vld [vmem:[%s29 + $0x28] sm:$0xff]
      %v10470 = vld [vmem:[%s29 + $0x30] sm:$0xff]
      %v10471 = vld [vmem:[%s29 + $0x38] sm:$0xff]
      %v10472 = vld [vmem:[%s29 + $0x40] sm:$0xff]
      %v10473 = vld [vmem:[%s29 + $0x48] sm:$0xff]
      %v10474 = vld [vmem:[%s29 + $0x50] sm:$0xff]
      %v10475 = vld [vmem:[%s29 + $0x58] sm:$0xff]
      %v10476 = vld [vmem:[%s29 + $0x60] sm:$0xff]
      %v10477 = vld [vmem:[%s29 + $0x68] sm:$0xff]
      %v10478 = vld [vmem:[%s29 + $0x70] sm:$0xff]
      %v10479 = vld [vmem:[%s29 + $0x78] sm:$0xff]
      %v10480 = vld [vmem:[%s29 + $0x80] sm:$0xff]
      %v10481 = vld [vmem:[%s29 + $0x88] sm:$0xff]
      %v10482 = vld [vmem:[%s29 + $0x90] sm:$0xff]
      %v10483 = vld [vmem:[%s29 + $0x98] sm:$0xff]
      %v10484 = vld [vmem:[%s29 + $0xa0] sm:$0xff]
      %v10485 = vld [vmem:[%s29 + $0xa8] sm:$0xff]
      %v10486 = vld [vmem:[%s29 + $0xb0] sm:$0xff]
      %v10487 = vld [vmem:[%s29 + $0xb8] sm:$0xff]
      %v10488 = vld [vmem:[%s29 + $0xc0] sm:$0xff]
      %v10489 = vld [vmem:[%s53] sm:$0x3]
      %v10491 = vlaneseq
      %v10492 = vshrl.u32 %v10491, 7
      %v10493 = vsub.s32 0, %v10492
      %v10494 = vrot.slane %v10489, %v10493
      %v10495 = vlaneseq
      %v10496 = vshrl.u32 %v10495, 7
      %v10497 = vsub.s32 1, %v10496
      %v10498 = vrot.slane %v10489, %v10497
      %v10526 = vunpack.c.l.b16 %v10464
      %v10527 = vunpack.c.h.b16 %v10464
      %v10528 = vunpack.c.l.b16 %v10465
      %v10529 = vunpack.c.h.b16 %v10465
      %v10530 = vunpack.c.l.b16 %v10466
      %v10531 = vunpack.c.h.b16 %v10466
      %v10532 = vunpack.c.l.b16 %v10467
      %v10533 = vunpack.c.h.b16 %v10467
      %v10534 = vunpack.c.l.b16 %v10468
      %v10535 = vunpack.c.h.b16 %v10468
      %v10536 = vunpack.c.l.b16 %v10469
      %v10537 = vunpack.c.h.b16 %v10469
      %v10538 = vunpack.c.l.b16 %v10470
      %v10539 = vunpack.c.h.b16 %v10470
      %v10540 = vunpack.c.l.b16 %v10471
      %v10541 = vunpack.c.h.b16 %v10471
      %v10542 = vunpack.c.l.b16 %v10472
      %v10543 = vunpack.c.h.b16 %v10472
      %v10544 = vunpack.c.l.b16 %v10473
      %v10545 = vunpack.c.h.b16 %v10473
      %v10546 = vunpack.c.l.b16 %v10474
      %v10547 = vunpack.c.h.b16 %v10474
      %v10548 = vunpack.c.l.b16 %v10475
      %v10549 = vunpack.c.h.b16 %v10475
      %v10550 = vunpack.c.l.b16 %v10476
      %v10551 = vunpack.c.h.b16 %v10476
      %v10552 = vunpack.c.l.b16 %v10477
      %v10553 = vunpack.c.h.b16 %v10477
      %v10554 = vunpack.c.l.b16 %v10478
      %v10555 = vunpack.c.h.b16 %v10478
      %v10556 = vunpack.c.l.b16 %v10479
      %v10557 = vunpack.c.h.b16 %v10479
      %v10558 = vunpack.c.l.b16 %v10480
      %v10559 = vunpack.c.h.b16 %v10480
      %v10560 = vunpack.c.l.b16 %v10481
      %v10561 = vunpack.c.h.b16 %v10481
      %v10562 = vunpack.c.l.b16 %v10482
      %v10563 = vunpack.c.h.b16 %v10482
      %v10564 = vunpack.c.l.b16 %v10483
      %v10565 = vunpack.c.h.b16 %v10483
      %v10566 = vunpack.c.l.b16 %v10484
      %v10567 = vunpack.c.h.b16 %v10484
      %v10568 = vunpack.c.l.b16 %v10485
      %v10569 = vunpack.c.h.b16 %v10485
      %v10570 = vunpack.c.l.b16 %v10486
      %v10571 = vunpack.c.h.b16 %v10486
      %v10572 = vunpack.c.l.b16 %v10487
      %v10573 = vunpack.c.h.b16 %v10487
      %v10574 = vunpack.c.l.b16 %v10488
      %v10575 = vunpack.c.h.b16 %v10488
      %v10576 = vpack.c.b16 %v10528, %v10526
      %v10577 = vpack.c.b16 %v10529, %v10527
      %v10578 = vpack.c.b16 %v10532, %v10530
      %v10579 = vpack.c.b16 %v10533, %v10531
      %v10580 = vpack.c.b16 %v10536, %v10534
      %v10581 = vpack.c.b16 %v10537, %v10535
      %v10582 = vpack.c.b16 %v10540, %v10538
      %v10583 = vpack.c.b16 %v10541, %v10539
      %v10584 = vpack.c.b16 %v10544, %v10542
      %v10585 = vpack.c.b16 %v10545, %v10543
      %v10586 = vpack.c.b16 %v10548, %v10546
      %v10587 = vpack.c.b16 %v10549, %v10547
      %v10588 = vpack.c.b16 %v10552, %v10550
      %v10589 = vpack.c.b16 %v10553, %v10551
      %v10590 = vpack.c.b16 %v10556, %v10554
      %v10591 = vpack.c.b16 %v10557, %v10555
      %v10592 = vpack.c.b16 %v10560, %v10558
      %v10593 = vpack.c.b16 %v10561, %v10559
      %v10594 = vpack.c.b16 %v10564, %v10562
      %v10595 = vpack.c.b16 %v10565, %v10563
      %v10596 = vpack.c.b16 %v10568, %v10566
      %v10597 = vpack.c.b16 %v10569, %v10567
      %v10598 = vpack.c.b16 %v10572, %v10570
      %v10599 = vpack.c.b16 %v10573, %v10571
      %v10600 = vpack.c.b16 %v10574, %v10574
      %v10601 = vpack.c.b16 %v10575, %v10575
      %v10627 = vsel %vm1971, %v10401, 0
      %v10630 = vsel %vm1971, %v10403, 0
      %v10633 = vsel %vm1971, %v10405, 0
      %v10636 = vsel %vm1971, %v10407, 0
      %v10639 = vsel %vm1971, %v10409, 0
      %v10642 = vsel %vm1971, %v10411, 0
      %v10645 = vsel %vm1971, %v10413, 0
      %v10648 = vsel %vm1971, %v10415, 0
      %v10651 = vsel %vm1971, %v10417, 0
      %v10654 = vsel %vm1971, %v10419, 0
      %v10657 = vsel %vm1971, %v10421, 0
      %v10660 = vsel %vm1971, %v10423, 0
      %v10663 = vsel %vm1971, %v10425, 0
      %v10666 = vsel %vm1971, %v10427, 0
      %v10669 = vsel %vm1971, %v10429, 0
      %v10672 = vsel %vm1971, %v10431, 0
      %v10675 = vsel %vm1971, %v10433, 0
      %v10678 = vsel %vm1971, %v10435, 0
      %v10681 = vsel %vm1971, %v10437, 0
      %v10684 = vsel %vm1971, %v10439, 0
      %v10687 = vsel %vm1971, %v10441, 0
      %v10690 = vsel %vm1971, %v10443, 0
      %v10693 = vsel %vm1971, %v10445, 0
      %v10696 = vsel %vm1971, %v10447, 0
      %v10699 = vsel %vm1971, %v10449, 0
      %v10702 = vsel %vm1971, %v10451, 0
      %v10705 = vsel %vm1971, %v10453, 0
      %v10708 = vsel %vm1971, %v10455, 0
      %v10711 = vsel %vm1971, %v10457, 0
      %v10714 = vsel %vm1971, %v10459, 0
      %v10717 = vsel %vm1971, %v10461, 0
      %v10720 = vsel %vm1971, %v10463, 0
      %v10723 = vsel %vm2068, %v10600, 0
      %v10726 = vsel %vm2068, %v10601, 0
      %10728 = vmatprep.subr.bf16.mxu0 %v10577
      %10729 = vmatpush1.bf16.msra.mxu0 %v10576
      %10730 = vmatprep.subr.bf16.mxu0 %v10579
      %10731 = vmatpush1.bf16.msra.mxu0 %v10578
      %10732 = vmatprep.subr.bf16.mxu0 %v10581
      %10733 = vmatpush1.bf16.msra.mxu0 %v10580
      %10734 = vmatprep.subr.bf16.mxu0 %v10583
      %10735 = vmatpush1.bf16.msra.mxu0 %v10582
      %10736 = vmatprep.subr.bf16.mxu0 %v10585
      %10737 = vmatpush1.bf16.msra.mxu0 %v10584
      %10738 = vmatprep.subr.bf16.mxu0 %v10587
      %10739 = vmatpush1.bf16.msra.mxu0 %v10586
      %10740 = vmatprep.subr.bf16.mxu0 %v10589
      %10741 = vmatpush1.bf16.msra.mxu0 %v10588
      %10742 = vmatprep.subr.bf16.mxu0 %v10591
      %10743 = vmatpush1.bf16.msra.mxu0 %v10590
      %10744 = vmatprep.subr.bf16.mxu0 %v10593
      %10745 = vmatpush1.bf16.msra.mxu0 %v10592
      %10746 = vmatprep.subr.bf16.mxu0 %v10595
      %10747 = vmatpush1.bf16.msra.mxu0 %v10594
      %10748 = vmatprep.subr.bf16.mxu0 %v10597
      %10749 = vmatpush1.bf16.msra.mxu0 %v10596
      %10750 = vmatprep.subr.bf16.mxu0 %v10599
      %10751 = vmatpush1.bf16.msra.mxu0 %v10598
      %10752 = vmatprep.subr.bf16.mxu0 %v10726
      %10753 = vmatpush1.bf16.msra.mxu0 %v10723
      %10754 = vmatprep.subr.bf16.mxu0 0
      %10755 = vmatpush1.bf16.msra.mxu0 0
      %10756 = vmatprep.subr.bf16.mxu0 0
      %10757 = vmatpush1.bf16.msra.mxu0 0
      %10758 = vmatprep.subr.bf16.mxu0 0
      %10759 = vmatpush1.bf16.msra.mxu0 0
      %10760 = vmatprep.mubr.bf16.mxu0 %v10627
      %10761 = vmatmul.mubr.bf16.gmra.mrb[0].mxu0 %v10400
      %v10762 = vpop.f32.mrb[0].mxu0
      %v10763 = vadd.f32 %v10494, %v10762
      %v10764 = vpop.f32.mrb[0].mxu0
      %v10765 = vadd.f32 %v10498, %v10764
      %v10766 = vpop.f32.mrb[0].mxu0
      %v10767 = vadd.f32 %v10494, %v10766
      %v10768 = vpop.f32.mrb[0].mxu0
      %v10769 = vadd.f32 %v10498, %v10768
      %10770 = vmatprep.mubr.bf16.mxu0 %v10630
      %10771 = vmatmul.mubr.bf16.gmra.mrb[0].mxu0 %v10402
      %v10772 = vpop.f32.mrb[0].mxu0
      %v10773 = vadd.f32 %v10494, %v10772
      %v10774 = vpop.f32.mrb[0].mxu0
      %v10775 = vadd.f32 %v10498, %v10774
      %v10776 = vpop.f32.mrb[0].mxu0
      %v10777 = vadd.f32 %v10494, %v10776
      %v10778 = vpop.f32.mrb[0].mxu0
      %v10779 = vadd.f32 %v10498, %v10778
      %10780 = vmatprep.mubr.bf16.mxu0 %v10633
      %10781 = vmatmul.mubr.bf16.gmra.mrb[0].mxu0 %v10404
      %v10782 = vpop.f32.mrb[0].mxu0
      %v10783 = vadd.f32 %v10494, %v10782
      %v10784 = vpop.f32.mrb[0].mxu0
      %v10785 = vadd.f32 %v10498, %v10784
      %v10786 = vpop.f32.mrb[0].mxu0
      %v10787 = vadd.f32 %v10494, %v10786
      %v10788 = vpop.f32.mrb[0].mxu0
      %v10789 = vadd.f32 %v10498, %v10788
      %10790 = vmatprep.mubr.bf16.mxu0 %v10636
      %10791 = vmatmul.mubr.bf16.gmra.mrb[0].mxu0 %v10406
      %v10792 = vpop.f32.mrb[0].mxu0
      %v10793 = vadd.f32 %v10494, %v10792
      %v10794 = vpop.f32.mrb[0].mxu0
      %v10795 = vadd.f32 %v10498, %v10794
      %v10796 = vpop.f32.mrb[0].mxu0
      %v10797 = vadd.f32 %v10494, %v10796
      %v10798 = vpop.f32.mrb[0].mxu0
      %v10799 = vadd.f32 %v10498, %v10798
      %10800 = vmatprep.mubr.bf16.mxu0 %v10639
      %10801 = vmatmul.mubr.bf16.gmra.mrb[0].mxu0 %v10408
      %v10802 = vpop.f32.mrb[0].mxu0
      %v10803 = vadd.f32 %v10494, %v10802
      %v10804 = vpop.f32.mrb[0].mxu0
      %v10805 = vadd.f32 %v10498, %v10804
      %v10806 = vpop.f32.mrb[0].mxu0
      %v10807 = vadd.f32 %v10494, %v10806
      %v10808 = vpop.f32.mrb[0].mxu0
      %v10809 = vadd.f32 %v10498, %v10808
      %10810 = vmatprep.mubr.bf16.mxu0 %v10642
      %10811 = vmatmul.mubr.bf16.gmra.mrb[0].mxu0 %v10410
      %v10812 = vpop.f32.mrb[0].mxu0
      %v10813 = vadd.f32 %v10494, %v10812
      %v10814 = vpop.f32.mrb[0].mxu0
      %v10815 = vadd.f32 %v10498, %v10814
      %v10816 = vpop.f32.mrb[0].mxu0
      %v10817 = vadd.f32 %v10494, %v10816
      %v10818 = vpop.f32.mrb[0].mxu0
      %v10819 = vadd.f32 %v10498, %v10818
      %10820 = vmatprep.mubr.bf16.mxu0 %v10645
      %10821 = vmatmul.mubr.bf16.gmra.mrb[0].mxu0 %v10412
      %v10822 = vpop.f32.mrb[0].mxu0
      %v10823 = vadd.f32 %v10494, %v10822
      %v10824 = vpop.f32.mrb[0].mxu0
      %v10825 = vadd.f32 %v10498, %v10824
      %v10826 = vpop.f32.mrb[0].mxu0
      %v10827 = vadd.f32 %v10494, %v10826
      %v10828 = vpop.f32.mrb[0].mxu0
      %v10829 = vadd.f32 %v10498, %v10828
      %10830 = vmatprep.mubr.bf16.mxu0 %v10648
      %10831 = vmatmul.mubr.bf16.gmra.mrb[0].mxu0 %v10414
      %v10832 = vpop.f32.mrb[0].mxu0
      %v10833 = vadd.f32 %v10494, %v10832
      %v10834 = vpop.f32.mrb[0].mxu0
      %v10835 = vadd.f32 %v10498, %v10834
      %v10836 = vpop.f32.mrb[0].mxu0
      %v10837 = vadd.f32 %v10494, %v10836
      %v10838 = vpop.f32.mrb[0].mxu0
      %v10839 = vadd.f32 %v10498, %v10838
      %10840 = vmatprep.mubr.bf16.mxu0 %v10651
      %10841 = vmatmul.mubr.bf16.gmra.mrb[0].mxu0 %v10416
      %v10842 = vpop.f32.mrb[0].mxu0
      %v10843 = vadd.f32 %v10494, %v10842
      %v10844 = vpop.f32.mrb[0].mxu0
      %v10845 = vadd.f32 %v10498, %v10844
      %v10846 = vpop.f32.mrb[0].mxu0
      %v10847 = vadd.f32 %v10494, %v10846
      %v10848 = vpop.f32.mrb[0].mxu0
      %v10849 = vadd.f32 %v10498, %v10848
      %10850 = vmatprep.mubr.bf16.mxu0 %v10654
      %10851 = vmatmul.mubr.bf16.gmra.mrb[0].mxu0 %v10418
      %v10852 = vpop.f32.mrb[0].mxu0
      %v10853 = vadd.f32 %v10494, %v10852
      %v10854 = vpop.f32.mrb[0].mxu0
      %v10855 = vadd.f32 %v10498, %v10854
      %v10856 = vpop.f32.mrb[0].mxu0
      %v10857 = vadd.f32 %v10494, %v10856
      %v10858 = vpop.f32.mrb[0].mxu0
      %v10859 = vadd.f32 %v10498, %v10858
      %10860 = vmatprep.mubr.bf16.mxu0 %v10657
      %10861 = vmatmul.mubr.bf16.gmra.mrb[0].mxu0 %v10420
      %v10862 = vpop.f32.mrb[0].mxu0
      %v10863 = vadd.f32 %v10494, %v10862
      %v10864 = vpop.f32.mrb[0].mxu0
      %v10865 = vadd.f32 %v10498, %v10864
      %v10866 = vpop.f32.mrb[0].mxu0
      %v10867 = vadd.f32 %v10494, %v10866
      %v10868 = vpop.f32.mrb[0].mxu0
      %v10869 = vadd.f32 %v10498, %v10868
      %10870 = vmatprep.mubr.bf16.mxu0 %v10660
      %10871 = vmatmul.mubr.bf16.gmra.mrb[0].mxu0 %v10422
      %v10872 = vpop.f32.mrb[0].mxu0
      %v10873 = vadd.f32 %v10494, %v10872
      %v10874 = vpop.f32.mrb[0].mxu0
      %v10875 = vadd.f32 %v10498, %v10874
      %v10876 = vpop.f32.mrb[0].mxu0
      %v10877 = vadd.f32 %v10494, %v10876
      %v10878 = vpop.f32.mrb[0].mxu0
      %v10879 = vadd.f32 %v10498, %v10878
      %10880 = vmatprep.mubr.bf16.mxu0 %v10663
      %10881 = vmatmul.mubr.bf16.gmra.mrb[0].mxu0 %v10424
      %v10882 = vpop.f32.mrb[0].mxu0
      %v10883 = vadd.f32 %v10494, %v10882
      %v10884 = vpop.f32.mrb[0].mxu0
      %v10885 = vadd.f32 %v10498, %v10884
      %v10886 = vpop.f32.mrb[0].mxu0
      %v10887 = vadd.f32 %v10494, %v10886
      %v10888 = vpop.f32.mrb[0].mxu0
      %v10889 = vadd.f32 %v10498, %v10888
      %10890 = vmatprep.mubr.bf16.mxu0 %v10666
      %10891 = vmatmul.mubr.bf16.gmra.mrb[0].mxu0 %v10426
      %v10892 = vpop.f32.mrb[0].mxu0
      %v10893 = vadd.f32 %v10494, %v10892
      %v10894 = vpop.f32.mrb[0].mxu0
      %v10895 = vadd.f32 %v10498, %v10894
      %v10896 = vpop.f32.mrb[0].mxu0
      %v10897 = vadd.f32 %v10494, %v10896
      %v10898 = vpop.f32.mrb[0].mxu0
      %v10899 = vadd.f32 %v10498, %v10898
      %10900 = vmatprep.mubr.bf16.mxu0 %v10669
      %10901 = vmatmul.mubr.bf16.gmra.mrb[0].mxu0 %v10428
      %v10902 = vpop.f32.mrb[0].mxu0
      %v10903 = vadd.f32 %v10494, %v10902
      %v10904 = vpop.f32.mrb[0].mxu0
      %v10905 = vadd.f32 %v10498, %v10904
      %v10906 = vpop.f32.mrb[0].mxu0
      %v10907 = vadd.f32 %v10494, %v10906
      %v10908 = vpop.f32.mrb[0].mxu0
      %v10909 = vadd.f32 %v10498, %v10908
      %10910 = vmatprep.mubr.bf16.mxu0 %v10672
      %10911 = vmatmul.mubr.bf16.gmra.mrb[0].mxu0 %v10430
      %v10912 = vpop.f32.mrb[0].mxu0
      %v10913 = vadd.f32 %v10494, %v10912
      %v10914 = vpop.f32.mrb[0].mxu0
      %v10915 = vadd.f32 %v10498, %v10914
      %v10916 = vpop.f32.mrb[0].mxu0
      %v10917 = vadd.f32 %v10494, %v10916
      %v10918 = vpop.f32.mrb[0].mxu0
      %v10919 = vadd.f32 %v10498, %v10918
      %10920 = vmatprep.mubr.bf16.mxu0 %v10675
      %10921 = vmatmul.mubr.bf16.gmra.mrb[0].mxu0 %v10432
      %v10922 = vpop.f32.mrb[0].mxu0
      %v10923 = vadd.f32 %v10494, %v10922
      %v10924 = vpop.f32.mrb[0].mxu0
      %v10925 = vadd.f32 %v10498, %v10924
      %v10926 = vpop.f32.mrb[0].mxu0
      %v10927 = vadd.f32 %v10494, %v10926
      %v10928 = vpop.f32.mrb[0].mxu0
      %v10929 = vadd.f32 %v10498, %v10928
      %10930 = vmatprep.mubr.bf16.mxu0 %v10678
      %10931 = vmatmul.mubr.bf16.gmra.mrb[0].mxu0 %v10434
      %v10932 = vpop.f32.mrb[0].mxu0
      %v10933 = vadd.f32 %v10494, %v10932
      %v10934 = vpop.f32.mrb[0].mxu0
      %v10935 = vadd.f32 %v10498, %v10934
      %v10936 = vpop.f32.mrb[0].mxu0
      %v10937 = vadd.f32 %v10494, %v10936
      %v10938 = vpop.f32.mrb[0].mxu0
      %v10939 = vadd.f32 %v10498, %v10938
      %10940 = vmatprep.mubr.bf16.mxu0 %v10681
      %10941 = vmatmul.mubr.bf16.gmra.mrb[0].mxu0 %v10436
      %v10942 = vpop.f32.mrb[0].mxu0
      %v10943 = vadd.f32 %v10494, %v10942
      %v10944 = vpop.f32.mrb[0].mxu0
      %v10945 = vadd.f32 %v10498, %v10944
      %v10946 = vpop.f32.mrb[0].mxu0
      %v10947 = vadd.f32 %v10494, %v10946
      %v10948 = vpop.f32.mrb[0].mxu0
      %v10949 = vadd.f32 %v10498, %v10948
      %10950 = vmatprep.mubr.bf16.mxu0 %v10684
      %10951 = vmatmul.mubr.bf16.gmra.mrb[0].mxu0 %v10438
      %v10952 = vpop.f32.mrb[0].mxu0
      %v10953 = vadd.f32 %v10494, %v10952
      %v10954 = vpop.f32.mrb[0].mxu0
      %v10955 = vadd.f32 %v10498, %v10954
      %v10956 = vpop.f32.mrb[0].mxu0
      %v10957 = vadd.f32 %v10494, %v10956
      %v10958 = vpop.f32.mrb[0].mxu0
      %v10959 = vadd.f32 %v10498, %v10958
      %10960 = vmatprep.mubr.bf16.mxu0 %v10687
      %10961 = vmatmul.mubr.bf16.gmra.mrb[0].mxu0 %v10440
      %v10962 = vpop.f32.mrb[0].mxu0
      %v10963 = vadd.f32 %v10494, %v10962
      %v10964 = vpop.f32.mrb[0].mxu0
      %v10965 = vadd.f32 %v10498, %v10964
      %v10966 = vpop.f32.mrb[0].mxu0
      %v10967 = vadd.f32 %v10494, %v10966
      %v10968 = vpop.f32.mrb[0].mxu0
      %v10969 = vadd.f32 %v10498, %v10968
      %10970 = vmatprep.mubr.bf16.mxu0 %v10690
      %10971 = vmatmul.mubr.bf16.gmra.mrb[0].mxu0 %v10442
      %v10972 = vpop.f32.mrb[0].mxu0
      %v10973 = vadd.f32 %v10494, %v10972
      %v10974 = vpop.f32.mrb[0].mxu0
      %v10975 = vadd.f32 %v10498, %v10974
      %v10976 = vpop.f32.mrb[0].mxu0
      %v10977 = vadd.f32 %v10494, %v10976
      %v10978 = vpop.f32.mrb[0].mxu0
      %v10979 = vadd.f32 %v10498, %v10978
      %10980 = vmatprep.mubr.bf16.mxu0 %v10693
      %10981 = vmatmul.mubr.bf16.gmra.mrb[0].mxu0 %v10444
      %v10982 = vpop.f32.mrb[0].mxu0
      %v10983 = vadd.f32 %v10494, %v10982
      %v10984 = vpop.f32.mrb[0].mxu0
      %v10985 = vadd.f32 %v10498, %v10984
      %v10986 = vpop.f32.mrb[0].mxu0
      %v10987 = vadd.f32 %v10494, %v10986
      %v10988 = vpop.f32.mrb[0].mxu0
      %v10989 = vadd.f32 %v10498, %v10988
      %10990 = vmatprep.mubr.bf16.mxu0 %v10696
      %10991 = vmatmul.mubr.bf16.gmra.mrb[0].mxu0 %v10446
      %v10992 = vpop.f32.mrb[0].mxu0
      %v10993 = vadd.f32 %v10494, %v10992
      %v10994 = vpop.f32.mrb[0].mxu0
      %v10995 = vadd.f32 %v10498, %v10994
      %v10996 = vpop.f32.mrb[0].mxu0
      %v10997 = vadd.f32 %v10494, %v10996
      %v10998 = vpop.f32.mrb[0].mxu0
      %v10999 = vadd.f32 %v10498, %v10998
      %11000 = vmatprep.mubr.bf16.mxu0 %v10699
      %11001 = vmatmul.mubr.bf16.gmra.mrb[0].mxu0 %v10448
      %v11002 = vpop.f32.mrb[0].mxu0
      %v11003 = vadd.f32 %v10494, %v11002
      %v11004 = vpop.f32.mrb[0].mxu0
      %v11005 = vadd.f32 %v10498, %v11004
      %v11006 = vpop.f32.mrb[0].mxu0
      %v11007 = vadd.f32 %v10494, %v11006
      %v11008 = vpop.f32.mrb[0].mxu0
      %v11009 = vadd.f32 %v10498, %v11008
      %11010 = vmatprep.mubr.bf16.mxu0 %v10702
      %11011 = vmatmul.mubr.bf16.gmra.mrb[0].mxu0 %v10450
      %v11012 = vpop.f32.mrb[0].mxu0
      %v11013 = vadd.f32 %v10494, %v11012
      %v11014 = vpop.f32.mrb[0].mxu0
      %v11015 = vadd.f32 %v10498, %v11014
      %v11016 = vpop.f32.mrb[0].mxu0
      %v11017 = vadd.f32 %v10494, %v11016
      %v11018 = vpop.f32.mrb[0].mxu0
      %v11019 = vadd.f32 %v10498, %v11018
      %11020 = vmatprep.mubr.bf16.mxu0 %v10705
      %11021 = vmatmul.mubr.bf16.gmra.mrb[0].mxu0 %v10452
      %v11022 = vpop.f32.mrb[0].mxu0
      %v11023 = vadd.f32 %v10494, %v11022
      %v11024 = vpop.f32.mrb[0].mxu0
      %v11025 = vadd.f32 %v10498, %v11024
      %v11026 = vpop.f32.mrb[0].mxu0
      %v11027 = vadd.f32 %v10494, %v11026
      %v11028 = vpop.f32.mrb[0].mxu0
      %v11029 = vadd.f32 %v10498, %v11028
      %11030 = vmatprep.mubr.bf16.mxu0 %v10708
      %11031 = vmatmul.mubr.bf16.gmra.mrb[0].mxu0 %v10454
      %v11032 = vpop.f32.mrb[0].mxu0
      %v11033 = vadd.f32 %v10494, %v11032
      %v11034 = vpop.f32.mrb[0].mxu0
      %v11035 = vadd.f32 %v10498, %v11034
      %v11036 = vpop.f32.mrb[0].mxu0
      %v11037 = vadd.f32 %v10494, %v11036
      %v11038 = vpop.f32.mrb[0].mxu0
      %v11039 = vadd.f32 %v10498, %v11038
      %11040 = vmatprep.mubr.bf16.mxu0 %v10711
      %11041 = vmatmul.mubr.bf16.gmra.mrb[0].mxu0 %v10456
      %v11042 = vpop.f32.mrb[0].mxu0
      %v11043 = vadd.f32 %v10494, %v11042
      %v11044 = vpop.f32.mrb[0].mxu0
      %v11045 = vadd.f32 %v10498, %v11044
      %v11046 = vpop.f32.mrb[0].mxu0
      %v11047 = vadd.f32 %v10494, %v11046
      %v11048 = vpop.f32.mrb[0].mxu0
      %v11049 = vadd.f32 %v10498, %v11048
      %11050 = vmatprep.mubr.bf16.mxu0 %v10714
      %11051 = vmatmul.mubr.bf16.gmra.mrb[0].mxu0 %v10458
      %v11052 = vpop.f32.mrb[0].mxu0
      %v11053 = vadd.f32 %v10494, %v11052
      %v11054 = vpop.f32.mrb[0].mxu0
      %v11055 = vadd.f32 %v10498, %v11054
      %v11056 = vpop.f32.mrb[0].mxu0
      %v11057 = vadd.f32 %v10494, %v11056
      %v11058 = vpop.f32.mrb[0].mxu0
      %v11059 = vadd.f32 %v10498, %v11058
      %11060 = vmatprep.mubr.bf16.mxu0 %v10717
      %11061 = vmatmul.mubr.bf16.gmra.mrb[0].mxu0 %v10460
      %v11062 = vpop.f32.mrb[0].mxu0
      %v11063 = vadd.f32 %v10494, %v11062
      %v11064 = vpop.f32.mrb[0].mxu0
      %v11065 = vadd.f32 %v10498, %v11064
      %v11066 = vpop.f32.mrb[0].mxu0
      %v11067 = vadd.f32 %v10494, %v11066
      %v11068 = vpop.f32.mrb[0].mxu0
      %v11069 = vadd.f32 %v10498, %v11068
      %11070 = vmatprep.mubr.bf16.mxu0 %v10720
      %11071 = vmatmul.mubr.bf16.gmra.mrb[0].mxu0 %v10462
      %v11072 = vpop.f32.mrb[0].mxu0
      %v11073 = vadd.f32 %v10494, %v11072
      %v11074 = vpop.f32.mrb[0].mxu0
      %v11075 = vadd.f32 %v10498, %v11074
      %v11076 = vpop.f32.mrb[0].mxu0
      %v11077 = vadd.f32 %v10494, %v11076
      %v11078 = vpop.f32.mrb[0].mxu0
      %v11079 = vadd.f32 %v10498, %v11078
      %11080 = vdwg.mxu0
      %v11081 = vmax.f32 %v10763, 0.0
      %v11082 = vmax.f32 %v10765, 0.0
      %v11083 = vmax.f32 %v10767, 0.0
      %v11084 = vmax.f32 %v10769, 0.0
      %v11085 = vmax.f32 %v10773, 0.0
      %v11086 = vmax.f32 %v10775, 0.0
      %v11087 = vmax.f32 %v10777, 0.0
      %v11088 = vmax.f32 %v10779, 0.0
      %v11089 = vmax.f32 %v10783, 0.0
      %v11090 = vmax.f32 %v10785, 0.0
      %v11091 = vmax.f32 %v10787, 0.0
      %v11092 = vmax.f32 %v10789, 0.0
      %v11093 = vmax.f32 %v10793, 0.0
      %v11094 = vmax.f32 %v10795, 0.0
      %v11095 = vmax.f32 %v10797, 0.0
      %v11096 = vmax.f32 %v10799, 0.0
      %v11097 = vmax.f32 %v10803, 0.0
      %v11098 = vmax.f32 %v10805, 0.0
      %v11099 = vmax.f32 %v10807, 0.0
      %v11100 = vmax.f32 %v10809, 0.0
      %v11101 = vmax.f32 %v10813, 0.0
      %v11102 = vmax.f32 %v10815, 0.0
      %v11103 = vmax.f32 %v10817, 0.0
      %v11104 = vmax.f32 %v10819, 0.0
      %v11105 = vmax.f32 %v10823, 0.0
      %v11106 = vmax.f32 %v10825, 0.0
      %v11107 = vmax.f32 %v10827, 0.0
      %v11108 = vmax.f32 %v10829, 0.0
      %v11109 = vmax.f32 %v10833, 0.0
      %v11110 = vmax.f32 %v10835, 0.0
      %v11111 = vmax.f32 %v10837, 0.0
      %v11112 = vmax.f32 %v10839, 0.0
      %v11113 = vmax.f32 %v10843, 0.0
      %v11114 = vmax.f32 %v10845, 0.0
      %v11115 = vmax.f32 %v10847, 0.0
      %v11116 = vmax.f32 %v10849, 0.0
      %v11117 = vmax.f32 %v10853, 0.0
      %v11118 = vmax.f32 %v10855, 0.0
      %v11119 = vmax.f32 %v10857, 0.0
      %v11120 = vmax.f32 %v10859, 0.0
      %v11121 = vmax.f32 %v10863, 0.0
      %v11122 = vmax.f32 %v10865, 0.0
      %v11123 = vmax.f32 %v10867, 0.0
      %v11124 = vmax.f32 %v10869, 0.0
      %v11125 = vmax.f32 %v10873, 0.0
      %v11126 = vmax.f32 %v10875, 0.0
      %v11127 = vmax.f32 %v10877, 0.0
      %v11128 = vmax.f32 %v10879, 0.0
      %v11129 = vmax.f32 %v10883, 0.0
      %v11130 = vmax.f32 %v10885, 0.0
      %v11131 = vmax.f32 %v10887, 0.0
      %v11132 = vmax.f32 %v10889, 0.0
      %v11133 = vmax.f32 %v10893, 0.0
      %v11134 = vmax.f32 %v10895, 0.0
      %v11135 = vmax.f32 %v10897, 0.0
      %v11136 = vmax.f32 %v10899, 0.0
      %v11137 = vmax.f32 %v10903, 0.0
      %v11138 = vmax.f32 %v10905, 0.0
      %v11139 = vmax.f32 %v10907, 0.0
      %v11140 = vmax.f32 %v10909, 0.0
      %v11141 = vmax.f32 %v10913, 0.0
      %v11142 = vmax.f32 %v10915, 0.0
      %v11143 = vmax.f32 %v10917, 0.0
      %v11144 = vmax.f32 %v10919, 0.0
      %v11145 = vmax.f32 %v10923, 0.0
      %v11146 = vmax.f32 %v10925, 0.0
      %v11147 = vmax.f32 %v10927, 0.0
      %v11148 = vmax.f32 %v10929, 0.0
      %v11149 = vmax.f32 %v10933, 0.0
      %v11150 = vmax.f32 %v10935, 0.0
      %v11151 = vmax.f32 %v10937, 0.0
      %v11152 = vmax.f32 %v10939, 0.0
      %v11153 = vmax.f32 %v10943, 0.0
      %v11154 = vmax.f32 %v10945, 0.0
      %v11155 = vmax.f32 %v10947, 0.0
      %v11156 = vmax.f32 %v10949, 0.0
      %v11157 = vmax.f32 %v10953, 0.0
      %v11158 = vmax.f32 %v10955, 0.0
      %v11159 = vmax.f32 %v10957, 0.0
      %v11160 = vmax.f32 %v10959, 0.0
      %v11161 = vmax.f32 %v10963, 0.0
      %v11162 = vmax.f32 %v10965, 0.0
      %v11163 = vmax.f32 %v10967, 0.0
      %v11164 = vmax.f32 %v10969, 0.0
      %v11165 = vmax.f32 %v10973, 0.0
      %v11166 = vmax.f32 %v10975, 0.0
      %v11167 = vmax.f32 %v10977, 0.0
      %v11168 = vmax.f32 %v10979, 0.0
      %v11169 = vmax.f32 %v10983, 0.0
      %v11170 = vmax.f32 %v10985, 0.0
      %v11171 = vmax.f32 %v10987, 0.0
      %v11172 = vmax.f32 %v10989, 0.0
      %v11173 = vmax.f32 %v10993, 0.0
      %v11174 = vmax.f32 %v10995, 0.0
      %v11175 = vmax.f32 %v10997, 0.0
      %v11176 = vmax.f32 %v10999, 0.0
      %v11177 = vmax.f32 %v11003, 0.0
      %v11178 = vmax.f32 %v11005, 0.0
      %v11179 = vmax.f32 %v11007, 0.0
      %v11180 = vmax.f32 %v11009, 0.0
      %v11181 = vmax.f32 %v11013, 0.0
      %v11182 = vmax.f32 %v11015, 0.0
      %v11183 = vmax.f32 %v11017, 0.0
      %v11184 = vmax.f32 %v11019, 0.0
      %v11185 = vmax.f32 %v11023, 0.0
      %v11186 = vmax.f32 %v11025, 0.0
      %v11187 = vmax.f32 %v11027, 0.0
      %v11188 = vmax.f32 %v11029, 0.0
      %v11189 = vmax.f32 %v11033, 0.0
      %v11190 = vmax.f32 %v11035, 0.0
      %v11191 = vmax.f32 %v11037, 0.0
      %v11192 = vmax.f32 %v11039, 0.0
      %v11193 = vmax.f32 %v11043, 0.0
      %v11194 = vmax.f32 %v11045, 0.0
      %v11195 = vmax.f32 %v11047, 0.0
      %v11196 = vmax.f32 %v11049, 0.0
      %v11197 = vmax.f32 %v11053, 0.0
      %v11198 = vmax.f32 %v11055, 0.0
      %v11199 = vmax.f32 %v11057, 0.0
      %v11200 = vmax.f32 %v11059, 0.0
      %v11201 = vmax.f32 %v11063, 0.0
      %v11202 = vmax.f32 %v11065, 0.0
      %v11203 = vmax.f32 %v11067, 0.0
      %v11204 = vmax.f32 %v11069, 0.0
      %v11205 = vmax.f32 %v11073, 0.0
      %v11206 = vmax.f32 %v11075, 0.0
      %v11207 = vmax.f32 %v11077, 0.0
      %v11208 = vmax.f32 %v11079, 0.0
      %v11209 = vpack.c.bf16 %v11083, %v11081
      %v11210 = vpack.c.bf16 %v11084, %v11082
      %v11211 = vpack.c.bf16 %v11087, %v11085
      %v11212 = vpack.c.bf16 %v11088, %v11086
      %v11213 = vpack.c.bf16 %v11091, %v11089
      %v11214 = vpack.c.bf16 %v11092, %v11090
      %v11215 = vpack.c.bf16 %v11095, %v11093
      %v11216 = vpack.c.bf16 %v11096, %v11094
      %v11217 = vpack.c.bf16 %v11099, %v11097
      %v11218 = vpack.c.bf16 %v11100, %v11098
      %v11219 = vpack.c.bf16 %v11103, %v11101
      %v11220 = vpack.c.bf16 %v11104, %v11102
      %v11221 = vpack.c.bf16 %v11107, %v11105
      %v11222 = vpack.c.bf16 %v11108, %v11106
      %v11223 = vpack.c.bf16 %v11111, %v11109
      %v11224 = vpack.c.bf16 %v11112, %v11110
      %v11225 = vpack.c.bf16 %v11115, %v11113
      %v11226 = vpack.c.bf16 %v11116, %v11114
      %v11227 = vpack.c.bf16 %v11119, %v11117
      %v11228 = vpack.c.bf16 %v11120, %v11118
      %v11229 = vpack.c.bf16 %v11123, %v11121
      %v11230 = vpack.c.bf16 %v11124, %v11122
      %v11231 = vpack.c.bf16 %v11127, %v11125
      %v11232 = vpack.c.bf16 %v11128, %v11126
      %v11233 = vpack.c.bf16 %v11131, %v11129
      %v11234 = vpack.c.bf16 %v11132, %v11130
      %v11235 = vpack.c.bf16 %v11135, %v11133
      %v11236 = vpack.c.bf16 %v11136, %v11134
      %v11237 = vpack.c.bf16 %v11139, %v11137
      %v11238 = vpack.c.bf16 %v11140, %v11138
      %v11239 = vpack.c.bf16 %v11143, %v11141
      %v11240 = vpack.c.bf16 %v11144, %v11142
      %v11241 = vpack.c.bf16 %v11147, %v11145
      %v11242 = vpack.c.bf16 %v11148, %v11146
      %v11243 = vpack.c.bf16 %v11151, %v11149
      %v11244 = vpack.c.bf16 %v11152, %v11150
      %v11245 = vpack.c.bf16 %v11155, %v11153
      %v11246 = vpack.c.bf16 %v11156, %v11154
      %v11247 = vpack.c.bf16 %v11159, %v11157
      %v11248 = vpack.c.bf16 %v11160, %v11158
      %v11249 = vpack.c.bf16 %v11163, %v11161
      %v11250 = vpack.c.bf16 %v11164, %v11162
      %v11251 = vpack.c.bf16 %v11167, %v11165
      %v11252 = vpack.c.bf16 %v11168, %v11166
      %v11253 = vpack.c.bf16 %v11171, %v11169
      %v11254 = vpack.c.bf16 %v11172, %v11170
      %v11255 = vpack.c.bf16 %v11175, %v11173
      %v11256 = vpack.c.bf16 %v11176, %v11174
      %v11257 = vpack.c.bf16 %v11179, %v11177
      %v11258 = vpack.c.bf16 %v11180, %v11178
      %v11259 = vpack.c.bf16 %v11183, %v11181
      %v11260 = vpack.c.bf16 %v11184, %v11182
      %v11261 = vpack.c.bf16 %v11187, %v11185
      %v11262 = vpack.c.bf16 %v11188, %v11186
      %v11263 = vpack.c.bf16 %v11191, %v11189
      %v11264 = vpack.c.bf16 %v11192, %v11190
      %v11265 = vpack.c.bf16 %v11195, %v11193
      %v11266 = vpack.c.bf16 %v11196, %v11194
      %v11267 = vpack.c.bf16 %v11199, %v11197
      %v11268 = vpack.c.bf16 %v11200, %v11198
      %v11269 = vpack.c.bf16 %v11203, %v11201
      %v11270 = vpack.c.bf16 %v11204, %v11202
      %v11271 = vpack.c.bf16 %v11207, %v11205
      %v11272 = vpack.c.bf16 %v11208, %v11206
      %v11273 = vld [vmem:[%s31] sm:$0xf]
      %v11274 = vld [vmem:[%s31 + $0x4] sm:$0xf]
      %v11275 = vld [vmem:[%s31 + $0x8] sm:$0xf]
      %v11276 = vld [vmem:[%s31 + $0xc] sm:$0xf]
      %v11277 = vld [vmem:[%s31 + $0x10] sm:$0xf]
      %v11278 = vld [vmem:[%s31 + $0x14] sm:$0xf]
      %v11279 = vld [vmem:[%s31 + $0x18] sm:$0xf]
      %v11280 = vld [vmem:[%s31 + $0x1c] sm:$0xf]
      %v11281 = vld [vmem:[%s31 + $0x20] sm:$0xf]
      %v11282 = vld [vmem:[%s31 + $0x24] sm:$0xf]
      %v11283 = vld [vmem:[%s31 + $0x28] sm:$0xf]
      %v11284 = vld [vmem:[%s31 + $0x2c] sm:$0xf]
      %v11285 = vld [vmem:[%s31 + $0x30] sm:$0xf]
      %v11286 = vld [vmem:[%s31 + $0x34] sm:$0xf]
      %v11287 = vld [vmem:[%s31 + $0x38] sm:$0xf]
      %v11288 = vld [vmem:[%s31 + $0x3c] sm:$0xf]
      %v11289 = vld [vmem:[%s31 + $0x40] sm:$0xf]
      %v11290 = vld [vmem:[%s31 + $0x44] sm:$0xf]
      %v11291 = vld [vmem:[%s31 + $0x48] sm:$0xf]
      %v11292 = vld [vmem:[%s31 + $0x4c] sm:$0xf]
      %v11293 = vld [vmem:[%s31 + $0x50] sm:$0xf]
      %v11294 = vld [vmem:[%s31 + $0x54] sm:$0xf]
      %v11295 = vld [vmem:[%s31 + $0x58] sm:$0xf]
      %v11296 = vld [vmem:[%s31 + $0x5c] sm:$0xf]
      %v11297 = vld [vmem:[%s31 + $0x60] sm:$0xf]
      %v11298 = vld [vmem:[%s55] sm:$0x1]
      %v11300 = vlaneseq
      %v11301 = vshrl.u32 %v11300, 7
      %v11302 = vsub.s32 0, %v11301
      %v11303 = vrot.slane %v11298, %v11302
      %v11330 = vunpack.c.l.b16 %v11273
      %v11331 = vunpack.c.l.b16 %v11274
      %v11332 = vunpack.c.l.b16 %v11275
      %v11333 = vunpack.c.l.b16 %v11276
      %v11334 = vunpack.c.l.b16 %v11277
      %v11335 = vunpack.c.l.b16 %v11278
      %v11336 = vunpack.c.l.b16 %v11279
      %v11337 = vunpack.c.l.b16 %v11280
      %v11338 = vunpack.c.l.b16 %v11281
      %v11339 = vunpack.c.l.b16 %v11282
      %v11340 = vunpack.c.l.b16 %v11283
      %v11341 = vunpack.c.l.b16 %v11284
      %v11342 = vunpack.c.l.b16 %v11285
      %v11343 = vunpack.c.l.b16 %v11286
      %v11344 = vunpack.c.l.b16 %v11287
      %v11345 = vunpack.c.l.b16 %v11288
      %v11346 = vunpack.c.l.b16 %v11289
      %v11347 = vunpack.c.l.b16 %v11290
      %v11348 = vunpack.c.l.b16 %v11291
      %v11349 = vunpack.c.l.b16 %v11292
      %v11350 = vunpack.c.l.b16 %v11293
      %v11351 = vunpack.c.l.b16 %v11294
      %v11352 = vunpack.c.l.b16 %v11295
      %v11353 = vunpack.c.l.b16 %v11296
      %v11354 = vunpack.c.l.b16 %v11297
      %v11355 = vpack.c.b16 %v11331, %v11330
      %v11356 = vpack.c.b16 %v11333, %v11332
      %v11357 = vpack.c.b16 %v11335, %v11334
      %v11358 = vpack.c.b16 %v11337, %v11336
      %v11359 = vpack.c.b16 %v11339, %v11338
      %v11360 = vpack.c.b16 %v11341, %v11340
      %v11361 = vpack.c.b16 %v11343, %v11342
      %v11362 = vpack.c.b16 %v11345, %v11344
      %v11363 = vpack.c.b16 %v11347, %v11346
      %v11364 = vpack.c.b16 %v11349, %v11348
      %v11365 = vpack.c.b16 %v11351, %v11350
      %v11366 = vpack.c.b16 %v11353, %v11352
      %v11367 = vpack.c.b16 %v11354, %v11354
      %v11381 = vsel %vm1971, %v11210, 0
      %v11384 = vsel %vm1971, %v11212, 0
      %v11387 = vsel %vm1971, %v11214, 0
      %v11390 = vsel %vm1971, %v11216, 0
      %v11393 = vsel %vm1971, %v11218, 0
      %v11396 = vsel %vm1971, %v11220, 0
      %v11399 = vsel %vm1971, %v11222, 0
      %v11402 = vsel %vm1971, %v11224, 0
      %v11405 = vsel %vm1971, %v11226, 0
      %v11408 = vsel %vm1971, %v11228, 0
      %v11411 = vsel %vm1971, %v11230, 0
      %v11414 = vsel %vm1971, %v11232, 0
      %v11417 = vsel %vm1971, %v11234, 0
      %v11420 = vsel %vm1971, %v11236, 0
      %v11423 = vsel %vm1971, %v11238, 0
      %v11426 = vsel %vm1971, %v11240, 0
      %v11429 = vsel %vm1971, %v11242, 0
      %v11432 = vsel %vm1971, %v11244, 0
      %v11435 = vsel %vm1971, %v11246, 0
      %v11438 = vsel %vm1971, %v11248, 0
      %v11441 = vsel %vm1971, %v11250, 0
      %v11444 = vsel %vm1971, %v11252, 0
      %v11447 = vsel %vm1971, %v11254, 0
      %v11450 = vsel %vm1971, %v11256, 0
      %v11453 = vsel %vm1971, %v11258, 0
      %v11456 = vsel %vm1971, %v11260, 0
      %v11459 = vsel %vm1971, %v11262, 0
      %v11462 = vsel %vm1971, %v11264, 0
      %v11465 = vsel %vm1971, %v11266, 0
      %v11468 = vsel %vm1971, %v11268, 0
      %v11471 = vsel %vm1971, %v11270, 0
      %v11474 = vsel %vm1971, %v11272, 0
      %v11477 = vsel %vm2068, %v11367, 0
      %11479 = vmatprep.subr.bf16.mxu0 0
      %11480 = vmatpush1.bf16.msra.mxu0 %v11355
      %11481 = vmatprep.subr.bf16.mxu0 0
      %11482 = vmatpush1.bf16.msra.mxu0 %v11356
      %11483 = vmatprep.subr.bf16.mxu0 0
      %11484 = vmatpush1.bf16.msra.mxu0 %v11357
      %11485 = vmatprep.subr.bf16.mxu0 0
      %11486 = vmatpush1.bf16.msra.mxu0 %v11358
      %11487 = vmatprep.subr.bf16.mxu0 0
      %11488 = vmatpush1.bf16.msra.mxu0 %v11359
      %11489 = vmatprep.subr.bf16.mxu0 0
      %11490 = vmatpush1.bf16.msra.mxu0 %v11360
      %11491 = vmatprep.subr.bf16.mxu0 0
      %11492 = vmatpush1.bf16.msra.mxu0 %v11361
      %11493 = vmatprep.subr.bf16.mxu0 0
      %11494 = vmatpush1.bf16.msra.mxu0 %v11362
      %11495 = vmatprep.subr.bf16.mxu0 0
      %11496 = vmatpush1.bf16.msra.mxu0 %v11363
      %11497 = vmatprep.subr.bf16.mxu0 0
      %11498 = vmatpush1.bf16.msra.mxu0 %v11364
      %11499 = vmatprep.subr.bf16.mxu0 0
      %11500 = vmatpush1.bf16.msra.mxu0 %v11365
      %11501 = vmatprep.subr.bf16.mxu0 0
      %11502 = vmatpush1.bf16.msra.mxu0 %v11366
      %11503 = vmatprep.subr.bf16.mxu0 0
      %11504 = vmatpush1.bf16.msra.mxu0 %v11477
      %11505 = vmatprep.subr.bf16.mxu0 0
      %11506 = vmatpush1.bf16.msra.mxu0 0
      %11507 = vmatprep.subr.bf16.mxu0 0
      %11508 = vmatpush1.bf16.msra.mxu0 0
      %11509 = vmatprep.subr.bf16.mxu0 0
      %11510 = vmatpush1.bf16.msra.mxu0 0
      %11511 = vmatprep.mubr.bf16.mxu0 %v11381
      %11512 = vmatmul.mubr.bf16.gmra.mrb[0].mxu0 %v11209
      %v11513 = vpop.f32.mrb[0].mxu0
      %v11514 = vadd.f32 %v11303, %v11513
      %v11515 = vpop.f32.mrb[0].mxu0
      %v11516 = vpop.f32.mrb[0].mxu0
      %v11517 = vadd.f32 %v11303, %v11516
      %v11518 = vpop.f32.mrb[0].mxu0
      %11519 = vmatprep.mubr.bf16.mxu0 %v11384
      %11520 = vmatmul.mubr.bf16.gmra.mrb[0].mxu0 %v11211
      %v11521 = vpop.f32.mrb[0].mxu0
      %v11522 = vadd.f32 %v11303, %v11521
      %v11523 = vpop.f32.mrb[0].mxu0
      %v11524 = vpop.f32.mrb[0].mxu0
      %v11525 = vadd.f32 %v11303, %v11524
      %v11526 = vpop.f32.mrb[0].mxu0
      %11527 = vmatprep.mubr.bf16.mxu0 %v11387
      %11528 = vmatmul.mubr.bf16.gmra.mrb[0].mxu0 %v11213
      %v11529 = vpop.f32.mrb[0].mxu0
      %v11530 = vadd.f32 %v11303, %v11529
      %v11531 = vpop.f32.mrb[0].mxu0
      %v11532 = vpop.f32.mrb[0].mxu0
      %v11533 = vadd.f32 %v11303, %v11532
      %v11534 = vpop.f32.mrb[0].mxu0
      %11535 = vmatprep.mubr.bf16.mxu0 %v11390
      %11536 = vmatmul.mubr.bf16.gmra.mrb[0].mxu0 %v11215
      %v11537 = vpop.f32.mrb[0].mxu0
      %v11538 = vadd.f32 %v11303, %v11537
      %v11539 = vpop.f32.mrb[0].mxu0
      %v11540 = vpop.f32.mrb[0].mxu0
      %v11541 = vadd.f32 %v11303, %v11540
      %v11542 = vpop.f32.mrb[0].mxu0
      %11543 = vmatprep.mubr.bf16.mxu0 %v11393
      %11544 = vmatmul.mubr.bf16.gmra.mrb[0].mxu0 %v11217
      %v11545 = vpop.f32.mrb[0].mxu0
      %v11546 = vadd.f32 %v11303, %v11545
      %v11547 = vpop.f32.mrb[0].mxu0
      %v11548 = vpop.f32.mrb[0].mxu0
      %v11549 = vadd.f32 %v11303, %v11548
      %v11550 = vpop.f32.mrb[0].mxu0
      %11551 = vmatprep.mubr.bf16.mxu0 %v11396
      %11552 = vmatmul.mubr.bf16.gmra.mrb[0].mxu0 %v11219
      %v11553 = vpop.f32.mrb[0].mxu0
      %v11554 = vadd.f32 %v11303, %v11553
      %v11555 = vpop.f32.mrb[0].mxu0
      %v11556 = vpop.f32.mrb[0].mxu0
      %v11557 = vadd.f32 %v11303, %v11556
      %v11558 = vpop.f32.mrb[0].mxu0
      %11559 = vmatprep.mubr.bf16.mxu0 %v11399
      %11560 = vmatmul.mubr.bf16.gmra.mrb[0].mxu0 %v11221
      %v11561 = vpop.f32.mrb[0].mxu0
      %v11562 = vadd.f32 %v11303, %v11561
      %v11563 = vpop.f32.mrb[0].mxu0
      %v11564 = vpop.f32.mrb[0].mxu0
      %v11565 = vadd.f32 %v11303, %v11564
      %v11566 = vpop.f32.mrb[0].mxu0
      %11567 = vmatprep.mubr.bf16.mxu0 %v11402
      %11568 = vmatmul.mubr.bf16.gmra.mrb[0].mxu0 %v11223
      %v11569 = vpop.f32.mrb[0].mxu0
      %v11570 = vadd.f32 %v11303, %v11569
      %v11571 = vpop.f32.mrb[0].mxu0
      %v11572 = vpop.f32.mrb[0].mxu0
      %v11573 = vadd.f32 %v11303, %v11572
      %v11574 = vpop.f32.mrb[0].mxu0
      %11575 = vmatprep.mubr.bf16.mxu0 %v11405
      %11576 = vmatmul.mubr.bf16.gmra.mrb[0].mxu0 %v11225
      %v11577 = vpop.f32.mrb[0].mxu0
      %v11578 = vadd.f32 %v11303, %v11577
      %v11579 = vpop.f32.mrb[0].mxu0
      %v11580 = vpop.f32.mrb[0].mxu0
      %v11581 = vadd.f32 %v11303, %v11580
      %v11582 = vpop.f32.mrb[0].mxu0
      %11583 = vmatprep.mubr.bf16.mxu0 %v11408
      %11584 = vmatmul.mubr.bf16.gmra.mrb[0].mxu0 %v11227
      %v11585 = vpop.f32.mrb[0].mxu0
      %v11586 = vadd.f32 %v11303, %v11585
      %v11587 = vpop.f32.mrb[0].mxu0
      %v11588 = vpop.f32.mrb[0].mxu0
      %v11589 = vadd.f32 %v11303, %v11588
      %v11590 = vpop.f32.mrb[0].mxu0
      %11591 = vmatprep.mubr.bf16.mxu0 %v11411
      %11592 = vmatmul.mubr.bf16.gmra.mrb[0].mxu0 %v11229
      %v11593 = vpop.f32.mrb[0].mxu0
      %v11594 = vadd.f32 %v11303, %v11593
      %v11595 = vpop.f32.mrb[0].mxu0
      %v11596 = vpop.f32.mrb[0].mxu0
      %v11597 = vadd.f32 %v11303, %v11596
      %v11598 = vpop.f32.mrb[0].mxu0
      %11599 = vmatprep.mubr.bf16.mxu0 %v11414
      %11600 = vmatmul.mubr.bf16.gmra.mrb[0].mxu0 %v11231
      %v11601 = vpop.f32.mrb[0].mxu0
      %v11602 = vadd.f32 %v11303, %v11601
      %v11603 = vpop.f32.mrb[0].mxu0
      %v11604 = vpop.f32.mrb[0].mxu0
      %v11605 = vadd.f32 %v11303, %v11604
      %v11606 = vpop.f32.mrb[0].mxu0
      %11607 = vmatprep.mubr.bf16.mxu0 %v11417
      %11608 = vmatmul.mubr.bf16.gmra.mrb[0].mxu0 %v11233
      %v11609 = vpop.f32.mrb[0].mxu0
      %v11610 = vadd.f32 %v11303, %v11609
      %v11611 = vpop.f32.mrb[0].mxu0
      %v11612 = vpop.f32.mrb[0].mxu0
      %v11613 = vadd.f32 %v11303, %v11612
      %v11614 = vpop.f32.mrb[0].mxu0
      %11615 = vmatprep.mubr.bf16.mxu0 %v11420
      %11616 = vmatmul.mubr.bf16.gmra.mrb[0].mxu0 %v11235
      %v11617 = vpop.f32.mrb[0].mxu0
      %v11618 = vadd.f32 %v11303, %v11617
      %v11619 = vpop.f32.mrb[0].mxu0
      %v11620 = vpop.f32.mrb[0].mxu0
      %v11621 = vadd.f32 %v11303, %v11620
      %v11622 = vpop.f32.mrb[0].mxu0
      %11623 = vmatprep.mubr.bf16.mxu0 %v11423
      %11624 = vmatmul.mubr.bf16.gmra.mrb[0].mxu0 %v11237
      %v11625 = vpop.f32.mrb[0].mxu0
      %v11626 = vadd.f32 %v11303, %v11625
      %v11627 = vpop.f32.mrb[0].mxu0
      %v11628 = vpop.f32.mrb[0].mxu0
      %v11629 = vadd.f32 %v11303, %v11628
      %v11630 = vpop.f32.mrb[0].mxu0
      %11631 = vmatprep.mubr.bf16.mxu0 %v11426
      %11632 = vmatmul.mubr.bf16.gmra.mrb[0].mxu0 %v11239
      %v11633 = vpop.f32.mrb[0].mxu0
      %v11634 = vadd.f32 %v11303, %v11633
      %v11635 = vpop.f32.mrb[0].mxu0
      %v11636 = vpop.f32.mrb[0].mxu0
      %v11637 = vadd.f32 %v11303, %v11636
      %v11638 = vpop.f32.mrb[0].mxu0
      %11639 = vmatprep.mubr.bf16.mxu0 %v11429
      %11640 = vmatmul.mubr.bf16.gmra.mrb[0].mxu0 %v11241
      %v11641 = vpop.f32.mrb[0].mxu0
      %v11642 = vadd.f32 %v11303, %v11641
      %v11643 = vpop.f32.mrb[0].mxu0
      %v11644 = vpop.f32.mrb[0].mxu0
      %v11645 = vadd.f32 %v11303, %v11644
      %v11646 = vpop.f32.mrb[0].mxu0
      %11647 = vmatprep.mubr.bf16.mxu0 %v11432
      %11648 = vmatmul.mubr.bf16.gmra.mrb[0].mxu0 %v11243
      %v11649 = vpop.f32.mrb[0].mxu0
      %v11650 = vadd.f32 %v11303, %v11649
      %v11651 = vpop.f32.mrb[0].mxu0
      %v11652 = vpop.f32.mrb[0].mxu0
      %v11653 = vadd.f32 %v11303, %v11652
      %v11654 = vpop.f32.mrb[0].mxu0
      %11655 = vmatprep.mubr.bf16.mxu0 %v11435
      %11656 = vmatmul.mubr.bf16.gmra.mrb[0].mxu0 %v11245
      %v11657 = vpop.f32.mrb[0].mxu0
      %v11658 = vadd.f32 %v11303, %v11657
      %v11659 = vpop.f32.mrb[0].mxu0
      %v11660 = vpop.f32.mrb[0].mxu0
      %v11661 = vadd.f32 %v11303, %v11660
      %v11662 = vpop.f32.mrb[0].mxu0
      %11663 = vmatprep.mubr.bf16.mxu0 %v11438
      %11664 = vmatmul.mubr.bf16.gmra.mrb[0].mxu0 %v11247
      %v11665 = vpop.f32.mrb[0].mxu0
      %v11666 = vadd.f32 %v11303, %v11665
      %v11667 = vpop.f32.mrb[0].mxu0
      %v11668 = vpop.f32.mrb[0].mxu0
      %v11669 = vadd.f32 %v11303, %v11668
      %v11670 = vpop.f32.mrb[0].mxu0
      %11671 = vmatprep.mubr.bf16.mxu0 %v11441
      %11672 = vmatmul.mubr.bf16.gmra.mrb[0].mxu0 %v11249
      %v11673 = vpop.f32.mrb[0].mxu0
      %v11674 = vadd.f32 %v11303, %v11673
      %v11675 = vpop.f32.mrb[0].mxu0
      %v11676 = vpop.f32.mrb[0].mxu0
      %v11677 = vadd.f32 %v11303, %v11676
      %v11678 = vpop.f32.mrb[0].mxu0
      %11679 = vmatprep.mubr.bf16.mxu0 %v11444
      %11680 = vmatmul.mubr.bf16.gmra.mrb[0].mxu0 %v11251
      %v11681 = vpop.f32.mrb[0].mxu0
      %v11682 = vadd.f32 %v11303, %v11681
      %v11683 = vpop.f32.mrb[0].mxu0
      %v11684 = vpop.f32.mrb[0].mxu0
      %v11685 = vadd.f32 %v11303, %v11684
      %v11686 = vpop.f32.mrb[0].mxu0
      %11687 = vmatprep.mubr.bf16.mxu0 %v11447
      %11688 = vmatmul.mubr.bf16.gmra.mrb[0].mxu0 %v11253
      %v11689 = vpop.f32.mrb[0].mxu0
      %v11690 = vadd.f32 %v11303, %v11689
      %v11691 = vpop.f32.mrb[0].mxu0
      %v11692 = vpop.f32.mrb[0].mxu0
      %v11693 = vadd.f32 %v11303, %v11692
      %v11694 = vpop.f32.mrb[0].mxu0
      %11695 = vmatprep.mubr.bf16.mxu0 %v11450
      %11696 = vmatmul.mubr.bf16.gmra.mrb[0].mxu0 %v11255
      %v11697 = vpop.f32.mrb[0].mxu0
      %v11698 = vadd.f32 %v11303, %v11697
      %v11699 = vpop.f32.mrb[0].mxu0
      %v11700 = vpop.f32.mrb[0].mxu0
      %v11701 = vadd.f32 %v11303, %v11700
      %v11702 = vpop.f32.mrb[0].mxu0
      %11703 = vmatprep.mubr.bf16.mxu0 %v11453
      %11704 = vmatmul.mubr.bf16.gmra.mrb[0].mxu0 %v11257
      %v11705 = vpop.f32.mrb[0].mxu0
      %v11706 = vadd.f32 %v11303, %v11705
      %v11707 = vpop.f32.mrb[0].mxu0
      %v11708 = vpop.f32.mrb[0].mxu0
      %v11709 = vadd.f32 %v11303, %v11708
      %v11710 = vpop.f32.mrb[0].mxu0
      %11711 = vmatprep.mubr.bf16.mxu0 %v11456
      %11712 = vmatmul.mubr.bf16.gmra.mrb[0].mxu0 %v11259
      %v11713 = vpop.f32.mrb[0].mxu0
      %v11714 = vadd.f32 %v11303, %v11713
      %v11715 = vpop.f32.mrb[0].mxu0
      %v11716 = vpop.f32.mrb[0].mxu0
      %v11717 = vadd.f32 %v11303, %v11716
      %v11718 = vpop.f32.mrb[0].mxu0
      %11719 = vmatprep.mubr.bf16.mxu0 %v11459
      %11720 = vmatmul.mubr.bf16.gmra.mrb[0].mxu0 %v11261
      %v11721 = vpop.f32.mrb[0].mxu0
      %v11722 = vadd.f32 %v11303, %v11721
      %v11723 = vpop.f32.mrb[0].mxu0
      %v11724 = vpop.f32.mrb[0].mxu0
      %v11725 = vadd.f32 %v11303, %v11724
      %v11726 = vpop.f32.mrb[0].mxu0
      %11727 = vmatprep.mubr.bf16.mxu0 %v11462
      %11728 = vmatmul.mubr.bf16.gmra.mrb[0].mxu0 %v11263
      %v11729 = vpop.f32.mrb[0].mxu0
      %v11730 = vadd.f32 %v11303, %v11729
      %v11731 = vpop.f32.mrb[0].mxu0
      %v11732 = vpop.f32.mrb[0].mxu0
      %v11733 = vadd.f32 %v11303, %v11732
      %v11734 = vpop.f32.mrb[0].mxu0
      %11735 = vmatprep.mubr.bf16.mxu0 %v11465
      %11736 = vmatmul.mubr.bf16.gmra.mrb[0].mxu0 %v11265
      %v11737 = vpop.f32.mrb[0].mxu0
      %v11738 = vadd.f32 %v11303, %v11737
      %v11739 = vpop.f32.mrb[0].mxu0
      %v11740 = vpop.f32.mrb[0].mxu0
      %v11741 = vadd.f32 %v11303, %v11740
      %v11742 = vpop.f32.mrb[0].mxu0
      %11743 = vmatprep.mubr.bf16.mxu0 %v11468
      %11744 = vmatmul.mubr.bf16.gmra.mrb[0].mxu0 %v11267
      %v11745 = vpop.f32.mrb[0].mxu0
      %v11746 = vadd.f32 %v11303, %v11745
      %v11747 = vpop.f32.mrb[0].mxu0
      %v11748 = vpop.f32.mrb[0].mxu0
      %v11749 = vadd.f32 %v11303, %v11748
      %v11750 = vpop.f32.mrb[0].mxu0
      %11751 = vmatprep.mubr.bf16.mxu0 %v11471
      %11752 = vmatmul.mubr.bf16.gmra.mrb[0].mxu0 %v11269
      %v11753 = vpop.f32.mrb[0].mxu0
      %v11754 = vadd.f32 %v11303, %v11753
      %v11755 = vpop.f32.mrb[0].mxu0
      %v11756 = vpop.f32.mrb[0].mxu0
      %v11757 = vadd.f32 %v11303, %v11756
      %v11758 = vpop.f32.mrb[0].mxu0
      %11759 = vmatprep.mubr.bf16.mxu0 %v11474
      %11760 = vmatmul.mubr.bf16.gmra.mrb[0].mxu0 %v11271
      %v11761 = vpop.f32.mrb[0].mxu0
      %v11762 = vadd.f32 %v11303, %v11761
      %v11763 = vpop.f32.mrb[0].mxu0
      %v11764 = vpop.f32.mrb[0].mxu0
      %v11765 = vadd.f32 %v11303, %v11764
      %v11766 = vpop.f32.mrb[0].mxu0
      %11767 = vdwg.mxu0
      %v11768 = vsub.f32 0.0, %v11514
      %v11769 = vsub.f32 0.0, %v11517
      %v11770 = vsub.f32 0.0, %v11522
      %v11771 = vsub.f32 0.0, %v11525
      %v11772 = vsub.f32 0.0, %v11530
      %v11773 = vsub.f32 0.0, %v11533
      %v11774 = vsub.f32 0.0, %v11538
      %v11775 = vsub.f32 0.0, %v11541
      %v11776 = vsub.f32 0.0, %v11546
      %v11777 = vsub.f32 0.0, %v11549
      %v11778 = vsub.f32 0.0, %v11554
      %v11779 = vsub.f32 0.0, %v11557
      %v11780 = vsub.f32 0.0, %v11562
      %v11781 = vsub.f32 0.0, %v11565
      %v11782 = vsub.f32 0.0, %v11570
      %v11783 = vsub.f32 0.0, %v11573
      %v11784 = vsub.f32 0.0, %v11578
      %v11785 = vsub.f32 0.0, %v11581
      %v11786 = vsub.f32 0.0, %v11586
      %v11787 = vsub.f32 0.0, %v11589
      %v11788 = vsub.f32 0.0, %v11594
      %v11789 = vsub.f32 0.0, %v11597
      %v11790 = vsub.f32 0.0, %v11602
      %v11791 = vsub.f32 0.0, %v11605
      %v11792 = vsub.f32 0.0, %v11610
      %v11793 = vsub.f32 0.0, %v11613
      %v11794 = vsub.f32 0.0, %v11618
      %v11795 = vsub.f32 0.0, %v11621
      %v11796 = vsub.f32 0.0, %v11626
      %v11797 = vsub.f32 0.0, %v11629
      %v11798 = vsub.f32 0.0, %v11634
      %v11799 = vsub.f32 0.0, %v11637
      %v11800 = vsub.f32 0.0, %v11642
      %v11801 = vsub.f32 0.0, %v11645
      %v11802 = vsub.f32 0.0, %v11650
      %v11803 = vsub.f32 0.0, %v11653
      %v11804 = vsub.f32 0.0, %v11658
      %v11805 = vsub.f32 0.0, %v11661
      %v11806 = vsub.f32 0.0, %v11666
      %v11807 = vsub.f32 0.0, %v11669
      %v11808 = vsub.f32 0.0, %v11674
      %v11809 = vsub.f32 0.0, %v11677
      %v11810 = vsub.f32 0.0, %v11682
      %v11811 = vsub.f32 0.0, %v11685
      %v11812 = vsub.f32 0.0, %v11690
      %v11813 = vsub.f32 0.0, %v11693
      %v11814 = vsub.f32 0.0, %v11698
      %v11815 = vsub.f32 0.0, %v11701
      %v11816 = vsub.f32 0.0, %v11706
      %v11817 = vsub.f32 0.0, %v11709
      %v11818 = vsub.f32 0.0, %v11714
      %v11819 = vsub.f32 0.0, %v11717
      %v11820 = vsub.f32 0.0, %v11722
      %v11821 = vsub.f32 0.0, %v11725
      %v11822 = vsub.f32 0.0, %v11730
      %v11823 = vsub.f32 0.0, %v11733
      %v11824 = vsub.f32 0.0, %v11738
      %v11825 = vsub.f32 0.0, %v11741
      %v11826 = vsub.f32 0.0, %v11746
      %v11827 = vsub.f32 0.0, %v11749
      %v11828 = vsub.f32 0.0, %v11754
      %v11829 = vsub.f32 0.0, %v11757
      %v11830 = vsub.f32 0.0, %v11762
      %v11831 = vsub.f32 0.0, %v11765
      %v11832 = vmul.f32 %v11768, 1.442695
      %v11833 = vpow.pop %v11832
      %v11834 = vmul.f32 %v11769, 1.442695
      %v11835 = vpow.pop %v11834
      %v11836 = vmul.f32 %v11770, 1.442695
      %v11837 = vpow.pop %v11836
      %v11838 = vmul.f32 %v11771, 1.442695
      %v11839 = vpow.pop %v11838
      %v11840 = vmul.f32 %v11772, 1.442695
      %v11841 = vpow.pop %v11840
      %v11842 = vmul.f32 %v11773, 1.442695
      %v11843 = vpow.pop %v11842
      %v11844 = vmul.f32 %v11774, 1.442695
      %v11845 = vpow.pop %v11844
      %v11846 = vmul.f32 %v11775, 1.442695
      %v11847 = vpow.pop %v11846
      %v11848 = vmul.f32 %v11776, 1.442695
      %v11849 = vpow.pop %v11848
      %v11850 = vmul.f32 %v11777, 1.442695
      %v11851 = vpow.pop %v11850
      %v11852 = vmul.f32 %v11778, 1.442695
      %v11853 = vpow.pop %v11852
      %v11854 = vmul.f32 %v11779, 1.442695
      %v11855 = vpow.pop %v11854
      %v11856 = vmul.f32 %v11780, 1.442695
      %v11857 = vpow.pop %v11856
      %v11858 = vmul.f32 %v11781, 1.442695
      %v11859 = vpow.pop %v11858
      %v11860 = vmul.f32 %v11782, 1.442695
      %v11861 = vpow.pop %v11860
      %v11862 = vmul.f32 %v11783, 1.442695
      %v11863 = vpow.pop %v11862
      %v11864 = vmul.f32 %v11784, 1.442695
      %v11865 = vpow.pop %v11864
      %v11866 = vmul.f32 %v11785, 1.442695
      %v11867 = vpow.pop %v11866
      %v11868 = vmul.f32 %v11786, 1.442695
      %v11869 = vpow.pop %v11868
      %v11870 = vmul.f32 %v11787, 1.442695
      %v11871 = vpow.pop %v11870
      %v11872 = vmul.f32 %v11788, 1.442695
      %v11873 = vpow.pop %v11872
      %v11874 = vmul.f32 %v11789, 1.442695
      %v11875 = vpow.pop %v11874
      %v11876 = vmul.f32 %v11790, 1.442695
      %v11877 = vpow.pop %v11876
      %v11878 = vmul.f32 %v11791, 1.442695
      %v11879 = vpow.pop %v11878
      %v11880 = vmul.f32 %v11792, 1.442695
      %v11881 = vpow.pop %v11880
      %v11882 = vmul.f32 %v11793, 1.442695
      %v11883 = vpow.pop %v11882
      %v11884 = vmul.f32 %v11794, 1.442695
      %v11885 = vpow.pop %v11884
      %v11886 = vmul.f32 %v11795, 1.442695
      %v11887 = vpow.pop %v11886
      %v11888 = vmul.f32 %v11796, 1.442695
      %v11889 = vpow.pop %v11888
      %v11890 = vmul.f32 %v11797, 1.442695
      %v11891 = vpow.pop %v11890
      %v11892 = vmul.f32 %v11798, 1.442695
      %v11893 = vpow.pop %v11892
      %v11894 = vmul.f32 %v11799, 1.442695
      %v11895 = vpow.pop %v11894
      %v11896 = vmul.f32 %v11800, 1.442695
      %v11897 = vpow.pop %v11896
      %v11898 = vmul.f32 %v11801, 1.442695
      %v11899 = vpow.pop %v11898
      %v11900 = vmul.f32 %v11802, 1.442695
      %v11901 = vpow.pop %v11900
      %v11902 = vmul.f32 %v11803, 1.442695
      %v11903 = vpow.pop %v11902
      %v11904 = vmul.f32 %v11804, 1.442695
      %v11905 = vpow.pop %v11904
      %v11906 = vmul.f32 %v11805, 1.442695
      %v11907 = vpow.pop %v11906
      %v11908 = vmul.f32 %v11806, 1.442695
      %v11909 = vpow.pop %v11908
      %v11910 = vmul.f32 %v11807, 1.442695
      %v11911 = vpow.pop %v11910
      %v11912 = vmul.f32 %v11808, 1.442695
      %v11913 = vpow.pop %v11912
      %v11914 = vmul.f32 %v11809, 1.442695
      %v11915 = vpow.pop %v11914
      %v11916 = vmul.f32 %v11810, 1.442695
      %v11917 = vpow.pop %v11916
      %v11918 = vmul.f32 %v11811, 1.442695
      %v11919 = vpow.pop %v11918
      %v11920 = vmul.f32 %v11812, 1.442695
      %v11921 = vpow.pop %v11920
      %v11922 = vmul.f32 %v11813, 1.442695
      %v11923 = vpow.pop %v11922
      %v11924 = vmul.f32 %v11814, 1.442695
      %v11925 = vpow.pop %v11924
      %v11926 = vmul.f32 %v11815, 1.442695
      %v11927 = vpow.pop %v11926
      %v11928 = vmul.f32 %v11816, 1.442695
      %v11929 = vpow.pop %v11928
      %v11930 = vmul.f32 %v11817, 1.442695
      %v11931 = vpow.pop %v11930
      %v11932 = vmul.f32 %v11818, 1.442695
      %v11933 = vpow.pop %v11932
      %v11934 = vmul.f32 %v11819, 1.442695
      %v11935 = vpow.pop %v11934
      %v11936 = vmul.f32 %v11820, 1.442695
      %v11937 = vpow.pop %v11936
      %v11938 = vmul.f32 %v11821, 1.442695
      %v11939 = vpow.pop %v11938
      %v11940 = vmul.f32 %v11822, 1.442695
      %v11941 = vpow.pop %v11940
      %v11942 = vmul.f32 %v11823, 1.442695
      %v11943 = vpow.pop %v11942
      %v11944 = vmul.f32 %v11824, 1.442695
      %v11945 = vpow.pop %v11944
      %v11946 = vmul.f32 %v11825, 1.442695
      %v11947 = vpow.pop %v11946
      %v11948 = vmul.f32 %v11826, 1.442695
      %v11949 = vpow.pop %v11948
      %v11950 = vmul.f32 %v11827, 1.442695
      %v11951 = vpow.pop %v11950
      %v11952 = vmul.f32 %v11828, 1.442695
      %v11953 = vpow.pop %v11952
      %v11954 = vmul.f32 %v11829, 1.442695
      %v11955 = vpow.pop %v11954
      %v11956 = vmul.f32 %v11830, 1.442695
      %v11957 = vpow.pop %v11956
      %v11958 = vmul.f32 %v11831, 1.442695
      %v11959 = vpow.pop %v11958
      %v11960 = vadd.f32 %v11833, 1.0
      %v11961 = vadd.f32 %v11835, 1.0
      %v11962 = vadd.f32 %v11837, 1.0
      %v11963 = vadd.f32 %v11839, 1.0
      %v11964 = vadd.f32 %v11841, 1.0
      %v11965 = vadd.f32 %v11843, 1.0
      %v11966 = vadd.f32 %v11845, 1.0
      %v11967 = vadd.f32 %v11847, 1.0
      %v11968 = vadd.f32 %v11849, 1.0
      %v11969 = vadd.f32 %v11851, 1.0
      %v11970 = vadd.f32 %v11853, 1.0
      %v11971 = vadd.f32 %v11855, 1.0
      %v11972 = vadd.f32 %v11857, 1.0
      %v11973 = vadd.f32 %v11859, 1.0
      %v11974 = vadd.f32 %v11861, 1.0
      %v11975 = vadd.f32 %v11863, 1.0
      %v11976 = vadd.f32 %v11865, 1.0
      %v11977 = vadd.f32 %v11867, 1.0
      %v11978 = vadd.f32 %v11869, 1.0
      %v11979 = vadd.f32 %v11871, 1.0
      %v11980 = vadd.f32 %v11873, 1.0
      %v11981 = vadd.f32 %v11875, 1.0
      %v11982 = vadd.f32 %v11877, 1.0
      %v11983 = vadd.f32 %v11879, 1.0
      %v11984 = vadd.f32 %v11881, 1.0
      %v11985 = vadd.f32 %v11883, 1.0
      %v11986 = vadd.f32 %v11885, 1.0
      %v11987 = vadd.f32 %v11887, 1.0
      %v11988 = vadd.f32 %v11889, 1.0
      %v11989 = vadd.f32 %v11891, 1.0
      %v11990 = vadd.f32 %v11893, 1.0
      %v11991 = vadd.f32 %v11895, 1.0
      %v11992 = vadd.f32 %v11897, 1.0
      %v11993 = vadd.f32 %v11899, 1.0
      %v11994 = vadd.f32 %v11901, 1.0
      %v11995 = vadd.f32 %v11903, 1.0
      %v11996 = vadd.f32 %v11905, 1.0
      %v11997 = vadd.f32 %v11907, 1.0
      %v11998 = vadd.f32 %v11909, 1.0
      %v11999 = vadd.f32 %v11911, 1.0
      %v12000 = vadd.f32 %v11913, 1.0
      %v12001 = vadd.f32 %v11915, 1.0
      %v12002 = vadd.f32 %v11917, 1.0
      %v12003 = vadd.f32 %v11919, 1.0
      %v12004 = vadd.f32 %v11921, 1.0
      %v12005 = vadd.f32 %v11923, 1.0
      %v12006 = vadd.f32 %v11925, 1.0
      %v12007 = vadd.f32 %v11927, 1.0
      %v12008 = vadd.f32 %v11929, 1.0
      %v12009 = vadd.f32 %v11931, 1.0
      %v12010 = vadd.f32 %v11933, 1.0
      %v12011 = vadd.f32 %v11935, 1.0
      %v12012 = vadd.f32 %v11937, 1.0
      %v12013 = vadd.f32 %v11939, 1.0
      %v12014 = vadd.f32 %v11941, 1.0
      %v12015 = vadd.f32 %v11943, 1.0
      %v12016 = vadd.f32 %v11945, 1.0
      %v12017 = vadd.f32 %v11947, 1.0
      %v12018 = vadd.f32 %v11949, 1.0
      %v12019 = vadd.f32 %v11951, 1.0
      %v12020 = vadd.f32 %v11953, 1.0
      %v12021 = vadd.f32 %v11955, 1.0
      %v12022 = vadd.f32 %v11957, 1.0
      %v12023 = vadd.f32 %v11959, 1.0
      %v12024 = vrcp.pop %v11960
      %v12025 = vrcp.pop %v11961
      %v12026 = vrcp.pop %v11962
      %v12027 = vrcp.pop %v11963
      %v12028 = vrcp.pop %v11964
      %v12029 = vrcp.pop %v11965
      %v12030 = vrcp.pop %v11966
      %v12031 = vrcp.pop %v11967
      %v12032 = vrcp.pop %v11968
      %v12033 = vrcp.pop %v11969
      %v12034 = vrcp.pop %v11970
      %v12035 = vrcp.pop %v11971
      %v12036 = vrcp.pop %v11972
      %v12037 = vrcp.pop %v11973
      %v12038 = vrcp.pop %v11974
      %v12039 = vrcp.pop %v11975
      %v12040 = vrcp.pop %v11976
      %v12041 = vrcp.pop %v11977
      %v12042 = vrcp.pop %v11978
      %v12043 = vrcp.pop %v11979
      %v12044 = vrcp.pop %v11980
      %v12045 = vrcp.pop %v11981
      %v12046 = vrcp.pop %v11982
      %v12047 = vrcp.pop %v11983
      %v12048 = vrcp.pop %v11984
      %v12049 = vrcp.pop %v11985
      %v12050 = vrcp.pop %v11986
      %v12051 = vrcp.pop %v11987
      %v12052 = vrcp.pop %v11988
      %v12053 = vrcp.pop %v11989
      %v12054 = vrcp.pop %v11990
      %v12055 = vrcp.pop %v11991
      %v12056 = vrcp.pop %v11992
      %v12057 = vrcp.pop %v11993
      %v12058 = vrcp.pop %v11994
      %v12059 = vrcp.pop %v11995
      %v12060 = vrcp.pop %v11996
      %v12061 = vrcp.pop %v11997
      %v12062 = vrcp.pop %v11998
      %v12063 = vrcp.pop %v11999
      %v12064 = vrcp.pop %v12000
      %v12065 = vrcp.pop %v12001
      %v12066 = vrcp.pop %v12002
      %v12067 = vrcp.pop %v12003
      %v12068 = vrcp.pop %v12004
      %v12069 = vrcp.pop %v12005
      %v12070 = vrcp.pop %v12006
      %v12071 = vrcp.pop %v12007
      %v12072 = vrcp.pop %v12008
      %v12073 = vrcp.pop %v12009
      %v12074 = vrcp.pop %v12010
      %v12075 = vrcp.pop %v12011
      %v12076 = vrcp.pop %v12012
      %v12077 = vrcp.pop %v12013
      %v12078 = vrcp.pop %v12014
      %v12079 = vrcp.pop %v12015
      %v12080 = vrcp.pop %v12016
      %v12081 = vrcp.pop %v12017
      %v12082 = vrcp.pop %v12018
      %v12083 = vrcp.pop %v12019
      %v12084 = vrcp.pop %v12020
      %v12085 = vrcp.pop %v12021
      %v12086 = vrcp.pop %v12022
      %v12087 = vrcp.pop %v12023
      %vm12088 = vcmask 23552
      %12089 = vst.msk [vmem:[%s928] sm:$0xff] %vm12088, %v12024
      %12090 = vst.msk [vmem:[%s928 + $0x8] sm:$0xff] %vm12088, %v12025
      %12091 = vst.msk [vmem:[%s928 + $0x10] sm:$0xff] %vm12088, %v12026
      %12092 = vst.msk [vmem:[%s928 + $0x18] sm:$0xff] %vm12088, %v12027
      %12093 = vst.msk [vmem:[%s928 + $0x20] sm:$0xff] %vm12088, %v12028
      %12094 = vst.msk [vmem:[%s928 + $0x28] sm:$0xff] %vm12088, %v12029
      %12095 = vst.msk [vmem:[%s928 + $0x30] sm:$0xff] %vm12088, %v12030
      %12096 = vst.msk [vmem:[%s928 + $0x38] sm:$0xff] %vm12088, %v12031
      %12097 = vst.msk [vmem:[%s928 + $0x40] sm:$0xff] %vm12088, %v12032
      %12098 = vst.msk [vmem:[%s928 + $0x48] sm:$0xff] %vm12088, %v12033
      %12099 = vst.msk [vmem:[%s928 + $0x50] sm:$0xff] %vm12088, %v12034
      %12100 = vst.msk [vmem:[%s928 + $0x58] sm:$0xff] %vm12088, %v12035
      %12101 = vst.msk [vmem:[%s928 + $0x60] sm:$0xff] %vm12088, %v12036
      %12102 = vst.msk [vmem:[%s928 + $0x68] sm:$0xff] %vm12088, %v12037
      %12103 = vst.msk [vmem:[%s928 + $0x70] sm:$0xff] %vm12088, %v12038
      %12104 = vst.msk [vmem:[%s928 + $0x78] sm:$0xff] %vm12088, %v12039
      %12105 = vst.msk [vmem:[%s928 + $0x80] sm:$0xff] %vm12088, %v12040
      %12106 = vst.msk [vmem:[%s928 + $0x88] sm:$0xff] %vm12088, %v12041
      %12107 = vst.msk [vmem:[%s928 + $0x90] sm:$0xff] %vm12088, %v12042
      %12108 = vst.msk [vmem:[%s928 + $0x98] sm:$0xff] %vm12088, %v12043
      %12109 = vst.msk [vmem:[%s928 + $0xa0] sm:$0xff] %vm12088, %v12044
      %12110 = vst.msk [vmem:[%s928 + $0xa8] sm:$0xff] %vm12088, %v12045
      %12111 = vst.msk [vmem:[%s928 + $0xb0] sm:$0xff] %vm12088, %v12046
      %12112 = vst.msk [vmem:[%s928 + $0xb8] sm:$0xff] %vm12088, %v12047
      %12113 = vst.msk [vmem:[%s928 + $0xc0] sm:$0xff] %vm12088, %v12048
      %12114 = vst.msk [vmem:[%s928 + $0xc8] sm:$0xff] %vm12088, %v12049
      %12115 = vst.msk [vmem:[%s928 + $0xd0] sm:$0xff] %vm12088, %v12050
      %12116 = vst.msk [vmem:[%s928 + $0xd8] sm:$0xff] %vm12088, %v12051
      %12117 = vst.msk [vmem:[%s928 + $0xe0] sm:$0xff] %vm12088, %v12052
      %12118 = vst.msk [vmem:[%s928 + $0xe8] sm:$0xff] %vm12088, %v12053
      %12119 = vst.msk [vmem:[%s928 + $0xf0] sm:$0xff] %vm12088, %v12054
      %12120 = vst.msk [vmem:[%s928 + $0xf8] sm:$0xff] %vm12088, %v12055
      %12121 = vst.msk [vmem:[%s928 + $0x100] sm:$0xff] %vm12088, %v12056
      %12122 = vst.msk [vmem:[%s928 + $0x108] sm:$0xff] %vm12088, %v12057
      %12123 = vst.msk [vmem:[%s928 + $0x110] sm:$0xff] %vm12088, %v12058
      %12124 = vst.msk [vmem:[%s928 + $0x118] sm:$0xff] %vm12088, %v12059
      %12125 = vst.msk [vmem:[%s928 + $0x120] sm:$0xff] %vm12088, %v12060
      %12126 = vst.msk [vmem:[%s928 + $0x128] sm:$0xff] %vm12088, %v12061
      %12127 = vst.msk [vmem:[%s928 + $0x130] sm:$0xff] %vm12088, %v12062
      %12128 = vst.msk [vmem:[%s928 + $0x138] sm:$0xff] %vm12088, %v12063
      %12129 = vst.msk [vmem:[%s928 + $0x140] sm:$0xff] %vm12088, %v12064
      %12130 = vst.msk [vmem:[%s928 + $0x148] sm:$0xff] %vm12088, %v12065
      %12131 = vst.msk [vmem:[%s928 + $0x150] sm:$0xff] %vm12088, %v12066
      %12132 = vst.msk [vmem:[%s928 + $0x158] sm:$0xff] %vm12088, %v12067
      %12133 = vst.msk [vmem:[%s928 + $0x160] sm:$0xff] %vm12088, %v12068
      %12134 = vst.msk [vmem:[%s928 + $0x168] sm:$0xff] %vm12088, %v12069
      %12135 = vst.msk [vmem:[%s928 + $0x170] sm:$0xff] %vm12088, %v12070
      %12136 = vst.msk [vmem:[%s928 + $0x178] sm:$0xff] %vm12088, %v12071
      %12137 = vst.msk [vmem:[%s928 + $0x180] sm:$0xff] %vm12088, %v12072
      %12138 = vst.msk [vmem:[%s928 + $0x188] sm:$0xff] %vm12088, %v12073
      %12139 = vst.msk [vmem:[%s928 + $0x190] sm:$0xff] %vm12088, %v12074
      %12140 = vst.msk [vmem:[%s928 + $0x198] sm:$0xff] %vm12088, %v12075
      %12141 = vst.msk [vmem:[%s928 + $0x1a0] sm:$0xff] %vm12088, %v12076
      %12142 = vst.msk [vmem:[%s928 + $0x1a8] sm:$0xff] %vm12088, %v12077
      %12143 = vst.msk [vmem:[%s928 + $0x1b0] sm:$0xff] %vm12088, %v12078
      %12144 = vst.msk [vmem:[%s928 + $0x1b8] sm:$0xff] %vm12088, %v12079
      %12145 = vst.msk [vmem:[%s928 + $0x1c0] sm:$0xff] %vm12088, %v12080
      %12146 = vst.msk [vmem:[%s928 + $0x1c8] sm:$0xff] %vm12088, %v12081
      %12147 = vst.msk [vmem:[%s928 + $0x1d0] sm:$0xff] %vm12088, %v12082
      %12148 = vst.msk [vmem:[%s928 + $0x1d8] sm:$0xff] %vm12088, %v12083
      %12149 = vst.msk [vmem:[%s928 + $0x1e0] sm:$0xff] %vm12088, %v12084
      %12150 = vst.msk [vmem:[%s928 + $0x1e8] sm:$0xff] %vm12088, %v12085
      %12151 = vst.msk [vmem:[%s928 + $0x1f0] sm:$0xff] %vm12088, %v12086
      %12152 = vst.msk [vmem:[%s928 + $0x1f8] sm:$0xff] %vm12088, %v12087
      %12217 = vrot.lane.b32.xlu0 %v9470, 59
      %v12218 = vpop.permute.xlu0 %12217
      %12219 = vrot.lane.b32.xlu0 %v9471, 59
      %v12220 = vpop.permute.xlu0 %12219
      %12221 = vrot.lane.b32.xlu0 %v9472, 59
      %v12222 = vpop.permute.xlu0 %12221
      %12223 = vrot.lane.b32.xlu0 %v9473, 59
      %v12224 = vpop.permute.xlu0 %12223
      %12225 = vrot.lane.b32.xlu0 %v9474, 59
      %v12226 = vpop.permute.xlu0 %12225
      %12227 = vrot.lane.b32.xlu0 %v9475, 59
      %v12228 = vpop.permute.xlu0 %12227
      %12229 = vrot.lane.b32.xlu0 %v9476, 59
      %v12230 = vpop.permute.xlu0 %12229
      %12231 = vrot.lane.b32.xlu0 %v9477, 59
      %v12232 = vpop.permute.xlu0 %12231
      %12233 = vrot.lane.b32.xlu0 %v9478, 59
      %v12234 = vpop.permute.xlu0 %12233
      %12235 = vrot.lane.b32.xlu0 %v9479, 59
      %v12236 = vpop.permute.xlu0 %12235
      %12237 = vrot.lane.b32.xlu0 %v9480, 59
      %v12238 = vpop.permute.xlu0 %12237
      %12239 = vrot.lane.b32.xlu0 %v9481, 59
      %v12240 = vpop.permute.xlu0 %12239
      %12241 = vrot.lane.b32.xlu0 %v9482, 59
      %v12242 = vpop.permute.xlu0 %12241
      %12243 = vrot.lane.b32.xlu0 %v9483, 59
      %v12244 = vpop.permute.xlu0 %12243
      %12245 = vrot.lane.b32.xlu0 %v9484, 59
      %v12246 = vpop.permute.xlu0 %12245
      %12247 = vrot.lane.b32.xlu0 %v9485, 59
      %v12248 = vpop.permute.xlu0 %12247
      %12249 = vrot.lane.b32.xlu0 %v9486, 59
      %v12250 = vpop.permute.xlu0 %12249
      %12251 = vrot.lane.b32.xlu0 %v9487, 59
      %v12252 = vpop.permute.xlu0 %12251
      %12253 = vrot.lane.b32.xlu0 %v9488, 59
      %v12254 = vpop.permute.xlu0 %12253
      %12255 = vrot.lane.b32.xlu0 %v9489, 59
      %v12256 = vpop.permute.xlu0 %12255
      %12257 = vrot.lane.b32.xlu0 %v9490, 59
      %v12258 = vpop.permute.xlu0 %12257
      %12259 = vrot.lane.b32.xlu0 %v9491, 59
      %v12260 = vpop.permute.xlu0 %12259
      %12261 = vrot.lane.b32.xlu0 %v9492, 59
      %v12262 = vpop.permute.xlu0 %12261
      %12263 = vrot.lane.b32.xlu0 %v9493, 59
      %v12264 = vpop.permute.xlu0 %12263
      %12265 = vrot.lane.b32.xlu0 %v9494, 59
      %v12266 = vpop.permute.xlu0 %12265
      %12267 = vrot.lane.b32.xlu0 %v9495, 59
      %v12268 = vpop.permute.xlu0 %12267
      %12269 = vrot.lane.b32.xlu0 %v9496, 59
      %v12270 = vpop.permute.xlu0 %12269
      %12271 = vrot.lane.b32.xlu0 %v9497, 59
      %v12272 = vpop.permute.xlu0 %12271
      %12273 = vrot.lane.b32.xlu0 %v9498, 59
      %v12274 = vpop.permute.xlu0 %12273
      %12275 = vrot.lane.b32.xlu0 %v9499, 59
      %v12276 = vpop.permute.xlu0 %12275
      %12277 = vrot.lane.b32.xlu0 %v9500, 59
      %v12278 = vpop.permute.xlu0 %12277
      %12279 = vrot.lane.b32.xlu0 %v9501, 59
      %v12280 = vpop.permute.xlu0 %12279
      %12281 = vrot.lane.b32.xlu0 %v9502, 59
      %v12282 = vpop.permute.xlu0 %12281
      %12283 = vrot.lane.b32.xlu0 %v9503, 59
      %v12284 = vpop.permute.xlu0 %12283
      %12285 = vrot.lane.b32.xlu0 %v9504, 59
      %v12286 = vpop.permute.xlu0 %12285
      %12287 = vrot.lane.b32.xlu0 %v9505, 59
      %v12288 = vpop.permute.xlu0 %12287
      %12289 = vrot.lane.b32.xlu0 %v9506, 59
      %v12290 = vpop.permute.xlu0 %12289
      %12291 = vrot.lane.b32.xlu0 %v9507, 59
      %v12292 = vpop.permute.xlu0 %12291
      %12293 = vrot.lane.b32.xlu0 %v9508, 59
      %v12294 = vpop.permute.xlu0 %12293
      %12295 = vrot.lane.b32.xlu0 %v9509, 59
      %v12296 = vpop.permute.xlu0 %12295
      %12297 = vrot.lane.b32.xlu0 %v9510, 59
      %v12298 = vpop.permute.xlu0 %12297
      %12299 = vrot.lane.b32.xlu0 %v9511, 59
      %v12300 = vpop.permute.xlu0 %12299
      %12301 = vrot.lane.b32.xlu0 %v9512, 59
      %v12302 = vpop.permute.xlu0 %12301
      %12303 = vrot.lane.b32.xlu0 %v9513, 59
      %v12304 = vpop.permute.xlu0 %12303
      %12305 = vrot.lane.b32.xlu0 %v9514, 59
      %v12306 = vpop.permute.xlu0 %12305
      %12307 = vrot.lane.b32.xlu0 %v9515, 59
      %v12308 = vpop.permute.xlu0 %12307
      %12309 = vrot.lane.b32.xlu0 %v9516, 59
      %v12310 = vpop.permute.xlu0 %12309
      %12311 = vrot.lane.b32.xlu0 %v9517, 59
      %v12312 = vpop.permute.xlu0 %12311
      %12313 = vrot.lane.b32.xlu0 %v9518, 59
      %v12314 = vpop.permute.xlu0 %12313
      %12315 = vrot.lane.b32.xlu0 %v9519, 59
      %v12316 = vpop.permute.xlu0 %12315
      %12317 = vrot.lane.b32.xlu0 %v9520, 59
      %v12318 = vpop.permute.xlu0 %12317
      %12319 = vrot.lane.b32.xlu0 %v9521, 59
      %v12320 = vpop.permute.xlu0 %12319
      %12321 = vrot.lane.b32.xlu0 %v9522, 59
      %v12322 = vpop.permute.xlu0 %12321
      %12323 = vrot.lane.b32.xlu0 %v9523, 59
      %v12324 = vpop.permute.xlu0 %12323
      %12325 = vrot.lane.b32.xlu0 %v9524, 59
      %v12326 = vpop.permute.xlu0 %12325
      %12327 = vrot.lane.b32.xlu0 %v9525, 59
      %v12328 = vpop.permute.xlu0 %12327
      %12329 = vrot.lane.b32.xlu0 %v9526, 59
      %v12330 = vpop.permute.xlu0 %12329
      %12331 = vrot.lane.b32.xlu0 %v9527, 59
      %v12332 = vpop.permute.xlu0 %12331
      %12333 = vrot.lane.b32.xlu0 %v9528, 59
      %v12334 = vpop.permute.xlu0 %12333
      %12335 = vrot.lane.b32.xlu0 %v9529, 59
      %v12336 = vpop.permute.xlu0 %12335
      %12337 = vrot.lane.b32.xlu0 %v9530, 59
      %v12338 = vpop.permute.xlu0 %12337
      %12339 = vrot.lane.b32.xlu0 %v9531, 59
      %v12340 = vpop.permute.xlu0 %12339
      %12341 = vrot.lane.b32.xlu0 %v9532, 59
      %v12342 = vpop.permute.xlu0 %12341
      %12343 = vrot.lane.b32.xlu0 %v9533, 59
      %v12344 = vpop.permute.xlu0 %12343
      %vm12409 = vcmask 31768
      %12410 = vst.msk [vmem:[%s928] sm:$0xff] %vm12409, %v12218
      %12411 = vst.msk [vmem:[%s928 + $0x8] sm:$0xff] %vm12409, %v12220
      %12412 = vst.msk [vmem:[%s928 + $0x10] sm:$0xff] %vm12409, %v12222
      %12413 = vst.msk [vmem:[%s928 + $0x18] sm:$0xff] %vm12409, %v12224
      %12414 = vst.msk [vmem:[%s928 + $0x20] sm:$0xff] %vm12409, %v12226
      %12415 = vst.msk [vmem:[%s928 + $0x28] sm:$0xff] %vm12409, %v12228
      %12416 = vst.msk [vmem:[%s928 + $0x30] sm:$0xff] %vm12409, %v12230
      %12417 = vst.msk [vmem:[%s928 + $0x38] sm:$0xff] %vm12409, %v12232
      %12418 = vst.msk [vmem:[%s928 + $0x40] sm:$0xff] %vm12409, %v12234
      %12419 = vst.msk [vmem:[%s928 + $0x48] sm:$0xff] %vm12409, %v12236
      %12420 = vst.msk [vmem:[%s928 + $0x50] sm:$0xff] %vm12409, %v12238
      %12421 = vst.msk [vmem:[%s928 + $0x58] sm:$0xff] %vm12409, %v12240
      %12422 = vst.msk [vmem:[%s928 + $0x60] sm:$0xff] %vm12409, %v12242
      %12423 = vst.msk [vmem:[%s928 + $0x68] sm:$0xff] %vm12409, %v12244
      %12424 = vst.msk [vmem:[%s928 + $0x70] sm:$0xff] %vm12409, %v12246
      %12425 = vst.msk [vmem:[%s928 + $0x78] sm:$0xff] %vm12409, %v12248
      %12426 = vst.msk [vmem:[%s928 + $0x80] sm:$0xff] %vm12409, %v12250
      %12427 = vst.msk [vmem:[%s928 + $0x88] sm:$0xff] %vm12409, %v12252
      %12428 = vst.msk [vmem:[%s928 + $0x90] sm:$0xff] %vm12409, %v12254
      %12429 = vst.msk [vmem:[%s928 + $0x98] sm:$0xff] %vm12409, %v12256
      %12430 = vst.msk [vmem:[%s928 + $0xa0] sm:$0xff] %vm12409, %v12258
      %12431 = vst.msk [vmem:[%s928 + $0xa8] sm:$0xff] %vm12409, %v12260
      %12432 = vst.msk [vmem:[%s928 + $0xb0] sm:$0xff] %vm12409, %v12262
      %12433 = vst.msk [vmem:[%s928 + $0xb8] sm:$0xff] %vm12409, %v12264
      %12434 = vst.msk [vmem:[%s928 + $0xc0] sm:$0xff] %vm12409, %v12266
      %12435 = vst.msk [vmem:[%s928 + $0xc8] sm:$0xff] %vm12409, %v12268
      %12436 = vst.msk [vmem:[%s928 + $0xd0] sm:$0xff] %vm12409, %v12270
      %12437 = vst.msk [vmem:[%s928 + $0xd8] sm:$0xff] %vm12409, %v12272
      %12438 = vst.msk [vmem:[%s928 + $0xe0] sm:$0xff] %vm12409, %v12274
      %12439 = vst.msk [vmem:[%s928 + $0xe8] sm:$0xff] %vm12409, %v12276
      %12440 = vst.msk [vmem:[%s928 + $0xf0] sm:$0xff] %vm12409, %v12278
      %12441 = vst.msk [vmem:[%s928 + $0xf8] sm:$0xff] %vm12409, %v12280
      %12442 = vst.msk [vmem:[%s928 + $0x100] sm:$0xff] %vm12409, %v12282
      %12443 = vst.msk [vmem:[%s928 + $0x108] sm:$0xff] %vm12409, %v12284
      %12444 = vst.msk [vmem:[%s928 + $0x110] sm:$0xff] %vm12409, %v12286
      %12445 = vst.msk [vmem:[%s928 + $0x118] sm:$0xff] %vm12409, %v12288
      %12446 = vst.msk [vmem:[%s928 + $0x120] sm:$0xff] %vm12409, %v12290
      %12447 = vst.msk [vmem:[%s928 + $0x128] sm:$0xff] %vm12409, %v12292
      %12448 = vst.msk [vmem:[%s928 + $0x130] sm:$0xff] %vm12409, %v12294
      %12449 = vst.msk [vmem:[%s928 + $0x138] sm:$0xff] %vm12409, %v12296
      %12450 = vst.msk [vmem:[%s928 + $0x140] sm:$0xff] %vm12409, %v12298
      %12451 = vst.msk [vmem:[%s928 + $0x148] sm:$0xff] %vm12409, %v12300
      %12452 = vst.msk [vmem:[%s928 + $0x150] sm:$0xff] %vm12409, %v12302
      %12453 = vst.msk [vmem:[%s928 + $0x158] sm:$0xff] %vm12409, %v12304
      %12454 = vst.msk [vmem:[%s928 + $0x160] sm:$0xff] %vm12409, %v12306
      %12455 = vst.msk [vmem:[%s928 + $0x168] sm:$0xff] %vm12409, %v12308
      %12456 = vst.msk [vmem:[%s928 + $0x170] sm:$0xff] %vm12409, %v12310
      %12457 = vst.msk [vmem:[%s928 + $0x178] sm:$0xff] %vm12409, %v12312
      %12458 = vst.msk [vmem:[%s928 + $0x180] sm:$0xff] %vm12409, %v12314
      %12459 = vst.msk [vmem:[%s928 + $0x188] sm:$0xff] %vm12409, %v12316
      %12460 = vst.msk [vmem:[%s928 + $0x190] sm:$0xff] %vm12409, %v12318
      %12461 = vst.msk [vmem:[%s928 + $0x198] sm:$0xff] %vm12409, %v12320
      %12462 = vst.msk [vmem:[%s928 + $0x1a0] sm:$0xff] %vm12409, %v12322
      %12463 = vst.msk [vmem:[%s928 + $0x1a8] sm:$0xff] %vm12409, %v12324
      %12464 = vst.msk [vmem:[%s928 + $0x1b0] sm:$0xff] %vm12409, %v12326
      %12465 = vst.msk [vmem:[%s928 + $0x1b8] sm:$0xff] %vm12409, %v12328
      %12466 = vst.msk [vmem:[%s928 + $0x1c0] sm:$0xff] %vm12409, %v12330
      %12467 = vst.msk [vmem:[%s928 + $0x1c8] sm:$0xff] %vm12409, %v12332
      %12468 = vst.msk [vmem:[%s928 + $0x1d0] sm:$0xff] %vm12409, %v12334
      %12469 = vst.msk [vmem:[%s928 + $0x1d8] sm:$0xff] %vm12409, %v12336
      %12470 = vst.msk [vmem:[%s928 + $0x1e0] sm:$0xff] %vm12409, %v12338
      %12471 = vst.msk [vmem:[%s928 + $0x1e8] sm:$0xff] %vm12409, %v12340
      %12472 = vst.msk [vmem:[%s928 + $0x1f0] sm:$0xff] %vm12409, %v12342
      %12473 = vst.msk [vmem:[%s928 + $0x1f8] sm:$0xff] %vm12409, %v12344
      %s12474 = smul.u32 64, %s72
      %p12475 = scmp.lt.s32.totalorder %s12474, 127
      %s12476 = scalar_select %p12475, %s12474, 127
      %s12477 = smul.addr %s12476, 8
      %s12478 = scalar_lea.vmem %s59, %s12477
      // Predicated region
      $region137: #{nerf_forward.1} parent=135 // pred_check
        %p12479 = pneg %p709
      $region138: #{nerf_forward.1} parent=135 // pred_check_branch
        %12481 = sbr.rel (%p12479) target = $region140
      $region139: #{nerf_forward.1} parent=135 // pred_region
        %s12482 = smul.u32 64, %s72
      $region140: #{nerf_forward.1} parent=135 // pred_fallthru
        _
    $region136: #{nerf_forward.1} parent=5 // pred_fallthru
      _
    %p12483 = scmp.le.s32.totalorder 2, %s67
    // Predicated region
    $region141: #{nerf_forward.1} parent=5 // pred_check
      %p12484 = pneg %p12483
    $region142: #{nerf_forward.1} parent=5 // pred_check_branch
      %12486 = sbr.rel (%p12484) target = $region144
    $region143: #{nerf_forward.1} parent=5 // pred_region
      %s12487 = ssub.s32 %s67, 2
      // Predicated region
      $region145: #{nerf_forward.1} parent=143 // pred_check
        %p12488 = pneg %p715
      $region146: #{nerf_forward.1} parent=143 // pred_check_branch
        %12490 = sbr.rel (%p12488) target = $region148
      $region147: #{nerf_forward.1} parent=143 // pred_region
        %s12491 = smul.u32 64, %s73
        %p12492 = scmp.lt.s32.totalorder %s12491, 127
        %s12493 = scalar_select %p12492, %s12491, 127
        %s12494 = smul.addr %s12493, 8
        %s12495 = scalar_lea.vmem %s59, %s12494
      $region148: #{nerf_forward.1} parent=143 // pred_fallthru
        _
    $region144: #{nerf_forward.1} parent=5 // pred_fallthru
      _
  $region6: #{nerf_forward.1} parent=0 // loop_footer
    %s71 = sadd.s32 1, %s67
  $region7: #{nerf_forward.1} parent=0 // loop_footer_branch
    %66 = sbr.rel target = $region3
  $region8: #{nerf_forward.1} parent=0 // loop_exit
    _

</llo_original>
